<compile_context>
chip_gen: v6e
topology: v6e:2x2x1
jax: 0.10.0
libtpu: 0.0.40
codegen_flags: <defaults>
</compile_context>

<pallas_src>
import jax
import jax.numpy as jnp
from jax.experimental import pallas as pl
from jax.experimental.pallas import tpu as pltpu

# ---- model hyper-parameters (module defaults except W shrunk for a small test) ----
D = 8
W = 128
INPUT_CH = 3
INPUT_CH_VIEWS = 3
SKIPS = (4,)
PAD_CH = 8            # x padded from 6 to 8 lanes (aligned K for the fused x matmul)

MAX_TILE = 2048       # rows per grid step (upper bound)
MIN_TILE = 256        # keeps the sublane dim a multiple of 8 and tiles reasonable

USE_VIEWDIRS = True
# TODO(synk): the use_viewdirs=False branch of the PyTorch forward references
#             self.output_linear which __init__ never creates; that path is not
#             implementable and is intentionally omitted.


def _nerf_kernel(x_ref, wx_ref, b0_ref, wmid_ref, bmid_ref,
                 wfa_ref, bfa_ref, wvf_ref, bv_ref, wrgb_ref, brgb_ref, out_ref):
    f32 = jnp.float32
    bf16 = jnp.bfloat16

    # x lanes: [0:3] = input_pts, [3:6] = input_views, [6:8] = zero padding.
    x_bf = x_ref[...]                                    # (TILE, 8) bf16 (host-cast)

    # ---- one fused matmul for every x-input contribution ----
    #   cols   0:128 -> layer-0 preactivation (input_pts)
    #   cols 128:256 -> skip-layer x slab      (input_pts)
    #   cols 256:320 -> views-branch x slab    (input_views)
    x_all = jnp.dot(x_bf, wx_ref[...], preferred_element_type=f32)   # (TILE, 320)
    pre0 = x_all[:, :W]
    skip_slab = x_all[:, W:2 * W]
    views_x = x_all[:, 2 * W:]

    # ---- layer 0 ----
    h = jnp.maximum(pre0 + b0_ref[...], 0.0)

    # ---- layers 1..7, all 128 -> 128. Skip concat folded into the precomputed
    #      x slab: h131 @ W5 == h128 @ W5[3:] + input_pts @ W5[:3]. ----
    for j in range(D - 1):                               # j + 1 = original layer index
        acc = jnp.dot(h.astype(bf16), wmid_ref[j], preferred_element_type=f32)
        if j == SKIPS[0]:                                # original layer 5
            acc = acc + skip_slab
        h = jnp.maximum(acc + bmid_ref[j], 0.0)

    # ---- fused feature(128) + alpha(1) head packed into 256 output lanes ----
    fa = jnp.dot(h.astype(bf16), wfa_ref[...], preferred_element_type=f32) + bfa_ref[...]
    feature = fa[:, :W]                                  # (TILE, 128)
    alpha = fa[:, W:W + 1]                               # (TILE, 1)

    # ---- views branch: cat([feature, input_views]) folded into split matmuls,
    #      the x part already sitting in views_x ----
    hv = (jnp.dot(feature.astype(bf16), wvf_ref[...], preferred_element_type=f32)
          + views_x + bv_ref[...])
    hv = jnp.maximum(hv, 0.0)

    # ---- rgb head padded to 4 lanes; alpha selected into lane 3 (no lane concat) ----
    rgb4 = jnp.dot(hv.astype(bf16), wrgb_ref[...], preferred_element_type=f32) + brgb_ref[...]
    lane = jax.lax.broadcasted_iota(jnp.int32, (1, 4), 1)
    out_ref[...] = jnp.where(lane == 3, alpha, rgb4).astype(out_ref.dtype)


def _rep_spec(shape):
    # Whole-array block, same block for every grid step (weights stay VMEM-resident).
    return pl.BlockSpec(shape, lambda i, _nd=len(shape): (0,) * _nd)


def _choose_tile(n):
    """Largest tile up to MAX_TILE, but keep >=2 grid steps when n allows so both
    v7x TensorCores get work via the parallel grid axis."""
    half = -(-n // 2)                                    # cdiv(n, 2)
    half_rounded = -(-half // MIN_TILE) * MIN_TILE       # round up to MIN_TILE
    return max(MIN_TILE, min(MAX_TILE, half_rounded))


def pack_params(p):
    """Host-side, one-time repack of PyTorch-layout params into the kernel layout
    (bf16 weights, f32 biases, padding/stacking/fusion)."""
    bf16 = jnp.bfloat16
    f32 = jnp.float32

    # fused x-input weight (8, 320): layer-0 || skip x-part || views x-part
    w_xall = jnp.zeros((PAD_CH, 2 * W + W // 2), f32)
    w_xall = w_xall.at[:INPUT_CH, :W].set(p["w_pts"][0])
    w_xall = w_xall.at[:INPUT_CH, W:2 * W].set(p["w_pts"][SKIPS[0] + 1][:INPUT_CH])
    w_xall = w_xall.at[INPUT_CH:INPUT_CH + INPUT_CH_VIEWS, 2 * W:].set(p["w_views"][W:])
    w_xall = w_xall.astype(bf16)

    b0 = p["b_pts"][0].astype(f32)

    # layers 1..7: h-part weights, all (128,128). The skip layer (orig. index 5)
    # is (131,128) with rows 0:3 = input_pts part (handled by w_xall), rows 3:131 = h part.
    w_mid, b_mid = [], []
    for i in range(1, D):
        wi = p["w_pts"][i]
        if i == SKIPS[0] + 1:
            wi = wi[INPUT_CH:]
        w_mid.append(wi)
        b_mid.append(p["b_pts"][i])
    w_mid = jnp.stack(w_mid).astype(bf16)                # (7, 128, 128)
    b_mid = jnp.stack(b_mid).astype(f32)                 # (7, 1, 128)

    # fused feature/alpha head: cols 0:128 = w_feat, col 128 = w_alpha, rest zero
    wfa = jnp.zeros((W, 2 * W), f32)
    wfa = wfa.at[:, :W].set(p["w_feat"]).at[:, W:W + 1].set(p["w_alpha"]).astype(bf16)
    bfa = jnp.zeros((1, 2 * W), f32)
    bfa = bfa.at[:, :W].set(p["b_feat"]).at[:, W:W + 1].set(p["b_alpha"])

    # views layer (131,64): feature part (128,64); views part lives in w_xall
    wvf = p["w_views"][:W].astype(bf16)
    bv = p["b_views"].astype(f32)

    # rgb head padded to 4 output lanes (lane 3 is zero; alpha is selected there in-kernel)
    wrgb4 = jnp.zeros((W // 2, 4), f32).at[:, :3].set(p["w_rgb"]).astype(bf16)
    brgb4 = jnp.zeros((1, 4), f32).at[:, :3].set(p["b_rgb"])

    return (w_xall, b0, w_mid, b_mid, wfa, bfa, wvf, bv, wrgb4, brgb4)


def nerf_forward(x, packed):
    """x: (N, INPUT_CH + INPUT_CH_VIEWS) float32 (any N; padded internally).
    packed: output of pack_params. Returns (N, 4) = concat([rgb(3), alpha(1)], -1)."""
    N, C = x.shape
    assert C == INPUT_CH + INPUT_CH_VIEWS

    tile = _choose_tile(N)
    n_pad = (-N) % tile
    Np = N + n_pad

    # host-side: pad to 8 lanes AND cast to bf16 (halves the per-step input DMA)
    x_pad = jnp.zeros((Np, PAD_CH), jnp.bfloat16).at[:N, :C].set(x.astype(jnp.bfloat16))

    weight_args = list(packed)
    in_specs = [pl.BlockSpec((tile, PAD_CH), lambda i: (i, 0))]
    in_specs += [_rep_spec(w.shape) for w in weight_args]

    out = pl.pallas_call(
        _nerf_kernel,
        out_shape=jax.ShapeDtypeStruct((Np, 4), jnp.float32),
        grid_spec=pltpu.PrefetchScalarGridSpec(
            num_scalar_prefetch=0,
            grid=(Np // tile,),
            in_specs=in_specs,
            out_specs=pl.BlockSpec((tile, 4), lambda i: (i, 0)),
        ),
        compiler_params=pltpu.CompilerParams(
            dimension_semantics=("parallel",),
            vmem_limit_bytes=48 * 1024 * 1024,
        ),
    )(x_pad, *weight_args)
    return out[:N]


def init_params(key):
    """Deterministic PyTorch-equivalent init. Weights stored as (in, out)."""
    def lin(k, fan_in, fan_out):
        kw, kb = jax.random.split(k)
        bound = 1.0 / jnp.sqrt(fan_in)
        w = jax.random.uniform(kw, (fan_in, fan_out), jnp.float32, -bound, bound)
        b = jax.random.uniform(kb, (1, fan_out), jnp.float32, -bound, bound)
        return w, b

    keys = jax.random.split(key, D + 4)
    w_pts, b_pts = [], []
    for i in range(D):
        if i == 0:
            fan_in = INPUT_CH
        elif (i - 1) in SKIPS:
            fan_in = W + INPUT_CH
        else:
            fan_in = W
        w, b = lin(keys[i], fan_in, W)
        w_pts.append(w)
        b_pts.append(b)

    w_feat, b_feat = lin(keys[D + 0], W, W)
    w_alpha, b_alpha = lin(keys[D + 1], W, 1)
    w_views, b_views = lin(keys[D + 2], W + INPUT_CH_VIEWS, W // 2)
    w_rgb, b_rgb = lin(keys[D + 3], W // 2, 3)

    return dict(
        w_pts=w_pts, b_pts=b_pts,
        w_feat=w_feat, b_feat=b_feat,
        w_alpha=w_alpha, b_alpha=b_alpha,
        w_views=w_views, b_views=b_views,
        w_rgb=w_rgb, b_rgb=b_rgb,
    )


def nerf_reference_f32(x, p):
    """Pure-JAX f32 reference mirroring the PyTorch forward exactly."""
    input_pts = x[:, :INPUT_CH]
    input_views = x[:, INPUT_CH:]
    h = input_pts
    for i in range(D):
        h = jnp.maximum(h @ p["w_pts"][i] + p["b_pts"][i], 0.0)
        if i in SKIPS:
            h = jnp.concatenate([input_pts, h], axis=-1)
    alpha = h @ p["w_alpha"] + p["b_alpha"]
    feature = h @ p["w_feat"] + p["b_feat"]
    hv = jnp.concatenate([feature, input_views], axis=-1)
    hv = jnp.maximum(hv @ p["w_views"] + p["b_views"], 0.0)
    rgb = hv @ p["w_rgb"] + p["b_rgb"]
    return jnp.concatenate([rgb, alpha], axis=-1)


def nerf_reference_bf16(x, p):
    """Reference mirroring the kernel's mixed precision (bf16 matmuls, f32 accumulate)."""
    bf = jnp.bfloat16

    def dot(a, w):
        return jnp.dot(a.astype(bf), w.astype(bf), preferred_element_type=jnp.float32)

    input_pts = x[:, :INPUT_CH]
    input_views = x[:, INPUT_CH:]
    h = input_pts
    for i in range(D):
        h = jnp.maximum(dot(h, p["w_pts"][i]) + p["b_pts"][i], 0.0)
        if i in SKIPS:
            h = jnp.concatenate([input_pts, h], axis=-1)
    alpha = dot(h, p["w_alpha"]) + p["b_alpha"]
    feature = dot(h, p["w_feat"]) + p["b_feat"]
    hv = jnp.concatenate([feature, input_views], axis=-1)
    hv = jnp.maximum(dot(hv, p["w_views"]) + p["b_views"], 0.0)
    rgb = dot(hv, p["w_rgb"]) + p["b_rgb"]
    return jnp.concatenate([rgb, alpha], axis=-1)


if __name__ == "__main__":
    key = jax.random.PRNGKey(0)
    kx, kp = jax.random.split(key)

    N = 1000  # sample points (not a multiple of the tile on purpose; padding path exercised)
    x = jax.random.normal(kx, (N, INPUT_CH + INPUT_CH_VIEWS), dtype=jnp.float32)
    params = init_params(kp)
    packed = pack_params(params)  # host-side, one-time bf16 repack

    out = jax.block_until_ready(nerf_forward(x, packed))
    assert out.shape == (N, 4)

    # Apples-to-apples check against a reference with identical bf16/f32 precision.
    ref_bf16 = jax.block_until_ready(nerf_reference_bf16(x, params))
    assert jnp.allclose(out, ref_bf16, rtol=5e-3, atol=5e-3), "mismatch vs bf16 reference"

    # Coarse sanity check of end-to-end semantics against the pure-f32 reference.
    ref_f32 = jax.block_until_ready(nerf_reference_f32(x, params))
    assert jnp.allclose(out, ref_f32, rtol=1e-1, atol=1e-1), "mismatch vs f32 reference"

    print("KERNEL_OK")
</pallas_src>

<mosaic_0001>
module attributes {stable_mosaic.version = 11 : i64} {
  func.func @_nerf_kernel(%arg0: i32, %arg1: memref<512x8xbf16, #tpu.memory_space<vmem>>, %arg2: memref<8x320xbf16, #tpu.memory_space<vmem>>, %arg3: memref<1x128xf32, #tpu.memory_space<vmem>>, %arg4: memref<7x128x128xbf16, #tpu.memory_space<vmem>>, %arg5: memref<7x1x128xf32, #tpu.memory_space<vmem>>, %arg6: memref<128x256xbf16, #tpu.memory_space<vmem>>, %arg7: memref<1x256xf32, #tpu.memory_space<vmem>>, %arg8: memref<128x64xbf16, #tpu.memory_space<vmem>>, %arg9: memref<1x64xf32, #tpu.memory_space<vmem>>, %arg10: memref<64x4xbf16, #tpu.memory_space<vmem>>, %arg11: memref<1x4xf32, #tpu.memory_space<vmem>>, %arg12: memref<512x4xf32, #tpu.memory_space<vmem>>) attributes {dimension_semantics = [#tpu.dimension_semantics<parallel>], iteration_bounds = array<i64: 2>, scalar_prefetch = 0 : i64, scratch_operands = 0 : i64, tpu.core_type = #tpu.core_type<tc>, window_params = [{transform_indices = @transform_0, window_bounds = array<i64: 512, 8>}, {pipeline_mode = #tpu.pipeline_mode<synchronous>, transform_indices = @transform_1, window_bounds = array<i64: 8, 320>}, {pipeline_mode = #tpu.pipeline_mode<synchronous>, transform_indices = @transform_2, window_bounds = array<i64: 1, 128>}, {pipeline_mode = #tpu.pipeline_mode<synchronous>, transform_indices = @transform_3, window_bounds = array<i64: 7, 128, 128>}, {pipeline_mode = #tpu.pipeline_mode<synchronous>, transform_indices = @transform_4, window_bounds = array<i64: 7, 1, 128>}, {pipeline_mode = #tpu.pipeline_mode<synchronous>, transform_indices = @transform_5, window_bounds = array<i64: 128, 256>}, {pipeline_mode = #tpu.pipeline_mode<synchronous>, transform_indices = @transform_6, window_bounds = array<i64: 1, 256>}, {pipeline_mode = #tpu.pipeline_mode<synchronous>, transform_indices = @transform_7, window_bounds = array<i64: 128, 64>}, {pipeline_mode = #tpu.pipeline_mode<synchronous>, transform_indices = @transform_8, window_bounds = array<i64: 1, 64>}, {pipeline_mode = #tpu.pipeline_mode<synchronous>, transform_indices = @transform_9, window_bounds = array<i64: 64, 4>}, {pipeline_mode = #tpu.pipeline_mode<synchronous>, transform_indices = @transform_10, window_bounds = array<i64: 1, 4>}, {transform_indices = @transform_11, window_bounds = array<i64: 512, 4>}]} {
    %c0 = arith.constant 0 : index
    %c0_0 = arith.constant 0 : index
    %0 = vector.load %arg1[%c0, %c0_0] : memref<512x8xbf16, #tpu.memory_space<vmem>>, vector<512x8xbf16>
    %c0_1 = arith.constant 0 : index
    %c0_2 = arith.constant 0 : index
    %1 = vector.load %arg2[%c0_1, %c0_2] : memref<8x320xbf16, #tpu.memory_space<vmem>>, vector<8x320xbf16>
    %cst = arith.constant dense<0.000000e+00> : vector<512x320xf32>
    %2 = tpu.matmul %0, %1, %cst {dimension_numbers = #tpu.dot_dimension_numbers<[1], [0], [0], [1], [0, 0, 1, 1], [], []>} : vector<512x8xbf16>, vector<8x320xbf16>, vector<512x320xf32> -> vector<512x320xf32>
    %3 = vector.extract_strided_slice %2 {offsets = [0, 0], sizes = [512, 128], strides = [1, 1]} : vector<512x320xf32> to vector<512x128xf32>
    %4 = vector.extract_strided_slice %2 {offsets = [0, 128], sizes = [512, 128], strides = [1, 1]} : vector<512x320xf32> to vector<512x128xf32>
    %5 = vector.extract_strided_slice %2 {offsets = [0, 256], sizes = [512, 64], strides = [1, 1]} : vector<512x320xf32> to vector<512x64xf32>
    %c0_3 = arith.constant 0 : index
    %c0_4 = arith.constant 0 : index
    %6 = vector.load %arg3[%c0_3, %c0_4] : memref<1x128xf32, #tpu.memory_space<vmem>>, vector<1x128xf32>
    %7 = vector.broadcast %6 : vector<1x128xf32> to vector<512x128xf32>
    %8 = arith.addf %3, %7 : vector<512x128xf32>
    %cst_5 = arith.constant 0.000000e+00 : f32
    %9 = vector.broadcast %cst_5 : f32 to vector<512x128xf32>
    %10 = arith.maximumf %8, %9 : vector<512x128xf32>
    %11 = arith.truncf %10 : vector<512x128xf32> to vector<512x128xbf16>
    %c0_6 = arith.constant 0 : index
    %c0_7 = arith.constant 0 : index
    %c0_8 = arith.constant 0 : index
    %12 = vector.load %arg4[%c0_6, %c0_7, %c0_8] : memref<7x128x128xbf16, #tpu.memory_space<vmem>>, vector<1x128x128xbf16>
    %13 = vector.shape_cast %12 : vector<1x128x128xbf16> to vector<128x128xbf16>
    %cst_9 = arith.constant dense<0.000000e+00> : vector<512x128xf32>
    %14 = tpu.matmul %11, %13, %cst_9 {dimension_numbers = #tpu.dot_dimension_numbers<[1], [0], [0], [1], [0, 0, 1, 1], [], []>} : vector<512x128xbf16>, vector<128x128xbf16>, vector<512x128xf32> -> vector<512x128xf32>
    %c0_10 = arith.constant 0 : index
    %c0_11 = arith.constant 0 : index
    %c0_12 = arith.constant 0 : index
    %15 = vector.load %arg5[%c0_10, %c0_11, %c0_12] : memref<7x1x128xf32, #tpu.memory_space<vmem>>, vector<1x1x128xf32>
    %16 = vector.shape_cast %15 : vector<1x1x128xf32> to vector<1x128xf32>
    %17 = vector.broadcast %16 : vector<1x128xf32> to vector<512x128xf32>
    %18 = arith.addf %14, %17 : vector<512x128xf32>
    %cst_13 = arith.constant 0.000000e+00 : f32
    %19 = vector.broadcast %cst_13 : f32 to vector<512x128xf32>
    %20 = arith.maximumf %18, %19 : vector<512x128xf32>
    %21 = arith.truncf %20 : vector<512x128xf32> to vector<512x128xbf16>
    %c1 = arith.constant 1 : index
    %c0_14 = arith.constant 0 : index
    %c0_15 = arith.constant 0 : index
    %22 = vector.load %arg4[%c1, %c0_14, %c0_15] : memref<7x128x128xbf16, #tpu.memory_space<vmem>>, vector<1x128x128xbf16>
    %23 = vector.shape_cast %22 : vector<1x128x128xbf16> to vector<128x128xbf16>
    %cst_16 = arith.constant dense<0.000000e+00> : vector<512x128xf32>
    %24 = tpu.matmul %21, %23, %cst_16 {dimension_numbers = #tpu.dot_dimension_numbers<[1], [0], [0], [1], [0, 0, 1, 1], [], []>} : vector<512x128xbf16>, vector<128x128xbf16>, vector<512x128xf32> -> vector<512x128xf32>
    %c1_17 = arith.constant 1 : index
    %c0_18 = arith.constant 0 : index
    %c0_19 = arith.constant 0 : index
    %25 = vector.load %arg5[%c1_17, %c0_18, %c0_19] : memref<7x1x128xf32, #tpu.memory_space<vmem>>, vector<1x1x128xf32>
    %26 = vector.shape_cast %25 : vector<1x1x128xf32> to vector<1x128xf32>
    %27 = vector.broadcast %26 : vector<1x128xf32> to vector<512x128xf32>
    %28 = arith.addf %24, %27 : vector<512x128xf32>
    %cst_20 = arith.constant 0.000000e+00 : f32
    %29 = vector.broadcast %cst_20 : f32 to vector<512x128xf32>
    %30 = arith.maximumf %28, %29 : vector<512x128xf32>
    %31 = arith.truncf %30 : vector<512x128xf32> to vector<512x128xbf16>
    %c2 = arith.constant 2 : index
    %c0_21 = arith.constant 0 : index
    %c0_22 = arith.constant 0 : index
    %32 = vector.load %arg4[%c2, %c0_21, %c0_22] : memref<7x128x128xbf16, #tpu.memory_space<vmem>>, vector<1x128x128xbf16>
    %33 = vector.shape_cast %32 : vector<1x128x128xbf16> to vector<128x128xbf16>
    %cst_23 = arith.constant dense<0.000000e+00> : vector<512x128xf32>
    %34 = tpu.matmul %31, %33, %cst_23 {dimension_numbers = #tpu.dot_dimension_numbers<[1], [0], [0], [1], [0, 0, 1, 1], [], []>} : vector<512x128xbf16>, vector<128x128xbf16>, vector<512x128xf32> -> vector<512x128xf32>
    %c2_24 = arith.constant 2 : index
    %c0_25 = arith.constant 0 : index
    %c0_26 = arith.constant 0 : index
    %35 = vector.load %arg5[%c2_24, %c0_25, %c0_26] : memref<7x1x128xf32, #tpu.memory_space<vmem>>, vector<1x1x128xf32>
    %36 = vector.shape_cast %35 : vector<1x1x128xf32> to vector<1x128xf32>
    %37 = vector.broadcast %36 : vector<1x128xf32> to vector<512x128xf32>
    %38 = arith.addf %34, %37 : vector<512x128xf32>
    %cst_27 = arith.constant 0.000000e+00 : f32
    %39 = vector.broadcast %cst_27 : f32 to vector<512x128xf32>
    %40 = arith.maximumf %38, %39 : vector<512x128xf32>
    %41 = arith.truncf %40 : vector<512x128xf32> to vector<512x128xbf16>
    %c3 = arith.constant 3 : index
    %c0_28 = arith.constant 0 : index
    %c0_29 = arith.constant 0 : index
    %42 = vector.load %arg4[%c3, %c0_28, %c0_29] : memref<7x128x128xbf16, #tpu.memory_space<vmem>>, vector<1x128x128xbf16>
    %43 = vector.shape_cast %42 : vector<1x128x128xbf16> to vector<128x128xbf16>
    %cst_30 = arith.constant dense<0.000000e+00> : vector<512x128xf32>
    %44 = tpu.matmul %41, %43, %cst_30 {dimension_numbers = #tpu.dot_dimension_numbers<[1], [0], [0], [1], [0, 0, 1, 1], [], []>} : vector<512x128xbf16>, vector<128x128xbf16>, vector<512x128xf32> -> vector<512x128xf32>
    %c3_31 = arith.constant 3 : index
    %c0_32 = arith.constant 0 : index
    %c0_33 = arith.constant 0 : index
    %45 = vector.load %arg5[%c3_31, %c0_32, %c0_33] : memref<7x1x128xf32, #tpu.memory_space<vmem>>, vector<1x1x128xf32>
    %46 = vector.shape_cast %45 : vector<1x1x128xf32> to vector<1x128xf32>
    %47 = vector.broadcast %46 : vector<1x128xf32> to vector<512x128xf32>
    %48 = arith.addf %44, %47 : vector<512x128xf32>
    %cst_34 = arith.constant 0.000000e+00 : f32
    %49 = vector.broadcast %cst_34 : f32 to vector<512x128xf32>
    %50 = arith.maximumf %48, %49 : vector<512x128xf32>
    %51 = arith.truncf %50 : vector<512x128xf32> to vector<512x128xbf16>
    %c4 = arith.constant 4 : index
    %c0_35 = arith.constant 0 : index
    %c0_36 = arith.constant 0 : index
    %52 = vector.load %arg4[%c4, %c0_35, %c0_36] : memref<7x128x128xbf16, #tpu.memory_space<vmem>>, vector<1x128x128xbf16>
    %53 = vector.shape_cast %52 : vector<1x128x128xbf16> to vector<128x128xbf16>
    %cst_37 = arith.constant dense<0.000000e+00> : vector<512x128xf32>
    %54 = tpu.matmul %51, %53, %cst_37 {dimension_numbers = #tpu.dot_dimension_numbers<[1], [0], [0], [1], [0, 0, 1, 1], [], []>} : vector<512x128xbf16>, vector<128x128xbf16>, vector<512x128xf32> -> vector<512x128xf32>
    %55 = arith.addf %54, %4 : vector<512x128xf32>
    %c4_38 = arith.constant 4 : index
    %c0_39 = arith.constant 0 : index
    %c0_40 = arith.constant 0 : index
    %56 = vector.load %arg5[%c4_38, %c0_39, %c0_40] : memref<7x1x128xf32, #tpu.memory_space<vmem>>, vector<1x1x128xf32>
    %57 = vector.shape_cast %56 : vector<1x1x128xf32> to vector<1x128xf32>
    %58 = vector.broadcast %57 : vector<1x128xf32> to vector<512x128xf32>
    %59 = arith.addf %55, %58 : vector<512x128xf32>
    %cst_41 = arith.constant 0.000000e+00 : f32
    %60 = vector.broadcast %cst_41 : f32 to vector<512x128xf32>
    %61 = arith.maximumf %59, %60 : vector<512x128xf32>
    %62 = arith.truncf %61 : vector<512x128xf32> to vector<512x128xbf16>
    %c5 = arith.constant 5 : index
    %c0_42 = arith.constant 0 : index
    %c0_43 = arith.constant 0 : index
    %63 = vector.load %arg4[%c5, %c0_42, %c0_43] : memref<7x128x128xbf16, #tpu.memory_space<vmem>>, vector<1x128x128xbf16>
    %64 = vector.shape_cast %63 : vector<1x128x128xbf16> to vector<128x128xbf16>
    %cst_44 = arith.constant dense<0.000000e+00> : vector<512x128xf32>
    %65 = tpu.matmul %62, %64, %cst_44 {dimension_numbers = #tpu.dot_dimension_numbers<[1], [0], [0], [1], [0, 0, 1, 1], [], []>} : vector<512x128xbf16>, vector<128x128xbf16>, vector<512x128xf32> -> vector<512x128xf32>
    %c5_45 = arith.constant 5 : index
    %c0_46 = arith.constant 0 : index
    %c0_47 = arith.constant 0 : index
    %66 = vector.load %arg5[%c5_45, %c0_46, %c0_47] : memref<7x1x128xf32, #tpu.memory_space<vmem>>, vector<1x1x128xf32>
    %67 = vector.shape_cast %66 : vector<1x1x128xf32> to vector<1x128xf32>
    %68 = vector.broadcast %67 : vector<1x128xf32> to vector<512x128xf32>
    %69 = arith.addf %65, %68 : vector<512x128xf32>
    %cst_48 = arith.constant 0.000000e+00 : f32
    %70 = vector.broadcast %cst_48 : f32 to vector<512x128xf32>
    %71 = arith.maximumf %69, %70 : vector<512x128xf32>
    %72 = arith.truncf %71 : vector<512x128xf32> to vector<512x128xbf16>
    %c6 = arith.constant 6 : index
    %c0_49 = arith.constant 0 : index
    %c0_50 = arith.constant 0 : index
    %73 = vector.load %arg4[%c6, %c0_49, %c0_50] : memref<7x128x128xbf16, #tpu.memory_space<vmem>>, vector<1x128x128xbf16>
    %74 = vector.shape_cast %73 : vector<1x128x128xbf16> to vector<128x128xbf16>
    %cst_51 = arith.constant dense<0.000000e+00> : vector<512x128xf32>
    %75 = tpu.matmul %72, %74, %cst_51 {dimension_numbers = #tpu.dot_dimension_numbers<[1], [0], [0], [1], [0, 0, 1, 1], [], []>} : vector<512x128xbf16>, vector<128x128xbf16>, vector<512x128xf32> -> vector<512x128xf32>
    %c6_52 = arith.constant 6 : index
    %c0_53 = arith.constant 0 : index
    %c0_54 = arith.constant 0 : index
    %76 = vector.load %arg5[%c6_52, %c0_53, %c0_54] : memref<7x1x128xf32, #tpu.memory_space<vmem>>, vector<1x1x128xf32>
    %77 = vector.shape_cast %76 : vector<1x1x128xf32> to vector<1x128xf32>
    %78 = vector.broadcast %77 : vector<1x128xf32> to vector<512x128xf32>
    %79 = arith.addf %75, %78 : vector<512x128xf32>
    %cst_55 = arith.constant 0.000000e+00 : f32
    %80 = vector.broadcast %cst_55 : f32 to vector<512x128xf32>
    %81 = arith.maximumf %79, %80 : vector<512x128xf32>
    %82 = arith.truncf %81 : vector<512x128xf32> to vector<512x128xbf16>
    %c0_56 = arith.constant 0 : index
    %c0_57 = arith.constant 0 : index
    %83 = vector.load %arg6[%c0_56, %c0_57] : memref<128x256xbf16, #tpu.memory_space<vmem>>, vector<128x256xbf16>
    %cst_58 = arith.constant dense<0.000000e+00> : vector<512x256xf32>
    %84 = tpu.matmul %82, %83, %cst_58 {dimension_numbers = #tpu.dot_dimension_numbers<[1], [0], [0], [1], [0, 0, 1, 1], [], []>} : vector<512x128xbf16>, vector<128x256xbf16>, vector<512x256xf32> -> vector<512x256xf32>
    %c0_59 = arith.constant 0 : index
    %c0_60 = arith.constant 0 : index
    %85 = vector.load %arg7[%c0_59, %c0_60] : memref<1x256xf32, #tpu.memory_space<vmem>>, vector<1x256xf32>
    %86 = vector.broadcast %85 : vector<1x256xf32> to vector<512x256xf32>
    %87 = arith.addf %84, %86 : vector<512x256xf32>
    %88 = vector.extract_strided_slice %87 {offsets = [0, 0], sizes = [512, 128], strides = [1, 1]} : vector<512x256xf32> to vector<512x128xf32>
    %89 = vector.extract_strided_slice %87 {offsets = [0, 128], sizes = [512, 1], strides = [1, 1]} : vector<512x256xf32> to vector<512x1xf32>
    %90 = arith.truncf %88 : vector<512x128xf32> to vector<512x128xbf16>
    %c0_61 = arith.constant 0 : index
    %c0_62 = arith.constant 0 : index
    %91 = vector.load %arg8[%c0_61, %c0_62] : memref<128x64xbf16, #tpu.memory_space<vmem>>, vector<128x64xbf16>
    %cst_63 = arith.constant dense<0.000000e+00> : vector<512x64xf32>
    %92 = tpu.matmul %90, %91, %cst_63 {dimension_numbers = #tpu.dot_dimension_numbers<[1], [0], [0], [1], [0, 0, 1, 1], [], []>} : vector<512x128xbf16>, vector<128x64xbf16>, vector<512x64xf32> -> vector<512x64xf32>
    %93 = arith.addf %92, %5 : vector<512x64xf32>
    %c0_64 = arith.constant 0 : index
    %c0_65 = arith.constant 0 : index
    %94 = vector.load %arg9[%c0_64, %c0_65] : memref<1x64xf32, #tpu.memory_space<vmem>>, vector<1x64xf32>
    %95 = vector.broadcast %94 : vector<1x64xf32> to vector<512x64xf32>
    %96 = arith.addf %93, %95 : vector<512x64xf32>
    %cst_66 = arith.constant 0.000000e+00 : f32
    %97 = vector.broadcast %cst_66 : f32 to vector<512x64xf32>
    %98 = arith.maximumf %96, %97 : vector<512x64xf32>
    %99 = arith.truncf %98 : vector<512x64xf32> to vector<512x64xbf16>
    %c0_67 = arith.constant 0 : index
    %c0_68 = arith.constant 0 : index
    %100 = vector.load %arg10[%c0_67, %c0_68] : memref<64x4xbf16, #tpu.memory_space<vmem>>, vector<64x4xbf16>
    %cst_69 = arith.constant dense<0.000000e+00> : vector<512x4xf32>
    %101 = tpu.matmul %99, %100, %cst_69 {dimension_numbers = #tpu.dot_dimension_numbers<[1], [0], [0], [1], [0, 0, 1, 1], [], []>} : vector<512x64xbf16>, vector<64x4xbf16>, vector<512x4xf32> -> vector<512x4xf32>
    %c0_70 = arith.constant 0 : index
    %c0_71 = arith.constant 0 : index
    %102 = vector.load %arg11[%c0_70, %c0_71] : memref<1x4xf32, #tpu.memory_space<vmem>>, vector<1x4xf32>
    %103 = vector.broadcast %102 : vector<1x4xf32> to vector<512x4xf32>
    %104 = arith.addf %101, %103 : vector<512x4xf32>
    %105 = tpu.iota {dimensions = array<i32: 1>} : vector<1x4xi32>
    %c3_i32 = arith.constant 3 : i32
    %106 = vector.broadcast %c3_i32 : i32 to vector<1x4xi32>
    %107 = arith.cmpi eq, %105, %106 : vector<1x4xi32>
    %108 = vector.shape_cast %107 : vector<1x4xi1> to vector<1x4xi1>
    %109 = vector.broadcast %108 : vector<1x4xi1> to vector<512x4xi1>
    %110 = vector.shape_cast %89 : vector<512x1xf32> to vector<512x1xf32>
    %111 = vector.broadcast %110 : vector<512x1xf32> to vector<512x4xf32>
    %112 = arith.select %109, %111, %104 : vector<512x4xi1>, vector<512x4xf32>
    %c0_72 = arith.constant 0 : index
    %c0_73 = arith.constant 0 : index
    %113 = vector.load %arg12[%c0_72, %c0_73] : memref<512x4xf32, #tpu.memory_space<vmem>>, vector<512x4xf32>
    tpu.vector_store %arg12[%c0_72, %c0_73], %112 {strides = array<i32>} : memref<512x4xf32, #tpu.memory_space<vmem>>, vector<512x4xf32>,
    return
  }
  func.func @transform_0(%arg0: i32) -> (i32, i32) {
    %c0_i32 = arith.constant 0 : i32
    %c0_i32_0 = arith.constant 0 : i32
    return %arg0, %c0_i32 : i32, i32
  }
  func.func @transform_1(%arg0: i32) -> (i32, i32) {
    %c0_i32 = arith.constant 0 : i32
    %c0_i32_0 = arith.constant 0 : i32
    %c0_i32_1 = arith.constant 0 : i32
    return %c0_i32, %c0_i32_0 : i32, i32
  }
  func.func @transform_2(%arg0: i32) -> (i32, i32) {
    %c0_i32 = arith.constant 0 : i32
    %c0_i32_0 = arith.constant 0 : i32
    %c0_i32_1 = arith.constant 0 : i32
    return %c0_i32, %c0_i32_0 : i32, i32
  }
  func.func @transform_3(%arg0: i32) -> (i32, i32, i32) {
    %c0_i32 = arith.constant 0 : i32
    %c0_i32_0 = arith.constant 0 : i32
    %c0_i32_1 = arith.constant 0 : i32
    %c0_i32_2 = arith.constant 0 : i32
    return %c0_i32, %c0_i32_0, %c0_i32_1 : i32, i32, i32
  }
  func.func @transform_4(%arg0: i32) -> (i32, i32, i32) {
    %c0_i32 = arith.constant 0 : i32
    %c0_i32_0 = arith.constant 0 : i32
    %c0_i32_1 = arith.constant 0 : i32
    %c0_i32_2 = arith.constant 0 : i32
    return %c0_i32, %c0_i32_0, %c0_i32_1 : i32, i32, i32
  }
  func.func @transform_5(%arg0: i32) -> (i32, i32) {
    %c0_i32 = arith.constant 0 : i32
    %c0_i32_0 = arith.constant 0 : i32
    %c0_i32_1 = arith.constant 0 : i32
    return %c0_i32, %c0_i32_0 : i32, i32
  }
  func.func @transform_6(%arg0: i32) -> (i32, i32) {
    %c0_i32 = arith.constant 0 : i32
    %c0_i32_0 = arith.constant 0 : i32
    %c0_i32_1 = arith.constant 0 : i32
    return %c0_i32, %c0_i32_0 : i32, i32
  }
  func.func @transform_7(%arg0: i32) -> (i32, i32) {
    %c0_i32 = arith.constant 0 : i32
    %c0_i32_0 = arith.constant 0 : i32
    %c0_i32_1 = arith.constant 0 : i32
    return %c0_i32, %c0_i32_0 : i32, i32
  }
  func.func @transform_8(%arg0: i32) -> (i32, i32) {
    %c0_i32 = arith.constant 0 : i32
    %c0_i32_0 = arith.constant 0 : i32
    %c0_i32_1 = arith.constant 0 : i32
    return %c0_i32, %c0_i32_0 : i32, i32
  }
  func.func @transform_9(%arg0: i32) -> (i32, i32) {
    %c0_i32 = arith.constant 0 : i32
    %c0_i32_0 = arith.constant 0 : i32
    %c0_i32_1 = arith.constant 0 : i32
    return %c0_i32, %c0_i32_0 : i32, i32
  }
  func.func @transform_10(%arg0: i32) -> (i32, i32) {
    %c0_i32 = arith.constant 0 : i32
    %c0_i32_0 = arith.constant 0 : i32
    %c0_i32_1 = arith.constant 0 : i32
    return %c0_i32, %c0_i32_0 : i32, i32
  }
  func.func @transform_11(%arg0: i32) -> (i32, i32) {
    %c0_i32 = arith.constant 0 : i32
    %c0_i32_0 = arith.constant 0 : i32
    return %arg0, %c0_i32 : i32, i32
  }
}

</mosaic_0001>

<llo_original>
// kernel: tpu_custom_call.1
$region0: #{tpu_custom_call.1}
  #allocation0 [shape = 'u32[]', space=smem, size = 0x4, offset = 0x4, fixed_abs, tag = 'smem constant byte address 0x4 - core index']
  #allocation1 [shape = 'u32[144,128]{1,0:T(1,128)}', space=vmem, size = 0x12000, scoped, tag = 'internal scratch']
  %s0 = inlined_call_operand.vmem [shape: bf16[1024,8], index: 0, kind: input, shape index: {}]
  %s1 = inlined_call_operand.vmem [shape: bf16[8,320], index: 1, kind: input, shape index: {}]
  %s2 = inlined_call_operand.vmem [shape: f32[1,128], index: 2, kind: input, shape index: {}]
  %s3 = inlined_call_operand.vmem [shape: bf16[7,128,128], index: 3, kind: input, shape index: {}]
  %s4 = inlined_call_operand.vmem [shape: f32[7,1,128], index: 4, kind: input, shape index: {}]
  %s5 = inlined_call_operand.vmem [shape: bf16[128,256], index: 5, kind: input, shape index: {}]
  %s6 = inlined_call_operand.vmem [shape: f32[1,256], index: 6, kind: input, shape index: {}]
  %s7 = inlined_call_operand.vmem [shape: bf16[128,64], index: 7, kind: input, shape index: {}]
  %s8 = inlined_call_operand.vmem [shape: f32[1,64], index: 8, kind: input, shape index: {}]
  %s9 = inlined_call_operand.vmem [shape: bf16[64,4], index: 9, kind: input, shape index: {}]
  %s10 = inlined_call_operand.vmem [shape: f32[1,4], index: 10, kind: input, shape index: {}]
  %s11 = inlined_call_operand.vmem [shape: f32[1024,4], index: 11, kind: output, shape index: {}]
  %s12 = sld [smem:[#allocation0]]
  $region77: #{tpu_custom_call.1} parent=0
    _
  %s14 = ssub.s32 1, %s12
  %s15 = scalar_select 0, %s14, %s12
  loop: start=0, step=1, limit=4
  $region2: #{tpu_custom_call.1} parent=0 // loop_pre_header
    _
  $region3: #{tpu_custom_call.1} parent=0 // loop_header
    %s17 = sphi 0, %s21
    %p18 = scmp.ge.s32.totalorder %s17, 4
    %s27 = sphi 0, %s29
    %s30 = sphi 0, %s27
    %s31 = sphi 0, %s30
    %s47 = sphi 0, %s31
    %s51 = sphi 0, %s51
    %s53 = sphi 0, %s51
    %s54 = sphi 0, %s53
    %s68 = sphi 0, %s54
    %s72 = sphi 0, %s72
    %s74 = sphi 0, %s72
    %s75 = sphi 0, %s74
    %s89 = sphi 0, %s75
    %s93 = sphi 0, %s93
    %s95 = sphi 0, %s93
    %s96 = sphi 0, %s95
    %s110 = sphi 0, %s96
    %s114 = sphi 0, %s114
    %s116 = sphi 0, %s114
    %s117 = sphi 0, %s116
    %s131 = sphi 0, %s117
    %s135 = sphi 0, %s135
    %s137 = sphi 0, %s135
    %s138 = sphi 0, %s137
    %s152 = sphi 0, %s138
    %s156 = sphi 0, %s156
    %s158 = sphi 0, %s156
    %s159 = sphi 0, %s158
    %s173 = sphi 0, %s159
    %s177 = sphi 0, %s177
    %s179 = sphi 0, %s177
    %s180 = sphi 0, %s179
    %s194 = sphi 0, %s180
    %s198 = sphi 0, %s198
    %s200 = sphi 0, %s198
    %s201 = sphi 0, %s200
    %s215 = sphi 0, %s201
    %s219 = sphi 0, %s219
    %s221 = sphi 0, %s219
    %s222 = sphi 0, %s221
    %s236 = sphi 0, %s222
    %s240 = sphi 0, %s240
    %s242 = sphi 0, %s240
    %s243 = sphi 0, %s242
    %s257 = sphi 0, %s243
    %s263 = sphi 0, %s265
    %s266 = sphi 0, %s263
    %s267 = sphi 0, %s266
    %s283 = sphi 0, %s267
  $region4: #{tpu_custom_call.1} parent=0 // loop_header_branch
    %20 = sbr.rel (%p18) target = $region8
  $region5: #{tpu_custom_call.1} parent=0 // loop_body
    %s22 = ssub.s32 %s17, 1
    %s23 = ssub.s32 %s17, 2
    %s24 = sadd.s32 %s17, 1
    %s25 = ssub.s32 %s17, %s24
    %p26 = scmp.eq.s32.totalorder %s25, 0
    %s28 = sadd.s32 %s27, 1
    %s29 = scalar_select %p26, %s27, %s28
    %p32 = pneg %p26
    %p33 = scmp.eq.s32.totalorder %s17, 1
    %p34 = por %p32, %p33
    %p35 = scmp.ne.s32.totalorder %s27, %s30
    %p36 = scmp.eq.s32.totalorder %s17, 0
    %p37 = por %p35, %p36
    %p38 = scmp.ne.s32.totalorder %s27, %s30
    %p39 = scmp.eq.s32.totalorder %s22, 1
    %p40 = por %p38, %p39
    %p41 = scmp.ne.s32.totalorder %s30, %s31
    %p42 = scmp.eq.s32.totalorder %s22, 0
    %p43 = por %p41, %p42
    %p44 = scmp.ne.s32.totalorder %s30, %s31
    %p45 = scmp.eq.s32.totalorder %s23, 1
    %p46 = por %p44, %p45
    %p48 = scmp.ne.s32.totalorder %s31, %s47
    %p49 = scmp.eq.s32.totalorder %s23, 0
    %p50 = por %p48, %p49
    %s52 = sadd.s32 %s51, 1
    %p55 = scmp.eq.s32.totalorder %s17, 1
    %p56 = scmp.ne.s32.totalorder %s51, %s53
    %p57 = scmp.eq.s32.totalorder %s17, 0
    %p58 = por %p56, %p57
    %p59 = scmp.ne.s32.totalorder %s51, %s53
    %p60 = scmp.eq.s32.totalorder %s22, 1
    %p61 = por %p59, %p60
    %p62 = scmp.ne.s32.totalorder %s53, %s54
    %p63 = scmp.eq.s32.totalorder %s22, 0
    %p64 = por %p62, %p63
    %p65 = scmp.ne.s32.totalorder %s53, %s54
    %p66 = scmp.eq.s32.totalorder %s23, 1
    %p67 = por %p65, %p66
    %p69 = scmp.ne.s32.totalorder %s54, %s68
    %p70 = scmp.eq.s32.totalorder %s23, 0
    %p71 = por %p69, %p70
    %s73 = sadd.s32 %s72, 1
    %p76 = scmp.eq.s32.totalorder %s17, 1
    %p77 = scmp.ne.s32.totalorder %s72, %s74
    %p78 = scmp.eq.s32.totalorder %s17, 0
    %p79 = por %p77, %p78
    %p80 = scmp.ne.s32.totalorder %s72, %s74
    %p81 = scmp.eq.s32.totalorder %s22, 1
    %p82 = por %p80, %p81
    %p83 = scmp.ne.s32.totalorder %s74, %s75
    %p84 = scmp.eq.s32.totalorder %s22, 0
    %p85 = por %p83, %p84
    %p86 = scmp.ne.s32.totalorder %s74, %s75
    %p87 = scmp.eq.s32.totalorder %s23, 1
    %p88 = por %p86, %p87
    %p90 = scmp.ne.s32.totalorder %s75, %s89
    %p91 = scmp.eq.s32.totalorder %s23, 0
    %p92 = por %p90, %p91
    %s94 = sadd.s32 %s93, 1
    %p97 = scmp.eq.s32.totalorder %s17, 1
    %p98 = scmp.ne.s32.totalorder %s93, %s95
    %p99 = scmp.eq.s32.totalorder %s17, 0
    %p100 = por %p98, %p99
    %p101 = scmp.ne.s32.totalorder %s93, %s95
    %p102 = scmp.eq.s32.totalorder %s22, 1
    %p103 = por %p101, %p102
    %p104 = scmp.ne.s32.totalorder %s95, %s96
    %p105 = scmp.eq.s32.totalorder %s22, 0
    %p106 = por %p104, %p105
    %p107 = scmp.ne.s32.totalorder %s95, %s96
    %p108 = scmp.eq.s32.totalorder %s23, 1
    %p109 = por %p107, %p108
    %p111 = scmp.ne.s32.totalorder %s96, %s110
    %p112 = scmp.eq.s32.totalorder %s23, 0
    %p113 = por %p111, %p112
    %s115 = sadd.s32 %s114, 1
    %p118 = scmp.eq.s32.totalorder %s17, 1
    %p119 = scmp.ne.s32.totalorder %s114, %s116
    %p120 = scmp.eq.s32.totalorder %s17, 0
    %p121 = por %p119, %p120
    %p122 = scmp.ne.s32.totalorder %s114, %s116
    %p123 = scmp.eq.s32.totalorder %s22, 1
    %p124 = por %p122, %p123
    %p125 = scmp.ne.s32.totalorder %s116, %s117
    %p126 = scmp.eq.s32.totalorder %s22, 0
    %p127 = por %p125, %p126
    %p128 = scmp.ne.s32.totalorder %s116, %s117
    %p129 = scmp.eq.s32.totalorder %s23, 1
    %p130 = por %p128, %p129
    %p132 = scmp.ne.s32.totalorder %s117, %s131
    %p133 = scmp.eq.s32.totalorder %s23, 0
    %p134 = por %p132, %p133
    %s136 = sadd.s32 %s135, 1
    %p139 = scmp.eq.s32.totalorder %s17, 1
    %p140 = scmp.ne.s32.totalorder %s135, %s137
    %p141 = scmp.eq.s32.totalorder %s17, 0
    %p142 = por %p140, %p141
    %p143 = scmp.ne.s32.totalorder %s135, %s137
    %p144 = scmp.eq.s32.totalorder %s22, 1
    %p145 = por %p143, %p144
    %p146 = scmp.ne.s32.totalorder %s137, %s138
    %p147 = scmp.eq.s32.totalorder %s22, 0
    %p148 = por %p146, %p147
    %p149 = scmp.ne.s32.totalorder %s137, %s138
    %p150 = scmp.eq.s32.totalorder %s23, 1
    %p151 = por %p149, %p150
    %p153 = scmp.ne.s32.totalorder %s138, %s152
    %p154 = scmp.eq.s32.totalorder %s23, 0
    %p155 = por %p153, %p154
    %s157 = sadd.s32 %s156, 1
    %p160 = scmp.eq.s32.totalorder %s17, 1
    %p161 = scmp.ne.s32.totalorder %s156, %s158
    %p162 = scmp.eq.s32.totalorder %s17, 0
    %p163 = por %p161, %p162
    %p164 = scmp.ne.s32.totalorder %s156, %s158
    %p165 = scmp.eq.s32.totalorder %s22, 1
    %p166 = por %p164, %p165
    %p167 = scmp.ne.s32.totalorder %s158, %s159
    %p168 = scmp.eq.s32.totalorder %s22, 0
    %p169 = por %p167, %p168
    %p170 = scmp.ne.s32.totalorder %s158, %s159
    %p171 = scmp.eq.s32.totalorder %s23, 1
    %p172 = por %p170, %p171
    %p174 = scmp.ne.s32.totalorder %s159, %s173
    %p175 = scmp.eq.s32.totalorder %s23, 0
    %p176 = por %p174, %p175
    %s178 = sadd.s32 %s177, 1
    %p181 = scmp.eq.s32.totalorder %s17, 1
    %p182 = scmp.ne.s32.totalorder %s177, %s179
    %p183 = scmp.eq.s32.totalorder %s17, 0
    %p184 = por %p182, %p183
    %p185 = scmp.ne.s32.totalorder %s177, %s179
    %p186 = scmp.eq.s32.totalorder %s22, 1
    %p187 = por %p185, %p186
    %p188 = scmp.ne.s32.totalorder %s179, %s180
    %p189 = scmp.eq.s32.totalorder %s22, 0
    %p190 = por %p188, %p189
    %p191 = scmp.ne.s32.totalorder %s179, %s180
    %p192 = scmp.eq.s32.totalorder %s23, 1
    %p193 = por %p191, %p192
    %p195 = scmp.ne.s32.totalorder %s180, %s194
    %p196 = scmp.eq.s32.totalorder %s23, 0
    %p197 = por %p195, %p196
    %s199 = sadd.s32 %s198, 1
    %p202 = scmp.eq.s32.totalorder %s17, 1
    %p203 = scmp.ne.s32.totalorder %s198, %s200
    %p204 = scmp.eq.s32.totalorder %s17, 0
    %p205 = por %p203, %p204
    %p206 = scmp.ne.s32.totalorder %s198, %s200
    %p207 = scmp.eq.s32.totalorder %s22, 1
    %p208 = por %p206, %p207
    %p209 = scmp.ne.s32.totalorder %s200, %s201
    %p210 = scmp.eq.s32.totalorder %s22, 0
    %p211 = por %p209, %p210
    %p212 = scmp.ne.s32.totalorder %s200, %s201
    %p213 = scmp.eq.s32.totalorder %s23, 1
    %p214 = por %p212, %p213
    %p216 = scmp.ne.s32.totalorder %s201, %s215
    %p217 = scmp.eq.s32.totalorder %s23, 0
    %p218 = por %p216, %p217
    %s220 = sadd.s32 %s219, 1
    %p223 = scmp.eq.s32.totalorder %s17, 1
    %p224 = scmp.ne.s32.totalorder %s219, %s221
    %p225 = scmp.eq.s32.totalorder %s17, 0
    %p226 = por %p224, %p225
    %p227 = scmp.ne.s32.totalorder %s219, %s221
    %p228 = scmp.eq.s32.totalorder %s22, 1
    %p229 = por %p227, %p228
    %p230 = scmp.ne.s32.totalorder %s221, %s222
    %p231 = scmp.eq.s32.totalorder %s22, 0
    %p232 = por %p230, %p231
    %p233 = scmp.ne.s32.totalorder %s221, %s222
    %p234 = scmp.eq.s32.totalorder %s23, 1
    %p235 = por %p233, %p234
    %p237 = scmp.ne.s32.totalorder %s222, %s236
    %p238 = scmp.eq.s32.totalorder %s23, 0
    %p239 = por %p237, %p238
    %s241 = sadd.s32 %s240, 1
    %p244 = scmp.eq.s32.totalorder %s17, 1
    %p245 = scmp.ne.s32.totalorder %s240, %s242
    %p246 = scmp.eq.s32.totalorder %s17, 0
    %p247 = por %p245, %p246
    %p248 = scmp.ne.s32.totalorder %s240, %s242
    %p249 = scmp.eq.s32.totalorder %s22, 1
    %p250 = por %p248, %p249
    %p251 = scmp.ne.s32.totalorder %s242, %s243
    %p252 = scmp.eq.s32.totalorder %s22, 0
    %p253 = por %p251, %p252
    %p254 = scmp.ne.s32.totalorder %s242, %s243
    %p255 = scmp.eq.s32.totalorder %s23, 1
    %p256 = por %p254, %p255
    %p258 = scmp.ne.s32.totalorder %s243, %s257
    %p259 = scmp.eq.s32.totalorder %s23, 0
    %p260 = por %p258, %p259
    %s261 = ssub.s32 %s17, %s24
    %p262 = scmp.eq.s32.totalorder %s261, 0
    %s264 = sadd.s32 %s263, 1
    %s265 = scalar_select %p262, %s263, %s264
    %p268 = pneg %p262
    %p269 = scmp.eq.s32.totalorder %s17, 1
    %p270 = por %p268, %p269
    %p271 = scmp.ne.s32.totalorder %s263, %s266
    %p272 = scmp.eq.s32.totalorder %s17, 0
    %p273 = por %p271, %p272
    %p274 = scmp.ne.s32.totalorder %s263, %s266
    %p275 = scmp.eq.s32.totalorder %s22, 1
    %p276 = por %p274, %p275
    %p277 = scmp.ne.s32.totalorder %s266, %s267
    %p278 = scmp.eq.s32.totalorder %s22, 0
    %p279 = por %p277, %p278
    %p280 = scmp.ne.s32.totalorder %s266, %s267
    %p281 = scmp.eq.s32.totalorder %s23, 1
    %p282 = por %p280, %p281
    %p284 = scmp.ne.s32.totalorder %s267, %s283
    %p285 = scmp.eq.s32.totalorder %s23, 0
    %p286 = por %p284, %p285
    %p287 = scmp.le.s32.totalorder 1, %s17
    %p288 = scmp.lt.s32.totalorder %s17, 3
    %p289 = pnand %p287, %p288
    %p290 = pneg %p289
    // Predicated region
    $region9: #{tpu_custom_call.1} parent=5 // pred_check
      _
    $region10: #{tpu_custom_call.1} parent=5 // pred_check_branch
      %292 = sbr.rel (%p289) target = $region12
    $region11: #{tpu_custom_call.1} parent=5 // pred_region
      %s293 = ssub.s32 %s17, 1
      // Predicated region
      $region13: #{tpu_custom_call.1} parent=11 // pred_check
        %p294 = pneg %p64
      $region14: #{tpu_custom_call.1} parent=11 // pred_check_branch
        %296 = sbr.rel (%p294) target = $region16
      $region15: #{tpu_custom_call.1} parent=11 // pred_region
        _
      $region16: #{tpu_custom_call.1} parent=11 // pred_fallthru
        _
      // Predicated region
      $region17: #{tpu_custom_call.1} parent=11 // pred_check
        %p297 = pneg %p85
      $region18: #{tpu_custom_call.1} parent=11 // pred_check_branch
        %299 = sbr.rel (%p297) target = $region20
      $region19: #{tpu_custom_call.1} parent=11 // pred_region
        _
      $region20: #{tpu_custom_call.1} parent=11 // pred_fallthru
        _
      // Predicated region
      $region21: #{tpu_custom_call.1} parent=11 // pred_check
        %p300 = pneg %p106
      $region22: #{tpu_custom_call.1} parent=11 // pred_check_branch
        %302 = sbr.rel (%p300) target = $region24
      $region23: #{tpu_custom_call.1} parent=11 // pred_region
        _
      $region24: #{tpu_custom_call.1} parent=11 // pred_fallthru
        _
      // Predicated region
      $region25: #{tpu_custom_call.1} parent=11 // pred_check
        %p303 = pneg %p127
      $region26: #{tpu_custom_call.1} parent=11 // pred_check_branch
        %305 = sbr.rel (%p303) target = $region28
      $region27: #{tpu_custom_call.1} parent=11 // pred_region
        _
      $region28: #{tpu_custom_call.1} parent=11 // pred_fallthru
        _
      // Predicated region
      $region29: #{tpu_custom_call.1} parent=11 // pred_check
        %p306 = pneg %p148
      $region30: #{tpu_custom_call.1} parent=11 // pred_check_branch
        %308 = sbr.rel (%p306) target = $region32
      $region31: #{tpu_custom_call.1} parent=11 // pred_region
        _
      $region32: #{tpu_custom_call.1} parent=11 // pred_fallthru
        _
      // Predicated region
      $region33: #{tpu_custom_call.1} parent=11 // pred_check
        %p309 = pneg %p169
      $region34: #{tpu_custom_call.1} parent=11 // pred_check_branch
        %311 = sbr.rel (%p309) target = $region36
      $region35: #{tpu_custom_call.1} parent=11 // pred_region
        _
      $region36: #{tpu_custom_call.1} parent=11 // pred_fallthru
        _
      // Predicated region
      $region37: #{tpu_custom_call.1} parent=11 // pred_check
        %p312 = pneg %p190
      $region38: #{tpu_custom_call.1} parent=11 // pred_check_branch
        %314 = sbr.rel (%p312) target = $region40
      $region39: #{tpu_custom_call.1} parent=11 // pred_region
        _
      $region40: #{tpu_custom_call.1} parent=11 // pred_fallthru
        _
      // Predicated region
      $region41: #{tpu_custom_call.1} parent=11 // pred_check
        %p315 = pneg %p211
      $region42: #{tpu_custom_call.1} parent=11 // pred_check_branch
        %317 = sbr.rel (%p315) target = $region44
      $region43: #{tpu_custom_call.1} parent=11 // pred_region
        _
      $region44: #{tpu_custom_call.1} parent=11 // pred_fallthru
        _
      // Predicated region
      $region45: #{tpu_custom_call.1} parent=11 // pred_check
        %p318 = pneg %p232
      $region46: #{tpu_custom_call.1} parent=11 // pred_check_branch
        %320 = sbr.rel (%p318) target = $region48
      $region47: #{tpu_custom_call.1} parent=11 // pred_region
        _
      $region48: #{tpu_custom_call.1} parent=11 // pred_fallthru
        _
      // Predicated region
      $region49: #{tpu_custom_call.1} parent=11 // pred_check
        %p321 = pneg %p253
      $region50: #{tpu_custom_call.1} parent=11 // pred_check_branch
        %323 = sbr.rel (%p321) target = $region52
      $region51: #{tpu_custom_call.1} parent=11 // pred_region
        _
      $region52: #{tpu_custom_call.1} parent=11 // pred_fallthru
        _
    $region12: #{tpu_custom_call.1} parent=5 // pred_fallthru
      _
    %p324 = scmp.lt.s32.totalorder %s17, 2
    // Predicated region
    $region53: #{tpu_custom_call.1} parent=5 // pred_check
      %p325 = pneg %p324
    $region54: #{tpu_custom_call.1} parent=5 // pred_check_branch
      %327 = sbr.rel (%p325) target = $region56
    $region55: #{tpu_custom_call.1} parent=5 // pred_region
      // Predicated region
      $region57: #{tpu_custom_call.1} parent=55 // pred_check
        %p328 = pneg %p37
      $region58: #{tpu_custom_call.1} parent=55 // pred_check_branch
        %330 = sbr.rel (%p328) target = $region60
      $region59: #{tpu_custom_call.1} parent=55 // pred_region
        %s331 = smul.u32 64, %s17
        %p332 = scmp.lt.s32.totalorder %s331, 127
        %s333 = scalar_select %p332, %s331, 127
        %s334 = smul.addr %s333, 4
        %s335 = scalar_lea.vmem %s0, %s334
        %s336 = smul.u32 64, %s17
      $region60: #{tpu_custom_call.1} parent=55 // pred_fallthru
        _
    $region56: #{tpu_custom_call.1} parent=5 // pred_fallthru
      _
    %p337 = scmp.le.s32.totalorder 1, %s17
    %p338 = scmp.lt.s32.totalorder %s17, 3
    %p339 = pnand %p337, %p338
    %p340 = pneg %p339
    // Predicated region
    $region61: #{tpu_custom_call.1} parent=5 // pred_check
      _
    $region62: #{tpu_custom_call.1} parent=5 // pred_check_branch
      %342 = sbr.rel (%p339) target = $region64
    $region63: #{tpu_custom_call.1} parent=5 // pred_region
      %s343 = ssub.s32 %s17, 1
      %s344 = smul.u32 64, %s22
      %p345 = scmp.lt.s32.totalorder %s344, 127
      %s346 = scalar_select %p345, %s344, 127
      %s347 = smul.addr %s346, 4
      %s348 = scalar_lea.vmem %s0, %s347
      %p349 = pneg %p43
      %p350 = pneg %p40
      %p351 = pneg %p64
      %p352 = pneg %p61
      %p353 = pneg %p85
      %p354 = pneg %p82
      %p355 = pneg %p106
      %p356 = pneg %p103
      %p357 = pneg %p127
      %p358 = pneg %p124
      %p359 = pneg %p148
      %p360 = pneg %p145
      %p361 = pneg %p169
      %p362 = pneg %p166
      %p363 = pneg %p190
      %p364 = pneg %p187
      %p365 = pneg %p211
      %p366 = pneg %p208
      %p367 = pneg %p232
      %p368 = pneg %p229
      %p369 = pneg %p253
      %p370 = pneg %p250
      %p371 = pneg %p279
      %p372 = pneg %p276
      %s373 = smul.u32 64, %s22
      %p374 = scmp.lt.s32.totalorder %s373, 127
      %s375 = scalar_select %p374, %s373, 127
      %s376 = smul.addr %s375, 8
      %s377 = scalar_lea.vmem %s11, %s376
      %s378 = smul.u32 64, %s22
      %p379 = scmp.lt.s32.totalorder %s378, 127
      %s380 = scalar_select %p379, %s378, 127
      %s381 = smul.addr %s380, 4
      %s382 = scalar_lea.vmem %s0, %s381
      %s383 = smul.u32 64, %s22
      %s384 = smul.u32 64, %s22
      %p385 = scmp.lt.s32.totalorder %s384, 127
      %s386 = scalar_select %p385, %s384, 127
      %s387 = smul.addr %s386, 8
      %s388 = scalar_lea.vmem %s11, %s387
      %s389 = smul.u32 64, %s22
      %v391 = vld [vmem:[%s382] sm:$0xf]
      %v392 = vld [vmem:[%s382 + $0x4] sm:$0xf]
      %v393 = vld [vmem:[%s382 + $0x8] sm:$0xf]
      %v394 = vld [vmem:[%s382 + $0xc] sm:$0xf]
      %v395 = vld [vmem:[%s382 + $0x10] sm:$0xf]
      %v396 = vld [vmem:[%s382 + $0x14] sm:$0xf]
      %v397 = vld [vmem:[%s382 + $0x18] sm:$0xf]
      %v398 = vld [vmem:[%s382 + $0x1c] sm:$0xf]
      %v399 = vld [vmem:[%s382 + $0x20] sm:$0xf]
      %v400 = vld [vmem:[%s382 + $0x24] sm:$0xf]
      %v401 = vld [vmem:[%s382 + $0x28] sm:$0xf]
      %v402 = vld [vmem:[%s382 + $0x2c] sm:$0xf]
      %v403 = vld [vmem:[%s382 + $0x30] sm:$0xf]
      %v404 = vld [vmem:[%s382 + $0x34] sm:$0xf]
      %v405 = vld [vmem:[%s382 + $0x38] sm:$0xf]
      %v406 = vld [vmem:[%s382 + $0x3c] sm:$0xf]
      %v407 = vld [vmem:[%s382 + $0x40] sm:$0xf]
      %v408 = vld [vmem:[%s382 + $0x44] sm:$0xf]
      %v409 = vld [vmem:[%s382 + $0x48] sm:$0xf]
      %v410 = vld [vmem:[%s382 + $0x4c] sm:$0xf]
      %v411 = vld [vmem:[%s382 + $0x50] sm:$0xf]
      %v412 = vld [vmem:[%s382 + $0x54] sm:$0xf]
      %v413 = vld [vmem:[%s382 + $0x58] sm:$0xf]
      %v414 = vld [vmem:[%s382 + $0x5c] sm:$0xf]
      %v415 = vld [vmem:[%s382 + $0x60] sm:$0xf]
      %v416 = vld [vmem:[%s382 + $0x64] sm:$0xf]
      %v417 = vld [vmem:[%s382 + $0x68] sm:$0xf]
      %v418 = vld [vmem:[%s382 + $0x6c] sm:$0xf]
      %v419 = vld [vmem:[%s382 + $0x70] sm:$0xf]
      %v420 = vld [vmem:[%s382 + $0x74] sm:$0xf]
      %v421 = vld [vmem:[%s382 + $0x78] sm:$0xf]
      %v422 = vld [vmem:[%s382 + $0x7c] sm:$0xf]
      %v423 = vld [vmem:[%s382 + $0x80] sm:$0xf]
      %v424 = vld [vmem:[%s382 + $0x84] sm:$0xf]
      %v425 = vld [vmem:[%s382 + $0x88] sm:$0xf]
      %v426 = vld [vmem:[%s382 + $0x8c] sm:$0xf]
      %v427 = vld [vmem:[%s382 + $0x90] sm:$0xf]
      %v428 = vld [vmem:[%s382 + $0x94] sm:$0xf]
      %v429 = vld [vmem:[%s382 + $0x98] sm:$0xf]
      %v430 = vld [vmem:[%s382 + $0x9c] sm:$0xf]
      %v431 = vld [vmem:[%s382 + $0xa0] sm:$0xf]
      %v432 = vld [vmem:[%s382 + $0xa4] sm:$0xf]
      %v433 = vld [vmem:[%s382 + $0xa8] sm:$0xf]
      %v434 = vld [vmem:[%s382 + $0xac] sm:$0xf]
      %v435 = vld [vmem:[%s382 + $0xb0] sm:$0xf]
      %v436 = vld [vmem:[%s382 + $0xb4] sm:$0xf]
      %v437 = vld [vmem:[%s382 + $0xb8] sm:$0xf]
      %v438 = vld [vmem:[%s382 + $0xbc] sm:$0xf]
      %v439 = vld [vmem:[%s382 + $0xc0] sm:$0xf]
      %v440 = vld [vmem:[%s382 + $0xc4] sm:$0xf]
      %v441 = vld [vmem:[%s382 + $0xc8] sm:$0xf]
      %v442 = vld [vmem:[%s382 + $0xcc] sm:$0xf]
      %v443 = vld [vmem:[%s382 + $0xd0] sm:$0xf]
      %v444 = vld [vmem:[%s382 + $0xd4] sm:$0xf]
      %v445 = vld [vmem:[%s382 + $0xd8] sm:$0xf]
      %v446 = vld [vmem:[%s382 + $0xdc] sm:$0xf]
      %v447 = vld [vmem:[%s382 + $0xe0] sm:$0xf]
      %v448 = vld [vmem:[%s382 + $0xe4] sm:$0xf]
      %v449 = vld [vmem:[%s382 + $0xe8] sm:$0xf]
      %v450 = vld [vmem:[%s382 + $0xec] sm:$0xf]
      %v451 = vld [vmem:[%s382 + $0xf0] sm:$0xf]
      %v452 = vld [vmem:[%s382 + $0xf4] sm:$0xf]
      %v453 = vld [vmem:[%s382 + $0xf8] sm:$0xf]
      %v454 = vld [vmem:[%s382 + $0xfc] sm:$0xf]
      %v455 = vld [vmem:[%s1] sm:$0xff]
      %v456 = vld [vmem:[%s1 + $0x8] sm:$0xf]
      %v521 = vunpack.c.l.b16 %v391
      %v522 = vunpack.c.l.b16 %v392
      %v523 = vunpack.c.l.b16 %v393
      %v524 = vunpack.c.l.b16 %v394
      %v525 = vunpack.c.l.b16 %v395
      %v526 = vunpack.c.l.b16 %v396
      %v527 = vunpack.c.l.b16 %v397
      %v528 = vunpack.c.l.b16 %v398
      %v529 = vunpack.c.l.b16 %v399
      %v530 = vunpack.c.l.b16 %v400
      %v531 = vunpack.c.l.b16 %v401
      %v532 = vunpack.c.l.b16 %v402
      %v533 = vunpack.c.l.b16 %v403
      %v534 = vunpack.c.l.b16 %v404
      %v535 = vunpack.c.l.b16 %v405
      %v536 = vunpack.c.l.b16 %v406
      %v537 = vunpack.c.l.b16 %v407
      %v538 = vunpack.c.l.b16 %v408
      %v539 = vunpack.c.l.b16 %v409
      %v540 = vunpack.c.l.b16 %v410
      %v541 = vunpack.c.l.b16 %v411
      %v542 = vunpack.c.l.b16 %v412
      %v543 = vunpack.c.l.b16 %v413
      %v544 = vunpack.c.l.b16 %v414
      %v545 = vunpack.c.l.b16 %v415
      %v546 = vunpack.c.l.b16 %v416
      %v547 = vunpack.c.l.b16 %v417
      %v548 = vunpack.c.l.b16 %v418
      %v549 = vunpack.c.l.b16 %v419
      %v550 = vunpack.c.l.b16 %v420
      %v551 = vunpack.c.l.b16 %v421
      %v552 = vunpack.c.l.b16 %v422
      %v553 = vunpack.c.l.b16 %v423
      %v554 = vunpack.c.l.b16 %v424
      %v555 = vunpack.c.l.b16 %v425
      %v556 = vunpack.c.l.b16 %v426
      %v557 = vunpack.c.l.b16 %v427
      %v558 = vunpack.c.l.b16 %v428
      %v559 = vunpack.c.l.b16 %v429
      %v560 = vunpack.c.l.b16 %v430
      %v561 = vunpack.c.l.b16 %v431
      %v562 = vunpack.c.l.b16 %v432
      %v563 = vunpack.c.l.b16 %v433
      %v564 = vunpack.c.l.b16 %v434
      %v565 = vunpack.c.l.b16 %v435
      %v566 = vunpack.c.l.b16 %v436
      %v567 = vunpack.c.l.b16 %v437
      %v568 = vunpack.c.l.b16 %v438
      %v569 = vunpack.c.l.b16 %v439
      %v570 = vunpack.c.l.b16 %v440
      %v571 = vunpack.c.l.b16 %v441
      %v572 = vunpack.c.l.b16 %v442
      %v573 = vunpack.c.l.b16 %v443
      %v574 = vunpack.c.l.b16 %v444
      %v575 = vunpack.c.l.b16 %v445
      %v576 = vunpack.c.l.b16 %v446
      %v577 = vunpack.c.l.b16 %v447
      %v578 = vunpack.c.l.b16 %v448
      %v579 = vunpack.c.l.b16 %v449
      %v580 = vunpack.c.l.b16 %v450
      %v581 = vunpack.c.l.b16 %v451
      %v582 = vunpack.c.l.b16 %v452
      %v583 = vunpack.c.l.b16 %v453
      %v584 = vunpack.c.l.b16 %v454
      %v585 = vpack.c.b16 %v522, %v521
      %v586 = vpack.c.b16 %v524, %v523
      %v587 = vpack.c.b16 %v526, %v525
      %v588 = vpack.c.b16 %v528, %v527
      %v589 = vpack.c.b16 %v530, %v529
      %v590 = vpack.c.b16 %v532, %v531
      %v591 = vpack.c.b16 %v534, %v533
      %v592 = vpack.c.b16 %v536, %v535
      %v593 = vpack.c.b16 %v538, %v537
      %v594 = vpack.c.b16 %v540, %v539
      %v595 = vpack.c.b16 %v542, %v541
      %v596 = vpack.c.b16 %v544, %v543
      %v597 = vpack.c.b16 %v546, %v545
      %v598 = vpack.c.b16 %v548, %v547
      %v599 = vpack.c.b16 %v550, %v549
      %v600 = vpack.c.b16 %v552, %v551
      %v601 = vpack.c.b16 %v554, %v553
      %v602 = vpack.c.b16 %v556, %v555
      %v603 = vpack.c.b16 %v558, %v557
      %v604 = vpack.c.b16 %v560, %v559
      %v605 = vpack.c.b16 %v562, %v561
      %v606 = vpack.c.b16 %v564, %v563
      %v607 = vpack.c.b16 %v566, %v565
      %v608 = vpack.c.b16 %v568, %v567
      %v609 = vpack.c.b16 %v570, %v569
      %v610 = vpack.c.b16 %v572, %v571
      %v611 = vpack.c.b16 %v574, %v573
      %v612 = vpack.c.b16 %v576, %v575
      %v613 = vpack.c.b16 %v578, %v577
      %v614 = vpack.c.b16 %v580, %v579
      %v615 = vpack.c.b16 %v582, %v581
      %v616 = vpack.c.b16 %v584, %v583
      %v619 = vunpack.c.l.b16 %v455
      %v620 = vunpack.c.h.b16 %v455
      %v621 = vunpack.c.l.b16 %v456
      %v622 = vpack.c.b16 %v619, %v619
      %v623 = vpack.c.b16 %v620, %v620
      %v624 = vpack.c.b16 %v621, %v621
      %vm625 = vcmask 64512
      %v627 = vsel %vm625, %v585, 0
      %v630 = vsel %vm625, %v586, 0
      %v633 = vsel %vm625, %v587, 0
      %v636 = vsel %vm625, %v588, 0
      %v639 = vsel %vm625, %v589, 0
      %v642 = vsel %vm625, %v590, 0
      %v645 = vsel %vm625, %v591, 0
      %v648 = vsel %vm625, %v592, 0
      %v651 = vsel %vm625, %v593, 0
      %v654 = vsel %vm625, %v594, 0
      %v657 = vsel %vm625, %v595, 0
      %v660 = vsel %vm625, %v596, 0
      %v663 = vsel %vm625, %v597, 0
      %v666 = vsel %vm625, %v598, 0
      %v669 = vsel %vm625, %v599, 0
      %v672 = vsel %vm625, %v600, 0
      %v675 = vsel %vm625, %v601, 0
      %v678 = vsel %vm625, %v602, 0
      %v681 = vsel %vm625, %v603, 0
      %v684 = vsel %vm625, %v604, 0
      %v687 = vsel %vm625, %v605, 0
      %v690 = vsel %vm625, %v606, 0
      %v693 = vsel %vm625, %v607, 0
      %v696 = vsel %vm625, %v608, 0
      %v699 = vsel %vm625, %v609, 0
      %v702 = vsel %vm625, %v610, 0
      %v705 = vsel %vm625, %v611, 0
      %v708 = vsel %vm625, %v612, 0
      %v711 = vsel %vm625, %v613, 0
      %v714 = vsel %vm625, %v614, 0
      %v717 = vsel %vm625, %v615, 0
      %v720 = vsel %vm625, %v616, 0
      %vm722 = vcmask 1043456
      %v724 = vsel %vm722, %v622, 0
      %v727 = vsel %vm722, %v623, 0
      %v730 = vsel %vm722, %v624, 0
      %732 = vmatprep.subr.bf16.mxu0 0
      %733 = vmatpush1.bf16.msra.mxu0 0
      %734 = vmatprep.subr.bf16.mxu0 0
      %735 = vmatpush1.bf16.msra.mxu0 0
      %736 = vmatprep.subr.bf16.mxu0 0
      %737 = vmatpush1.bf16.msra.mxu0 0
      %738 = vmatprep.subr.bf16.mxu0 0
      %739 = vmatpush1.bf16.msra.mxu0 0
      %740 = vmatprep.subr.bf16.mxu0 0
      %741 = vmatpush1.bf16.msra.mxu0 0
      %742 = vmatprep.subr.bf16.mxu0 0
      %743 = vmatpush1.bf16.msra.mxu0 0
      %744 = vmatprep.subr.bf16.mxu0 0
      %745 = vmatpush1.bf16.msra.mxu0 0
      %746 = vmatprep.subr.bf16.mxu0 %v727
      %747 = vmatpush1.bf16.msra.mxu0 %v724
      %748 = vmatprep.subr.bf16.mxu0 0
      %749 = vmatpush2.bf16.msra.mxu0 0
      %750 = vmatprep.subr.bf16.mxu0 0
      %751 = vmatpush2.bf16.msra.mxu0 0
      %752 = vmatprep.subr.bf16.mxu0 0
      %753 = vmatpush2.bf16.msra.mxu0 0
      %754 = vmatprep.subr.bf16.mxu0 0
      %755 = vmatpush2.bf16.msra.mxu0 0
      %756 = vmatprep.subr.bf16.mxu0 0
      %757 = vmatpush2.bf16.msra.mxu0 0
      %758 = vmatprep.subr.bf16.mxu0 0
      %759 = vmatpush2.bf16.msra.mxu0 0
      %760 = vmatprep.subr.bf16.mxu0 0
      %761 = vmatpush2.bf16.msra.mxu0 0
      %762 = vmatprep.subr.bf16.mxu0 0
      %763 = vmatpush2.bf16.msra.mxu0 0
      %764 = vmatprep.mubr.bf16.mxu0 0
      %765 = vmatmul.mubr.bf16.gmra.mxu0 %v627
      %v766 = vpop.f32.mrf.mxu0
      %v767 = vadd.f32 0.0, %v766
      %v768 = vpop.f32.mrf.mxu0
      %v769 = vadd.f32 0.0, %v768
      %v770 = vpop.f32.mrf.mxu0
      %v771 = vadd.f32 0.0, %v770
      %v772 = vpop.f32.mrf.mxu0
      %v773 = vadd.f32 0.0, %v772
      %774 = vmatprep.mubr.bf16.mxu0 0
      %775 = vmatmul.mubr.bf16.gmra.mxu0 %v630
      %v776 = vpop.f32.mrf.mxu0
      %v777 = vadd.f32 0.0, %v776
      %v778 = vpop.f32.mrf.mxu0
      %v779 = vadd.f32 0.0, %v778
      %v780 = vpop.f32.mrf.mxu0
      %v781 = vadd.f32 0.0, %v780
      %v782 = vpop.f32.mrf.mxu0
      %v783 = vadd.f32 0.0, %v782
      %784 = vmatprep.mubr.bf16.mxu0 0
      %785 = vmatmul.mubr.bf16.gmra.mxu0 %v633
      %v786 = vpop.f32.mrf.mxu0
      %v787 = vadd.f32 0.0, %v786
      %v788 = vpop.f32.mrf.mxu0
      %v789 = vadd.f32 0.0, %v788
      %v790 = vpop.f32.mrf.mxu0
      %v791 = vadd.f32 0.0, %v790
      %v792 = vpop.f32.mrf.mxu0
      %v793 = vadd.f32 0.0, %v792
      %794 = vmatprep.mubr.bf16.mxu0 0
      %795 = vmatmul.mubr.bf16.gmra.mxu0 %v636
      %v796 = vpop.f32.mrf.mxu0
      %v797 = vadd.f32 0.0, %v796
      %v798 = vpop.f32.mrf.mxu0
      %v799 = vadd.f32 0.0, %v798
      %v800 = vpop.f32.mrf.mxu0
      %v801 = vadd.f32 0.0, %v800
      %v802 = vpop.f32.mrf.mxu0
      %v803 = vadd.f32 0.0, %v802
      %804 = vmatprep.mubr.bf16.mxu0 0
      %805 = vmatmul.mubr.bf16.gmra.mxu0 %v639
      %v806 = vpop.f32.mrf.mxu0
      %v807 = vadd.f32 0.0, %v806
      %v808 = vpop.f32.mrf.mxu0
      %v809 = vadd.f32 0.0, %v808
      %v810 = vpop.f32.mrf.mxu0
      %v811 = vadd.f32 0.0, %v810
      %v812 = vpop.f32.mrf.mxu0
      %v813 = vadd.f32 0.0, %v812
      %814 = vmatprep.mubr.bf16.mxu0 0
      %815 = vmatmul.mubr.bf16.gmra.mxu0 %v642
      %v816 = vpop.f32.mrf.mxu0
      %v817 = vadd.f32 0.0, %v816
      %v818 = vpop.f32.mrf.mxu0
      %v819 = vadd.f32 0.0, %v818
      %v820 = vpop.f32.mrf.mxu0
      %v821 = vadd.f32 0.0, %v820
      %v822 = vpop.f32.mrf.mxu0
      %v823 = vadd.f32 0.0, %v822
      %824 = vmatprep.mubr.bf16.mxu0 0
      %825 = vmatmul.mubr.bf16.gmra.mxu0 %v645
      %v826 = vpop.f32.mrf.mxu0
      %v827 = vadd.f32 0.0, %v826
      %v828 = vpop.f32.mrf.mxu0
      %v829 = vadd.f32 0.0, %v828
      %v830 = vpop.f32.mrf.mxu0
      %v831 = vadd.f32 0.0, %v830
      %v832 = vpop.f32.mrf.mxu0
      %v833 = vadd.f32 0.0, %v832
      %834 = vmatprep.mubr.bf16.mxu0 0
      %835 = vmatmul.mubr.bf16.gmra.mxu0 %v648
      %v836 = vpop.f32.mrf.mxu0
      %v837 = vadd.f32 0.0, %v836
      %v838 = vpop.f32.mrf.mxu0
      %v839 = vadd.f32 0.0, %v838
      %v840 = vpop.f32.mrf.mxu0
      %v841 = vadd.f32 0.0, %v840
      %v842 = vpop.f32.mrf.mxu0
      %v843 = vadd.f32 0.0, %v842
      %844 = vmatprep.mubr.bf16.mxu0 0
      %845 = vmatmul.mubr.bf16.gmra.mxu0 %v651
      %v846 = vpop.f32.mrf.mxu0
      %v847 = vadd.f32 0.0, %v846
      %v848 = vpop.f32.mrf.mxu0
      %v849 = vadd.f32 0.0, %v848
      %v850 = vpop.f32.mrf.mxu0
      %v851 = vadd.f32 0.0, %v850
      %v852 = vpop.f32.mrf.mxu0
      %v853 = vadd.f32 0.0, %v852
      %854 = vmatprep.mubr.bf16.mxu0 0
      %855 = vmatmul.mubr.bf16.gmra.mxu0 %v654
      %v856 = vpop.f32.mrf.mxu0
      %v857 = vadd.f32 0.0, %v856
      %v858 = vpop.f32.mrf.mxu0
      %v859 = vadd.f32 0.0, %v858
      %v860 = vpop.f32.mrf.mxu0
      %v861 = vadd.f32 0.0, %v860
      %v862 = vpop.f32.mrf.mxu0
      %v863 = vadd.f32 0.0, %v862
      %864 = vmatprep.mubr.bf16.mxu0 0
      %865 = vmatmul.mubr.bf16.gmra.mxu0 %v657
      %v866 = vpop.f32.mrf.mxu0
      %v867 = vadd.f32 0.0, %v866
      %v868 = vpop.f32.mrf.mxu0
      %v869 = vadd.f32 0.0, %v868
      %v870 = vpop.f32.mrf.mxu0
      %v871 = vadd.f32 0.0, %v870
      %v872 = vpop.f32.mrf.mxu0
      %v873 = vadd.f32 0.0, %v872
      %874 = vmatprep.mubr.bf16.mxu0 0
      %875 = vmatmul.mubr.bf16.gmra.mxu0 %v660
      %v876 = vpop.f32.mrf.mxu0
      %v877 = vadd.f32 0.0, %v876
      %v878 = vpop.f32.mrf.mxu0
      %v879 = vadd.f32 0.0, %v878
      %v880 = vpop.f32.mrf.mxu0
      %v881 = vadd.f32 0.0, %v880
      %v882 = vpop.f32.mrf.mxu0
      %v883 = vadd.f32 0.0, %v882
      %884 = vmatprep.mubr.bf16.mxu0 0
      %885 = vmatmul.mubr.bf16.gmra.mxu0 %v663
      %v886 = vpop.f32.mrf.mxu0
      %v887 = vadd.f32 0.0, %v886
      %v888 = vpop.f32.mrf.mxu0
      %v889 = vadd.f32 0.0, %v888
      %v890 = vpop.f32.mrf.mxu0
      %v891 = vadd.f32 0.0, %v890
      %v892 = vpop.f32.mrf.mxu0
      %v893 = vadd.f32 0.0, %v892
      %894 = vmatprep.mubr.bf16.mxu0 0
      %895 = vmatmul.mubr.bf16.gmra.mxu0 %v666
      %v896 = vpop.f32.mrf.mxu0
      %v897 = vadd.f32 0.0, %v896
      %v898 = vpop.f32.mrf.mxu0
      %v899 = vadd.f32 0.0, %v898
      %v900 = vpop.f32.mrf.mxu0
      %v901 = vadd.f32 0.0, %v900
      %v902 = vpop.f32.mrf.mxu0
      %v903 = vadd.f32 0.0, %v902
      %904 = vmatprep.mubr.bf16.mxu0 0
      %905 = vmatmul.mubr.bf16.gmra.mxu0 %v669
      %v906 = vpop.f32.mrf.mxu0
      %v907 = vadd.f32 0.0, %v906
      %v908 = vpop.f32.mrf.mxu0
      %v909 = vadd.f32 0.0, %v908
      %v910 = vpop.f32.mrf.mxu0
      %v911 = vadd.f32 0.0, %v910
      %v912 = vpop.f32.mrf.mxu0
      %v913 = vadd.f32 0.0, %v912
      %914 = vmatprep.mubr.bf16.mxu0 0
      %915 = vmatmul.mubr.bf16.gmra.mxu0 %v672
      %v916 = vpop.f32.mrf.mxu0
      %v917 = vadd.f32 0.0, %v916
      %v918 = vpop.f32.mrf.mxu0
      %v919 = vadd.f32 0.0, %v918
      %v920 = vpop.f32.mrf.mxu0
      %v921 = vadd.f32 0.0, %v920
      %v922 = vpop.f32.mrf.mxu0
      %v923 = vadd.f32 0.0, %v922
      %924 = vmatprep.mubr.bf16.mxu0 0
      %925 = vmatmul.mubr.bf16.gmra.mxu0 %v675
      %v926 = vpop.f32.mrf.mxu0
      %v927 = vadd.f32 0.0, %v926
      %v928 = vpop.f32.mrf.mxu0
      %v929 = vadd.f32 0.0, %v928
      %v930 = vpop.f32.mrf.mxu0
      %v931 = vadd.f32 0.0, %v930
      %v932 = vpop.f32.mrf.mxu0
      %v933 = vadd.f32 0.0, %v932
      %934 = vmatprep.mubr.bf16.mxu0 0
      %935 = vmatmul.mubr.bf16.gmra.mxu0 %v678
      %v936 = vpop.f32.mrf.mxu0
      %v937 = vadd.f32 0.0, %v936
      %v938 = vpop.f32.mrf.mxu0
      %v939 = vadd.f32 0.0, %v938
      %v940 = vpop.f32.mrf.mxu0
      %v941 = vadd.f32 0.0, %v940
      %v942 = vpop.f32.mrf.mxu0
      %v943 = vadd.f32 0.0, %v942
      %944 = vmatprep.mubr.bf16.mxu0 0
      %945 = vmatmul.mubr.bf16.gmra.mxu0 %v681
      %v946 = vpop.f32.mrf.mxu0
      %v947 = vadd.f32 0.0, %v946
      %v948 = vpop.f32.mrf.mxu0
      %v949 = vadd.f32 0.0, %v948
      %v950 = vpop.f32.mrf.mxu0
      %v951 = vadd.f32 0.0, %v950
      %v952 = vpop.f32.mrf.mxu0
      %v953 = vadd.f32 0.0, %v952
      %954 = vmatprep.mubr.bf16.mxu0 0
      %955 = vmatmul.mubr.bf16.gmra.mxu0 %v684
      %v956 = vpop.f32.mrf.mxu0
      %v957 = vadd.f32 0.0, %v956
      %v958 = vpop.f32.mrf.mxu0
      %v959 = vadd.f32 0.0, %v958
      %v960 = vpop.f32.mrf.mxu0
      %v961 = vadd.f32 0.0, %v960
      %v962 = vpop.f32.mrf.mxu0
      %v963 = vadd.f32 0.0, %v962
      %964 = vmatprep.mubr.bf16.mxu0 0
      %965 = vmatmul.mubr.bf16.gmra.mxu0 %v687
      %v966 = vpop.f32.mrf.mxu0
      %v967 = vadd.f32 0.0, %v966
      %v968 = vpop.f32.mrf.mxu0
      %v969 = vadd.f32 0.0, %v968
      %v970 = vpop.f32.mrf.mxu0
      %v971 = vadd.f32 0.0, %v970
      %v972 = vpop.f32.mrf.mxu0
      %v973 = vadd.f32 0.0, %v972
      %974 = vmatprep.mubr.bf16.mxu0 0
      %975 = vmatmul.mubr.bf16.gmra.mxu0 %v690
      %v976 = vpop.f32.mrf.mxu0
      %v977 = vadd.f32 0.0, %v976
      %v978 = vpop.f32.mrf.mxu0
      %v979 = vadd.f32 0.0, %v978
      %v980 = vpop.f32.mrf.mxu0
      %v981 = vadd.f32 0.0, %v980
      %v982 = vpop.f32.mrf.mxu0
      %v983 = vadd.f32 0.0, %v982
      %984 = vmatprep.mubr.bf16.mxu0 0
      %985 = vmatmul.mubr.bf16.gmra.mxu0 %v693
      %v986 = vpop.f32.mrf.mxu0
      %v987 = vadd.f32 0.0, %v986
      %v988 = vpop.f32.mrf.mxu0
      %v989 = vadd.f32 0.0, %v988
      %v990 = vpop.f32.mrf.mxu0
      %v991 = vadd.f32 0.0, %v990
      %v992 = vpop.f32.mrf.mxu0
      %v993 = vadd.f32 0.0, %v992
      %994 = vmatprep.mubr.bf16.mxu0 0
      %995 = vmatmul.mubr.bf16.gmra.mxu0 %v696
      %v996 = vpop.f32.mrf.mxu0
      %v997 = vadd.f32 0.0, %v996
      %v998 = vpop.f32.mrf.mxu0
      %v999 = vadd.f32 0.0, %v998
      %v1000 = vpop.f32.mrf.mxu0
      %v1001 = vadd.f32 0.0, %v1000
      %v1002 = vpop.f32.mrf.mxu0
      %v1003 = vadd.f32 0.0, %v1002
      %1004 = vmatprep.mubr.bf16.mxu0 0
      %1005 = vmatmul.mubr.bf16.gmra.mxu0 %v699
      %v1006 = vpop.f32.mrf.mxu0
      %v1007 = vadd.f32 0.0, %v1006
      %v1008 = vpop.f32.mrf.mxu0
      %v1009 = vadd.f32 0.0, %v1008
      %v1010 = vpop.f32.mrf.mxu0
      %v1011 = vadd.f32 0.0, %v1010
      %v1012 = vpop.f32.mrf.mxu0
      %v1013 = vadd.f32 0.0, %v1012
      %1014 = vmatprep.mubr.bf16.mxu0 0
      %1015 = vmatmul.mubr.bf16.gmra.mxu0 %v702
      %v1016 = vpop.f32.mrf.mxu0
      %v1017 = vadd.f32 0.0, %v1016
      %v1018 = vpop.f32.mrf.mxu0
      %v1019 = vadd.f32 0.0, %v1018
      %v1020 = vpop.f32.mrf.mxu0
      %v1021 = vadd.f32 0.0, %v1020
      %v1022 = vpop.f32.mrf.mxu0
      %v1023 = vadd.f32 0.0, %v1022
      %1024 = vmatprep.mubr.bf16.mxu0 0
      %1025 = vmatmul.mubr.bf16.gmra.mxu0 %v705
      %v1026 = vpop.f32.mrf.mxu0
      %v1027 = vadd.f32 0.0, %v1026
      %v1028 = vpop.f32.mrf.mxu0
      %v1029 = vadd.f32 0.0, %v1028
      %v1030 = vpop.f32.mrf.mxu0
      %v1031 = vadd.f32 0.0, %v1030
      %v1032 = vpop.f32.mrf.mxu0
      %v1033 = vadd.f32 0.0, %v1032
      %1034 = vmatprep.mubr.bf16.mxu0 0
      %1035 = vmatmul.mubr.bf16.gmra.mxu0 %v708
      %v1036 = vpop.f32.mrf.mxu0
      %v1037 = vadd.f32 0.0, %v1036
      %v1038 = vpop.f32.mrf.mxu0
      %v1039 = vadd.f32 0.0, %v1038
      %v1040 = vpop.f32.mrf.mxu0
      %v1041 = vadd.f32 0.0, %v1040
      %v1042 = vpop.f32.mrf.mxu0
      %v1043 = vadd.f32 0.0, %v1042
      %1044 = vmatprep.mubr.bf16.mxu0 0
      %1045 = vmatmul.mubr.bf16.gmra.mxu0 %v711
      %v1046 = vpop.f32.mrf.mxu0
      %v1047 = vadd.f32 0.0, %v1046
      %v1048 = vpop.f32.mrf.mxu0
      %v1049 = vadd.f32 0.0, %v1048
      %v1050 = vpop.f32.mrf.mxu0
      %v1051 = vadd.f32 0.0, %v1050
      %v1052 = vpop.f32.mrf.mxu0
      %v1053 = vadd.f32 0.0, %v1052
      %1054 = vmatprep.mubr.bf16.mxu0 0
      %1055 = vmatmul.mubr.bf16.gmra.mxu0 %v714
      %v1056 = vpop.f32.mrf.mxu0
      %v1057 = vadd.f32 0.0, %v1056
      %v1058 = vpop.f32.mrf.mxu0
      %v1059 = vadd.f32 0.0, %v1058
      %v1060 = vpop.f32.mrf.mxu0
      %v1061 = vadd.f32 0.0, %v1060
      %v1062 = vpop.f32.mrf.mxu0
      %v1063 = vadd.f32 0.0, %v1062
      %1064 = vmatprep.mubr.bf16.mxu0 0
      %1065 = vmatmul.mubr.bf16.gmra.mxu0 %v717
      %v1066 = vpop.f32.mrf.mxu0
      %v1067 = vadd.f32 0.0, %v1066
      %v1068 = vpop.f32.mrf.mxu0
      %v1069 = vadd.f32 0.0, %v1068
      %v1070 = vpop.f32.mrf.mxu0
      %v1071 = vadd.f32 0.0, %v1070
      %v1072 = vpop.f32.mrf.mxu0
      %v1073 = vadd.f32 0.0, %v1072
      %1074 = vmatprep.mubr.bf16.mxu0 0
      %1075 = vmatmul.mubr.bf16.gmra.mxu0 %v720
      %v1076 = vpop.f32.mrf.mxu0
      %v1077 = vadd.f32 0.0, %v1076
      %v1078 = vpop.f32.mrf.mxu0
      %v1079 = vadd.f32 0.0, %v1078
      %v1080 = vpop.f32.mrf.mxu0
      %v1081 = vadd.f32 0.0, %v1080
      %v1082 = vpop.f32.mrf.mxu0
      %v1083 = vadd.f32 0.0, %v1082
      %1084 = vdwg.mxu0
      %1085 = vmatprep.subr.bf16.mxu0 0
      %1086 = vmatpush1.bf16.msra.mxu0 0
      %1087 = vmatprep.subr.bf16.mxu0 0
      %1088 = vmatpush1.bf16.msra.mxu0 0
      %1089 = vmatprep.subr.bf16.mxu0 0
      %1090 = vmatpush1.bf16.msra.mxu0 0
      %1091 = vmatprep.subr.bf16.mxu0 0
      %1092 = vmatpush1.bf16.msra.mxu0 0
      %1093 = vmatprep.subr.bf16.mxu0 0
      %1094 = vmatpush1.bf16.msra.mxu0 0
      %1095 = vmatprep.subr.bf16.mxu0 0
      %1096 = vmatpush1.bf16.msra.mxu0 0
      %1097 = vmatprep.subr.bf16.mxu0 0
      %1098 = vmatpush1.bf16.msra.mxu0 0
      %1099 = vmatprep.subr.bf16.mxu0 0
      %1100 = vmatpush1.bf16.msra.mxu0 %v730
      %1101 = vmatprep.subr.bf16.mxu0 0
      %1102 = vmatpush2.bf16.msra.mxu0 0
      %1103 = vmatprep.subr.bf16.mxu0 0
      %1104 = vmatpush2.bf16.msra.mxu0 0
      %1105 = vmatprep.subr.bf16.mxu0 0
      %1106 = vmatpush2.bf16.msra.mxu0 0
      %1107 = vmatprep.subr.bf16.mxu0 0
      %1108 = vmatpush2.bf16.msra.mxu0 0
      %1109 = vmatprep.subr.bf16.mxu0 0
      %1110 = vmatpush2.bf16.msra.mxu0 0
      %1111 = vmatprep.subr.bf16.mxu0 0
      %1112 = vmatpush2.bf16.msra.mxu0 0
      %1113 = vmatprep.subr.bf16.mxu0 0
      %1114 = vmatpush2.bf16.msra.mxu0 0
      %1115 = vmatprep.subr.bf16.mxu0 0
      %1116 = vmatpush2.bf16.msra.mxu0 0
      %1117 = vmatprep.mubr.bf16.mxu0 0
      %1118 = vmatmul.mubr.bf16.gmra.mxu0 %v627
      %v1119 = vpop.f32.mrf.mxu0
      %v1120 = vadd.f32 0.0, %v1119
      %v1121 = vpop.f32.mrf.mxu0
      %v1122 = vpop.f32.mrf.mxu0
      %v1123 = vadd.f32 0.0, %v1122
      %v1124 = vpop.f32.mrf.mxu0
      %1125 = vmatprep.mubr.bf16.mxu0 0
      %1126 = vmatmul.mubr.bf16.gmra.mxu0 %v630
      %v1127 = vpop.f32.mrf.mxu0
      %v1128 = vadd.f32 0.0, %v1127
      %v1129 = vpop.f32.mrf.mxu0
      %v1130 = vpop.f32.mrf.mxu0
      %v1131 = vadd.f32 0.0, %v1130
      %v1132 = vpop.f32.mrf.mxu0
      %1133 = vmatprep.mubr.bf16.mxu0 0
      %1134 = vmatmul.mubr.bf16.gmra.mxu0 %v633
      %v1135 = vpop.f32.mrf.mxu0
      %v1136 = vadd.f32 0.0, %v1135
      %v1137 = vpop.f32.mrf.mxu0
      %v1138 = vpop.f32.mrf.mxu0
      %v1139 = vadd.f32 0.0, %v1138
      %v1140 = vpop.f32.mrf.mxu0
      %1141 = vmatprep.mubr.bf16.mxu0 0
      %1142 = vmatmul.mubr.bf16.gmra.mxu0 %v636
      %v1143 = vpop.f32.mrf.mxu0
      %v1144 = vadd.f32 0.0, %v1143
      %v1145 = vpop.f32.mrf.mxu0
      %v1146 = vpop.f32.mrf.mxu0
      %v1147 = vadd.f32 0.0, %v1146
      %v1148 = vpop.f32.mrf.mxu0
      %1149 = vmatprep.mubr.bf16.mxu0 0
      %1150 = vmatmul.mubr.bf16.gmra.mxu0 %v639
      %v1151 = vpop.f32.mrf.mxu0
      %v1152 = vadd.f32 0.0, %v1151
      %v1153 = vpop.f32.mrf.mxu0
      %v1154 = vpop.f32.mrf.mxu0
      %v1155 = vadd.f32 0.0, %v1154
      %v1156 = vpop.f32.mrf.mxu0
      %1157 = vmatprep.mubr.bf16.mxu0 0
      %1158 = vmatmul.mubr.bf16.gmra.mxu0 %v642
      %v1159 = vpop.f32.mrf.mxu0
      %v1160 = vadd.f32 0.0, %v1159
      %v1161 = vpop.f32.mrf.mxu0
      %v1162 = vpop.f32.mrf.mxu0
      %v1163 = vadd.f32 0.0, %v1162
      %v1164 = vpop.f32.mrf.mxu0
      %1165 = vmatprep.mubr.bf16.mxu0 0
      %1166 = vmatmul.mubr.bf16.gmra.mxu0 %v645
      %v1167 = vpop.f32.mrf.mxu0
      %v1168 = vadd.f32 0.0, %v1167
      %v1169 = vpop.f32.mrf.mxu0
      %v1170 = vpop.f32.mrf.mxu0
      %v1171 = vadd.f32 0.0, %v1170
      %v1172 = vpop.f32.mrf.mxu0
      %1173 = vmatprep.mubr.bf16.mxu0 0
      %1174 = vmatmul.mubr.bf16.gmra.mxu0 %v648
      %v1175 = vpop.f32.mrf.mxu0
      %v1176 = vadd.f32 0.0, %v1175
      %v1177 = vpop.f32.mrf.mxu0
      %v1178 = vpop.f32.mrf.mxu0
      %v1179 = vadd.f32 0.0, %v1178
      %v1180 = vpop.f32.mrf.mxu0
      %1181 = vmatprep.mubr.bf16.mxu0 0
      %1182 = vmatmul.mubr.bf16.gmra.mxu0 %v651
      %v1183 = vpop.f32.mrf.mxu0
      %v1184 = vadd.f32 0.0, %v1183
      %v1185 = vpop.f32.mrf.mxu0
      %v1186 = vpop.f32.mrf.mxu0
      %v1187 = vadd.f32 0.0, %v1186
      %v1188 = vpop.f32.mrf.mxu0
      %1189 = vmatprep.mubr.bf16.mxu0 0
      %1190 = vmatmul.mubr.bf16.gmra.mxu0 %v654
      %v1191 = vpop.f32.mrf.mxu0
      %v1192 = vadd.f32 0.0, %v1191
      %v1193 = vpop.f32.mrf.mxu0
      %v1194 = vpop.f32.mrf.mxu0
      %v1195 = vadd.f32 0.0, %v1194
      %v1196 = vpop.f32.mrf.mxu0
      %1197 = vmatprep.mubr.bf16.mxu0 0
      %1198 = vmatmul.mubr.bf16.gmra.mxu0 %v657
      %v1199 = vpop.f32.mrf.mxu0
      %v1200 = vadd.f32 0.0, %v1199
      %v1201 = vpop.f32.mrf.mxu0
      %v1202 = vpop.f32.mrf.mxu0
      %v1203 = vadd.f32 0.0, %v1202
      %v1204 = vpop.f32.mrf.mxu0
      %1205 = vmatprep.mubr.bf16.mxu0 0
      %1206 = vmatmul.mubr.bf16.gmra.mxu0 %v660
      %v1207 = vpop.f32.mrf.mxu0
      %v1208 = vadd.f32 0.0, %v1207
      %v1209 = vpop.f32.mrf.mxu0
      %v1210 = vpop.f32.mrf.mxu0
      %v1211 = vadd.f32 0.0, %v1210
      %v1212 = vpop.f32.mrf.mxu0
      %1213 = vmatprep.mubr.bf16.mxu0 0
      %1214 = vmatmul.mubr.bf16.gmra.mxu0 %v663
      %v1215 = vpop.f32.mrf.mxu0
      %v1216 = vadd.f32 0.0, %v1215
      %v1217 = vpop.f32.mrf.mxu0
      %v1218 = vpop.f32.mrf.mxu0
      %v1219 = vadd.f32 0.0, %v1218
      %v1220 = vpop.f32.mrf.mxu0
      %1221 = vmatprep.mubr.bf16.mxu0 0
      %1222 = vmatmul.mubr.bf16.gmra.mxu0 %v666
      %v1223 = vpop.f32.mrf.mxu0
      %v1224 = vadd.f32 0.0, %v1223
      %v1225 = vpop.f32.mrf.mxu0
      %v1226 = vpop.f32.mrf.mxu0
      %v1227 = vadd.f32 0.0, %v1226
      %v1228 = vpop.f32.mrf.mxu0
      %1229 = vmatprep.mubr.bf16.mxu0 0
      %1230 = vmatmul.mubr.bf16.gmra.mxu0 %v669
      %v1231 = vpop.f32.mrf.mxu0
      %v1232 = vadd.f32 0.0, %v1231
      %v1233 = vpop.f32.mrf.mxu0
      %v1234 = vpop.f32.mrf.mxu0
      %v1235 = vadd.f32 0.0, %v1234
      %v1236 = vpop.f32.mrf.mxu0
      %1237 = vmatprep.mubr.bf16.mxu0 0
      %1238 = vmatmul.mubr.bf16.gmra.mxu0 %v672
      %v1239 = vpop.f32.mrf.mxu0
      %v1240 = vadd.f32 0.0, %v1239
      %v1241 = vpop.f32.mrf.mxu0
      %v1242 = vpop.f32.mrf.mxu0
      %v1243 = vadd.f32 0.0, %v1242
      %v1244 = vpop.f32.mrf.mxu0
      %1245 = vmatprep.mubr.bf16.mxu0 0
      %1246 = vmatmul.mubr.bf16.gmra.mxu0 %v675
      %v1247 = vpop.f32.mrf.mxu0
      %v1248 = vadd.f32 0.0, %v1247
      %v1249 = vpop.f32.mrf.mxu0
      %v1250 = vpop.f32.mrf.mxu0
      %v1251 = vadd.f32 0.0, %v1250
      %v1252 = vpop.f32.mrf.mxu0
      %1253 = vmatprep.mubr.bf16.mxu0 0
      %1254 = vmatmul.mubr.bf16.gmra.mxu0 %v678
      %v1255 = vpop.f32.mrf.mxu0
      %v1256 = vadd.f32 0.0, %v1255
      %v1257 = vpop.f32.mrf.mxu0
      %v1258 = vpop.f32.mrf.mxu0
      %v1259 = vadd.f32 0.0, %v1258
      %v1260 = vpop.f32.mrf.mxu0
      %1261 = vmatprep.mubr.bf16.mxu0 0
      %1262 = vmatmul.mubr.bf16.gmra.mxu0 %v681
      %v1263 = vpop.f32.mrf.mxu0
      %v1264 = vadd.f32 0.0, %v1263
      %v1265 = vpop.f32.mrf.mxu0
      %v1266 = vpop.f32.mrf.mxu0
      %v1267 = vadd.f32 0.0, %v1266
      %v1268 = vpop.f32.mrf.mxu0
      %1269 = vmatprep.mubr.bf16.mxu0 0
      %1270 = vmatmul.mubr.bf16.gmra.mxu0 %v684
      %v1271 = vpop.f32.mrf.mxu0
      %v1272 = vadd.f32 0.0, %v1271
      %v1273 = vpop.f32.mrf.mxu0
      %v1274 = vpop.f32.mrf.mxu0
      %v1275 = vadd.f32 0.0, %v1274
      %v1276 = vpop.f32.mrf.mxu0
      %1277 = vmatprep.mubr.bf16.mxu0 0
      %1278 = vmatmul.mubr.bf16.gmra.mxu0 %v687
      %v1279 = vpop.f32.mrf.mxu0
      %v1280 = vadd.f32 0.0, %v1279
      %v1281 = vpop.f32.mrf.mxu0
      %v1282 = vpop.f32.mrf.mxu0
      %v1283 = vadd.f32 0.0, %v1282
      %v1284 = vpop.f32.mrf.mxu0
      %1285 = vmatprep.mubr.bf16.mxu0 0
      %1286 = vmatmul.mubr.bf16.gmra.mxu0 %v690
      %v1287 = vpop.f32.mrf.mxu0
      %v1288 = vadd.f32 0.0, %v1287
      %v1289 = vpop.f32.mrf.mxu0
      %v1290 = vpop.f32.mrf.mxu0
      %v1291 = vadd.f32 0.0, %v1290
      %v1292 = vpop.f32.mrf.mxu0
      %1293 = vmatprep.mubr.bf16.mxu0 0
      %1294 = vmatmul.mubr.bf16.gmra.mxu0 %v693
      %v1295 = vpop.f32.mrf.mxu0
      %v1296 = vadd.f32 0.0, %v1295
      %v1297 = vpop.f32.mrf.mxu0
      %v1298 = vpop.f32.mrf.mxu0
      %v1299 = vadd.f32 0.0, %v1298
      %v1300 = vpop.f32.mrf.mxu0
      %1301 = vmatprep.mubr.bf16.mxu0 0
      %1302 = vmatmul.mubr.bf16.gmra.mxu0 %v696
      %v1303 = vpop.f32.mrf.mxu0
      %v1304 = vadd.f32 0.0, %v1303
      %v1305 = vpop.f32.mrf.mxu0
      %v1306 = vpop.f32.mrf.mxu0
      %v1307 = vadd.f32 0.0, %v1306
      %v1308 = vpop.f32.mrf.mxu0
      %1309 = vmatprep.mubr.bf16.mxu0 0
      %1310 = vmatmul.mubr.bf16.gmra.mxu0 %v699
      %v1311 = vpop.f32.mrf.mxu0
      %v1312 = vadd.f32 0.0, %v1311
      %v1313 = vpop.f32.mrf.mxu0
      %v1314 = vpop.f32.mrf.mxu0
      %v1315 = vadd.f32 0.0, %v1314
      %v1316 = vpop.f32.mrf.mxu0
      %1317 = vmatprep.mubr.bf16.mxu0 0
      %1318 = vmatmul.mubr.bf16.gmra.mxu0 %v702
      %v1319 = vpop.f32.mrf.mxu0
      %v1320 = vadd.f32 0.0, %v1319
      %v1321 = vpop.f32.mrf.mxu0
      %v1322 = vpop.f32.mrf.mxu0
      %v1323 = vadd.f32 0.0, %v1322
      %v1324 = vpop.f32.mrf.mxu0
      %1325 = vmatprep.mubr.bf16.mxu0 0
      %1326 = vmatmul.mubr.bf16.gmra.mxu0 %v705
      %v1327 = vpop.f32.mrf.mxu0
      %v1328 = vadd.f32 0.0, %v1327
      %v1329 = vpop.f32.mrf.mxu0
      %v1330 = vpop.f32.mrf.mxu0
      %v1331 = vadd.f32 0.0, %v1330
      %v1332 = vpop.f32.mrf.mxu0
      %1333 = vmatprep.mubr.bf16.mxu0 0
      %1334 = vmatmul.mubr.bf16.gmra.mxu0 %v708
      %v1335 = vpop.f32.mrf.mxu0
      %v1336 = vadd.f32 0.0, %v1335
      %v1337 = vpop.f32.mrf.mxu0
      %v1338 = vpop.f32.mrf.mxu0
      %v1339 = vadd.f32 0.0, %v1338
      %v1340 = vpop.f32.mrf.mxu0
      %1341 = vmatprep.mubr.bf16.mxu0 0
      %1342 = vmatmul.mubr.bf16.gmra.mxu0 %v711
      %v1343 = vpop.f32.mrf.mxu0
      %v1344 = vadd.f32 0.0, %v1343
      %v1345 = vpop.f32.mrf.mxu0
      %v1346 = vpop.f32.mrf.mxu0
      %v1347 = vadd.f32 0.0, %v1346
      %v1348 = vpop.f32.mrf.mxu0
      %1349 = vmatprep.mubr.bf16.mxu0 0
      %1350 = vmatmul.mubr.bf16.gmra.mxu0 %v714
      %v1351 = vpop.f32.mrf.mxu0
      %v1352 = vadd.f32 0.0, %v1351
      %v1353 = vpop.f32.mrf.mxu0
      %v1354 = vpop.f32.mrf.mxu0
      %v1355 = vadd.f32 0.0, %v1354
      %v1356 = vpop.f32.mrf.mxu0
      %1357 = vmatprep.mubr.bf16.mxu0 0
      %1358 = vmatmul.mubr.bf16.gmra.mxu0 %v717
      %v1359 = vpop.f32.mrf.mxu0
      %v1360 = vadd.f32 0.0, %v1359
      %v1361 = vpop.f32.mrf.mxu0
      %v1362 = vpop.f32.mrf.mxu0
      %v1363 = vadd.f32 0.0, %v1362
      %v1364 = vpop.f32.mrf.mxu0
      %1365 = vmatprep.mubr.bf16.mxu0 0
      %1366 = vmatmul.mubr.bf16.gmra.mxu0 %v720
      %v1367 = vpop.f32.mrf.mxu0
      %v1368 = vadd.f32 0.0, %v1367
      %v1369 = vpop.f32.mrf.mxu0
      %v1370 = vpop.f32.mrf.mxu0
      %v1371 = vadd.f32 0.0, %v1370
      %v1372 = vpop.f32.mrf.mxu0
      %1373 = vdwg.mxu0
      %v1374 = vld [vmem:[%s2] sm:$0x1]
      %v1376 = vlaneseq
      %v1377 = vshrl.u32 %v1376, 7
      %v1378 = vsub.s32 0, %v1377
      %v1379 = vrot.slane %v1374, %v1378
      %v1381 = vadd.f32 %v767, %v1379
      %v1382 = vadd.f32 %v771, %v1379
      %v1383 = vadd.f32 %v777, %v1379
      %v1384 = vadd.f32 %v781, %v1379
      %v1385 = vadd.f32 %v787, %v1379
      %v1386 = vadd.f32 %v791, %v1379
      %v1387 = vadd.f32 %v797, %v1379
      %v1388 = vadd.f32 %v801, %v1379
      %v1389 = vadd.f32 %v807, %v1379
      %v1390 = vadd.f32 %v811, %v1379
      %v1391 = vadd.f32 %v817, %v1379
      %v1392 = vadd.f32 %v821, %v1379
      %v1393 = vadd.f32 %v827, %v1379
      %v1394 = vadd.f32 %v831, %v1379
      %v1395 = vadd.f32 %v837, %v1379
      %v1396 = vadd.f32 %v841, %v1379
      %v1397 = vadd.f32 %v847, %v1379
      %v1398 = vadd.f32 %v851, %v1379
      %v1399 = vadd.f32 %v857, %v1379
      %v1400 = vadd.f32 %v861, %v1379
      %v1401 = vadd.f32 %v867, %v1379
      %v1402 = vadd.f32 %v871, %v1379
      %v1403 = vadd.f32 %v877, %v1379
      %v1404 = vadd.f32 %v881, %v1379
      %v1405 = vadd.f32 %v887, %v1379
      %v1406 = vadd.f32 %v891, %v1379
      %v1407 = vadd.f32 %v897, %v1379
      %v1408 = vadd.f32 %v901, %v1379
      %v1409 = vadd.f32 %v907, %v1379
      %v1410 = vadd.f32 %v911, %v1379
      %v1411 = vadd.f32 %v917, %v1379
      %v1412 = vadd.f32 %v921, %v1379
      %v1413 = vadd.f32 %v927, %v1379
      %v1414 = vadd.f32 %v931, %v1379
      %v1415 = vadd.f32 %v937, %v1379
      %v1416 = vadd.f32 %v941, %v1379
      %v1417 = vadd.f32 %v947, %v1379
      %v1418 = vadd.f32 %v951, %v1379
      %v1419 = vadd.f32 %v957, %v1379
      %v1420 = vadd.f32 %v961, %v1379
      %v1421 = vadd.f32 %v967, %v1379
      %v1422 = vadd.f32 %v971, %v1379
      %v1423 = vadd.f32 %v977, %v1379
      %v1424 = vadd.f32 %v981, %v1379
      %v1425 = vadd.f32 %v987, %v1379
      %v1426 = vadd.f32 %v991, %v1379
      %v1427 = vadd.f32 %v997, %v1379
      %v1428 = vadd.f32 %v1001, %v1379
      %v1429 = vadd.f32 %v1007, %v1379
      %v1430 = vadd.f32 %v1011, %v1379
      %v1431 = vadd.f32 %v1017, %v1379
      %v1432 = vadd.f32 %v1021, %v1379
      %v1433 = vadd.f32 %v1027, %v1379
      %v1434 = vadd.f32 %v1031, %v1379
      %v1435 = vadd.f32 %v1037, %v1379
      %v1436 = vadd.f32 %v1041, %v1379
      %v1437 = vadd.f32 %v1047, %v1379
      %v1438 = vadd.f32 %v1051, %v1379
      %v1439 = vadd.f32 %v1057, %v1379
      %v1440 = vadd.f32 %v1061, %v1379
      %v1441 = vadd.f32 %v1067, %v1379
      %v1442 = vadd.f32 %v1071, %v1379
      %v1443 = vadd.f32 %v1077, %v1379
      %v1444 = vadd.f32 %v1081, %v1379
      %v1445 = vmax.f32 %v1381, 0.0
      %v1446 = vmax.f32 %v1382, 0.0
      %v1447 = vmax.f32 %v1383, 0.0
      %v1448 = vmax.f32 %v1384, 0.0
      %v1449 = vmax.f32 %v1385, 0.0
      %v1450 = vmax.f32 %v1386, 0.0
      %v1451 = vmax.f32 %v1387, 0.0
      %v1452 = vmax.f32 %v1388, 0.0
      %v1453 = vmax.f32 %v1389, 0.0
      %v1454 = vmax.f32 %v1390, 0.0
      %v1455 = vmax.f32 %v1391, 0.0
      %v1456 = vmax.f32 %v1392, 0.0
      %v1457 = vmax.f32 %v1393, 0.0
      %v1458 = vmax.f32 %v1394, 0.0
      %v1459 = vmax.f32 %v1395, 0.0
      %v1460 = vmax.f32 %v1396, 0.0
      %v1461 = vmax.f32 %v1397, 0.0
      %v1462 = vmax.f32 %v1398, 0.0
      %v1463 = vmax.f32 %v1399, 0.0
      %v1464 = vmax.f32 %v1400, 0.0
      %v1465 = vmax.f32 %v1401, 0.0
      %v1466 = vmax.f32 %v1402, 0.0
      %v1467 = vmax.f32 %v1403, 0.0
      %v1468 = vmax.f32 %v1404, 0.0
      %v1469 = vmax.f32 %v1405, 0.0
      %v1470 = vmax.f32 %v1406, 0.0
      %v1471 = vmax.f32 %v1407, 0.0
      %v1472 = vmax.f32 %v1408, 0.0
      %v1473 = vmax.f32 %v1409, 0.0
      %v1474 = vmax.f32 %v1410, 0.0
      %v1475 = vmax.f32 %v1411, 0.0
      %v1476 = vmax.f32 %v1412, 0.0
      %v1477 = vmax.f32 %v1413, 0.0
      %v1478 = vmax.f32 %v1414, 0.0
      %v1479 = vmax.f32 %v1415, 0.0
      %v1480 = vmax.f32 %v1416, 0.0
      %v1481 = vmax.f32 %v1417, 0.0
      %v1482 = vmax.f32 %v1418, 0.0
      %v1483 = vmax.f32 %v1419, 0.0
      %v1484 = vmax.f32 %v1420, 0.0
      %v1485 = vmax.f32 %v1421, 0.0
      %v1486 = vmax.f32 %v1422, 0.0
      %v1487 = vmax.f32 %v1423, 0.0
      %v1488 = vmax.f32 %v1424, 0.0
      %v1489 = vmax.f32 %v1425, 0.0
      %v1490 = vmax.f32 %v1426, 0.0
      %v1491 = vmax.f32 %v1427, 0.0
      %v1492 = vmax.f32 %v1428, 0.0
      %v1493 = vmax.f32 %v1429, 0.0
      %v1494 = vmax.f32 %v1430, 0.0
      %v1495 = vmax.f32 %v1431, 0.0
      %v1496 = vmax.f32 %v1432, 0.0
      %v1497 = vmax.f32 %v1433, 0.0
      %v1498 = vmax.f32 %v1434, 0.0
      %v1499 = vmax.f32 %v1435, 0.0
      %v1500 = vmax.f32 %v1436, 0.0
      %v1501 = vmax.f32 %v1437, 0.0
      %v1502 = vmax.f32 %v1438, 0.0
      %v1503 = vmax.f32 %v1439, 0.0
      %v1504 = vmax.f32 %v1440, 0.0
      %v1505 = vmax.f32 %v1441, 0.0
      %v1506 = vmax.f32 %v1442, 0.0
      %v1507 = vmax.f32 %v1443, 0.0
      %v1508 = vmax.f32 %v1444, 0.0
      %v1509 = vpack.c.bf16 %v1446, %v1445
      %v1510 = vpack.c.bf16 %v1448, %v1447
      %v1511 = vpack.c.bf16 %v1450, %v1449
      %v1512 = vpack.c.bf16 %v1452, %v1451
      %v1513 = vpack.c.bf16 %v1454, %v1453
      %v1514 = vpack.c.bf16 %v1456, %v1455
      %v1515 = vpack.c.bf16 %v1458, %v1457
      %v1516 = vpack.c.bf16 %v1460, %v1459
      %v1517 = vpack.c.bf16 %v1462, %v1461
      %v1518 = vpack.c.bf16 %v1464, %v1463
      %v1519 = vpack.c.bf16 %v1466, %v1465
      %v1520 = vpack.c.bf16 %v1468, %v1467
      %v1521 = vpack.c.bf16 %v1470, %v1469
      %v1522 = vpack.c.bf16 %v1472, %v1471
      %v1523 = vpack.c.bf16 %v1474, %v1473
      %v1524 = vpack.c.bf16 %v1476, %v1475
      %v1525 = vpack.c.bf16 %v1478, %v1477
      %v1526 = vpack.c.bf16 %v1480, %v1479
      %v1527 = vpack.c.bf16 %v1482, %v1481
      %v1528 = vpack.c.bf16 %v1484, %v1483
      %v1529 = vpack.c.bf16 %v1486, %v1485
      %v1530 = vpack.c.bf16 %v1488, %v1487
      %v1531 = vpack.c.bf16 %v1490, %v1489
      %v1532 = vpack.c.bf16 %v1492, %v1491
      %v1533 = vpack.c.bf16 %v1494, %v1493
      %v1534 = vpack.c.bf16 %v1496, %v1495
      %v1535 = vpack.c.bf16 %v1498, %v1497
      %v1536 = vpack.c.bf16 %v1500, %v1499
      %v1537 = vpack.c.bf16 %v1502, %v1501
      %v1538 = vpack.c.bf16 %v1504, %v1503
      %v1539 = vpack.c.bf16 %v1506, %v1505
      %v1540 = vpack.c.bf16 %v1508, %v1507
      %v1541 = vld [vmem:[%s3] sm:$0xf]
      %v1542 = vld [vmem:[%s3 + $0x4] sm:$0xf]
      %v1543 = vld [vmem:[%s3 + $0x8] sm:$0xf]
      %v1544 = vld [vmem:[%s3 + $0xc] sm:$0xf]
      %v1545 = vld [vmem:[%s3 + $0x10] sm:$0xf]
      %v1546 = vld [vmem:[%s3 + $0x14] sm:$0xf]
      %v1547 = vld [vmem:[%s3 + $0x18] sm:$0xf]
      %v1548 = vld [vmem:[%s3 + $0x1c] sm:$0xf]
      %v1549 = vld [vmem:[%s3 + $0x20] sm:$0xf]
      %v1550 = vld [vmem:[%s3 + $0x24] sm:$0xf]
      %v1551 = vld [vmem:[%s3 + $0x28] sm:$0xf]
      %v1552 = vld [vmem:[%s3 + $0x2c] sm:$0xf]
      %v1553 = vld [vmem:[%s3 + $0x30] sm:$0xf]
      %v1554 = vld [vmem:[%s3 + $0x34] sm:$0xf]
      %v1555 = vld [vmem:[%s3 + $0x38] sm:$0xf]
      %v1556 = vld [vmem:[%s3 + $0x3c] sm:$0xf]
      %v1557 = vld [vmem:[%s4] sm:$0x1]
      %v1559 = vlaneseq
      %v1560 = vshrl.u32 %v1559, 7
      %v1561 = vsub.s32 0, %v1560
      %v1562 = vrot.slane %v1557, %v1561
      %v1580 = vunpack.c.l.b16 %v1541
      %v1581 = vunpack.c.l.b16 %v1542
      %v1582 = vunpack.c.l.b16 %v1543
      %v1583 = vunpack.c.l.b16 %v1544
      %v1584 = vunpack.c.l.b16 %v1545
      %v1585 = vunpack.c.l.b16 %v1546
      %v1586 = vunpack.c.l.b16 %v1547
      %v1587 = vunpack.c.l.b16 %v1548
      %v1588 = vunpack.c.l.b16 %v1549
      %v1589 = vunpack.c.l.b16 %v1550
      %v1590 = vunpack.c.l.b16 %v1551
      %v1591 = vunpack.c.l.b16 %v1552
      %v1592 = vunpack.c.l.b16 %v1553
      %v1593 = vunpack.c.l.b16 %v1554
      %v1594 = vunpack.c.l.b16 %v1555
      %v1595 = vunpack.c.l.b16 %v1556
      %v1596 = vpack.c.b16 %v1581, %v1580
      %v1597 = vpack.c.b16 %v1583, %v1582
      %v1598 = vpack.c.b16 %v1585, %v1584
      %v1599 = vpack.c.b16 %v1587, %v1586
      %v1600 = vpack.c.b16 %v1589, %v1588
      %v1601 = vpack.c.b16 %v1591, %v1590
      %v1602 = vpack.c.b16 %v1593, %v1592
      %v1603 = vpack.c.b16 %v1595, %v1594
      %1612 = vmatprep.subr.bf16.mxu0 0
      %1613 = vmatpush1.bf16.msra.mxu0 %v1603
      %1614 = vmatprep.subr.bf16.mxu0 0
      %1615 = vmatpush1.bf16.msra.mxu0 %v1602
      %1616 = vmatprep.subr.bf16.mxu0 0
      %1617 = vmatpush1.bf16.msra.mxu0 %v1601
      %1618 = vmatprep.subr.bf16.mxu0 0
      %1619 = vmatpush1.bf16.msra.mxu0 %v1600
      %1620 = vmatprep.subr.bf16.mxu0 0
      %1621 = vmatpush1.bf16.msra.mxu0 %v1599
      %1622 = vmatprep.subr.bf16.mxu0 0
      %1623 = vmatpush1.bf16.msra.mxu0 %v1598
      %1624 = vmatprep.subr.bf16.mxu0 0
      %1625 = vmatpush1.bf16.msra.mxu0 %v1597
      %1626 = vmatprep.subr.bf16.mxu0 0
      %1627 = vmatpush1.bf16.msra.mxu0 %v1596
      %1628 = vmatprep.subr.bf16.mxu0 0
      %1629 = vmatpush2.bf16.msra.mxu0 0
      %1630 = vmatprep.subr.bf16.mxu0 0
      %1631 = vmatpush2.bf16.msra.mxu0 0
      %1632 = vmatprep.subr.bf16.mxu0 0
      %1633 = vmatpush2.bf16.msra.mxu0 0
      %1634 = vmatprep.subr.bf16.mxu0 0
      %1635 = vmatpush2.bf16.msra.mxu0 0
      %1636 = vmatprep.subr.bf16.mxu0 0
      %1637 = vmatpush2.bf16.msra.mxu0 0
      %1638 = vmatprep.subr.bf16.mxu0 0
      %1639 = vmatpush2.bf16.msra.mxu0 0
      %1640 = vmatprep.subr.bf16.mxu0 0
      %1641 = vmatpush2.bf16.msra.mxu0 0
      %1642 = vmatprep.subr.bf16.mxu0 0
      %1643 = vmatpush2.bf16.msra.mxu0 0
      %1644 = vmatprep.mubr.bf16.mxu0 0
      %1645 = vmatmul.mubr.bf16.gmra.mxu0 %v1509
      %v1646 = vpop.f32.mrf.mxu0
      %v1647 = vadd.f32 %v1562, %v1646
      %v1648 = vpop.f32.mrf.mxu0
      %v1649 = vpop.f32.mrf.mxu0
      %v1650 = vadd.f32 %v1562, %v1649
      %v1651 = vpop.f32.mrf.mxu0
      %1652 = vmatprep.mubr.bf16.mxu0 0
      %1653 = vmatmul.mubr.bf16.gmra.mxu0 %v1510
      %v1654 = vpop.f32.mrf.mxu0
      %v1655 = vadd.f32 %v1562, %v1654
      %v1656 = vpop.f32.mrf.mxu0
      %v1657 = vpop.f32.mrf.mxu0
      %v1658 = vadd.f32 %v1562, %v1657
      %v1659 = vpop.f32.mrf.mxu0
      %1660 = vmatprep.mubr.bf16.mxu0 0
      %1661 = vmatmul.mubr.bf16.gmra.mxu0 %v1511
      %v1662 = vpop.f32.mrf.mxu0
      %v1663 = vadd.f32 %v1562, %v1662
      %v1664 = vpop.f32.mrf.mxu0
      %v1665 = vpop.f32.mrf.mxu0
      %v1666 = vadd.f32 %v1562, %v1665
      %v1667 = vpop.f32.mrf.mxu0
      %1668 = vmatprep.mubr.bf16.mxu0 0
      %1669 = vmatmul.mubr.bf16.gmra.mxu0 %v1512
      %v1670 = vpop.f32.mrf.mxu0
      %v1671 = vadd.f32 %v1562, %v1670
      %v1672 = vpop.f32.mrf.mxu0
      %v1673 = vpop.f32.mrf.mxu0
      %v1674 = vadd.f32 %v1562, %v1673
      %v1675 = vpop.f32.mrf.mxu0
      %1676 = vmatprep.mubr.bf16.mxu0 0
      %1677 = vmatmul.mubr.bf16.gmra.mxu0 %v1513
      %v1678 = vpop.f32.mrf.mxu0
      %v1679 = vadd.f32 %v1562, %v1678
      %v1680 = vpop.f32.mrf.mxu0
      %v1681 = vpop.f32.mrf.mxu0
      %v1682 = vadd.f32 %v1562, %v1681
      %v1683 = vpop.f32.mrf.mxu0
      %1684 = vmatprep.mubr.bf16.mxu0 0
      %1685 = vmatmul.mubr.bf16.gmra.mxu0 %v1514
      %v1686 = vpop.f32.mrf.mxu0
      %v1687 = vadd.f32 %v1562, %v1686
      %v1688 = vpop.f32.mrf.mxu0
      %v1689 = vpop.f32.mrf.mxu0
      %v1690 = vadd.f32 %v1562, %v1689
      %v1691 = vpop.f32.mrf.mxu0
      %1692 = vmatprep.mubr.bf16.mxu0 0
      %1693 = vmatmul.mubr.bf16.gmra.mxu0 %v1515
      %v1694 = vpop.f32.mrf.mxu0
      %v1695 = vadd.f32 %v1562, %v1694
      %v1696 = vpop.f32.mrf.mxu0
      %v1697 = vpop.f32.mrf.mxu0
      %v1698 = vadd.f32 %v1562, %v1697
      %v1699 = vpop.f32.mrf.mxu0
      %1700 = vmatprep.mubr.bf16.mxu0 0
      %1701 = vmatmul.mubr.bf16.gmra.mxu0 %v1516
      %v1702 = vpop.f32.mrf.mxu0
      %v1703 = vadd.f32 %v1562, %v1702
      %v1704 = vpop.f32.mrf.mxu0
      %v1705 = vpop.f32.mrf.mxu0
      %v1706 = vadd.f32 %v1562, %v1705
      %v1707 = vpop.f32.mrf.mxu0
      %1708 = vmatprep.mubr.bf16.mxu0 0
      %1709 = vmatmul.mubr.bf16.gmra.mxu0 %v1517
      %v1710 = vpop.f32.mrf.mxu0
      %v1711 = vadd.f32 %v1562, %v1710
      %v1712 = vpop.f32.mrf.mxu0
      %v1713 = vpop.f32.mrf.mxu0
      %v1714 = vadd.f32 %v1562, %v1713
      %v1715 = vpop.f32.mrf.mxu0
      %1716 = vmatprep.mubr.bf16.mxu0 0
      %1717 = vmatmul.mubr.bf16.gmra.mxu0 %v1518
      %v1718 = vpop.f32.mrf.mxu0
      %v1719 = vadd.f32 %v1562, %v1718
      %v1720 = vpop.f32.mrf.mxu0
      %v1721 = vpop.f32.mrf.mxu0
      %v1722 = vadd.f32 %v1562, %v1721
      %v1723 = vpop.f32.mrf.mxu0
      %1724 = vmatprep.mubr.bf16.mxu0 0
      %1725 = vmatmul.mubr.bf16.gmra.mxu0 %v1519
      %v1726 = vpop.f32.mrf.mxu0
      %v1727 = vadd.f32 %v1562, %v1726
      %v1728 = vpop.f32.mrf.mxu0
      %v1729 = vpop.f32.mrf.mxu0
      %v1730 = vadd.f32 %v1562, %v1729
      %v1731 = vpop.f32.mrf.mxu0
      %1732 = vmatprep.mubr.bf16.mxu0 0
      %1733 = vmatmul.mubr.bf16.gmra.mxu0 %v1520
      %v1734 = vpop.f32.mrf.mxu0
      %v1735 = vadd.f32 %v1562, %v1734
      %v1736 = vpop.f32.mrf.mxu0
      %v1737 = vpop.f32.mrf.mxu0
      %v1738 = vadd.f32 %v1562, %v1737
      %v1739 = vpop.f32.mrf.mxu0
      %1740 = vmatprep.mubr.bf16.mxu0 0
      %1741 = vmatmul.mubr.bf16.gmra.mxu0 %v1521
      %v1742 = vpop.f32.mrf.mxu0
      %v1743 = vadd.f32 %v1562, %v1742
      %v1744 = vpop.f32.mrf.mxu0
      %v1745 = vpop.f32.mrf.mxu0
      %v1746 = vadd.f32 %v1562, %v1745
      %v1747 = vpop.f32.mrf.mxu0
      %1748 = vmatprep.mubr.bf16.mxu0 0
      %1749 = vmatmul.mubr.bf16.gmra.mxu0 %v1522
      %v1750 = vpop.f32.mrf.mxu0
      %v1751 = vadd.f32 %v1562, %v1750
      %v1752 = vpop.f32.mrf.mxu0
      %v1753 = vpop.f32.mrf.mxu0
      %v1754 = vadd.f32 %v1562, %v1753
      %v1755 = vpop.f32.mrf.mxu0
      %1756 = vmatprep.mubr.bf16.mxu0 0
      %1757 = vmatmul.mubr.bf16.gmra.mxu0 %v1523
      %v1758 = vpop.f32.mrf.mxu0
      %v1759 = vadd.f32 %v1562, %v1758
      %v1760 = vpop.f32.mrf.mxu0
      %v1761 = vpop.f32.mrf.mxu0
      %v1762 = vadd.f32 %v1562, %v1761
      %v1763 = vpop.f32.mrf.mxu0
      %1764 = vmatprep.mubr.bf16.mxu0 0
      %1765 = vmatmul.mubr.bf16.gmra.mxu0 %v1524
      %v1766 = vpop.f32.mrf.mxu0
      %v1767 = vadd.f32 %v1562, %v1766
      %v1768 = vpop.f32.mrf.mxu0
      %v1769 = vpop.f32.mrf.mxu0
      %v1770 = vadd.f32 %v1562, %v1769
      %v1771 = vpop.f32.mrf.mxu0
      %1772 = vmatprep.mubr.bf16.mxu0 0
      %1773 = vmatmul.mubr.bf16.gmra.mxu0 %v1525
      %v1774 = vpop.f32.mrf.mxu0
      %v1775 = vadd.f32 %v1562, %v1774
      %v1776 = vpop.f32.mrf.mxu0
      %v1777 = vpop.f32.mrf.mxu0
      %v1778 = vadd.f32 %v1562, %v1777
      %v1779 = vpop.f32.mrf.mxu0
      %1780 = vmatprep.mubr.bf16.mxu0 0
      %1781 = vmatmul.mubr.bf16.gmra.mxu0 %v1526
      %v1782 = vpop.f32.mrf.mxu0
      %v1783 = vadd.f32 %v1562, %v1782
      %v1784 = vpop.f32.mrf.mxu0
      %v1785 = vpop.f32.mrf.mxu0
      %v1786 = vadd.f32 %v1562, %v1785
      %v1787 = vpop.f32.mrf.mxu0
      %1788 = vmatprep.mubr.bf16.mxu0 0
      %1789 = vmatmul.mubr.bf16.gmra.mxu0 %v1527
      %v1790 = vpop.f32.mrf.mxu0
      %v1791 = vadd.f32 %v1562, %v1790
      %v1792 = vpop.f32.mrf.mxu0
      %v1793 = vpop.f32.mrf.mxu0
      %v1794 = vadd.f32 %v1562, %v1793
      %v1795 = vpop.f32.mrf.mxu0
      %1796 = vmatprep.mubr.bf16.mxu0 0
      %1797 = vmatmul.mubr.bf16.gmra.mxu0 %v1528
      %v1798 = vpop.f32.mrf.mxu0
      %v1799 = vadd.f32 %v1562, %v1798
      %v1800 = vpop.f32.mrf.mxu0
      %v1801 = vpop.f32.mrf.mxu0
      %v1802 = vadd.f32 %v1562, %v1801
      %v1803 = vpop.f32.mrf.mxu0
      %1804 = vmatprep.mubr.bf16.mxu0 0
      %1805 = vmatmul.mubr.bf16.gmra.mxu0 %v1529
      %v1806 = vpop.f32.mrf.mxu0
      %v1807 = vadd.f32 %v1562, %v1806
      %v1808 = vpop.f32.mrf.mxu0
      %v1809 = vpop.f32.mrf.mxu0
      %v1810 = vadd.f32 %v1562, %v1809
      %v1811 = vpop.f32.mrf.mxu0
      %1812 = vmatprep.mubr.bf16.mxu0 0
      %1813 = vmatmul.mubr.bf16.gmra.mxu0 %v1530
      %v1814 = vpop.f32.mrf.mxu0
      %v1815 = vadd.f32 %v1562, %v1814
      %v1816 = vpop.f32.mrf.mxu0
      %v1817 = vpop.f32.mrf.mxu0
      %v1818 = vadd.f32 %v1562, %v1817
      %v1819 = vpop.f32.mrf.mxu0
      %1820 = vmatprep.mubr.bf16.mxu0 0
      %1821 = vmatmul.mubr.bf16.gmra.mxu0 %v1531
      %v1822 = vpop.f32.mrf.mxu0
      %v1823 = vadd.f32 %v1562, %v1822
      %v1824 = vpop.f32.mrf.mxu0
      %v1825 = vpop.f32.mrf.mxu0
      %v1826 = vadd.f32 %v1562, %v1825
      %v1827 = vpop.f32.mrf.mxu0
      %1828 = vmatprep.mubr.bf16.mxu0 0
      %1829 = vmatmul.mubr.bf16.gmra.mxu0 %v1532
      %v1830 = vpop.f32.mrf.mxu0
      %v1831 = vadd.f32 %v1562, %v1830
      %v1832 = vpop.f32.mrf.mxu0
      %v1833 = vpop.f32.mrf.mxu0
      %v1834 = vadd.f32 %v1562, %v1833
      %v1835 = vpop.f32.mrf.mxu0
      %1836 = vmatprep.mubr.bf16.mxu0 0
      %1837 = vmatmul.mubr.bf16.gmra.mxu0 %v1533
      %v1838 = vpop.f32.mrf.mxu0
      %v1839 = vadd.f32 %v1562, %v1838
      %v1840 = vpop.f32.mrf.mxu0
      %v1841 = vpop.f32.mrf.mxu0
      %v1842 = vadd.f32 %v1562, %v1841
      %v1843 = vpop.f32.mrf.mxu0
      %1844 = vmatprep.mubr.bf16.mxu0 0
      %1845 = vmatmul.mubr.bf16.gmra.mxu0 %v1534
      %v1846 = vpop.f32.mrf.mxu0
      %v1847 = vadd.f32 %v1562, %v1846
      %v1848 = vpop.f32.mrf.mxu0
      %v1849 = vpop.f32.mrf.mxu0
      %v1850 = vadd.f32 %v1562, %v1849
      %v1851 = vpop.f32.mrf.mxu0
      %1852 = vmatprep.mubr.bf16.mxu0 0
      %1853 = vmatmul.mubr.bf16.gmra.mxu0 %v1535
      %v1854 = vpop.f32.mrf.mxu0
      %v1855 = vadd.f32 %v1562, %v1854
      %v1856 = vpop.f32.mrf.mxu0
      %v1857 = vpop.f32.mrf.mxu0
      %v1858 = vadd.f32 %v1562, %v1857
      %v1859 = vpop.f32.mrf.mxu0
      %1860 = vmatprep.mubr.bf16.mxu0 0
      %1861 = vmatmul.mubr.bf16.gmra.mxu0 %v1536
      %v1862 = vpop.f32.mrf.mxu0
      %v1863 = vadd.f32 %v1562, %v1862
      %v1864 = vpop.f32.mrf.mxu0
      %v1865 = vpop.f32.mrf.mxu0
      %v1866 = vadd.f32 %v1562, %v1865
      %v1867 = vpop.f32.mrf.mxu0
      %1868 = vmatprep.mubr.bf16.mxu0 0
      %1869 = vmatmul.mubr.bf16.gmra.mxu0 %v1537
      %v1870 = vpop.f32.mrf.mxu0
      %v1871 = vadd.f32 %v1562, %v1870
      %v1872 = vpop.f32.mrf.mxu0
      %v1873 = vpop.f32.mrf.mxu0
      %v1874 = vadd.f32 %v1562, %v1873
      %v1875 = vpop.f32.mrf.mxu0
      %1876 = vmatprep.mubr.bf16.mxu0 0
      %1877 = vmatmul.mubr.bf16.gmra.mxu0 %v1538
      %v1878 = vpop.f32.mrf.mxu0
      %v1879 = vadd.f32 %v1562, %v1878
      %v1880 = vpop.f32.mrf.mxu0
      %v1881 = vpop.f32.mrf.mxu0
      %v1882 = vadd.f32 %v1562, %v1881
      %v1883 = vpop.f32.mrf.mxu0
      %1884 = vmatprep.mubr.bf16.mxu0 0
      %1885 = vmatmul.mubr.bf16.gmra.mxu0 %v1539
      %v1886 = vpop.f32.mrf.mxu0
      %v1887 = vadd.f32 %v1562, %v1886
      %v1888 = vpop.f32.mrf.mxu0
      %v1889 = vpop.f32.mrf.mxu0
      %v1890 = vadd.f32 %v1562, %v1889
      %v1891 = vpop.f32.mrf.mxu0
      %1892 = vmatprep.mubr.bf16.mxu0 0
      %1893 = vmatmul.mubr.bf16.gmra.mxu0 %v1540
      %v1894 = vpop.f32.mrf.mxu0
      %v1895 = vadd.f32 %v1562, %v1894
      %v1896 = vpop.f32.mrf.mxu0
      %v1897 = vpop.f32.mrf.mxu0
      %v1898 = vadd.f32 %v1562, %v1897
      %v1899 = vpop.f32.mrf.mxu0
      %1900 = vdwg.mxu0
      %v1901 = vmax.f32 %v1647, 0.0
      %v1902 = vmax.f32 %v1650, 0.0
      %v1903 = vmax.f32 %v1655, 0.0
      %v1904 = vmax.f32 %v1658, 0.0
      %v1905 = vmax.f32 %v1663, 0.0
      %v1906 = vmax.f32 %v1666, 0.0
      %v1907 = vmax.f32 %v1671, 0.0
      %v1908 = vmax.f32 %v1674, 0.0
      %v1909 = vmax.f32 %v1679, 0.0
      %v1910 = vmax.f32 %v1682, 0.0
      %v1911 = vmax.f32 %v1687, 0.0
      %v1912 = vmax.f32 %v1690, 0.0
      %v1913 = vmax.f32 %v1695, 0.0
      %v1914 = vmax.f32 %v1698, 0.0
      %v1915 = vmax.f32 %v1703, 0.0
      %v1916 = vmax.f32 %v1706, 0.0
      %v1917 = vmax.f32 %v1711, 0.0
      %v1918 = vmax.f32 %v1714, 0.0
      %v1919 = vmax.f32 %v1719, 0.0
      %v1920 = vmax.f32 %v1722, 0.0
      %v1921 = vmax.f32 %v1727, 0.0
      %v1922 = vmax.f32 %v1730, 0.0
      %v1923 = vmax.f32 %v1735, 0.0
      %v1924 = vmax.f32 %v1738, 0.0
      %v1925 = vmax.f32 %v1743, 0.0
      %v1926 = vmax.f32 %v1746, 0.0
      %v1927 = vmax.f32 %v1751, 0.0
      %v1928 = vmax.f32 %v1754, 0.0
      %v1929 = vmax.f32 %v1759, 0.0
      %v1930 = vmax.f32 %v1762, 0.0
      %v1931 = vmax.f32 %v1767, 0.0
      %v1932 = vmax.f32 %v1770, 0.0
      %v1933 = vmax.f32 %v1775, 0.0
      %v1934 = vmax.f32 %v1778, 0.0
      %v1935 = vmax.f32 %v1783, 0.0
      %v1936 = vmax.f32 %v1786, 0.0
      %v1937 = vmax.f32 %v1791, 0.0
      %v1938 = vmax.f32 %v1794, 0.0
      %v1939 = vmax.f32 %v1799, 0.0
      %v1940 = vmax.f32 %v1802, 0.0
      %v1941 = vmax.f32 %v1807, 0.0
      %v1942 = vmax.f32 %v1810, 0.0
      %v1943 = vmax.f32 %v1815, 0.0
      %v1944 = vmax.f32 %v1818, 0.0
      %v1945 = vmax.f32 %v1823, 0.0
      %v1946 = vmax.f32 %v1826, 0.0
      %v1947 = vmax.f32 %v1831, 0.0
      %v1948 = vmax.f32 %v1834, 0.0
      %v1949 = vmax.f32 %v1839, 0.0
      %v1950 = vmax.f32 %v1842, 0.0
      %v1951 = vmax.f32 %v1847, 0.0
      %v1952 = vmax.f32 %v1850, 0.0
      %v1953 = vmax.f32 %v1855, 0.0
      %v1954 = vmax.f32 %v1858, 0.0
      %v1955 = vmax.f32 %v1863, 0.0
      %v1956 = vmax.f32 %v1866, 0.0
      %v1957 = vmax.f32 %v1871, 0.0
      %v1958 = vmax.f32 %v1874, 0.0
      %v1959 = vmax.f32 %v1879, 0.0
      %v1960 = vmax.f32 %v1882, 0.0
      %v1961 = vmax.f32 %v1887, 0.0
      %v1962 = vmax.f32 %v1890, 0.0
      %v1963 = vmax.f32 %v1895, 0.0
      %v1964 = vmax.f32 %v1898, 0.0
      %v1965 = vpack.c.bf16 %v1902, %v1901
      %v1966 = vpack.c.bf16 %v1904, %v1903
      %v1967 = vpack.c.bf16 %v1906, %v1905
      %v1968 = vpack.c.bf16 %v1908, %v1907
      %v1969 = vpack.c.bf16 %v1910, %v1909
      %v1970 = vpack.c.bf16 %v1912, %v1911
      %v1971 = vpack.c.bf16 %v1914, %v1913
      %v1972 = vpack.c.bf16 %v1916, %v1915
      %v1973 = vpack.c.bf16 %v1918, %v1917
      %v1974 = vpack.c.bf16 %v1920, %v1919
      %v1975 = vpack.c.bf16 %v1922, %v1921
      %v1976 = vpack.c.bf16 %v1924, %v1923
      %v1977 = vpack.c.bf16 %v1926, %v1925
      %v1978 = vpack.c.bf16 %v1928, %v1927
      %v1979 = vpack.c.bf16 %v1930, %v1929
      %v1980 = vpack.c.bf16 %v1932, %v1931
      %v1981 = vpack.c.bf16 %v1934, %v1933
      %v1982 = vpack.c.bf16 %v1936, %v1935
      %v1983 = vpack.c.bf16 %v1938, %v1937
      %v1984 = vpack.c.bf16 %v1940, %v1939
      %v1985 = vpack.c.bf16 %v1942, %v1941
      %v1986 = vpack.c.bf16 %v1944, %v1943
      %v1987 = vpack.c.bf16 %v1946, %v1945
      %v1988 = vpack.c.bf16 %v1948, %v1947
      %v1989 = vpack.c.bf16 %v1950, %v1949
      %v1990 = vpack.c.bf16 %v1952, %v1951
      %v1991 = vpack.c.bf16 %v1954, %v1953
      %v1992 = vpack.c.bf16 %v1956, %v1955
      %v1993 = vpack.c.bf16 %v1958, %v1957
      %v1994 = vpack.c.bf16 %v1960, %v1959
      %v1995 = vpack.c.bf16 %v1962, %v1961
      %v1996 = vpack.c.bf16 %v1964, %v1963
      %s1997 = scalar_lea.vmem %s3, 64
      %v1998 = vld [vmem:[%s1997] sm:$0xf]
      %v1999 = vld [vmem:[%s1997 + $0x4] sm:$0xf]
      %v2000 = vld [vmem:[%s1997 + $0x8] sm:$0xf]
      %v2001 = vld [vmem:[%s1997 + $0xc] sm:$0xf]
      %v2002 = vld [vmem:[%s1997 + $0x10] sm:$0xf]
      %v2003 = vld [vmem:[%s1997 + $0x14] sm:$0xf]
      %v2004 = vld [vmem:[%s1997 + $0x18] sm:$0xf]
      %v2005 = vld [vmem:[%s1997 + $0x1c] sm:$0xf]
      %v2006 = vld [vmem:[%s1997 + $0x20] sm:$0xf]
      %v2007 = vld [vmem:[%s1997 + $0x24] sm:$0xf]
      %v2008 = vld [vmem:[%s1997 + $0x28] sm:$0xf]
      %v2009 = vld [vmem:[%s1997 + $0x2c] sm:$0xf]
      %v2010 = vld [vmem:[%s1997 + $0x30] sm:$0xf]
      %v2011 = vld [vmem:[%s1997 + $0x34] sm:$0xf]
      %v2012 = vld [vmem:[%s1997 + $0x38] sm:$0xf]
      %v2013 = vld [vmem:[%s1997 + $0x3c] sm:$0xf]
      %s2014 = scalar_lea.vmem %s4, 1
      %v2015 = vld [vmem:[%s2014] sm:$0x1]
      %v2017 = vlaneseq
      %v2018 = vshrl.u32 %v2017, 7
      %v2019 = vsub.s32 0, %v2018
      %v2020 = vrot.slane %v2015, %v2019
      %v2038 = vunpack.c.l.b16 %v1998
      %v2039 = vunpack.c.l.b16 %v1999
      %v2040 = vunpack.c.l.b16 %v2000
      %v2041 = vunpack.c.l.b16 %v2001
      %v2042 = vunpack.c.l.b16 %v2002
      %v2043 = vunpack.c.l.b16 %v2003
      %v2044 = vunpack.c.l.b16 %v2004
      %v2045 = vunpack.c.l.b16 %v2005
      %v2046 = vunpack.c.l.b16 %v2006
      %v2047 = vunpack.c.l.b16 %v2007
      %v2048 = vunpack.c.l.b16 %v2008
      %v2049 = vunpack.c.l.b16 %v2009
      %v2050 = vunpack.c.l.b16 %v2010
      %v2051 = vunpack.c.l.b16 %v2011
      %v2052 = vunpack.c.l.b16 %v2012
      %v2053 = vunpack.c.l.b16 %v2013
      %v2054 = vpack.c.b16 %v2039, %v2038
      %v2055 = vpack.c.b16 %v2041, %v2040
      %v2056 = vpack.c.b16 %v2043, %v2042
      %v2057 = vpack.c.b16 %v2045, %v2044
      %v2058 = vpack.c.b16 %v2047, %v2046
      %v2059 = vpack.c.b16 %v2049, %v2048
      %v2060 = vpack.c.b16 %v2051, %v2050
      %v2061 = vpack.c.b16 %v2053, %v2052
      %2070 = vmatprep.subr.bf16.mxu0 0
      %2071 = vmatpush1.bf16.msra.mxu0 %v2061
      %2072 = vmatprep.subr.bf16.mxu0 0
      %2073 = vmatpush1.bf16.msra.mxu0 %v2060
      %2074 = vmatprep.subr.bf16.mxu0 0
      %2075 = vmatpush1.bf16.msra.mxu0 %v2059
      %2076 = vmatprep.subr.bf16.mxu0 0
      %2077 = vmatpush1.bf16.msra.mxu0 %v2058
      %2078 = vmatprep.subr.bf16.mxu0 0
      %2079 = vmatpush1.bf16.msra.mxu0 %v2057
      %2080 = vmatprep.subr.bf16.mxu0 0
      %2081 = vmatpush1.bf16.msra.mxu0 %v2056
      %2082 = vmatprep.subr.bf16.mxu0 0
      %2083 = vmatpush1.bf16.msra.mxu0 %v2055
      %2084 = vmatprep.subr.bf16.mxu0 0
      %2085 = vmatpush1.bf16.msra.mxu0 %v2054
      %2086 = vmatprep.subr.bf16.mxu0 0
      %2087 = vmatpush2.bf16.msra.mxu0 0
      %2088 = vmatprep.subr.bf16.mxu0 0
      %2089 = vmatpush2.bf16.msra.mxu0 0
      %2090 = vmatprep.subr.bf16.mxu0 0
      %2091 = vmatpush2.bf16.msra.mxu0 0
      %2092 = vmatprep.subr.bf16.mxu0 0
      %2093 = vmatpush2.bf16.msra.mxu0 0
      %2094 = vmatprep.subr.bf16.mxu0 0
      %2095 = vmatpush2.bf16.msra.mxu0 0
      %2096 = vmatprep.subr.bf16.mxu0 0
      %2097 = vmatpush2.bf16.msra.mxu0 0
      %2098 = vmatprep.subr.bf16.mxu0 0
      %2099 = vmatpush2.bf16.msra.mxu0 0
      %2100 = vmatprep.subr.bf16.mxu0 0
      %2101 = vmatpush2.bf16.msra.mxu0 0
      %2102 = vmatprep.mubr.bf16.mxu0 0
      %2103 = vmatmul.mubr.bf16.gmra.mxu0 %v1965
      %v2104 = vpop.f32.mrf.mxu0
      %v2105 = vadd.f32 %v2020, %v2104
      %v2106 = vpop.f32.mrf.mxu0
      %v2107 = vpop.f32.mrf.mxu0
      %v2108 = vadd.f32 %v2020, %v2107
      %v2109 = vpop.f32.mrf.mxu0
      %2110 = vmatprep.mubr.bf16.mxu0 0
      %2111 = vmatmul.mubr.bf16.gmra.mxu0 %v1966
      %v2112 = vpop.f32.mrf.mxu0
      %v2113 = vadd.f32 %v2020, %v2112
      %v2114 = vpop.f32.mrf.mxu0
      %v2115 = vpop.f32.mrf.mxu0
      %v2116 = vadd.f32 %v2020, %v2115
      %v2117 = vpop.f32.mrf.mxu0
      %2118 = vmatprep.mubr.bf16.mxu0 0
      %2119 = vmatmul.mubr.bf16.gmra.mxu0 %v1967
      %v2120 = vpop.f32.mrf.mxu0
      %v2121 = vadd.f32 %v2020, %v2120
      %v2122 = vpop.f32.mrf.mxu0
      %v2123 = vpop.f32.mrf.mxu0
      %v2124 = vadd.f32 %v2020, %v2123
      %v2125 = vpop.f32.mrf.mxu0
      %2126 = vmatprep.mubr.bf16.mxu0 0
      %2127 = vmatmul.mubr.bf16.gmra.mxu0 %v1968
      %v2128 = vpop.f32.mrf.mxu0
      %v2129 = vadd.f32 %v2020, %v2128
      %v2130 = vpop.f32.mrf.mxu0
      %v2131 = vpop.f32.mrf.mxu0
      %v2132 = vadd.f32 %v2020, %v2131
      %v2133 = vpop.f32.mrf.mxu0
      %2134 = vmatprep.mubr.bf16.mxu0 0
      %2135 = vmatmul.mubr.bf16.gmra.mxu0 %v1969
      %v2136 = vpop.f32.mrf.mxu0
      %v2137 = vadd.f32 %v2020, %v2136
      %v2138 = vpop.f32.mrf.mxu0
      %v2139 = vpop.f32.mrf.mxu0
      %v2140 = vadd.f32 %v2020, %v2139
      %v2141 = vpop.f32.mrf.mxu0
      %2142 = vmatprep.mubr.bf16.mxu0 0
      %2143 = vmatmul.mubr.bf16.gmra.mxu0 %v1970
      %v2144 = vpop.f32.mrf.mxu0
      %v2145 = vadd.f32 %v2020, %v2144
      %v2146 = vpop.f32.mrf.mxu0
      %v2147 = vpop.f32.mrf.mxu0
      %v2148 = vadd.f32 %v2020, %v2147
      %v2149 = vpop.f32.mrf.mxu0
      %2150 = vmatprep.mubr.bf16.mxu0 0
      %2151 = vmatmul.mubr.bf16.gmra.mxu0 %v1971
      %v2152 = vpop.f32.mrf.mxu0
      %v2153 = vadd.f32 %v2020, %v2152
      %v2154 = vpop.f32.mrf.mxu0
      %v2155 = vpop.f32.mrf.mxu0
      %v2156 = vadd.f32 %v2020, %v2155
      %v2157 = vpop.f32.mrf.mxu0
      %2158 = vmatprep.mubr.bf16.mxu0 0
      %2159 = vmatmul.mubr.bf16.gmra.mxu0 %v1972
      %v2160 = vpop.f32.mrf.mxu0
      %v2161 = vadd.f32 %v2020, %v2160
      %v2162 = vpop.f32.mrf.mxu0
      %v2163 = vpop.f32.mrf.mxu0
      %v2164 = vadd.f32 %v2020, %v2163
      %v2165 = vpop.f32.mrf.mxu0
      %2166 = vmatprep.mubr.bf16.mxu0 0
      %2167 = vmatmul.mubr.bf16.gmra.mxu0 %v1973
      %v2168 = vpop.f32.mrf.mxu0
      %v2169 = vadd.f32 %v2020, %v2168
      %v2170 = vpop.f32.mrf.mxu0
      %v2171 = vpop.f32.mrf.mxu0
      %v2172 = vadd.f32 %v2020, %v2171
      %v2173 = vpop.f32.mrf.mxu0
      %2174 = vmatprep.mubr.bf16.mxu0 0
      %2175 = vmatmul.mubr.bf16.gmra.mxu0 %v1974
      %v2176 = vpop.f32.mrf.mxu0
      %v2177 = vadd.f32 %v2020, %v2176
      %v2178 = vpop.f32.mrf.mxu0
      %v2179 = vpop.f32.mrf.mxu0
      %v2180 = vadd.f32 %v2020, %v2179
      %v2181 = vpop.f32.mrf.mxu0
      %2182 = vmatprep.mubr.bf16.mxu0 0
      %2183 = vmatmul.mubr.bf16.gmra.mxu0 %v1975
      %v2184 = vpop.f32.mrf.mxu0
      %v2185 = vadd.f32 %v2020, %v2184
      %v2186 = vpop.f32.mrf.mxu0
      %v2187 = vpop.f32.mrf.mxu0
      %v2188 = vadd.f32 %v2020, %v2187
      %v2189 = vpop.f32.mrf.mxu0
      %2190 = vmatprep.mubr.bf16.mxu0 0
      %2191 = vmatmul.mubr.bf16.gmra.mxu0 %v1976
      %v2192 = vpop.f32.mrf.mxu0
      %v2193 = vadd.f32 %v2020, %v2192
      %v2194 = vpop.f32.mrf.mxu0
      %v2195 = vpop.f32.mrf.mxu0
      %v2196 = vadd.f32 %v2020, %v2195
      %v2197 = vpop.f32.mrf.mxu0
      %2198 = vmatprep.mubr.bf16.mxu0 0
      %2199 = vmatmul.mubr.bf16.gmra.mxu0 %v1977
      %v2200 = vpop.f32.mrf.mxu0
      %v2201 = vadd.f32 %v2020, %v2200
      %v2202 = vpop.f32.mrf.mxu0
      %v2203 = vpop.f32.mrf.mxu0
      %v2204 = vadd.f32 %v2020, %v2203
      %v2205 = vpop.f32.mrf.mxu0
      %2206 = vmatprep.mubr.bf16.mxu0 0
      %2207 = vmatmul.mubr.bf16.gmra.mxu0 %v1978
      %v2208 = vpop.f32.mrf.mxu0
      %v2209 = vadd.f32 %v2020, %v2208
      %v2210 = vpop.f32.mrf.mxu0
      %v2211 = vpop.f32.mrf.mxu0
      %v2212 = vadd.f32 %v2020, %v2211
      %v2213 = vpop.f32.mrf.mxu0
      %2214 = vmatprep.mubr.bf16.mxu0 0
      %2215 = vmatmul.mubr.bf16.gmra.mxu0 %v1979
      %v2216 = vpop.f32.mrf.mxu0
      %v2217 = vadd.f32 %v2020, %v2216
      %v2218 = vpop.f32.mrf.mxu0
      %v2219 = vpop.f32.mrf.mxu0
      %v2220 = vadd.f32 %v2020, %v2219
      %v2221 = vpop.f32.mrf.mxu0
      %2222 = vmatprep.mubr.bf16.mxu0 0
      %2223 = vmatmul.mubr.bf16.gmra.mxu0 %v1980
      %v2224 = vpop.f32.mrf.mxu0
      %v2225 = vadd.f32 %v2020, %v2224
      %v2226 = vpop.f32.mrf.mxu0
      %v2227 = vpop.f32.mrf.mxu0
      %v2228 = vadd.f32 %v2020, %v2227
      %v2229 = vpop.f32.mrf.mxu0
      %2230 = vmatprep.mubr.bf16.mxu0 0
      %2231 = vmatmul.mubr.bf16.gmra.mxu0 %v1981
      %v2232 = vpop.f32.mrf.mxu0
      %v2233 = vadd.f32 %v2020, %v2232
      %v2234 = vpop.f32.mrf.mxu0
      %v2235 = vpop.f32.mrf.mxu0
      %v2236 = vadd.f32 %v2020, %v2235
      %v2237 = vpop.f32.mrf.mxu0
      %2238 = vmatprep.mubr.bf16.mxu0 0
      %2239 = vmatmul.mubr.bf16.gmra.mxu0 %v1982
      %v2240 = vpop.f32.mrf.mxu0
      %v2241 = vadd.f32 %v2020, %v2240
      %v2242 = vpop.f32.mrf.mxu0
      %v2243 = vpop.f32.mrf.mxu0
      %v2244 = vadd.f32 %v2020, %v2243
      %v2245 = vpop.f32.mrf.mxu0
      %2246 = vmatprep.mubr.bf16.mxu0 0
      %2247 = vmatmul.mubr.bf16.gmra.mxu0 %v1983
      %v2248 = vpop.f32.mrf.mxu0
      %v2249 = vadd.f32 %v2020, %v2248
      %v2250 = vpop.f32.mrf.mxu0
      %v2251 = vpop.f32.mrf.mxu0
      %v2252 = vadd.f32 %v2020, %v2251
      %v2253 = vpop.f32.mrf.mxu0
      %2254 = vmatprep.mubr.bf16.mxu0 0
      %2255 = vmatmul.mubr.bf16.gmra.mxu0 %v1984
      %v2256 = vpop.f32.mrf.mxu0
      %v2257 = vadd.f32 %v2020, %v2256
      %v2258 = vpop.f32.mrf.mxu0
      %v2259 = vpop.f32.mrf.mxu0
      %v2260 = vadd.f32 %v2020, %v2259
      %v2261 = vpop.f32.mrf.mxu0
      %2262 = vmatprep.mubr.bf16.mxu0 0
      %2263 = vmatmul.mubr.bf16.gmra.mxu0 %v1985
      %v2264 = vpop.f32.mrf.mxu0
      %v2265 = vadd.f32 %v2020, %v2264
      %v2266 = vpop.f32.mrf.mxu0
      %v2267 = vpop.f32.mrf.mxu0
      %v2268 = vadd.f32 %v2020, %v2267
      %v2269 = vpop.f32.mrf.mxu0
      %2270 = vmatprep.mubr.bf16.mxu0 0
      %2271 = vmatmul.mubr.bf16.gmra.mxu0 %v1986
      %v2272 = vpop.f32.mrf.mxu0
      %v2273 = vadd.f32 %v2020, %v2272
      %v2274 = vpop.f32.mrf.mxu0
      %v2275 = vpop.f32.mrf.mxu0
      %v2276 = vadd.f32 %v2020, %v2275
      %v2277 = vpop.f32.mrf.mxu0
      %2278 = vmatprep.mubr.bf16.mxu0 0
      %2279 = vmatmul.mubr.bf16.gmra.mxu0 %v1987
      %v2280 = vpop.f32.mrf.mxu0
      %v2281 = vadd.f32 %v2020, %v2280
      %v2282 = vpop.f32.mrf.mxu0
      %v2283 = vpop.f32.mrf.mxu0
      %v2284 = vadd.f32 %v2020, %v2283
      %v2285 = vpop.f32.mrf.mxu0
      %2286 = vmatprep.mubr.bf16.mxu0 0
      %2287 = vmatmul.mubr.bf16.gmra.mxu0 %v1988
      %v2288 = vpop.f32.mrf.mxu0
      %v2289 = vadd.f32 %v2020, %v2288
      %v2290 = vpop.f32.mrf.mxu0
      %v2291 = vpop.f32.mrf.mxu0
      %v2292 = vadd.f32 %v2020, %v2291
      %v2293 = vpop.f32.mrf.mxu0
      %2294 = vmatprep.mubr.bf16.mxu0 0
      %2295 = vmatmul.mubr.bf16.gmra.mxu0 %v1989
      %v2296 = vpop.f32.mrf.mxu0
      %v2297 = vadd.f32 %v2020, %v2296
      %v2298 = vpop.f32.mrf.mxu0
      %v2299 = vpop.f32.mrf.mxu0
      %v2300 = vadd.f32 %v2020, %v2299
      %v2301 = vpop.f32.mrf.mxu0
      %2302 = vmatprep.mubr.bf16.mxu0 0
      %2303 = vmatmul.mubr.bf16.gmra.mxu0 %v1990
      %v2304 = vpop.f32.mrf.mxu0
      %v2305 = vadd.f32 %v2020, %v2304
      %v2306 = vpop.f32.mrf.mxu0
      %v2307 = vpop.f32.mrf.mxu0
      %v2308 = vadd.f32 %v2020, %v2307
      %v2309 = vpop.f32.mrf.mxu0
      %2310 = vmatprep.mubr.bf16.mxu0 0
      %2311 = vmatmul.mubr.bf16.gmra.mxu0 %v1991
      %v2312 = vpop.f32.mrf.mxu0
      %v2313 = vadd.f32 %v2020, %v2312
      %v2314 = vpop.f32.mrf.mxu0
      %v2315 = vpop.f32.mrf.mxu0
      %v2316 = vadd.f32 %v2020, %v2315
      %v2317 = vpop.f32.mrf.mxu0
      %2318 = vmatprep.mubr.bf16.mxu0 0
      %2319 = vmatmul.mubr.bf16.gmra.mxu0 %v1992
      %v2320 = vpop.f32.mrf.mxu0
      %v2321 = vadd.f32 %v2020, %v2320
      %v2322 = vpop.f32.mrf.mxu0
      %v2323 = vpop.f32.mrf.mxu0
      %v2324 = vadd.f32 %v2020, %v2323
      %v2325 = vpop.f32.mrf.mxu0
      %2326 = vmatprep.mubr.bf16.mxu0 0
      %2327 = vmatmul.mubr.bf16.gmra.mxu0 %v1993
      %v2328 = vpop.f32.mrf.mxu0
      %v2329 = vadd.f32 %v2020, %v2328
      %v2330 = vpop.f32.mrf.mxu0
      %v2331 = vpop.f32.mrf.mxu0
      %v2332 = vadd.f32 %v2020, %v2331
      %v2333 = vpop.f32.mrf.mxu0
      %2334 = vmatprep.mubr.bf16.mxu0 0
      %2335 = vmatmul.mubr.bf16.gmra.mxu0 %v1994
      %v2336 = vpop.f32.mrf.mxu0
      %v2337 = vadd.f32 %v2020, %v2336
      %v2338 = vpop.f32.mrf.mxu0
      %v2339 = vpop.f32.mrf.mxu0
      %v2340 = vadd.f32 %v2020, %v2339
      %v2341 = vpop.f32.mrf.mxu0
      %2342 = vmatprep.mubr.bf16.mxu0 0
      %2343 = vmatmul.mubr.bf16.gmra.mxu0 %v1995
      %v2344 = vpop.f32.mrf.mxu0
      %v2345 = vadd.f32 %v2020, %v2344
      %v2346 = vpop.f32.mrf.mxu0
      %v2347 = vpop.f32.mrf.mxu0
      %v2348 = vadd.f32 %v2020, %v2347
      %v2349 = vpop.f32.mrf.mxu0
      %2350 = vmatprep.mubr.bf16.mxu0 0
      %2351 = vmatmul.mubr.bf16.gmra.mxu0 %v1996
      %v2352 = vpop.f32.mrf.mxu0
      %v2353 = vadd.f32 %v2020, %v2352
      %v2354 = vpop.f32.mrf.mxu0
      %v2355 = vpop.f32.mrf.mxu0
      %v2356 = vadd.f32 %v2020, %v2355
      %v2357 = vpop.f32.mrf.mxu0
      %2358 = vdwg.mxu0
      %v2359 = vmax.f32 %v2105, 0.0
      %v2360 = vmax.f32 %v2108, 0.0
      %v2361 = vmax.f32 %v2113, 0.0
      %v2362 = vmax.f32 %v2116, 0.0
      %v2363 = vmax.f32 %v2121, 0.0
      %v2364 = vmax.f32 %v2124, 0.0
      %v2365 = vmax.f32 %v2129, 0.0
      %v2366 = vmax.f32 %v2132, 0.0
      %v2367 = vmax.f32 %v2137, 0.0
      %v2368 = vmax.f32 %v2140, 0.0
      %v2369 = vmax.f32 %v2145, 0.0
      %v2370 = vmax.f32 %v2148, 0.0
      %v2371 = vmax.f32 %v2153, 0.0
      %v2372 = vmax.f32 %v2156, 0.0
      %v2373 = vmax.f32 %v2161, 0.0
      %v2374 = vmax.f32 %v2164, 0.0
      %v2375 = vmax.f32 %v2169, 0.0
      %v2376 = vmax.f32 %v2172, 0.0
      %v2377 = vmax.f32 %v2177, 0.0
      %v2378 = vmax.f32 %v2180, 0.0
      %v2379 = vmax.f32 %v2185, 0.0
      %v2380 = vmax.f32 %v2188, 0.0
      %v2381 = vmax.f32 %v2193, 0.0
      %v2382 = vmax.f32 %v2196, 0.0
      %v2383 = vmax.f32 %v2201, 0.0
      %v2384 = vmax.f32 %v2204, 0.0
      %v2385 = vmax.f32 %v2209, 0.0
      %v2386 = vmax.f32 %v2212, 0.0
      %v2387 = vmax.f32 %v2217, 0.0
      %v2388 = vmax.f32 %v2220, 0.0
      %v2389 = vmax.f32 %v2225, 0.0
      %v2390 = vmax.f32 %v2228, 0.0
      %v2391 = vmax.f32 %v2233, 0.0
      %v2392 = vmax.f32 %v2236, 0.0
      %v2393 = vmax.f32 %v2241, 0.0
      %v2394 = vmax.f32 %v2244, 0.0
      %v2395 = vmax.f32 %v2249, 0.0
      %v2396 = vmax.f32 %v2252, 0.0
      %v2397 = vmax.f32 %v2257, 0.0
      %v2398 = vmax.f32 %v2260, 0.0
      %v2399 = vmax.f32 %v2265, 0.0
      %v2400 = vmax.f32 %v2268, 0.0
      %v2401 = vmax.f32 %v2273, 0.0
      %v2402 = vmax.f32 %v2276, 0.0
      %v2403 = vmax.f32 %v2281, 0.0
      %v2404 = vmax.f32 %v2284, 0.0
      %v2405 = vmax.f32 %v2289, 0.0
      %v2406 = vmax.f32 %v2292, 0.0
      %v2407 = vmax.f32 %v2297, 0.0
      %v2408 = vmax.f32 %v2300, 0.0
      %v2409 = vmax.f32 %v2305, 0.0
      %v2410 = vmax.f32 %v2308, 0.0
      %v2411 = vmax.f32 %v2313, 0.0
      %v2412 = vmax.f32 %v2316, 0.0
      %v2413 = vmax.f32 %v2321, 0.0
      %v2414 = vmax.f32 %v2324, 0.0
      %v2415 = vmax.f32 %v2329, 0.0
      %v2416 = vmax.f32 %v2332, 0.0
      %v2417 = vmax.f32 %v2337, 0.0
      %v2418 = vmax.f32 %v2340, 0.0
      %v2419 = vmax.f32 %v2345, 0.0
      %v2420 = vmax.f32 %v2348, 0.0
      %v2421 = vmax.f32 %v2353, 0.0
      %v2422 = vmax.f32 %v2356, 0.0
      %v2423 = vpack.c.bf16 %v2360, %v2359
      %v2424 = vpack.c.bf16 %v2362, %v2361
      %v2425 = vpack.c.bf16 %v2364, %v2363
      %v2426 = vpack.c.bf16 %v2366, %v2365
      %v2427 = vpack.c.bf16 %v2368, %v2367
      %v2428 = vpack.c.bf16 %v2370, %v2369
      %v2429 = vpack.c.bf16 %v2372, %v2371
      %v2430 = vpack.c.bf16 %v2374, %v2373
      %v2431 = vpack.c.bf16 %v2376, %v2375
      %v2432 = vpack.c.bf16 %v2378, %v2377
      %v2433 = vpack.c.bf16 %v2380, %v2379
      %v2434 = vpack.c.bf16 %v2382, %v2381
      %v2435 = vpack.c.bf16 %v2384, %v2383
      %v2436 = vpack.c.bf16 %v2386, %v2385
      %v2437 = vpack.c.bf16 %v2388, %v2387
      %v2438 = vpack.c.bf16 %v2390, %v2389
      %v2439 = vpack.c.bf16 %v2392, %v2391
      %v2440 = vpack.c.bf16 %v2394, %v2393
      %v2441 = vpack.c.bf16 %v2396, %v2395
      %v2442 = vpack.c.bf16 %v2398, %v2397
      %v2443 = vpack.c.bf16 %v2400, %v2399
      %v2444 = vpack.c.bf16 %v2402, %v2401
      %v2445 = vpack.c.bf16 %v2404, %v2403
      %v2446 = vpack.c.bf16 %v2406, %v2405
      %v2447 = vpack.c.bf16 %v2408, %v2407
      %v2448 = vpack.c.bf16 %v2410, %v2409
      %v2449 = vpack.c.bf16 %v2412, %v2411
      %v2450 = vpack.c.bf16 %v2414, %v2413
      %v2451 = vpack.c.bf16 %v2416, %v2415
      %v2452 = vpack.c.bf16 %v2418, %v2417
      %v2453 = vpack.c.bf16 %v2420, %v2419
      %v2454 = vpack.c.bf16 %v2422, %v2421
      %s2455 = scalar_lea.vmem %s3, 128
      %v2456 = vld [vmem:[%s2455] sm:$0xf]
      %v2457 = vld [vmem:[%s2455 + $0x4] sm:$0xf]
      %v2458 = vld [vmem:[%s2455 + $0x8] sm:$0xf]
      %v2459 = vld [vmem:[%s2455 + $0xc] sm:$0xf]
      %v2460 = vld [vmem:[%s2455 + $0x10] sm:$0xf]
      %v2461 = vld [vmem:[%s2455 + $0x14] sm:$0xf]
      %v2462 = vld [vmem:[%s2455 + $0x18] sm:$0xf]
      %v2463 = vld [vmem:[%s2455 + $0x1c] sm:$0xf]
      %v2464 = vld [vmem:[%s2455 + $0x20] sm:$0xf]
      %v2465 = vld [vmem:[%s2455 + $0x24] sm:$0xf]
      %v2466 = vld [vmem:[%s2455 + $0x28] sm:$0xf]
      %v2467 = vld [vmem:[%s2455 + $0x2c] sm:$0xf]
      %v2468 = vld [vmem:[%s2455 + $0x30] sm:$0xf]
      %v2469 = vld [vmem:[%s2455 + $0x34] sm:$0xf]
      %v2470 = vld [vmem:[%s2455 + $0x38] sm:$0xf]
      %v2471 = vld [vmem:[%s2455 + $0x3c] sm:$0xf]
      %s2472 = scalar_lea.vmem %s4, 2
      %v2473 = vld [vmem:[%s2472] sm:$0x1]
      %v2475 = vlaneseq
      %v2476 = vshrl.u32 %v2475, 7
      %v2477 = vsub.s32 0, %v2476
      %v2478 = vrot.slane %v2473, %v2477
      %v2496 = vunpack.c.l.b16 %v2456
      %v2497 = vunpack.c.l.b16 %v2457
      %v2498 = vunpack.c.l.b16 %v2458
      %v2499 = vunpack.c.l.b16 %v2459
      %v2500 = vunpack.c.l.b16 %v2460
      %v2501 = vunpack.c.l.b16 %v2461
      %v2502 = vunpack.c.l.b16 %v2462
      %v2503 = vunpack.c.l.b16 %v2463
      %v2504 = vunpack.c.l.b16 %v2464
      %v2505 = vunpack.c.l.b16 %v2465
      %v2506 = vunpack.c.l.b16 %v2466
      %v2507 = vunpack.c.l.b16 %v2467
      %v2508 = vunpack.c.l.b16 %v2468
      %v2509 = vunpack.c.l.b16 %v2469
      %v2510 = vunpack.c.l.b16 %v2470
      %v2511 = vunpack.c.l.b16 %v2471
      %v2512 = vpack.c.b16 %v2497, %v2496
      %v2513 = vpack.c.b16 %v2499, %v2498
      %v2514 = vpack.c.b16 %v2501, %v2500
      %v2515 = vpack.c.b16 %v2503, %v2502
      %v2516 = vpack.c.b16 %v2505, %v2504
      %v2517 = vpack.c.b16 %v2507, %v2506
      %v2518 = vpack.c.b16 %v2509, %v2508
      %v2519 = vpack.c.b16 %v2511, %v2510
      %2528 = vmatprep.subr.bf16.mxu0 0
      %2529 = vmatpush1.bf16.msra.mxu0 %v2519
      %2530 = vmatprep.subr.bf16.mxu0 0
      %2531 = vmatpush1.bf16.msra.mxu0 %v2518
      %2532 = vmatprep.subr.bf16.mxu0 0
      %2533 = vmatpush1.bf16.msra.mxu0 %v2517
      %2534 = vmatprep.subr.bf16.mxu0 0
      %2535 = vmatpush1.bf16.msra.mxu0 %v2516
      %2536 = vmatprep.subr.bf16.mxu0 0
      %2537 = vmatpush1.bf16.msra.mxu0 %v2515
      %2538 = vmatprep.subr.bf16.mxu0 0
      %2539 = vmatpush1.bf16.msra.mxu0 %v2514
      %2540 = vmatprep.subr.bf16.mxu0 0
      %2541 = vmatpush1.bf16.msra.mxu0 %v2513
      %2542 = vmatprep.subr.bf16.mxu0 0
      %2543 = vmatpush1.bf16.msra.mxu0 %v2512
      %2544 = vmatprep.subr.bf16.mxu0 0
      %2545 = vmatpush2.bf16.msra.mxu0 0
      %2546 = vmatprep.subr.bf16.mxu0 0
      %2547 = vmatpush2.bf16.msra.mxu0 0
      %2548 = vmatprep.subr.bf16.mxu0 0
      %2549 = vmatpush2.bf16.msra.mxu0 0
      %2550 = vmatprep.subr.bf16.mxu0 0
      %2551 = vmatpush2.bf16.msra.mxu0 0
      %2552 = vmatprep.subr.bf16.mxu0 0
      %2553 = vmatpush2.bf16.msra.mxu0 0
      %2554 = vmatprep.subr.bf16.mxu0 0
      %2555 = vmatpush2.bf16.msra.mxu0 0
      %2556 = vmatprep.subr.bf16.mxu0 0
      %2557 = vmatpush2.bf16.msra.mxu0 0
      %2558 = vmatprep.subr.bf16.mxu0 0
      %2559 = vmatpush2.bf16.msra.mxu0 0
      %2560 = vmatprep.mubr.bf16.mxu0 0
      %2561 = vmatmul.mubr.bf16.gmra.mxu0 %v2423
      %v2562 = vpop.f32.mrf.mxu0
      %v2563 = vadd.f32 %v2478, %v2562
      %v2564 = vpop.f32.mrf.mxu0
      %v2565 = vpop.f32.mrf.mxu0
      %v2566 = vadd.f32 %v2478, %v2565
      %v2567 = vpop.f32.mrf.mxu0
      %2568 = vmatprep.mubr.bf16.mxu0 0
      %2569 = vmatmul.mubr.bf16.gmra.mxu0 %v2424
      %v2570 = vpop.f32.mrf.mxu0
      %v2571 = vadd.f32 %v2478, %v2570
      %v2572 = vpop.f32.mrf.mxu0
      %v2573 = vpop.f32.mrf.mxu0
      %v2574 = vadd.f32 %v2478, %v2573
      %v2575 = vpop.f32.mrf.mxu0
      %2576 = vmatprep.mubr.bf16.mxu0 0
      %2577 = vmatmul.mubr.bf16.gmra.mxu0 %v2425
      %v2578 = vpop.f32.mrf.mxu0
      %v2579 = vadd.f32 %v2478, %v2578
      %v2580 = vpop.f32.mrf.mxu0
      %v2581 = vpop.f32.mrf.mxu0
      %v2582 = vadd.f32 %v2478, %v2581
      %v2583 = vpop.f32.mrf.mxu0
      %2584 = vmatprep.mubr.bf16.mxu0 0
      %2585 = vmatmul.mubr.bf16.gmra.mxu0 %v2426
      %v2586 = vpop.f32.mrf.mxu0
      %v2587 = vadd.f32 %v2478, %v2586
      %v2588 = vpop.f32.mrf.mxu0
      %v2589 = vpop.f32.mrf.mxu0
      %v2590 = vadd.f32 %v2478, %v2589
      %v2591 = vpop.f32.mrf.mxu0
      %2592 = vmatprep.mubr.bf16.mxu0 0
      %2593 = vmatmul.mubr.bf16.gmra.mxu0 %v2427
      %v2594 = vpop.f32.mrf.mxu0
      %v2595 = vadd.f32 %v2478, %v2594
      %v2596 = vpop.f32.mrf.mxu0
      %v2597 = vpop.f32.mrf.mxu0
      %v2598 = vadd.f32 %v2478, %v2597
      %v2599 = vpop.f32.mrf.mxu0
      %2600 = vmatprep.mubr.bf16.mxu0 0
      %2601 = vmatmul.mubr.bf16.gmra.mxu0 %v2428
      %v2602 = vpop.f32.mrf.mxu0
      %v2603 = vadd.f32 %v2478, %v2602
      %v2604 = vpop.f32.mrf.mxu0
      %v2605 = vpop.f32.mrf.mxu0
      %v2606 = vadd.f32 %v2478, %v2605
      %v2607 = vpop.f32.mrf.mxu0
      %2608 = vmatprep.mubr.bf16.mxu0 0
      %2609 = vmatmul.mubr.bf16.gmra.mxu0 %v2429
      %v2610 = vpop.f32.mrf.mxu0
      %v2611 = vadd.f32 %v2478, %v2610
      %v2612 = vpop.f32.mrf.mxu0
      %v2613 = vpop.f32.mrf.mxu0
      %v2614 = vadd.f32 %v2478, %v2613
      %v2615 = vpop.f32.mrf.mxu0
      %2616 = vmatprep.mubr.bf16.mxu0 0
      %2617 = vmatmul.mubr.bf16.gmra.mxu0 %v2430
      %v2618 = vpop.f32.mrf.mxu0
      %v2619 = vadd.f32 %v2478, %v2618
      %v2620 = vpop.f32.mrf.mxu0
      %v2621 = vpop.f32.mrf.mxu0
      %v2622 = vadd.f32 %v2478, %v2621
      %v2623 = vpop.f32.mrf.mxu0
      %2624 = vmatprep.mubr.bf16.mxu0 0
      %2625 = vmatmul.mubr.bf16.gmra.mxu0 %v2431
      %v2626 = vpop.f32.mrf.mxu0
      %v2627 = vadd.f32 %v2478, %v2626
      %v2628 = vpop.f32.mrf.mxu0
      %v2629 = vpop.f32.mrf.mxu0
      %v2630 = vadd.f32 %v2478, %v2629
      %v2631 = vpop.f32.mrf.mxu0
      %2632 = vmatprep.mubr.bf16.mxu0 0
      %2633 = vmatmul.mubr.bf16.gmra.mxu0 %v2432
      %v2634 = vpop.f32.mrf.mxu0
      %v2635 = vadd.f32 %v2478, %v2634
      %v2636 = vpop.f32.mrf.mxu0
      %v2637 = vpop.f32.mrf.mxu0
      %v2638 = vadd.f32 %v2478, %v2637
      %v2639 = vpop.f32.mrf.mxu0
      %2640 = vmatprep.mubr.bf16.mxu0 0
      %2641 = vmatmul.mubr.bf16.gmra.mxu0 %v2433
      %v2642 = vpop.f32.mrf.mxu0
      %v2643 = vadd.f32 %v2478, %v2642
      %v2644 = vpop.f32.mrf.mxu0
      %v2645 = vpop.f32.mrf.mxu0
      %v2646 = vadd.f32 %v2478, %v2645
      %v2647 = vpop.f32.mrf.mxu0
      %2648 = vmatprep.mubr.bf16.mxu0 0
      %2649 = vmatmul.mubr.bf16.gmra.mxu0 %v2434
      %v2650 = vpop.f32.mrf.mxu0
      %v2651 = vadd.f32 %v2478, %v2650
      %v2652 = vpop.f32.mrf.mxu0
      %v2653 = vpop.f32.mrf.mxu0
      %v2654 = vadd.f32 %v2478, %v2653
      %v2655 = vpop.f32.mrf.mxu0
      %2656 = vmatprep.mubr.bf16.mxu0 0
      %2657 = vmatmul.mubr.bf16.gmra.mxu0 %v2435
      %v2658 = vpop.f32.mrf.mxu0
      %v2659 = vadd.f32 %v2478, %v2658
      %v2660 = vpop.f32.mrf.mxu0
      %v2661 = vpop.f32.mrf.mxu0
      %v2662 = vadd.f32 %v2478, %v2661
      %v2663 = vpop.f32.mrf.mxu0
      %2664 = vmatprep.mubr.bf16.mxu0 0
      %2665 = vmatmul.mubr.bf16.gmra.mxu0 %v2436
      %v2666 = vpop.f32.mrf.mxu0
      %v2667 = vadd.f32 %v2478, %v2666
      %v2668 = vpop.f32.mrf.mxu0
      %v2669 = vpop.f32.mrf.mxu0
      %v2670 = vadd.f32 %v2478, %v2669
      %v2671 = vpop.f32.mrf.mxu0
      %2672 = vmatprep.mubr.bf16.mxu0 0
      %2673 = vmatmul.mubr.bf16.gmra.mxu0 %v2437
      %v2674 = vpop.f32.mrf.mxu0
      %v2675 = vadd.f32 %v2478, %v2674
      %v2676 = vpop.f32.mrf.mxu0
      %v2677 = vpop.f32.mrf.mxu0
      %v2678 = vadd.f32 %v2478, %v2677
      %v2679 = vpop.f32.mrf.mxu0
      %2680 = vmatprep.mubr.bf16.mxu0 0
      %2681 = vmatmul.mubr.bf16.gmra.mxu0 %v2438
      %v2682 = vpop.f32.mrf.mxu0
      %v2683 = vadd.f32 %v2478, %v2682
      %v2684 = vpop.f32.mrf.mxu0
      %v2685 = vpop.f32.mrf.mxu0
      %v2686 = vadd.f32 %v2478, %v2685
      %v2687 = vpop.f32.mrf.mxu0
      %2688 = vmatprep.mubr.bf16.mxu0 0
      %2689 = vmatmul.mubr.bf16.gmra.mxu0 %v2439
      %v2690 = vpop.f32.mrf.mxu0
      %v2691 = vadd.f32 %v2478, %v2690
      %v2692 = vpop.f32.mrf.mxu0
      %v2693 = vpop.f32.mrf.mxu0
      %v2694 = vadd.f32 %v2478, %v2693
      %v2695 = vpop.f32.mrf.mxu0
      %2696 = vmatprep.mubr.bf16.mxu0 0
      %2697 = vmatmul.mubr.bf16.gmra.mxu0 %v2440
      %v2698 = vpop.f32.mrf.mxu0
      %v2699 = vadd.f32 %v2478, %v2698
      %v2700 = vpop.f32.mrf.mxu0
      %v2701 = vpop.f32.mrf.mxu0
      %v2702 = vadd.f32 %v2478, %v2701
      %v2703 = vpop.f32.mrf.mxu0
      %2704 = vmatprep.mubr.bf16.mxu0 0
      %2705 = vmatmul.mubr.bf16.gmra.mxu0 %v2441
      %v2706 = vpop.f32.mrf.mxu0
      %v2707 = vadd.f32 %v2478, %v2706
      %v2708 = vpop.f32.mrf.mxu0
      %v2709 = vpop.f32.mrf.mxu0
      %v2710 = vadd.f32 %v2478, %v2709
      %v2711 = vpop.f32.mrf.mxu0
      %2712 = vmatprep.mubr.bf16.mxu0 0
      %2713 = vmatmul.mubr.bf16.gmra.mxu0 %v2442
      %v2714 = vpop.f32.mrf.mxu0
      %v2715 = vadd.f32 %v2478, %v2714
      %v2716 = vpop.f32.mrf.mxu0
      %v2717 = vpop.f32.mrf.mxu0
      %v2718 = vadd.f32 %v2478, %v2717
      %v2719 = vpop.f32.mrf.mxu0
      %2720 = vmatprep.mubr.bf16.mxu0 0
      %2721 = vmatmul.mubr.bf16.gmra.mxu0 %v2443
      %v2722 = vpop.f32.mrf.mxu0
      %v2723 = vadd.f32 %v2478, %v2722
      %v2724 = vpop.f32.mrf.mxu0
      %v2725 = vpop.f32.mrf.mxu0
      %v2726 = vadd.f32 %v2478, %v2725
      %v2727 = vpop.f32.mrf.mxu0
      %2728 = vmatprep.mubr.bf16.mxu0 0
      %2729 = vmatmul.mubr.bf16.gmra.mxu0 %v2444
      %v2730 = vpop.f32.mrf.mxu0
      %v2731 = vadd.f32 %v2478, %v2730
      %v2732 = vpop.f32.mrf.mxu0
      %v2733 = vpop.f32.mrf.mxu0
      %v2734 = vadd.f32 %v2478, %v2733
      %v2735 = vpop.f32.mrf.mxu0
      %2736 = vmatprep.mubr.bf16.mxu0 0
      %2737 = vmatmul.mubr.bf16.gmra.mxu0 %v2445
      %v2738 = vpop.f32.mrf.mxu0
      %v2739 = vadd.f32 %v2478, %v2738
      %v2740 = vpop.f32.mrf.mxu0
      %v2741 = vpop.f32.mrf.mxu0
      %v2742 = vadd.f32 %v2478, %v2741
      %v2743 = vpop.f32.mrf.mxu0
      %2744 = vmatprep.mubr.bf16.mxu0 0
      %2745 = vmatmul.mubr.bf16.gmra.mxu0 %v2446
      %v2746 = vpop.f32.mrf.mxu0
      %v2747 = vadd.f32 %v2478, %v2746
      %v2748 = vpop.f32.mrf.mxu0
      %v2749 = vpop.f32.mrf.mxu0
      %v2750 = vadd.f32 %v2478, %v2749
      %v2751 = vpop.f32.mrf.mxu0
      %2752 = vmatprep.mubr.bf16.mxu0 0
      %2753 = vmatmul.mubr.bf16.gmra.mxu0 %v2447
      %v2754 = vpop.f32.mrf.mxu0
      %v2755 = vadd.f32 %v2478, %v2754
      %v2756 = vpop.f32.mrf.mxu0
      %v2757 = vpop.f32.mrf.mxu0
      %v2758 = vadd.f32 %v2478, %v2757
      %v2759 = vpop.f32.mrf.mxu0
      %2760 = vmatprep.mubr.bf16.mxu0 0
      %2761 = vmatmul.mubr.bf16.gmra.mxu0 %v2448
      %v2762 = vpop.f32.mrf.mxu0
      %v2763 = vadd.f32 %v2478, %v2762
      %v2764 = vpop.f32.mrf.mxu0
      %v2765 = vpop.f32.mrf.mxu0
      %v2766 = vadd.f32 %v2478, %v2765
      %v2767 = vpop.f32.mrf.mxu0
      %2768 = vmatprep.mubr.bf16.mxu0 0
      %2769 = vmatmul.mubr.bf16.gmra.mxu0 %v2449
      %v2770 = vpop.f32.mrf.mxu0
      %v2771 = vadd.f32 %v2478, %v2770
      %v2772 = vpop.f32.mrf.mxu0
      %v2773 = vpop.f32.mrf.mxu0
      %v2774 = vadd.f32 %v2478, %v2773
      %v2775 = vpop.f32.mrf.mxu0
      %2776 = vmatprep.mubr.bf16.mxu0 0
      %2777 = vmatmul.mubr.bf16.gmra.mxu0 %v2450
      %v2778 = vpop.f32.mrf.mxu0
      %v2779 = vadd.f32 %v2478, %v2778
      %v2780 = vpop.f32.mrf.mxu0
      %v2781 = vpop.f32.mrf.mxu0
      %v2782 = vadd.f32 %v2478, %v2781
      %v2783 = vpop.f32.mrf.mxu0
      %2784 = vmatprep.mubr.bf16.mxu0 0
      %2785 = vmatmul.mubr.bf16.gmra.mxu0 %v2451
      %v2786 = vpop.f32.mrf.mxu0
      %v2787 = vadd.f32 %v2478, %v2786
      %v2788 = vpop.f32.mrf.mxu0
      %v2789 = vpop.f32.mrf.mxu0
      %v2790 = vadd.f32 %v2478, %v2789
      %v2791 = vpop.f32.mrf.mxu0
      %2792 = vmatprep.mubr.bf16.mxu0 0
      %2793 = vmatmul.mubr.bf16.gmra.mxu0 %v2452
      %v2794 = vpop.f32.mrf.mxu0
      %v2795 = vadd.f32 %v2478, %v2794
      %v2796 = vpop.f32.mrf.mxu0
      %v2797 = vpop.f32.mrf.mxu0
      %v2798 = vadd.f32 %v2478, %v2797
      %v2799 = vpop.f32.mrf.mxu0
      %2800 = vmatprep.mubr.bf16.mxu0 0
      %2801 = vmatmul.mubr.bf16.gmra.mxu0 %v2453
      %v2802 = vpop.f32.mrf.mxu0
      %v2803 = vadd.f32 %v2478, %v2802
      %v2804 = vpop.f32.mrf.mxu0
      %v2805 = vpop.f32.mrf.mxu0
      %v2806 = vadd.f32 %v2478, %v2805
      %v2807 = vpop.f32.mrf.mxu0
      %2808 = vmatprep.mubr.bf16.mxu0 0
      %2809 = vmatmul.mubr.bf16.gmra.mxu0 %v2454
      %v2810 = vpop.f32.mrf.mxu0
      %v2811 = vadd.f32 %v2478, %v2810
      %v2812 = vpop.f32.mrf.mxu0
      %v2813 = vpop.f32.mrf.mxu0
      %v2814 = vadd.f32 %v2478, %v2813
      %v2815 = vpop.f32.mrf.mxu0
      %2816 = vdwg.mxu0
      %v2817 = vmax.f32 %v2563, 0.0
      %v2818 = vmax.f32 %v2566, 0.0
      %v2819 = vmax.f32 %v2571, 0.0
      %v2820 = vmax.f32 %v2574, 0.0
      %v2821 = vmax.f32 %v2579, 0.0
      %v2822 = vmax.f32 %v2582, 0.0
      %v2823 = vmax.f32 %v2587, 0.0
      %v2824 = vmax.f32 %v2590, 0.0
      %v2825 = vmax.f32 %v2595, 0.0
      %v2826 = vmax.f32 %v2598, 0.0
      %v2827 = vmax.f32 %v2603, 0.0
      %v2828 = vmax.f32 %v2606, 0.0
      %v2829 = vmax.f32 %v2611, 0.0
      %v2830 = vmax.f32 %v2614, 0.0
      %v2831 = vmax.f32 %v2619, 0.0
      %v2832 = vmax.f32 %v2622, 0.0
      %v2833 = vmax.f32 %v2627, 0.0
      %v2834 = vmax.f32 %v2630, 0.0
      %v2835 = vmax.f32 %v2635, 0.0
      %v2836 = vmax.f32 %v2638, 0.0
      %v2837 = vmax.f32 %v2643, 0.0
      %v2838 = vmax.f32 %v2646, 0.0
      %v2839 = vmax.f32 %v2651, 0.0
      %v2840 = vmax.f32 %v2654, 0.0
      %v2841 = vmax.f32 %v2659, 0.0
      %v2842 = vmax.f32 %v2662, 0.0
      %v2843 = vmax.f32 %v2667, 0.0
      %v2844 = vmax.f32 %v2670, 0.0
      %v2845 = vmax.f32 %v2675, 0.0
      %v2846 = vmax.f32 %v2678, 0.0
      %v2847 = vmax.f32 %v2683, 0.0
      %v2848 = vmax.f32 %v2686, 0.0
      %v2849 = vmax.f32 %v2691, 0.0
      %v2850 = vmax.f32 %v2694, 0.0
      %v2851 = vmax.f32 %v2699, 0.0
      %v2852 = vmax.f32 %v2702, 0.0
      %v2853 = vmax.f32 %v2707, 0.0
      %v2854 = vmax.f32 %v2710, 0.0
      %v2855 = vmax.f32 %v2715, 0.0
      %v2856 = vmax.f32 %v2718, 0.0
      %v2857 = vmax.f32 %v2723, 0.0
      %v2858 = vmax.f32 %v2726, 0.0
      %v2859 = vmax.f32 %v2731, 0.0
      %v2860 = vmax.f32 %v2734, 0.0
      %v2861 = vmax.f32 %v2739, 0.0
      %v2862 = vmax.f32 %v2742, 0.0
      %v2863 = vmax.f32 %v2747, 0.0
      %v2864 = vmax.f32 %v2750, 0.0
      %v2865 = vmax.f32 %v2755, 0.0
      %v2866 = vmax.f32 %v2758, 0.0
      %v2867 = vmax.f32 %v2763, 0.0
      %v2868 = vmax.f32 %v2766, 0.0
      %v2869 = vmax.f32 %v2771, 0.0
      %v2870 = vmax.f32 %v2774, 0.0
      %v2871 = vmax.f32 %v2779, 0.0
      %v2872 = vmax.f32 %v2782, 0.0
      %v2873 = vmax.f32 %v2787, 0.0
      %v2874 = vmax.f32 %v2790, 0.0
      %v2875 = vmax.f32 %v2795, 0.0
      %v2876 = vmax.f32 %v2798, 0.0
      %v2877 = vmax.f32 %v2803, 0.0
      %v2878 = vmax.f32 %v2806, 0.0
      %v2879 = vmax.f32 %v2811, 0.0
      %v2880 = vmax.f32 %v2814, 0.0
      %v2881 = vpack.c.bf16 %v2818, %v2817
      %v2882 = vpack.c.bf16 %v2820, %v2819
      %v2883 = vpack.c.bf16 %v2822, %v2821
      %v2884 = vpack.c.bf16 %v2824, %v2823
      %v2885 = vpack.c.bf16 %v2826, %v2825
      %v2886 = vpack.c.bf16 %v2828, %v2827
      %v2887 = vpack.c.bf16 %v2830, %v2829
      %v2888 = vpack.c.bf16 %v2832, %v2831
      %v2889 = vpack.c.bf16 %v2834, %v2833
      %v2890 = vpack.c.bf16 %v2836, %v2835
      %v2891 = vpack.c.bf16 %v2838, %v2837
      %v2892 = vpack.c.bf16 %v2840, %v2839
      %v2893 = vpack.c.bf16 %v2842, %v2841
      %v2894 = vpack.c.bf16 %v2844, %v2843
      %v2895 = vpack.c.bf16 %v2846, %v2845
      %v2896 = vpack.c.bf16 %v2848, %v2847
      %v2897 = vpack.c.bf16 %v2850, %v2849
      %v2898 = vpack.c.bf16 %v2852, %v2851
      %v2899 = vpack.c.bf16 %v2854, %v2853
      %v2900 = vpack.c.bf16 %v2856, %v2855
      %v2901 = vpack.c.bf16 %v2858, %v2857
      %v2902 = vpack.c.bf16 %v2860, %v2859
      %v2903 = vpack.c.bf16 %v2862, %v2861
      %v2904 = vpack.c.bf16 %v2864, %v2863
      %v2905 = vpack.c.bf16 %v2866, %v2865
      %v2906 = vpack.c.bf16 %v2868, %v2867
      %v2907 = vpack.c.bf16 %v2870, %v2869
      %v2908 = vpack.c.bf16 %v2872, %v2871
      %v2909 = vpack.c.bf16 %v2874, %v2873
      %v2910 = vpack.c.bf16 %v2876, %v2875
      %v2911 = vpack.c.bf16 %v2878, %v2877
      %v2912 = vpack.c.bf16 %v2880, %v2879
      %s2913 = scalar_lea.vmem %s3, 192
      %v2914 = vld [vmem:[%s2913] sm:$0xf]
      %v2915 = vld [vmem:[%s2913 + $0x4] sm:$0xf]
      %v2916 = vld [vmem:[%s2913 + $0x8] sm:$0xf]
      %v2917 = vld [vmem:[%s2913 + $0xc] sm:$0xf]
      %v2918 = vld [vmem:[%s2913 + $0x10] sm:$0xf]
      %v2919 = vld [vmem:[%s2913 + $0x14] sm:$0xf]
      %v2920 = vld [vmem:[%s2913 + $0x18] sm:$0xf]
      %v2921 = vld [vmem:[%s2913 + $0x1c] sm:$0xf]
      %v2922 = vld [vmem:[%s2913 + $0x20] sm:$0xf]
      %v2923 = vld [vmem:[%s2913 + $0x24] sm:$0xf]
      %v2924 = vld [vmem:[%s2913 + $0x28] sm:$0xf]
      %v2925 = vld [vmem:[%s2913 + $0x2c] sm:$0xf]
      %v2926 = vld [vmem:[%s2913 + $0x30] sm:$0xf]
      %v2927 = vld [vmem:[%s2913 + $0x34] sm:$0xf]
      %v2928 = vld [vmem:[%s2913 + $0x38] sm:$0xf]
      %v2929 = vld [vmem:[%s2913 + $0x3c] sm:$0xf]
      %s2930 = scalar_lea.vmem %s4, 3
      %v2931 = vld [vmem:[%s2930] sm:$0x1]
      %v2933 = vlaneseq
      %v2934 = vshrl.u32 %v2933, 7
      %v2935 = vsub.s32 0, %v2934
      %v2936 = vrot.slane %v2931, %v2935
      %v2954 = vunpack.c.l.b16 %v2914
      %v2955 = vunpack.c.l.b16 %v2915
      %v2956 = vunpack.c.l.b16 %v2916
      %v2957 = vunpack.c.l.b16 %v2917
      %v2958 = vunpack.c.l.b16 %v2918
      %v2959 = vunpack.c.l.b16 %v2919
      %v2960 = vunpack.c.l.b16 %v2920
      %v2961 = vunpack.c.l.b16 %v2921
      %v2962 = vunpack.c.l.b16 %v2922
      %v2963 = vunpack.c.l.b16 %v2923
      %v2964 = vunpack.c.l.b16 %v2924
      %v2965 = vunpack.c.l.b16 %v2925
      %v2966 = vunpack.c.l.b16 %v2926
      %v2967 = vunpack.c.l.b16 %v2927
      %v2968 = vunpack.c.l.b16 %v2928
      %v2969 = vunpack.c.l.b16 %v2929
      %v2970 = vpack.c.b16 %v2955, %v2954
      %v2971 = vpack.c.b16 %v2957, %v2956
      %v2972 = vpack.c.b16 %v2959, %v2958
      %v2973 = vpack.c.b16 %v2961, %v2960
      %v2974 = vpack.c.b16 %v2963, %v2962
      %v2975 = vpack.c.b16 %v2965, %v2964
      %v2976 = vpack.c.b16 %v2967, %v2966
      %v2977 = vpack.c.b16 %v2969, %v2968
      %2986 = vmatprep.subr.bf16.mxu0 0
      %2987 = vmatpush1.bf16.msra.mxu0 %v2977
      %2988 = vmatprep.subr.bf16.mxu0 0
      %2989 = vmatpush1.bf16.msra.mxu0 %v2976
      %2990 = vmatprep.subr.bf16.mxu0 0
      %2991 = vmatpush1.bf16.msra.mxu0 %v2975
      %2992 = vmatprep.subr.bf16.mxu0 0
      %2993 = vmatpush1.bf16.msra.mxu0 %v2974
      %2994 = vmatprep.subr.bf16.mxu0 0
      %2995 = vmatpush1.bf16.msra.mxu0 %v2973
      %2996 = vmatprep.subr.bf16.mxu0 0
      %2997 = vmatpush1.bf16.msra.mxu0 %v2972
      %2998 = vmatprep.subr.bf16.mxu0 0
      %2999 = vmatpush1.bf16.msra.mxu0 %v2971
      %3000 = vmatprep.subr.bf16.mxu0 0
      %3001 = vmatpush1.bf16.msra.mxu0 %v2970
      %3002 = vmatprep.subr.bf16.mxu0 0
      %3003 = vmatpush2.bf16.msra.mxu0 0
      %3004 = vmatprep.subr.bf16.mxu0 0
      %3005 = vmatpush2.bf16.msra.mxu0 0
      %3006 = vmatprep.subr.bf16.mxu0 0
      %3007 = vmatpush2.bf16.msra.mxu0 0
      %3008 = vmatprep.subr.bf16.mxu0 0
      %3009 = vmatpush2.bf16.msra.mxu0 0
      %3010 = vmatprep.subr.bf16.mxu0 0
      %3011 = vmatpush2.bf16.msra.mxu0 0
      %3012 = vmatprep.subr.bf16.mxu0 0
      %3013 = vmatpush2.bf16.msra.mxu0 0
      %3014 = vmatprep.subr.bf16.mxu0 0
      %3015 = vmatpush2.bf16.msra.mxu0 0
      %3016 = vmatprep.subr.bf16.mxu0 0
      %3017 = vmatpush2.bf16.msra.mxu0 0
      %3018 = vmatprep.mubr.bf16.mxu0 0
      %3019 = vmatmul.mubr.bf16.gmra.mxu0 %v2881
      %v3020 = vpop.f32.mrf.mxu0
      %v3021 = vadd.f32 %v2936, %v3020
      %v3022 = vpop.f32.mrf.mxu0
      %v3023 = vpop.f32.mrf.mxu0
      %v3024 = vadd.f32 %v2936, %v3023
      %v3025 = vpop.f32.mrf.mxu0
      %3026 = vmatprep.mubr.bf16.mxu0 0
      %3027 = vmatmul.mubr.bf16.gmra.mxu0 %v2882
      %v3028 = vpop.f32.mrf.mxu0
      %v3029 = vadd.f32 %v2936, %v3028
      %v3030 = vpop.f32.mrf.mxu0
      %v3031 = vpop.f32.mrf.mxu0
      %v3032 = vadd.f32 %v2936, %v3031
      %v3033 = vpop.f32.mrf.mxu0
      %3034 = vmatprep.mubr.bf16.mxu0 0
      %3035 = vmatmul.mubr.bf16.gmra.mxu0 %v2883
      %v3036 = vpop.f32.mrf.mxu0
      %v3037 = vadd.f32 %v2936, %v3036
      %v3038 = vpop.f32.mrf.mxu0
      %v3039 = vpop.f32.mrf.mxu0
      %v3040 = vadd.f32 %v2936, %v3039
      %v3041 = vpop.f32.mrf.mxu0
      %3042 = vmatprep.mubr.bf16.mxu0 0
      %3043 = vmatmul.mubr.bf16.gmra.mxu0 %v2884
      %v3044 = vpop.f32.mrf.mxu0
      %v3045 = vadd.f32 %v2936, %v3044
      %v3046 = vpop.f32.mrf.mxu0
      %v3047 = vpop.f32.mrf.mxu0
      %v3048 = vadd.f32 %v2936, %v3047
      %v3049 = vpop.f32.mrf.mxu0
      %3050 = vmatprep.mubr.bf16.mxu0 0
      %3051 = vmatmul.mubr.bf16.gmra.mxu0 %v2885
      %v3052 = vpop.f32.mrf.mxu0
      %v3053 = vadd.f32 %v2936, %v3052
      %v3054 = vpop.f32.mrf.mxu0
      %v3055 = vpop.f32.mrf.mxu0
      %v3056 = vadd.f32 %v2936, %v3055
      %v3057 = vpop.f32.mrf.mxu0
      %3058 = vmatprep.mubr.bf16.mxu0 0
      %3059 = vmatmul.mubr.bf16.gmra.mxu0 %v2886
      %v3060 = vpop.f32.mrf.mxu0
      %v3061 = vadd.f32 %v2936, %v3060
      %v3062 = vpop.f32.mrf.mxu0
      %v3063 = vpop.f32.mrf.mxu0
      %v3064 = vadd.f32 %v2936, %v3063
      %v3065 = vpop.f32.mrf.mxu0
      %3066 = vmatprep.mubr.bf16.mxu0 0
      %3067 = vmatmul.mubr.bf16.gmra.mxu0 %v2887
      %v3068 = vpop.f32.mrf.mxu0
      %v3069 = vadd.f32 %v2936, %v3068
      %v3070 = vpop.f32.mrf.mxu0
      %v3071 = vpop.f32.mrf.mxu0
      %v3072 = vadd.f32 %v2936, %v3071
      %v3073 = vpop.f32.mrf.mxu0
      %3074 = vmatprep.mubr.bf16.mxu0 0
      %3075 = vmatmul.mubr.bf16.gmra.mxu0 %v2888
      %v3076 = vpop.f32.mrf.mxu0
      %v3077 = vadd.f32 %v2936, %v3076
      %v3078 = vpop.f32.mrf.mxu0
      %v3079 = vpop.f32.mrf.mxu0
      %v3080 = vadd.f32 %v2936, %v3079
      %v3081 = vpop.f32.mrf.mxu0
      %3082 = vmatprep.mubr.bf16.mxu0 0
      %3083 = vmatmul.mubr.bf16.gmra.mxu0 %v2889
      %v3084 = vpop.f32.mrf.mxu0
      %v3085 = vadd.f32 %v2936, %v3084
      %v3086 = vpop.f32.mrf.mxu0
      %v3087 = vpop.f32.mrf.mxu0
      %v3088 = vadd.f32 %v2936, %v3087
      %v3089 = vpop.f32.mrf.mxu0
      %3090 = vmatprep.mubr.bf16.mxu0 0
      %3091 = vmatmul.mubr.bf16.gmra.mxu0 %v2890
      %v3092 = vpop.f32.mrf.mxu0
      %v3093 = vadd.f32 %v2936, %v3092
      %v3094 = vpop.f32.mrf.mxu0
      %v3095 = vpop.f32.mrf.mxu0
      %v3096 = vadd.f32 %v2936, %v3095
      %v3097 = vpop.f32.mrf.mxu0
      %3098 = vmatprep.mubr.bf16.mxu0 0
      %3099 = vmatmul.mubr.bf16.gmra.mxu0 %v2891
      %v3100 = vpop.f32.mrf.mxu0
      %v3101 = vadd.f32 %v2936, %v3100
      %v3102 = vpop.f32.mrf.mxu0
      %v3103 = vpop.f32.mrf.mxu0
      %v3104 = vadd.f32 %v2936, %v3103
      %v3105 = vpop.f32.mrf.mxu0
      %3106 = vmatprep.mubr.bf16.mxu0 0
      %3107 = vmatmul.mubr.bf16.gmra.mxu0 %v2892
      %v3108 = vpop.f32.mrf.mxu0
      %v3109 = vadd.f32 %v2936, %v3108
      %v3110 = vpop.f32.mrf.mxu0
      %v3111 = vpop.f32.mrf.mxu0
      %v3112 = vadd.f32 %v2936, %v3111
      %v3113 = vpop.f32.mrf.mxu0
      %3114 = vmatprep.mubr.bf16.mxu0 0
      %3115 = vmatmul.mubr.bf16.gmra.mxu0 %v2893
      %v3116 = vpop.f32.mrf.mxu0
      %v3117 = vadd.f32 %v2936, %v3116
      %v3118 = vpop.f32.mrf.mxu0
      %v3119 = vpop.f32.mrf.mxu0
      %v3120 = vadd.f32 %v2936, %v3119
      %v3121 = vpop.f32.mrf.mxu0
      %3122 = vmatprep.mubr.bf16.mxu0 0
      %3123 = vmatmul.mubr.bf16.gmra.mxu0 %v2894
      %v3124 = vpop.f32.mrf.mxu0
      %v3125 = vadd.f32 %v2936, %v3124
      %v3126 = vpop.f32.mrf.mxu0
      %v3127 = vpop.f32.mrf.mxu0
      %v3128 = vadd.f32 %v2936, %v3127
      %v3129 = vpop.f32.mrf.mxu0
      %3130 = vmatprep.mubr.bf16.mxu0 0
      %3131 = vmatmul.mubr.bf16.gmra.mxu0 %v2895
      %v3132 = vpop.f32.mrf.mxu0
      %v3133 = vadd.f32 %v2936, %v3132
      %v3134 = vpop.f32.mrf.mxu0
      %v3135 = vpop.f32.mrf.mxu0
      %v3136 = vadd.f32 %v2936, %v3135
      %v3137 = vpop.f32.mrf.mxu0
      %3138 = vmatprep.mubr.bf16.mxu0 0
      %3139 = vmatmul.mubr.bf16.gmra.mxu0 %v2896
      %v3140 = vpop.f32.mrf.mxu0
      %v3141 = vadd.f32 %v2936, %v3140
      %v3142 = vpop.f32.mrf.mxu0
      %v3143 = vpop.f32.mrf.mxu0
      %v3144 = vadd.f32 %v2936, %v3143
      %v3145 = vpop.f32.mrf.mxu0
      %3146 = vmatprep.mubr.bf16.mxu0 0
      %3147 = vmatmul.mubr.bf16.gmra.mxu0 %v2897
      %v3148 = vpop.f32.mrf.mxu0
      %v3149 = vadd.f32 %v2936, %v3148
      %v3150 = vpop.f32.mrf.mxu0
      %v3151 = vpop.f32.mrf.mxu0
      %v3152 = vadd.f32 %v2936, %v3151
      %v3153 = vpop.f32.mrf.mxu0
      %3154 = vmatprep.mubr.bf16.mxu0 0
      %3155 = vmatmul.mubr.bf16.gmra.mxu0 %v2898
      %v3156 = vpop.f32.mrf.mxu0
      %v3157 = vadd.f32 %v2936, %v3156
      %v3158 = vpop.f32.mrf.mxu0
      %v3159 = vpop.f32.mrf.mxu0
      %v3160 = vadd.f32 %v2936, %v3159
      %v3161 = vpop.f32.mrf.mxu0
      %3162 = vmatprep.mubr.bf16.mxu0 0
      %3163 = vmatmul.mubr.bf16.gmra.mxu0 %v2899
      %v3164 = vpop.f32.mrf.mxu0
      %v3165 = vadd.f32 %v2936, %v3164
      %v3166 = vpop.f32.mrf.mxu0
      %v3167 = vpop.f32.mrf.mxu0
      %v3168 = vadd.f32 %v2936, %v3167
      %v3169 = vpop.f32.mrf.mxu0
      %3170 = vmatprep.mubr.bf16.mxu0 0
      %3171 = vmatmul.mubr.bf16.gmra.mxu0 %v2900
      %v3172 = vpop.f32.mrf.mxu0
      %v3173 = vadd.f32 %v2936, %v3172
      %v3174 = vpop.f32.mrf.mxu0
      %v3175 = vpop.f32.mrf.mxu0
      %v3176 = vadd.f32 %v2936, %v3175
      %v3177 = vpop.f32.mrf.mxu0
      %3178 = vmatprep.mubr.bf16.mxu0 0
      %3179 = vmatmul.mubr.bf16.gmra.mxu0 %v2901
      %v3180 = vpop.f32.mrf.mxu0
      %v3181 = vadd.f32 %v2936, %v3180
      %v3182 = vpop.f32.mrf.mxu0
      %v3183 = vpop.f32.mrf.mxu0
      %v3184 = vadd.f32 %v2936, %v3183
      %v3185 = vpop.f32.mrf.mxu0
      %3186 = vmatprep.mubr.bf16.mxu0 0
      %3187 = vmatmul.mubr.bf16.gmra.mxu0 %v2902
      %v3188 = vpop.f32.mrf.mxu0
      %v3189 = vadd.f32 %v2936, %v3188
      %v3190 = vpop.f32.mrf.mxu0
      %v3191 = vpop.f32.mrf.mxu0
      %v3192 = vadd.f32 %v2936, %v3191
      %v3193 = vpop.f32.mrf.mxu0
      %3194 = vmatprep.mubr.bf16.mxu0 0
      %3195 = vmatmul.mubr.bf16.gmra.mxu0 %v2903
      %v3196 = vpop.f32.mrf.mxu0
      %v3197 = vadd.f32 %v2936, %v3196
      %v3198 = vpop.f32.mrf.mxu0
      %v3199 = vpop.f32.mrf.mxu0
      %v3200 = vadd.f32 %v2936, %v3199
      %v3201 = vpop.f32.mrf.mxu0
      %3202 = vmatprep.mubr.bf16.mxu0 0
      %3203 = vmatmul.mubr.bf16.gmra.mxu0 %v2904
      %v3204 = vpop.f32.mrf.mxu0
      %v3205 = vadd.f32 %v2936, %v3204
      %v3206 = vpop.f32.mrf.mxu0
      %v3207 = vpop.f32.mrf.mxu0
      %v3208 = vadd.f32 %v2936, %v3207
      %v3209 = vpop.f32.mrf.mxu0
      %3210 = vmatprep.mubr.bf16.mxu0 0
      %3211 = vmatmul.mubr.bf16.gmra.mxu0 %v2905
      %v3212 = vpop.f32.mrf.mxu0
      %v3213 = vadd.f32 %v2936, %v3212
      %v3214 = vpop.f32.mrf.mxu0
      %v3215 = vpop.f32.mrf.mxu0
      %v3216 = vadd.f32 %v2936, %v3215
      %v3217 = vpop.f32.mrf.mxu0
      %3218 = vmatprep.mubr.bf16.mxu0 0
      %3219 = vmatmul.mubr.bf16.gmra.mxu0 %v2906
      %v3220 = vpop.f32.mrf.mxu0
      %v3221 = vadd.f32 %v2936, %v3220
      %v3222 = vpop.f32.mrf.mxu0
      %v3223 = vpop.f32.mrf.mxu0
      %v3224 = vadd.f32 %v2936, %v3223
      %v3225 = vpop.f32.mrf.mxu0
      %3226 = vmatprep.mubr.bf16.mxu0 0
      %3227 = vmatmul.mubr.bf16.gmra.mxu0 %v2907
      %v3228 = vpop.f32.mrf.mxu0
      %v3229 = vadd.f32 %v2936, %v3228
      %v3230 = vpop.f32.mrf.mxu0
      %v3231 = vpop.f32.mrf.mxu0
      %v3232 = vadd.f32 %v2936, %v3231
      %v3233 = vpop.f32.mrf.mxu0
      %3234 = vmatprep.mubr.bf16.mxu0 0
      %3235 = vmatmul.mubr.bf16.gmra.mxu0 %v2908
      %v3236 = vpop.f32.mrf.mxu0
      %v3237 = vadd.f32 %v2936, %v3236
      %v3238 = vpop.f32.mrf.mxu0
      %v3239 = vpop.f32.mrf.mxu0
      %v3240 = vadd.f32 %v2936, %v3239
      %v3241 = vpop.f32.mrf.mxu0
      %3242 = vmatprep.mubr.bf16.mxu0 0
      %3243 = vmatmul.mubr.bf16.gmra.mxu0 %v2909
      %v3244 = vpop.f32.mrf.mxu0
      %v3245 = vadd.f32 %v2936, %v3244
      %v3246 = vpop.f32.mrf.mxu0
      %v3247 = vpop.f32.mrf.mxu0
      %v3248 = vadd.f32 %v2936, %v3247
      %v3249 = vpop.f32.mrf.mxu0
      %3250 = vmatprep.mubr.bf16.mxu0 0
      %3251 = vmatmul.mubr.bf16.gmra.mxu0 %v2910
      %v3252 = vpop.f32.mrf.mxu0
      %v3253 = vadd.f32 %v2936, %v3252
      %v3254 = vpop.f32.mrf.mxu0
      %v3255 = vpop.f32.mrf.mxu0
      %v3256 = vadd.f32 %v2936, %v3255
      %v3257 = vpop.f32.mrf.mxu0
      %3258 = vmatprep.mubr.bf16.mxu0 0
      %3259 = vmatmul.mubr.bf16.gmra.mxu0 %v2911
      %v3260 = vpop.f32.mrf.mxu0
      %v3261 = vadd.f32 %v2936, %v3260
      %v3262 = vpop.f32.mrf.mxu0
      %v3263 = vpop.f32.mrf.mxu0
      %v3264 = vadd.f32 %v2936, %v3263
      %v3265 = vpop.f32.mrf.mxu0
      %3266 = vmatprep.mubr.bf16.mxu0 0
      %3267 = vmatmul.mubr.bf16.gmra.mxu0 %v2912
      %v3268 = vpop.f32.mrf.mxu0
      %v3269 = vadd.f32 %v2936, %v3268
      %v3270 = vpop.f32.mrf.mxu0
      %v3271 = vpop.f32.mrf.mxu0
      %v3272 = vadd.f32 %v2936, %v3271
      %v3273 = vpop.f32.mrf.mxu0
      %3274 = vdwg.mxu0
      %v3275 = vmax.f32 %v3021, 0.0
      %v3276 = vmax.f32 %v3024, 0.0
      %v3277 = vmax.f32 %v3029, 0.0
      %v3278 = vmax.f32 %v3032, 0.0
      %v3279 = vmax.f32 %v3037, 0.0
      %v3280 = vmax.f32 %v3040, 0.0
      %v3281 = vmax.f32 %v3045, 0.0
      %v3282 = vmax.f32 %v3048, 0.0
      %v3283 = vmax.f32 %v3053, 0.0
      %v3284 = vmax.f32 %v3056, 0.0
      %v3285 = vmax.f32 %v3061, 0.0
      %v3286 = vmax.f32 %v3064, 0.0
      %v3287 = vmax.f32 %v3069, 0.0
      %v3288 = vmax.f32 %v3072, 0.0
      %v3289 = vmax.f32 %v3077, 0.0
      %v3290 = vmax.f32 %v3080, 0.0
      %v3291 = vmax.f32 %v3085, 0.0
      %v3292 = vmax.f32 %v3088, 0.0
      %v3293 = vmax.f32 %v3093, 0.0
      %v3294 = vmax.f32 %v3096, 0.0
      %v3295 = vmax.f32 %v3101, 0.0
      %v3296 = vmax.f32 %v3104, 0.0
      %v3297 = vmax.f32 %v3109, 0.0
      %v3298 = vmax.f32 %v3112, 0.0
      %v3299 = vmax.f32 %v3117, 0.0
      %v3300 = vmax.f32 %v3120, 0.0
      %v3301 = vmax.f32 %v3125, 0.0
      %v3302 = vmax.f32 %v3128, 0.0
      %v3303 = vmax.f32 %v3133, 0.0
      %v3304 = vmax.f32 %v3136, 0.0
      %v3305 = vmax.f32 %v3141, 0.0
      %v3306 = vmax.f32 %v3144, 0.0
      %v3307 = vmax.f32 %v3149, 0.0
      %v3308 = vmax.f32 %v3152, 0.0
      %v3309 = vmax.f32 %v3157, 0.0
      %v3310 = vmax.f32 %v3160, 0.0
      %v3311 = vmax.f32 %v3165, 0.0
      %v3312 = vmax.f32 %v3168, 0.0
      %v3313 = vmax.f32 %v3173, 0.0
      %v3314 = vmax.f32 %v3176, 0.0
      %v3315 = vmax.f32 %v3181, 0.0
      %v3316 = vmax.f32 %v3184, 0.0
      %v3317 = vmax.f32 %v3189, 0.0
      %v3318 = vmax.f32 %v3192, 0.0
      %v3319 = vmax.f32 %v3197, 0.0
      %v3320 = vmax.f32 %v3200, 0.0
      %v3321 = vmax.f32 %v3205, 0.0
      %v3322 = vmax.f32 %v3208, 0.0
      %v3323 = vmax.f32 %v3213, 0.0
      %v3324 = vmax.f32 %v3216, 0.0
      %v3325 = vmax.f32 %v3221, 0.0
      %v3326 = vmax.f32 %v3224, 0.0
      %v3327 = vmax.f32 %v3229, 0.0
      %v3328 = vmax.f32 %v3232, 0.0
      %v3329 = vmax.f32 %v3237, 0.0
      %v3330 = vmax.f32 %v3240, 0.0
      %v3331 = vmax.f32 %v3245, 0.0
      %v3332 = vmax.f32 %v3248, 0.0
      %v3333 = vmax.f32 %v3253, 0.0
      %v3334 = vmax.f32 %v3256, 0.0
      %v3335 = vmax.f32 %v3261, 0.0
      %v3336 = vmax.f32 %v3264, 0.0
      %v3337 = vmax.f32 %v3269, 0.0
      %v3338 = vmax.f32 %v3272, 0.0
      %v3339 = vpack.c.bf16 %v3276, %v3275
      %v3340 = vpack.c.bf16 %v3278, %v3277
      %v3341 = vpack.c.bf16 %v3280, %v3279
      %v3342 = vpack.c.bf16 %v3282, %v3281
      %v3343 = vpack.c.bf16 %v3284, %v3283
      %v3344 = vpack.c.bf16 %v3286, %v3285
      %v3345 = vpack.c.bf16 %v3288, %v3287
      %v3346 = vpack.c.bf16 %v3290, %v3289
      %v3347 = vpack.c.bf16 %v3292, %v3291
      %v3348 = vpack.c.bf16 %v3294, %v3293
      %v3349 = vpack.c.bf16 %v3296, %v3295
      %v3350 = vpack.c.bf16 %v3298, %v3297
      %v3351 = vpack.c.bf16 %v3300, %v3299
      %v3352 = vpack.c.bf16 %v3302, %v3301
      %v3353 = vpack.c.bf16 %v3304, %v3303
      %v3354 = vpack.c.bf16 %v3306, %v3305
      %v3355 = vpack.c.bf16 %v3308, %v3307
      %v3356 = vpack.c.bf16 %v3310, %v3309
      %v3357 = vpack.c.bf16 %v3312, %v3311
      %v3358 = vpack.c.bf16 %v3314, %v3313
      %v3359 = vpack.c.bf16 %v3316, %v3315
      %v3360 = vpack.c.bf16 %v3318, %v3317
      %v3361 = vpack.c.bf16 %v3320, %v3319
      %v3362 = vpack.c.bf16 %v3322, %v3321
      %v3363 = vpack.c.bf16 %v3324, %v3323
      %v3364 = vpack.c.bf16 %v3326, %v3325
      %v3365 = vpack.c.bf16 %v3328, %v3327
      %v3366 = vpack.c.bf16 %v3330, %v3329
      %v3367 = vpack.c.bf16 %v3332, %v3331
      %v3368 = vpack.c.bf16 %v3334, %v3333
      %v3369 = vpack.c.bf16 %v3336, %v3335
      %v3370 = vpack.c.bf16 %v3338, %v3337
      %s3371 = scalar_lea.vmem %s3, 256
      %v3372 = vld [vmem:[%s3371] sm:$0xf]
      %v3373 = vld [vmem:[%s3371 + $0x4] sm:$0xf]
      %v3374 = vld [vmem:[%s3371 + $0x8] sm:$0xf]
      %v3375 = vld [vmem:[%s3371 + $0xc] sm:$0xf]
      %v3376 = vld [vmem:[%s3371 + $0x10] sm:$0xf]
      %v3377 = vld [vmem:[%s3371 + $0x14] sm:$0xf]
      %v3378 = vld [vmem:[%s3371 + $0x18] sm:$0xf]
      %v3379 = vld [vmem:[%s3371 + $0x1c] sm:$0xf]
      %v3380 = vld [vmem:[%s3371 + $0x20] sm:$0xf]
      %v3381 = vld [vmem:[%s3371 + $0x24] sm:$0xf]
      %v3382 = vld [vmem:[%s3371 + $0x28] sm:$0xf]
      %v3383 = vld [vmem:[%s3371 + $0x2c] sm:$0xf]
      %v3384 = vld [vmem:[%s3371 + $0x30] sm:$0xf]
      %v3385 = vld [vmem:[%s3371 + $0x34] sm:$0xf]
      %v3386 = vld [vmem:[%s3371 + $0x38] sm:$0xf]
      %v3387 = vld [vmem:[%s3371 + $0x3c] sm:$0xf]
      %v3404 = vunpack.c.l.b16 %v3372
      %v3405 = vunpack.c.l.b16 %v3373
      %v3406 = vunpack.c.l.b16 %v3374
      %v3407 = vunpack.c.l.b16 %v3375
      %v3408 = vunpack.c.l.b16 %v3376
      %v3409 = vunpack.c.l.b16 %v3377
      %v3410 = vunpack.c.l.b16 %v3378
      %v3411 = vunpack.c.l.b16 %v3379
      %v3412 = vunpack.c.l.b16 %v3380
      %v3413 = vunpack.c.l.b16 %v3381
      %v3414 = vunpack.c.l.b16 %v3382
      %v3415 = vunpack.c.l.b16 %v3383
      %v3416 = vunpack.c.l.b16 %v3384
      %v3417 = vunpack.c.l.b16 %v3385
      %v3418 = vunpack.c.l.b16 %v3386
      %v3419 = vunpack.c.l.b16 %v3387
      %v3420 = vpack.c.b16 %v3405, %v3404
      %v3421 = vpack.c.b16 %v3407, %v3406
      %v3422 = vpack.c.b16 %v3409, %v3408
      %v3423 = vpack.c.b16 %v3411, %v3410
      %v3424 = vpack.c.b16 %v3413, %v3412
      %v3425 = vpack.c.b16 %v3415, %v3414
      %v3426 = vpack.c.b16 %v3417, %v3416
      %v3427 = vpack.c.b16 %v3419, %v3418
      %3436 = vmatprep.subr.bf16.mxu0 0
      %3437 = vmatpush1.bf16.msra.mxu0 %v3427
      %3438 = vmatprep.subr.bf16.mxu0 0
      %3439 = vmatpush1.bf16.msra.mxu0 %v3426
      %3440 = vmatprep.subr.bf16.mxu0 0
      %3441 = vmatpush1.bf16.msra.mxu0 %v3425
      %3442 = vmatprep.subr.bf16.mxu0 0
      %3443 = vmatpush1.bf16.msra.mxu0 %v3424
      %3444 = vmatprep.subr.bf16.mxu0 0
      %3445 = vmatpush1.bf16.msra.mxu0 %v3423
      %3446 = vmatprep.subr.bf16.mxu0 0
      %3447 = vmatpush1.bf16.msra.mxu0 %v3422
      %3448 = vmatprep.subr.bf16.mxu0 0
      %3449 = vmatpush1.bf16.msra.mxu0 %v3421
      %3450 = vmatprep.subr.bf16.mxu0 0
      %3451 = vmatpush1.bf16.msra.mxu0 %v3420
      %3452 = vmatprep.subr.bf16.mxu0 0
      %3453 = vmatpush2.bf16.msra.mxu0 0
      %3454 = vmatprep.subr.bf16.mxu0 0
      %3455 = vmatpush2.bf16.msra.mxu0 0
      %3456 = vmatprep.subr.bf16.mxu0 0
      %3457 = vmatpush2.bf16.msra.mxu0 0
      %3458 = vmatprep.subr.bf16.mxu0 0
      %3459 = vmatpush2.bf16.msra.mxu0 0
      %3460 = vmatprep.subr.bf16.mxu0 0
      %3461 = vmatpush2.bf16.msra.mxu0 0
      %3462 = vmatprep.subr.bf16.mxu0 0
      %3463 = vmatpush2.bf16.msra.mxu0 0
      %3464 = vmatprep.subr.bf16.mxu0 0
      %3465 = vmatpush2.bf16.msra.mxu0 0
      %3466 = vmatprep.subr.bf16.mxu0 0
      %3467 = vmatpush2.bf16.msra.mxu0 0
      %3468 = vmatprep.mubr.bf16.mxu0 0
      %3469 = vmatmul.mubr.bf16.gmra.mxu0 %v3339
      %v3470 = vpop.f32.mrf.mxu0
      %v3471 = vadd.f32 %v769, %v3470
      %v3472 = vpop.f32.mrf.mxu0
      %v3473 = vpop.f32.mrf.mxu0
      %v3474 = vadd.f32 %v773, %v3473
      %v3475 = vpop.f32.mrf.mxu0
      %3476 = vmatprep.mubr.bf16.mxu0 0
      %3477 = vmatmul.mubr.bf16.gmra.mxu0 %v3340
      %v3478 = vpop.f32.mrf.mxu0
      %v3479 = vadd.f32 %v779, %v3478
      %v3480 = vpop.f32.mrf.mxu0
      %v3481 = vpop.f32.mrf.mxu0
      %v3482 = vadd.f32 %v783, %v3481
      %v3483 = vpop.f32.mrf.mxu0
      %3484 = vmatprep.mubr.bf16.mxu0 0
      %3485 = vmatmul.mubr.bf16.gmra.mxu0 %v3341
      %v3486 = vpop.f32.mrf.mxu0
      %v3487 = vadd.f32 %v789, %v3486
      %v3488 = vpop.f32.mrf.mxu0
      %v3489 = vpop.f32.mrf.mxu0
      %v3490 = vadd.f32 %v793, %v3489
      %v3491 = vpop.f32.mrf.mxu0
      %3492 = vmatprep.mubr.bf16.mxu0 0
      %3493 = vmatmul.mubr.bf16.gmra.mxu0 %v3342
      %v3494 = vpop.f32.mrf.mxu0
      %v3495 = vadd.f32 %v799, %v3494
      %v3496 = vpop.f32.mrf.mxu0
      %v3497 = vpop.f32.mrf.mxu0
      %v3498 = vadd.f32 %v803, %v3497
      %v3499 = vpop.f32.mrf.mxu0
      %3500 = vmatprep.mubr.bf16.mxu0 0
      %3501 = vmatmul.mubr.bf16.gmra.mxu0 %v3343
      %v3502 = vpop.f32.mrf.mxu0
      %v3503 = vadd.f32 %v809, %v3502
      %v3504 = vpop.f32.mrf.mxu0
      %v3505 = vpop.f32.mrf.mxu0
      %v3506 = vadd.f32 %v813, %v3505
      %v3507 = vpop.f32.mrf.mxu0
      %3508 = vmatprep.mubr.bf16.mxu0 0
      %3509 = vmatmul.mubr.bf16.gmra.mxu0 %v3344
      %v3510 = vpop.f32.mrf.mxu0
      %v3511 = vadd.f32 %v819, %v3510
      %v3512 = vpop.f32.mrf.mxu0
      %v3513 = vpop.f32.mrf.mxu0
      %v3514 = vadd.f32 %v823, %v3513
      %v3515 = vpop.f32.mrf.mxu0
      %3516 = vmatprep.mubr.bf16.mxu0 0
      %3517 = vmatmul.mubr.bf16.gmra.mxu0 %v3345
      %v3518 = vpop.f32.mrf.mxu0
      %v3519 = vadd.f32 %v829, %v3518
      %v3520 = vpop.f32.mrf.mxu0
      %v3521 = vpop.f32.mrf.mxu0
      %v3522 = vadd.f32 %v833, %v3521
      %v3523 = vpop.f32.mrf.mxu0
      %3524 = vmatprep.mubr.bf16.mxu0 0
      %3525 = vmatmul.mubr.bf16.gmra.mxu0 %v3346
      %v3526 = vpop.f32.mrf.mxu0
      %v3527 = vadd.f32 %v839, %v3526
      %v3528 = vpop.f32.mrf.mxu0
      %v3529 = vpop.f32.mrf.mxu0
      %v3530 = vadd.f32 %v843, %v3529
      %v3531 = vpop.f32.mrf.mxu0
      %3532 = vmatprep.mubr.bf16.mxu0 0
      %3533 = vmatmul.mubr.bf16.gmra.mxu0 %v3347
      %v3534 = vpop.f32.mrf.mxu0
      %v3535 = vadd.f32 %v849, %v3534
      %v3536 = vpop.f32.mrf.mxu0
      %v3537 = vpop.f32.mrf.mxu0
      %v3538 = vadd.f32 %v853, %v3537
      %v3539 = vpop.f32.mrf.mxu0
      %3540 = vmatprep.mubr.bf16.mxu0 0
      %3541 = vmatmul.mubr.bf16.gmra.mxu0 %v3348
      %v3542 = vpop.f32.mrf.mxu0
      %v3543 = vadd.f32 %v859, %v3542
      %v3544 = vpop.f32.mrf.mxu0
      %v3545 = vpop.f32.mrf.mxu0
      %v3546 = vadd.f32 %v863, %v3545
      %v3547 = vpop.f32.mrf.mxu0
      %3548 = vmatprep.mubr.bf16.mxu0 0
      %3549 = vmatmul.mubr.bf16.gmra.mxu0 %v3349
      %v3550 = vpop.f32.mrf.mxu0
      %v3551 = vadd.f32 %v869, %v3550
      %v3552 = vpop.f32.mrf.mxu0
      %v3553 = vpop.f32.mrf.mxu0
      %v3554 = vadd.f32 %v873, %v3553
      %v3555 = vpop.f32.mrf.mxu0
      %3556 = vmatprep.mubr.bf16.mxu0 0
      %3557 = vmatmul.mubr.bf16.gmra.mxu0 %v3350
      %v3558 = vpop.f32.mrf.mxu0
      %v3559 = vadd.f32 %v879, %v3558
      %v3560 = vpop.f32.mrf.mxu0
      %v3561 = vpop.f32.mrf.mxu0
      %v3562 = vadd.f32 %v883, %v3561
      %v3563 = vpop.f32.mrf.mxu0
      %3564 = vmatprep.mubr.bf16.mxu0 0
      %3565 = vmatmul.mubr.bf16.gmra.mxu0 %v3351
      %v3566 = vpop.f32.mrf.mxu0
      %v3567 = vadd.f32 %v889, %v3566
      %v3568 = vpop.f32.mrf.mxu0
      %v3569 = vpop.f32.mrf.mxu0
      %v3570 = vadd.f32 %v893, %v3569
      %v3571 = vpop.f32.mrf.mxu0
      %3572 = vmatprep.mubr.bf16.mxu0 0
      %3573 = vmatmul.mubr.bf16.gmra.mxu0 %v3352
      %v3574 = vpop.f32.mrf.mxu0
      %v3575 = vadd.f32 %v899, %v3574
      %v3576 = vpop.f32.mrf.mxu0
      %v3577 = vpop.f32.mrf.mxu0
      %v3578 = vadd.f32 %v903, %v3577
      %v3579 = vpop.f32.mrf.mxu0
      %3580 = vmatprep.mubr.bf16.mxu0 0
      %3581 = vmatmul.mubr.bf16.gmra.mxu0 %v3353
      %v3582 = vpop.f32.mrf.mxu0
      %v3583 = vadd.f32 %v909, %v3582
      %v3584 = vpop.f32.mrf.mxu0
      %v3585 = vpop.f32.mrf.mxu0
      %v3586 = vadd.f32 %v913, %v3585
      %v3587 = vpop.f32.mrf.mxu0
      %3588 = vmatprep.mubr.bf16.mxu0 0
      %3589 = vmatmul.mubr.bf16.gmra.mxu0 %v3354
      %v3590 = vpop.f32.mrf.mxu0
      %v3591 = vadd.f32 %v919, %v3590
      %v3592 = vpop.f32.mrf.mxu0
      %v3593 = vpop.f32.mrf.mxu0
      %v3594 = vadd.f32 %v923, %v3593
      %v3595 = vpop.f32.mrf.mxu0
      %3596 = vmatprep.mubr.bf16.mxu0 0
      %3597 = vmatmul.mubr.bf16.gmra.mxu0 %v3355
      %v3598 = vpop.f32.mrf.mxu0
      %v3599 = vadd.f32 %v929, %v3598
      %v3600 = vpop.f32.mrf.mxu0
      %v3601 = vpop.f32.mrf.mxu0
      %v3602 = vadd.f32 %v933, %v3601
      %v3603 = vpop.f32.mrf.mxu0
      %3604 = vmatprep.mubr.bf16.mxu0 0
      %3605 = vmatmul.mubr.bf16.gmra.mxu0 %v3356
      %v3606 = vpop.f32.mrf.mxu0
      %v3607 = vadd.f32 %v939, %v3606
      %v3608 = vpop.f32.mrf.mxu0
      %v3609 = vpop.f32.mrf.mxu0
      %v3610 = vadd.f32 %v943, %v3609
      %v3611 = vpop.f32.mrf.mxu0
      %3612 = vmatprep.mubr.bf16.mxu0 0
      %3613 = vmatmul.mubr.bf16.gmra.mxu0 %v3357
      %v3614 = vpop.f32.mrf.mxu0
      %v3615 = vadd.f32 %v949, %v3614
      %v3616 = vpop.f32.mrf.mxu0
      %v3617 = vpop.f32.mrf.mxu0
      %v3618 = vadd.f32 %v953, %v3617
      %v3619 = vpop.f32.mrf.mxu0
      %3620 = vmatprep.mubr.bf16.mxu0 0
      %3621 = vmatmul.mubr.bf16.gmra.mxu0 %v3358
      %v3622 = vpop.f32.mrf.mxu0
      %v3623 = vadd.f32 %v959, %v3622
      %v3624 = vpop.f32.mrf.mxu0
      %v3625 = vpop.f32.mrf.mxu0
      %v3626 = vadd.f32 %v963, %v3625
      %v3627 = vpop.f32.mrf.mxu0
      %3628 = vmatprep.mubr.bf16.mxu0 0
      %3629 = vmatmul.mubr.bf16.gmra.mxu0 %v3359
      %v3630 = vpop.f32.mrf.mxu0
      %v3631 = vadd.f32 %v969, %v3630
      %v3632 = vpop.f32.mrf.mxu0
      %v3633 = vpop.f32.mrf.mxu0
      %v3634 = vadd.f32 %v973, %v3633
      %v3635 = vpop.f32.mrf.mxu0
      %3636 = vmatprep.mubr.bf16.mxu0 0
      %3637 = vmatmul.mubr.bf16.gmra.mxu0 %v3360
      %v3638 = vpop.f32.mrf.mxu0
      %v3639 = vadd.f32 %v979, %v3638
      %v3640 = vpop.f32.mrf.mxu0
      %v3641 = vpop.f32.mrf.mxu0
      %v3642 = vadd.f32 %v983, %v3641
      %v3643 = vpop.f32.mrf.mxu0
      %3644 = vmatprep.mubr.bf16.mxu0 0
      %3645 = vmatmul.mubr.bf16.gmra.mxu0 %v3361
      %v3646 = vpop.f32.mrf.mxu0
      %v3647 = vadd.f32 %v989, %v3646
      %v3648 = vpop.f32.mrf.mxu0
      %v3649 = vpop.f32.mrf.mxu0
      %v3650 = vadd.f32 %v993, %v3649
      %v3651 = vpop.f32.mrf.mxu0
      %3652 = vmatprep.mubr.bf16.mxu0 0
      %3653 = vmatmul.mubr.bf16.gmra.mxu0 %v3362
      %v3654 = vpop.f32.mrf.mxu0
      %v3655 = vadd.f32 %v999, %v3654
      %v3656 = vpop.f32.mrf.mxu0
      %v3657 = vpop.f32.mrf.mxu0
      %v3658 = vadd.f32 %v1003, %v3657
      %v3659 = vpop.f32.mrf.mxu0
      %3660 = vmatprep.mubr.bf16.mxu0 0
      %3661 = vmatmul.mubr.bf16.gmra.mxu0 %v3363
      %v3662 = vpop.f32.mrf.mxu0
      %v3663 = vadd.f32 %v1009, %v3662
      %v3664 = vpop.f32.mrf.mxu0
      %v3665 = vpop.f32.mrf.mxu0
      %v3666 = vadd.f32 %v1013, %v3665
      %v3667 = vpop.f32.mrf.mxu0
      %3668 = vmatprep.mubr.bf16.mxu0 0
      %3669 = vmatmul.mubr.bf16.gmra.mxu0 %v3364
      %v3670 = vpop.f32.mrf.mxu0
      %v3671 = vadd.f32 %v1019, %v3670
      %v3672 = vpop.f32.mrf.mxu0
      %v3673 = vpop.f32.mrf.mxu0
      %v3674 = vadd.f32 %v1023, %v3673
      %v3675 = vpop.f32.mrf.mxu0
      %3676 = vmatprep.mubr.bf16.mxu0 0
      %3677 = vmatmul.mubr.bf16.gmra.mxu0 %v3365
      %v3678 = vpop.f32.mrf.mxu0
      %v3679 = vadd.f32 %v1029, %v3678
      %v3680 = vpop.f32.mrf.mxu0
      %v3681 = vpop.f32.mrf.mxu0
      %v3682 = vadd.f32 %v1033, %v3681
      %v3683 = vpop.f32.mrf.mxu0
      %3684 = vmatprep.mubr.bf16.mxu0 0
      %3685 = vmatmul.mubr.bf16.gmra.mxu0 %v3366
      %v3686 = vpop.f32.mrf.mxu0
      %v3687 = vadd.f32 %v1039, %v3686
      %v3688 = vpop.f32.mrf.mxu0
      %v3689 = vpop.f32.mrf.mxu0
      %v3690 = vadd.f32 %v1043, %v3689
      %v3691 = vpop.f32.mrf.mxu0
      %3692 = vmatprep.mubr.bf16.mxu0 0
      %3693 = vmatmul.mubr.bf16.gmra.mxu0 %v3367
      %v3694 = vpop.f32.mrf.mxu0
      %v3695 = vadd.f32 %v1049, %v3694
      %v3696 = vpop.f32.mrf.mxu0
      %v3697 = vpop.f32.mrf.mxu0
      %v3698 = vadd.f32 %v1053, %v3697
      %v3699 = vpop.f32.mrf.mxu0
      %3700 = vmatprep.mubr.bf16.mxu0 0
      %3701 = vmatmul.mubr.bf16.gmra.mxu0 %v3368
      %v3702 = vpop.f32.mrf.mxu0
      %v3703 = vadd.f32 %v1059, %v3702
      %v3704 = vpop.f32.mrf.mxu0
      %v3705 = vpop.f32.mrf.mxu0
      %v3706 = vadd.f32 %v1063, %v3705
      %v3707 = vpop.f32.mrf.mxu0
      %3708 = vmatprep.mubr.bf16.mxu0 0
      %3709 = vmatmul.mubr.bf16.gmra.mxu0 %v3369
      %v3710 = vpop.f32.mrf.mxu0
      %v3711 = vadd.f32 %v1069, %v3710
      %v3712 = vpop.f32.mrf.mxu0
      %v3713 = vpop.f32.mrf.mxu0
      %v3714 = vadd.f32 %v1073, %v3713
      %v3715 = vpop.f32.mrf.mxu0
      %3716 = vmatprep.mubr.bf16.mxu0 0
      %3717 = vmatmul.mubr.bf16.gmra.mxu0 %v3370
      %v3718 = vpop.f32.mrf.mxu0
      %v3719 = vadd.f32 %v1079, %v3718
      %v3720 = vpop.f32.mrf.mxu0
      %v3721 = vpop.f32.mrf.mxu0
      %v3722 = vadd.f32 %v1083, %v3721
      %v3723 = vpop.f32.mrf.mxu0
      %3724 = vdwg.mxu0
      %s3725 = scalar_lea.vmem %s4, 4
      %v3726 = vld [vmem:[%s3725] sm:$0x1]
      %v3728 = vlaneseq
      %v3729 = vshrl.u32 %v3728, 7
      %v3730 = vsub.s32 0, %v3729
      %v3731 = vrot.slane %v3726, %v3730
      %v3733 = vadd.f32 %v3471, %v3731
      %v3734 = vadd.f32 %v3474, %v3731
      %v3735 = vadd.f32 %v3479, %v3731
      %v3736 = vadd.f32 %v3482, %v3731
      %v3737 = vadd.f32 %v3487, %v3731
      %v3738 = vadd.f32 %v3490, %v3731
      %v3739 = vadd.f32 %v3495, %v3731
      %v3740 = vadd.f32 %v3498, %v3731
      %v3741 = vadd.f32 %v3503, %v3731
      %v3742 = vadd.f32 %v3506, %v3731
      %v3743 = vadd.f32 %v3511, %v3731
      %v3744 = vadd.f32 %v3514, %v3731
      %v3745 = vadd.f32 %v3519, %v3731
      %v3746 = vadd.f32 %v3522, %v3731
      %v3747 = vadd.f32 %v3527, %v3731
      %v3748 = vadd.f32 %v3530, %v3731
      %v3749 = vadd.f32 %v3535, %v3731
      %v3750 = vadd.f32 %v3538, %v3731
      %v3751 = vadd.f32 %v3543, %v3731
      %v3752 = vadd.f32 %v3546, %v3731
      %v3753 = vadd.f32 %v3551, %v3731
      %v3754 = vadd.f32 %v3554, %v3731
      %v3755 = vadd.f32 %v3559, %v3731
      %v3756 = vadd.f32 %v3562, %v3731
      %v3757 = vadd.f32 %v3567, %v3731
      %v3758 = vadd.f32 %v3570, %v3731
      %v3759 = vadd.f32 %v3575, %v3731
      %v3760 = vadd.f32 %v3578, %v3731
      %v3761 = vadd.f32 %v3583, %v3731
      %v3762 = vadd.f32 %v3586, %v3731
      %v3763 = vadd.f32 %v3591, %v3731
      %v3764 = vadd.f32 %v3594, %v3731
      %v3765 = vadd.f32 %v3599, %v3731
      %v3766 = vadd.f32 %v3602, %v3731
      %v3767 = vadd.f32 %v3607, %v3731
      %v3768 = vadd.f32 %v3610, %v3731
      %v3769 = vadd.f32 %v3615, %v3731
      %v3770 = vadd.f32 %v3618, %v3731
      %v3771 = vadd.f32 %v3623, %v3731
      %v3772 = vadd.f32 %v3626, %v3731
      %v3773 = vadd.f32 %v3631, %v3731
      %v3774 = vadd.f32 %v3634, %v3731
      %v3775 = vadd.f32 %v3639, %v3731
      %v3776 = vadd.f32 %v3642, %v3731
      %v3777 = vadd.f32 %v3647, %v3731
      %v3778 = vadd.f32 %v3650, %v3731
      %v3779 = vadd.f32 %v3655, %v3731
      %v3780 = vadd.f32 %v3658, %v3731
      %v3781 = vadd.f32 %v3663, %v3731
      %v3782 = vadd.f32 %v3666, %v3731
      %v3783 = vadd.f32 %v3671, %v3731
      %v3784 = vadd.f32 %v3674, %v3731
      %v3785 = vadd.f32 %v3679, %v3731
      %v3786 = vadd.f32 %v3682, %v3731
      %v3787 = vadd.f32 %v3687, %v3731
      %v3788 = vadd.f32 %v3690, %v3731
      %v3789 = vadd.f32 %v3695, %v3731
      %v3790 = vadd.f32 %v3698, %v3731
      %v3791 = vadd.f32 %v3703, %v3731
      %v3792 = vadd.f32 %v3706, %v3731
      %v3793 = vadd.f32 %v3711, %v3731
      %v3794 = vadd.f32 %v3714, %v3731
      %v3795 = vadd.f32 %v3719, %v3731
      %v3796 = vadd.f32 %v3722, %v3731
      %v3797 = vmax.f32 %v3733, 0.0
      %v3798 = vmax.f32 %v3734, 0.0
      %v3799 = vmax.f32 %v3735, 0.0
      %v3800 = vmax.f32 %v3736, 0.0
      %v3801 = vmax.f32 %v3737, 0.0
      %v3802 = vmax.f32 %v3738, 0.0
      %v3803 = vmax.f32 %v3739, 0.0
      %v3804 = vmax.f32 %v3740, 0.0
      %v3805 = vmax.f32 %v3741, 0.0
      %v3806 = vmax.f32 %v3742, 0.0
      %v3807 = vmax.f32 %v3743, 0.0
      %v3808 = vmax.f32 %v3744, 0.0
      %v3809 = vmax.f32 %v3745, 0.0
      %v3810 = vmax.f32 %v3746, 0.0
      %v3811 = vmax.f32 %v3747, 0.0
      %v3812 = vmax.f32 %v3748, 0.0
      %v3813 = vmax.f32 %v3749, 0.0
      %v3814 = vmax.f32 %v3750, 0.0
      %v3815 = vmax.f32 %v3751, 0.0
      %v3816 = vmax.f32 %v3752, 0.0
      %v3817 = vmax.f32 %v3753, 0.0
      %v3818 = vmax.f32 %v3754, 0.0
      %v3819 = vmax.f32 %v3755, 0.0
      %v3820 = vmax.f32 %v3756, 0.0
      %v3821 = vmax.f32 %v3757, 0.0
      %v3822 = vmax.f32 %v3758, 0.0
      %v3823 = vmax.f32 %v3759, 0.0
      %v3824 = vmax.f32 %v3760, 0.0
      %v3825 = vmax.f32 %v3761, 0.0
      %v3826 = vmax.f32 %v3762, 0.0
      %v3827 = vmax.f32 %v3763, 0.0
      %v3828 = vmax.f32 %v3764, 0.0
      %v3829 = vmax.f32 %v3765, 0.0
      %v3830 = vmax.f32 %v3766, 0.0
      %v3831 = vmax.f32 %v3767, 0.0
      %v3832 = vmax.f32 %v3768, 0.0
      %v3833 = vmax.f32 %v3769, 0.0
      %v3834 = vmax.f32 %v3770, 0.0
      %v3835 = vmax.f32 %v3771, 0.0
      %v3836 = vmax.f32 %v3772, 0.0
      %v3837 = vmax.f32 %v3773, 0.0
      %v3838 = vmax.f32 %v3774, 0.0
      %v3839 = vmax.f32 %v3775, 0.0
      %v3840 = vmax.f32 %v3776, 0.0
      %v3841 = vmax.f32 %v3777, 0.0
      %v3842 = vmax.f32 %v3778, 0.0
      %v3843 = vmax.f32 %v3779, 0.0
      %v3844 = vmax.f32 %v3780, 0.0
      %v3845 = vmax.f32 %v3781, 0.0
      %v3846 = vmax.f32 %v3782, 0.0
      %v3847 = vmax.f32 %v3783, 0.0
      %v3848 = vmax.f32 %v3784, 0.0
      %v3849 = vmax.f32 %v3785, 0.0
      %v3850 = vmax.f32 %v3786, 0.0
      %v3851 = vmax.f32 %v3787, 0.0
      %v3852 = vmax.f32 %v3788, 0.0
      %v3853 = vmax.f32 %v3789, 0.0
      %v3854 = vmax.f32 %v3790, 0.0
      %v3855 = vmax.f32 %v3791, 0.0
      %v3856 = vmax.f32 %v3792, 0.0
      %v3857 = vmax.f32 %v3793, 0.0
      %v3858 = vmax.f32 %v3794, 0.0
      %v3859 = vmax.f32 %v3795, 0.0
      %v3860 = vmax.f32 %v3796, 0.0
      %v3861 = vpack.c.bf16 %v3798, %v3797
      %v3862 = vpack.c.bf16 %v3800, %v3799
      %v3863 = vpack.c.bf16 %v3802, %v3801
      %v3864 = vpack.c.bf16 %v3804, %v3803
      %v3865 = vpack.c.bf16 %v3806, %v3805
      %v3866 = vpack.c.bf16 %v3808, %v3807
      %v3867 = vpack.c.bf16 %v3810, %v3809
      %v3868 = vpack.c.bf16 %v3812, %v3811
      %v3869 = vpack.c.bf16 %v3814, %v3813
      %v3870 = vpack.c.bf16 %v3816, %v3815
      %v3871 = vpack.c.bf16 %v3818, %v3817
      %v3872 = vpack.c.bf16 %v3820, %v3819
      %v3873 = vpack.c.bf16 %v3822, %v3821
      %v3874 = vpack.c.bf16 %v3824, %v3823
      %v3875 = vpack.c.bf16 %v3826, %v3825
      %v3876 = vpack.c.bf16 %v3828, %v3827
      %v3877 = vpack.c.bf16 %v3830, %v3829
      %v3878 = vpack.c.bf16 %v3832, %v3831
      %v3879 = vpack.c.bf16 %v3834, %v3833
      %v3880 = vpack.c.bf16 %v3836, %v3835
      %v3881 = vpack.c.bf16 %v3838, %v3837
      %v3882 = vpack.c.bf16 %v3840, %v3839
      %v3883 = vpack.c.bf16 %v3842, %v3841
      %v3884 = vpack.c.bf16 %v3844, %v3843
      %v3885 = vpack.c.bf16 %v3846, %v3845
      %v3886 = vpack.c.bf16 %v3848, %v3847
      %v3887 = vpack.c.bf16 %v3850, %v3849
      %v3888 = vpack.c.bf16 %v3852, %v3851
      %v3889 = vpack.c.bf16 %v3854, %v3853
      %v3890 = vpack.c.bf16 %v3856, %v3855
      %v3891 = vpack.c.bf16 %v3858, %v3857
      %v3892 = vpack.c.bf16 %v3860, %v3859
      %s3893 = scalar_lea.vmem %s3, 320
      %v3894 = vld [vmem:[%s3893] sm:$0xf]
      %v3895 = vld [vmem:[%s3893 + $0x4] sm:$0xf]
      %v3896 = vld [vmem:[%s3893 + $0x8] sm:$0xf]
      %v3897 = vld [vmem:[%s3893 + $0xc] sm:$0xf]
      %v3898 = vld [vmem:[%s3893 + $0x10] sm:$0xf]
      %v3899 = vld [vmem:[%s3893 + $0x14] sm:$0xf]
      %v3900 = vld [vmem:[%s3893 + $0x18] sm:$0xf]
      %v3901 = vld [vmem:[%s3893 + $0x1c] sm:$0xf]
      %v3902 = vld [vmem:[%s3893 + $0x20] sm:$0xf]
      %v3903 = vld [vmem:[%s3893 + $0x24] sm:$0xf]
      %v3904 = vld [vmem:[%s3893 + $0x28] sm:$0xf]
      %v3905 = vld [vmem:[%s3893 + $0x2c] sm:$0xf]
      %v3906 = vld [vmem:[%s3893 + $0x30] sm:$0xf]
      %v3907 = vld [vmem:[%s3893 + $0x34] sm:$0xf]
      %v3908 = vld [vmem:[%s3893 + $0x38] sm:$0xf]
      %v3909 = vld [vmem:[%s3893 + $0x3c] sm:$0xf]
      %s3910 = scalar_lea.vmem %s4, 5
      %v3911 = vld [vmem:[%s3910] sm:$0x1]
      %v3913 = vlaneseq
      %v3914 = vshrl.u32 %v3913, 7
      %v3915 = vsub.s32 0, %v3914
      %v3916 = vrot.slane %v3911, %v3915
      %v3934 = vunpack.c.l.b16 %v3894
      %v3935 = vunpack.c.l.b16 %v3895
      %v3936 = vunpack.c.l.b16 %v3896
      %v3937 = vunpack.c.l.b16 %v3897
      %v3938 = vunpack.c.l.b16 %v3898
      %v3939 = vunpack.c.l.b16 %v3899
      %v3940 = vunpack.c.l.b16 %v3900
      %v3941 = vunpack.c.l.b16 %v3901
      %v3942 = vunpack.c.l.b16 %v3902
      %v3943 = vunpack.c.l.b16 %v3903
      %v3944 = vunpack.c.l.b16 %v3904
      %v3945 = vunpack.c.l.b16 %v3905
      %v3946 = vunpack.c.l.b16 %v3906
      %v3947 = vunpack.c.l.b16 %v3907
      %v3948 = vunpack.c.l.b16 %v3908
      %v3949 = vunpack.c.l.b16 %v3909
      %v3950 = vpack.c.b16 %v3935, %v3934
      %v3951 = vpack.c.b16 %v3937, %v3936
      %v3952 = vpack.c.b16 %v3939, %v3938
      %v3953 = vpack.c.b16 %v3941, %v3940
      %v3954 = vpack.c.b16 %v3943, %v3942
      %v3955 = vpack.c.b16 %v3945, %v3944
      %v3956 = vpack.c.b16 %v3947, %v3946
      %v3957 = vpack.c.b16 %v3949, %v3948
      %3966 = vmatprep.subr.bf16.mxu0 0
      %3967 = vmatpush1.bf16.msra.mxu0 %v3957
      %3968 = vmatprep.subr.bf16.mxu0 0
      %3969 = vmatpush1.bf16.msra.mxu0 %v3956
      %3970 = vmatprep.subr.bf16.mxu0 0
      %3971 = vmatpush1.bf16.msra.mxu0 %v3955
      %3972 = vmatprep.subr.bf16.mxu0 0
      %3973 = vmatpush1.bf16.msra.mxu0 %v3954
      %3974 = vmatprep.subr.bf16.mxu0 0
      %3975 = vmatpush1.bf16.msra.mxu0 %v3953
      %3976 = vmatprep.subr.bf16.mxu0 0
      %3977 = vmatpush1.bf16.msra.mxu0 %v3952
      %3978 = vmatprep.subr.bf16.mxu0 0
      %3979 = vmatpush1.bf16.msra.mxu0 %v3951
      %3980 = vmatprep.subr.bf16.mxu0 0
      %3981 = vmatpush1.bf16.msra.mxu0 %v3950
      %3982 = vmatprep.subr.bf16.mxu0 0
      %3983 = vmatpush2.bf16.msra.mxu0 0
      %3984 = vmatprep.subr.bf16.mxu0 0
      %3985 = vmatpush2.bf16.msra.mxu0 0
      %3986 = vmatprep.subr.bf16.mxu0 0
      %3987 = vmatpush2.bf16.msra.mxu0 0
      %3988 = vmatprep.subr.bf16.mxu0 0
      %3989 = vmatpush2.bf16.msra.mxu0 0
      %3990 = vmatprep.subr.bf16.mxu0 0
      %3991 = vmatpush2.bf16.msra.mxu0 0
      %3992 = vmatprep.subr.bf16.mxu0 0
      %3993 = vmatpush2.bf16.msra.mxu0 0
      %3994 = vmatprep.subr.bf16.mxu0 0
      %3995 = vmatpush2.bf16.msra.mxu0 0
      %3996 = vmatprep.subr.bf16.mxu0 0
      %3997 = vmatpush2.bf16.msra.mxu0 0
      %3998 = vmatprep.mubr.bf16.mxu0 0
      %3999 = vmatmul.mubr.bf16.gmra.mxu0 %v3861
      %v4000 = vpop.f32.mrf.mxu0
      %v4001 = vadd.f32 %v3916, %v4000
      %v4002 = vpop.f32.mrf.mxu0
      %v4003 = vpop.f32.mrf.mxu0
      %v4004 = vadd.f32 %v3916, %v4003
      %v4005 = vpop.f32.mrf.mxu0
      %4006 = vmatprep.mubr.bf16.mxu0 0
      %4007 = vmatmul.mubr.bf16.gmra.mxu0 %v3862
      %v4008 = vpop.f32.mrf.mxu0
      %v4009 = vadd.f32 %v3916, %v4008
      %v4010 = vpop.f32.mrf.mxu0
      %v4011 = vpop.f32.mrf.mxu0
      %v4012 = vadd.f32 %v3916, %v4011
      %v4013 = vpop.f32.mrf.mxu0
      %4014 = vmatprep.mubr.bf16.mxu0 0
      %4015 = vmatmul.mubr.bf16.gmra.mxu0 %v3863
      %v4016 = vpop.f32.mrf.mxu0
      %v4017 = vadd.f32 %v3916, %v4016
      %v4018 = vpop.f32.mrf.mxu0
      %v4019 = vpop.f32.mrf.mxu0
      %v4020 = vadd.f32 %v3916, %v4019
      %v4021 = vpop.f32.mrf.mxu0
      %4022 = vmatprep.mubr.bf16.mxu0 0
      %4023 = vmatmul.mubr.bf16.gmra.mxu0 %v3864
      %v4024 = vpop.f32.mrf.mxu0
      %v4025 = vadd.f32 %v3916, %v4024
      %v4026 = vpop.f32.mrf.mxu0
      %v4027 = vpop.f32.mrf.mxu0
      %v4028 = vadd.f32 %v3916, %v4027
      %v4029 = vpop.f32.mrf.mxu0
      %4030 = vmatprep.mubr.bf16.mxu0 0
      %4031 = vmatmul.mubr.bf16.gmra.mxu0 %v3865
      %v4032 = vpop.f32.mrf.mxu0
      %v4033 = vadd.f32 %v3916, %v4032
      %v4034 = vpop.f32.mrf.mxu0
      %v4035 = vpop.f32.mrf.mxu0
      %v4036 = vadd.f32 %v3916, %v4035
      %v4037 = vpop.f32.mrf.mxu0
      %4038 = vmatprep.mubr.bf16.mxu0 0
      %4039 = vmatmul.mubr.bf16.gmra.mxu0 %v3866
      %v4040 = vpop.f32.mrf.mxu0
      %v4041 = vadd.f32 %v3916, %v4040
      %v4042 = vpop.f32.mrf.mxu0
      %v4043 = vpop.f32.mrf.mxu0
      %v4044 = vadd.f32 %v3916, %v4043
      %v4045 = vpop.f32.mrf.mxu0
      %4046 = vmatprep.mubr.bf16.mxu0 0
      %4047 = vmatmul.mubr.bf16.gmra.mxu0 %v3867
      %v4048 = vpop.f32.mrf.mxu0
      %v4049 = vadd.f32 %v3916, %v4048
      %v4050 = vpop.f32.mrf.mxu0
      %v4051 = vpop.f32.mrf.mxu0
      %v4052 = vadd.f32 %v3916, %v4051
      %v4053 = vpop.f32.mrf.mxu0
      %4054 = vmatprep.mubr.bf16.mxu0 0
      %4055 = vmatmul.mubr.bf16.gmra.mxu0 %v3868
      %v4056 = vpop.f32.mrf.mxu0
      %v4057 = vadd.f32 %v3916, %v4056
      %v4058 = vpop.f32.mrf.mxu0
      %v4059 = vpop.f32.mrf.mxu0
      %v4060 = vadd.f32 %v3916, %v4059
      %v4061 = vpop.f32.mrf.mxu0
      %4062 = vmatprep.mubr.bf16.mxu0 0
      %4063 = vmatmul.mubr.bf16.gmra.mxu0 %v3869
      %v4064 = vpop.f32.mrf.mxu0
      %v4065 = vadd.f32 %v3916, %v4064
      %v4066 = vpop.f32.mrf.mxu0
      %v4067 = vpop.f32.mrf.mxu0
      %v4068 = vadd.f32 %v3916, %v4067
      %v4069 = vpop.f32.mrf.mxu0
      %4070 = vmatprep.mubr.bf16.mxu0 0
      %4071 = vmatmul.mubr.bf16.gmra.mxu0 %v3870
      %v4072 = vpop.f32.mrf.mxu0
      %v4073 = vadd.f32 %v3916, %v4072
      %v4074 = vpop.f32.mrf.mxu0
      %v4075 = vpop.f32.mrf.mxu0
      %v4076 = vadd.f32 %v3916, %v4075
      %v4077 = vpop.f32.mrf.mxu0
      %4078 = vmatprep.mubr.bf16.mxu0 0
      %4079 = vmatmul.mubr.bf16.gmra.mxu0 %v3871
      %v4080 = vpop.f32.mrf.mxu0
      %v4081 = vadd.f32 %v3916, %v4080
      %v4082 = vpop.f32.mrf.mxu0
      %v4083 = vpop.f32.mrf.mxu0
      %v4084 = vadd.f32 %v3916, %v4083
      %v4085 = vpop.f32.mrf.mxu0
      %4086 = vmatprep.mubr.bf16.mxu0 0
      %4087 = vmatmul.mubr.bf16.gmra.mxu0 %v3872
      %v4088 = vpop.f32.mrf.mxu0
      %v4089 = vadd.f32 %v3916, %v4088
      %v4090 = vpop.f32.mrf.mxu0
      %v4091 = vpop.f32.mrf.mxu0
      %v4092 = vadd.f32 %v3916, %v4091
      %v4093 = vpop.f32.mrf.mxu0
      %4094 = vmatprep.mubr.bf16.mxu0 0
      %4095 = vmatmul.mubr.bf16.gmra.mxu0 %v3873
      %v4096 = vpop.f32.mrf.mxu0
      %v4097 = vadd.f32 %v3916, %v4096
      %v4098 = vpop.f32.mrf.mxu0
      %v4099 = vpop.f32.mrf.mxu0
      %v4100 = vadd.f32 %v3916, %v4099
      %v4101 = vpop.f32.mrf.mxu0
      %4102 = vmatprep.mubr.bf16.mxu0 0
      %4103 = vmatmul.mubr.bf16.gmra.mxu0 %v3874
      %v4104 = vpop.f32.mrf.mxu0
      %v4105 = vadd.f32 %v3916, %v4104
      %v4106 = vpop.f32.mrf.mxu0
      %v4107 = vpop.f32.mrf.mxu0
      %v4108 = vadd.f32 %v3916, %v4107
      %v4109 = vpop.f32.mrf.mxu0
      %4110 = vmatprep.mubr.bf16.mxu0 0
      %4111 = vmatmul.mubr.bf16.gmra.mxu0 %v3875
      %v4112 = vpop.f32.mrf.mxu0
      %v4113 = vadd.f32 %v3916, %v4112
      %v4114 = vpop.f32.mrf.mxu0
      %v4115 = vpop.f32.mrf.mxu0
      %v4116 = vadd.f32 %v3916, %v4115
      %v4117 = vpop.f32.mrf.mxu0
      %4118 = vmatprep.mubr.bf16.mxu0 0
      %4119 = vmatmul.mubr.bf16.gmra.mxu0 %v3876
      %v4120 = vpop.f32.mrf.mxu0
      %v4121 = vadd.f32 %v3916, %v4120
      %v4122 = vpop.f32.mrf.mxu0
      %v4123 = vpop.f32.mrf.mxu0
      %v4124 = vadd.f32 %v3916, %v4123
      %v4125 = vpop.f32.mrf.mxu0
      %4126 = vmatprep.mubr.bf16.mxu0 0
      %4127 = vmatmul.mubr.bf16.gmra.mxu0 %v3877
      %v4128 = vpop.f32.mrf.mxu0
      %v4129 = vadd.f32 %v3916, %v4128
      %v4130 = vpop.f32.mrf.mxu0
      %v4131 = vpop.f32.mrf.mxu0
      %v4132 = vadd.f32 %v3916, %v4131
      %v4133 = vpop.f32.mrf.mxu0
      %4134 = vmatprep.mubr.bf16.mxu0 0
      %4135 = vmatmul.mubr.bf16.gmra.mxu0 %v3878
      %v4136 = vpop.f32.mrf.mxu0
      %v4137 = vadd.f32 %v3916, %v4136
      %v4138 = vpop.f32.mrf.mxu0
      %v4139 = vpop.f32.mrf.mxu0
      %v4140 = vadd.f32 %v3916, %v4139
      %v4141 = vpop.f32.mrf.mxu0
      %4142 = vmatprep.mubr.bf16.mxu0 0
      %4143 = vmatmul.mubr.bf16.gmra.mxu0 %v3879
      %v4144 = vpop.f32.mrf.mxu0
      %v4145 = vadd.f32 %v3916, %v4144
      %v4146 = vpop.f32.mrf.mxu0
      %v4147 = vpop.f32.mrf.mxu0
      %v4148 = vadd.f32 %v3916, %v4147
      %v4149 = vpop.f32.mrf.mxu0
      %4150 = vmatprep.mubr.bf16.mxu0 0
      %4151 = vmatmul.mubr.bf16.gmra.mxu0 %v3880
      %v4152 = vpop.f32.mrf.mxu0
      %v4153 = vadd.f32 %v3916, %v4152
      %v4154 = vpop.f32.mrf.mxu0
      %v4155 = vpop.f32.mrf.mxu0
      %v4156 = vadd.f32 %v3916, %v4155
      %v4157 = vpop.f32.mrf.mxu0
      %4158 = vmatprep.mubr.bf16.mxu0 0
      %4159 = vmatmul.mubr.bf16.gmra.mxu0 %v3881
      %v4160 = vpop.f32.mrf.mxu0
      %v4161 = vadd.f32 %v3916, %v4160
      %v4162 = vpop.f32.mrf.mxu0
      %v4163 = vpop.f32.mrf.mxu0
      %v4164 = vadd.f32 %v3916, %v4163
      %v4165 = vpop.f32.mrf.mxu0
      %4166 = vmatprep.mubr.bf16.mxu0 0
      %4167 = vmatmul.mubr.bf16.gmra.mxu0 %v3882
      %v4168 = vpop.f32.mrf.mxu0
      %v4169 = vadd.f32 %v3916, %v4168
      %v4170 = vpop.f32.mrf.mxu0
      %v4171 = vpop.f32.mrf.mxu0
      %v4172 = vadd.f32 %v3916, %v4171
      %v4173 = vpop.f32.mrf.mxu0
      %4174 = vmatprep.mubr.bf16.mxu0 0
      %4175 = vmatmul.mubr.bf16.gmra.mxu0 %v3883
      %v4176 = vpop.f32.mrf.mxu0
      %v4177 = vadd.f32 %v3916, %v4176
      %v4178 = vpop.f32.mrf.mxu0
      %v4179 = vpop.f32.mrf.mxu0
      %v4180 = vadd.f32 %v3916, %v4179
      %v4181 = vpop.f32.mrf.mxu0
      %4182 = vmatprep.mubr.bf16.mxu0 0
      %4183 = vmatmul.mubr.bf16.gmra.mxu0 %v3884
      %v4184 = vpop.f32.mrf.mxu0
      %v4185 = vadd.f32 %v3916, %v4184
      %v4186 = vpop.f32.mrf.mxu0
      %v4187 = vpop.f32.mrf.mxu0
      %v4188 = vadd.f32 %v3916, %v4187
      %v4189 = vpop.f32.mrf.mxu0
      %4190 = vmatprep.mubr.bf16.mxu0 0
      %4191 = vmatmul.mubr.bf16.gmra.mxu0 %v3885
      %v4192 = vpop.f32.mrf.mxu0
      %v4193 = vadd.f32 %v3916, %v4192
      %v4194 = vpop.f32.mrf.mxu0
      %v4195 = vpop.f32.mrf.mxu0
      %v4196 = vadd.f32 %v3916, %v4195
      %v4197 = vpop.f32.mrf.mxu0
      %4198 = vmatprep.mubr.bf16.mxu0 0
      %4199 = vmatmul.mubr.bf16.gmra.mxu0 %v3886
      %v4200 = vpop.f32.mrf.mxu0
      %v4201 = vadd.f32 %v3916, %v4200
      %v4202 = vpop.f32.mrf.mxu0
      %v4203 = vpop.f32.mrf.mxu0
      %v4204 = vadd.f32 %v3916, %v4203
      %v4205 = vpop.f32.mrf.mxu0
      %4206 = vmatprep.mubr.bf16.mxu0 0
      %4207 = vmatmul.mubr.bf16.gmra.mxu0 %v3887
      %v4208 = vpop.f32.mrf.mxu0
      %v4209 = vadd.f32 %v3916, %v4208
      %v4210 = vpop.f32.mrf.mxu0
      %v4211 = vpop.f32.mrf.mxu0
      %v4212 = vadd.f32 %v3916, %v4211
      %v4213 = vpop.f32.mrf.mxu0
      %4214 = vmatprep.mubr.bf16.mxu0 0
      %4215 = vmatmul.mubr.bf16.gmra.mxu0 %v3888
      %v4216 = vpop.f32.mrf.mxu0
      %v4217 = vadd.f32 %v3916, %v4216
      %v4218 = vpop.f32.mrf.mxu0
      %v4219 = vpop.f32.mrf.mxu0
      %v4220 = vadd.f32 %v3916, %v4219
      %v4221 = vpop.f32.mrf.mxu0
      %4222 = vmatprep.mubr.bf16.mxu0 0
      %4223 = vmatmul.mubr.bf16.gmra.mxu0 %v3889
      %v4224 = vpop.f32.mrf.mxu0
      %v4225 = vadd.f32 %v3916, %v4224
      %v4226 = vpop.f32.mrf.mxu0
      %v4227 = vpop.f32.mrf.mxu0
      %v4228 = vadd.f32 %v3916, %v4227
      %v4229 = vpop.f32.mrf.mxu0
      %4230 = vmatprep.mubr.bf16.mxu0 0
      %4231 = vmatmul.mubr.bf16.gmra.mxu0 %v3890
      %v4232 = vpop.f32.mrf.mxu0
      %v4233 = vadd.f32 %v3916, %v4232
      %v4234 = vpop.f32.mrf.mxu0
      %v4235 = vpop.f32.mrf.mxu0
      %v4236 = vadd.f32 %v3916, %v4235
      %v4237 = vpop.f32.mrf.mxu0
      %4238 = vmatprep.mubr.bf16.mxu0 0
      %4239 = vmatmul.mubr.bf16.gmra.mxu0 %v3891
      %v4240 = vpop.f32.mrf.mxu0
      %v4241 = vadd.f32 %v3916, %v4240
      %v4242 = vpop.f32.mrf.mxu0
      %v4243 = vpop.f32.mrf.mxu0
      %v4244 = vadd.f32 %v3916, %v4243
      %v4245 = vpop.f32.mrf.mxu0
      %4246 = vmatprep.mubr.bf16.mxu0 0
      %4247 = vmatmul.mubr.bf16.gmra.mxu0 %v3892
      %v4248 = vpop.f32.mrf.mxu0
      %v4249 = vadd.f32 %v3916, %v4248
      %v4250 = vpop.f32.mrf.mxu0
      %v4251 = vpop.f32.mrf.mxu0
      %v4252 = vadd.f32 %v3916, %v4251
      %v4253 = vpop.f32.mrf.mxu0
      %4254 = vdwg.mxu0
      %v4255 = vmax.f32 %v4001, 0.0
      %v4256 = vmax.f32 %v4004, 0.0
      %v4257 = vmax.f32 %v4009, 0.0
      %v4258 = vmax.f32 %v4012, 0.0
      %v4259 = vmax.f32 %v4017, 0.0
      %v4260 = vmax.f32 %v4020, 0.0
      %v4261 = vmax.f32 %v4025, 0.0
      %v4262 = vmax.f32 %v4028, 0.0
      %v4263 = vmax.f32 %v4033, 0.0
      %v4264 = vmax.f32 %v4036, 0.0
      %v4265 = vmax.f32 %v4041, 0.0
      %v4266 = vmax.f32 %v4044, 0.0
      %v4267 = vmax.f32 %v4049, 0.0
      %v4268 = vmax.f32 %v4052, 0.0
      %v4269 = vmax.f32 %v4057, 0.0
      %v4270 = vmax.f32 %v4060, 0.0
      %v4271 = vmax.f32 %v4065, 0.0
      %v4272 = vmax.f32 %v4068, 0.0
      %v4273 = vmax.f32 %v4073, 0.0
      %v4274 = vmax.f32 %v4076, 0.0
      %v4275 = vmax.f32 %v4081, 0.0
      %v4276 = vmax.f32 %v4084, 0.0
      %v4277 = vmax.f32 %v4089, 0.0
      %v4278 = vmax.f32 %v4092, 0.0
      %v4279 = vmax.f32 %v4097, 0.0
      %v4280 = vmax.f32 %v4100, 0.0
      %v4281 = vmax.f32 %v4105, 0.0
      %v4282 = vmax.f32 %v4108, 0.0
      %v4283 = vmax.f32 %v4113, 0.0
      %v4284 = vmax.f32 %v4116, 0.0
      %v4285 = vmax.f32 %v4121, 0.0
      %v4286 = vmax.f32 %v4124, 0.0
      %v4287 = vmax.f32 %v4129, 0.0
      %v4288 = vmax.f32 %v4132, 0.0
      %v4289 = vmax.f32 %v4137, 0.0
      %v4290 = vmax.f32 %v4140, 0.0
      %v4291 = vmax.f32 %v4145, 0.0
      %v4292 = vmax.f32 %v4148, 0.0
      %v4293 = vmax.f32 %v4153, 0.0
      %v4294 = vmax.f32 %v4156, 0.0
      %v4295 = vmax.f32 %v4161, 0.0
      %v4296 = vmax.f32 %v4164, 0.0
      %v4297 = vmax.f32 %v4169, 0.0
      %v4298 = vmax.f32 %v4172, 0.0
      %v4299 = vmax.f32 %v4177, 0.0
      %v4300 = vmax.f32 %v4180, 0.0
      %v4301 = vmax.f32 %v4185, 0.0
      %v4302 = vmax.f32 %v4188, 0.0
      %v4303 = vmax.f32 %v4193, 0.0
      %v4304 = vmax.f32 %v4196, 0.0
      %v4305 = vmax.f32 %v4201, 0.0
      %v4306 = vmax.f32 %v4204, 0.0
      %v4307 = vmax.f32 %v4209, 0.0
      %v4308 = vmax.f32 %v4212, 0.0
      %v4309 = vmax.f32 %v4217, 0.0
      %v4310 = vmax.f32 %v4220, 0.0
      %v4311 = vmax.f32 %v4225, 0.0
      %v4312 = vmax.f32 %v4228, 0.0
      %v4313 = vmax.f32 %v4233, 0.0
      %v4314 = vmax.f32 %v4236, 0.0
      %v4315 = vmax.f32 %v4241, 0.0
      %v4316 = vmax.f32 %v4244, 0.0
      %v4317 = vmax.f32 %v4249, 0.0
      %v4318 = vmax.f32 %v4252, 0.0
      %v4319 = vpack.c.bf16 %v4256, %v4255
      %v4320 = vpack.c.bf16 %v4258, %v4257
      %v4321 = vpack.c.bf16 %v4260, %v4259
      %v4322 = vpack.c.bf16 %v4262, %v4261
      %v4323 = vpack.c.bf16 %v4264, %v4263
      %v4324 = vpack.c.bf16 %v4266, %v4265
      %v4325 = vpack.c.bf16 %v4268, %v4267
      %v4326 = vpack.c.bf16 %v4270, %v4269
      %v4327 = vpack.c.bf16 %v4272, %v4271
      %v4328 = vpack.c.bf16 %v4274, %v4273
      %v4329 = vpack.c.bf16 %v4276, %v4275
      %v4330 = vpack.c.bf16 %v4278, %v4277
      %v4331 = vpack.c.bf16 %v4280, %v4279
      %v4332 = vpack.c.bf16 %v4282, %v4281
      %v4333 = vpack.c.bf16 %v4284, %v4283
      %v4334 = vpack.c.bf16 %v4286, %v4285
      %v4335 = vpack.c.bf16 %v4288, %v4287
      %v4336 = vpack.c.bf16 %v4290, %v4289
      %v4337 = vpack.c.bf16 %v4292, %v4291
      %v4338 = vpack.c.bf16 %v4294, %v4293
      %v4339 = vpack.c.bf16 %v4296, %v4295
      %v4340 = vpack.c.bf16 %v4298, %v4297
      %v4341 = vpack.c.bf16 %v4300, %v4299
      %v4342 = vpack.c.bf16 %v4302, %v4301
      %v4343 = vpack.c.bf16 %v4304, %v4303
      %v4344 = vpack.c.bf16 %v4306, %v4305
      %v4345 = vpack.c.bf16 %v4308, %v4307
      %v4346 = vpack.c.bf16 %v4310, %v4309
      %v4347 = vpack.c.bf16 %v4312, %v4311
      %v4348 = vpack.c.bf16 %v4314, %v4313
      %v4349 = vpack.c.bf16 %v4316, %v4315
      %v4350 = vpack.c.bf16 %v4318, %v4317
      %s4351 = scalar_lea.vmem %s3, 384
      %v4352 = vld [vmem:[%s4351] sm:$0xf]
      %v4353 = vld [vmem:[%s4351 + $0x4] sm:$0xf]
      %v4354 = vld [vmem:[%s4351 + $0x8] sm:$0xf]
      %v4355 = vld [vmem:[%s4351 + $0xc] sm:$0xf]
      %v4356 = vld [vmem:[%s4351 + $0x10] sm:$0xf]
      %v4357 = vld [vmem:[%s4351 + $0x14] sm:$0xf]
      %v4358 = vld [vmem:[%s4351 + $0x18] sm:$0xf]
      %v4359 = vld [vmem:[%s4351 + $0x1c] sm:$0xf]
      %v4360 = vld [vmem:[%s4351 + $0x20] sm:$0xf]
      %v4361 = vld [vmem:[%s4351 + $0x24] sm:$0xf]
      %v4362 = vld [vmem:[%s4351 + $0x28] sm:$0xf]
      %v4363 = vld [vmem:[%s4351 + $0x2c] sm:$0xf]
      %v4364 = vld [vmem:[%s4351 + $0x30] sm:$0xf]
      %v4365 = vld [vmem:[%s4351 + $0x34] sm:$0xf]
      %v4366 = vld [vmem:[%s4351 + $0x38] sm:$0xf]
      %v4367 = vld [vmem:[%s4351 + $0x3c] sm:$0xf]
      %s4368 = scalar_lea.vmem %s4, 6
      %v4369 = vld [vmem:[%s4368] sm:$0x1]
      %v4371 = vlaneseq
      %v4372 = vshrl.u32 %v4371, 7
      %v4373 = vsub.s32 0, %v4372
      %v4374 = vrot.slane %v4369, %v4373
      %v4392 = vunpack.c.l.b16 %v4352
      %v4393 = vunpack.c.l.b16 %v4353
      %v4394 = vunpack.c.l.b16 %v4354
      %v4395 = vunpack.c.l.b16 %v4355
      %v4396 = vunpack.c.l.b16 %v4356
      %v4397 = vunpack.c.l.b16 %v4357
      %v4398 = vunpack.c.l.b16 %v4358
      %v4399 = vunpack.c.l.b16 %v4359
      %v4400 = vunpack.c.l.b16 %v4360
      %v4401 = vunpack.c.l.b16 %v4361
      %v4402 = vunpack.c.l.b16 %v4362
      %v4403 = vunpack.c.l.b16 %v4363
      %v4404 = vunpack.c.l.b16 %v4364
      %v4405 = vunpack.c.l.b16 %v4365
      %v4406 = vunpack.c.l.b16 %v4366
      %v4407 = vunpack.c.l.b16 %v4367
      %v4408 = vpack.c.b16 %v4393, %v4392
      %v4409 = vpack.c.b16 %v4395, %v4394
      %v4410 = vpack.c.b16 %v4397, %v4396
      %v4411 = vpack.c.b16 %v4399, %v4398
      %v4412 = vpack.c.b16 %v4401, %v4400
      %v4413 = vpack.c.b16 %v4403, %v4402
      %v4414 = vpack.c.b16 %v4405, %v4404
      %v4415 = vpack.c.b16 %v4407, %v4406
      %4424 = vmatprep.subr.bf16.mxu0 0
      %4425 = vmatpush1.bf16.msra.mxu0 %v4415
      %4426 = vmatprep.subr.bf16.mxu0 0
      %4427 = vmatpush1.bf16.msra.mxu0 %v4414
      %4428 = vmatprep.subr.bf16.mxu0 0
      %4429 = vmatpush1.bf16.msra.mxu0 %v4413
      %4430 = vmatprep.subr.bf16.mxu0 0
      %4431 = vmatpush1.bf16.msra.mxu0 %v4412
      %4432 = vmatprep.subr.bf16.mxu0 0
      %4433 = vmatpush1.bf16.msra.mxu0 %v4411
      %4434 = vmatprep.subr.bf16.mxu0 0
      %4435 = vmatpush1.bf16.msra.mxu0 %v4410
      %4436 = vmatprep.subr.bf16.mxu0 0
      %4437 = vmatpush1.bf16.msra.mxu0 %v4409
      %4438 = vmatprep.subr.bf16.mxu0 0
      %4439 = vmatpush1.bf16.msra.mxu0 %v4408
      %4440 = vmatprep.subr.bf16.mxu0 0
      %4441 = vmatpush2.bf16.msra.mxu0 0
      %4442 = vmatprep.subr.bf16.mxu0 0
      %4443 = vmatpush2.bf16.msra.mxu0 0
      %4444 = vmatprep.subr.bf16.mxu0 0
      %4445 = vmatpush2.bf16.msra.mxu0 0
      %4446 = vmatprep.subr.bf16.mxu0 0
      %4447 = vmatpush2.bf16.msra.mxu0 0
      %4448 = vmatprep.subr.bf16.mxu0 0
      %4449 = vmatpush2.bf16.msra.mxu0 0
      %4450 = vmatprep.subr.bf16.mxu0 0
      %4451 = vmatpush2.bf16.msra.mxu0 0
      %4452 = vmatprep.subr.bf16.mxu0 0
      %4453 = vmatpush2.bf16.msra.mxu0 0
      %4454 = vmatprep.subr.bf16.mxu0 0
      %4455 = vmatpush2.bf16.msra.mxu0 0
      %4456 = vmatprep.mubr.bf16.mxu0 0
      %4457 = vmatmul.mubr.bf16.gmra.mxu0 %v4319
      %v4458 = vpop.f32.mrf.mxu0
      %v4459 = vadd.f32 %v4374, %v4458
      %v4460 = vpop.f32.mrf.mxu0
      %v4461 = vpop.f32.mrf.mxu0
      %v4462 = vadd.f32 %v4374, %v4461
      %v4463 = vpop.f32.mrf.mxu0
      %4464 = vmatprep.mubr.bf16.mxu0 0
      %4465 = vmatmul.mubr.bf16.gmra.mxu0 %v4320
      %v4466 = vpop.f32.mrf.mxu0
      %v4467 = vadd.f32 %v4374, %v4466
      %v4468 = vpop.f32.mrf.mxu0
      %v4469 = vpop.f32.mrf.mxu0
      %v4470 = vadd.f32 %v4374, %v4469
      %v4471 = vpop.f32.mrf.mxu0
      %4472 = vmatprep.mubr.bf16.mxu0 0
      %4473 = vmatmul.mubr.bf16.gmra.mxu0 %v4321
      %v4474 = vpop.f32.mrf.mxu0
      %v4475 = vadd.f32 %v4374, %v4474
      %v4476 = vpop.f32.mrf.mxu0
      %v4477 = vpop.f32.mrf.mxu0
      %v4478 = vadd.f32 %v4374, %v4477
      %v4479 = vpop.f32.mrf.mxu0
      %4480 = vmatprep.mubr.bf16.mxu0 0
      %4481 = vmatmul.mubr.bf16.gmra.mxu0 %v4322
      %v4482 = vpop.f32.mrf.mxu0
      %v4483 = vadd.f32 %v4374, %v4482
      %v4484 = vpop.f32.mrf.mxu0
      %v4485 = vpop.f32.mrf.mxu0
      %v4486 = vadd.f32 %v4374, %v4485
      %v4487 = vpop.f32.mrf.mxu0
      %4488 = vmatprep.mubr.bf16.mxu0 0
      %4489 = vmatmul.mubr.bf16.gmra.mxu0 %v4323
      %v4490 = vpop.f32.mrf.mxu0
      %v4491 = vadd.f32 %v4374, %v4490
      %v4492 = vpop.f32.mrf.mxu0
      %v4493 = vpop.f32.mrf.mxu0
      %v4494 = vadd.f32 %v4374, %v4493
      %v4495 = vpop.f32.mrf.mxu0
      %4496 = vmatprep.mubr.bf16.mxu0 0
      %4497 = vmatmul.mubr.bf16.gmra.mxu0 %v4324
      %v4498 = vpop.f32.mrf.mxu0
      %v4499 = vadd.f32 %v4374, %v4498
      %v4500 = vpop.f32.mrf.mxu0
      %v4501 = vpop.f32.mrf.mxu0
      %v4502 = vadd.f32 %v4374, %v4501
      %v4503 = vpop.f32.mrf.mxu0
      %4504 = vmatprep.mubr.bf16.mxu0 0
      %4505 = vmatmul.mubr.bf16.gmra.mxu0 %v4325
      %v4506 = vpop.f32.mrf.mxu0
      %v4507 = vadd.f32 %v4374, %v4506
      %v4508 = vpop.f32.mrf.mxu0
      %v4509 = vpop.f32.mrf.mxu0
      %v4510 = vadd.f32 %v4374, %v4509
      %v4511 = vpop.f32.mrf.mxu0
      %4512 = vmatprep.mubr.bf16.mxu0 0
      %4513 = vmatmul.mubr.bf16.gmra.mxu0 %v4326
      %v4514 = vpop.f32.mrf.mxu0
      %v4515 = vadd.f32 %v4374, %v4514
      %v4516 = vpop.f32.mrf.mxu0
      %v4517 = vpop.f32.mrf.mxu0
      %v4518 = vadd.f32 %v4374, %v4517
      %v4519 = vpop.f32.mrf.mxu0
      %4520 = vmatprep.mubr.bf16.mxu0 0
      %4521 = vmatmul.mubr.bf16.gmra.mxu0 %v4327
      %v4522 = vpop.f32.mrf.mxu0
      %v4523 = vadd.f32 %v4374, %v4522
      %v4524 = vpop.f32.mrf.mxu0
      %v4525 = vpop.f32.mrf.mxu0
      %v4526 = vadd.f32 %v4374, %v4525
      %v4527 = vpop.f32.mrf.mxu0
      %4528 = vmatprep.mubr.bf16.mxu0 0
      %4529 = vmatmul.mubr.bf16.gmra.mxu0 %v4328
      %v4530 = vpop.f32.mrf.mxu0
      %v4531 = vadd.f32 %v4374, %v4530
      %v4532 = vpop.f32.mrf.mxu0
      %v4533 = vpop.f32.mrf.mxu0
      %v4534 = vadd.f32 %v4374, %v4533
      %v4535 = vpop.f32.mrf.mxu0
      %4536 = vmatprep.mubr.bf16.mxu0 0
      %4537 = vmatmul.mubr.bf16.gmra.mxu0 %v4329
      %v4538 = vpop.f32.mrf.mxu0
      %v4539 = vadd.f32 %v4374, %v4538
      %v4540 = vpop.f32.mrf.mxu0
      %v4541 = vpop.f32.mrf.mxu0
      %v4542 = vadd.f32 %v4374, %v4541
      %v4543 = vpop.f32.mrf.mxu0
      %4544 = vmatprep.mubr.bf16.mxu0 0
      %4545 = vmatmul.mubr.bf16.gmra.mxu0 %v4330
      %v4546 = vpop.f32.mrf.mxu0
      %v4547 = vadd.f32 %v4374, %v4546
      %v4548 = vpop.f32.mrf.mxu0
      %v4549 = vpop.f32.mrf.mxu0
      %v4550 = vadd.f32 %v4374, %v4549
      %v4551 = vpop.f32.mrf.mxu0
      %4552 = vmatprep.mubr.bf16.mxu0 0
      %4553 = vmatmul.mubr.bf16.gmra.mxu0 %v4331
      %v4554 = vpop.f32.mrf.mxu0
      %v4555 = vadd.f32 %v4374, %v4554
      %v4556 = vpop.f32.mrf.mxu0
      %v4557 = vpop.f32.mrf.mxu0
      %v4558 = vadd.f32 %v4374, %v4557
      %v4559 = vpop.f32.mrf.mxu0
      %4560 = vmatprep.mubr.bf16.mxu0 0
      %4561 = vmatmul.mubr.bf16.gmra.mxu0 %v4332
      %v4562 = vpop.f32.mrf.mxu0
      %v4563 = vadd.f32 %v4374, %v4562
      %v4564 = vpop.f32.mrf.mxu0
      %v4565 = vpop.f32.mrf.mxu0
      %v4566 = vadd.f32 %v4374, %v4565
      %v4567 = vpop.f32.mrf.mxu0
      %4568 = vmatprep.mubr.bf16.mxu0 0
      %4569 = vmatmul.mubr.bf16.gmra.mxu0 %v4333
      %v4570 = vpop.f32.mrf.mxu0
      %v4571 = vadd.f32 %v4374, %v4570
      %v4572 = vpop.f32.mrf.mxu0
      %v4573 = vpop.f32.mrf.mxu0
      %v4574 = vadd.f32 %v4374, %v4573
      %v4575 = vpop.f32.mrf.mxu0
      %4576 = vmatprep.mubr.bf16.mxu0 0
      %4577 = vmatmul.mubr.bf16.gmra.mxu0 %v4334
      %v4578 = vpop.f32.mrf.mxu0
      %v4579 = vadd.f32 %v4374, %v4578
      %v4580 = vpop.f32.mrf.mxu0
      %v4581 = vpop.f32.mrf.mxu0
      %v4582 = vadd.f32 %v4374, %v4581
      %v4583 = vpop.f32.mrf.mxu0
      %4584 = vmatprep.mubr.bf16.mxu0 0
      %4585 = vmatmul.mubr.bf16.gmra.mxu0 %v4335
      %v4586 = vpop.f32.mrf.mxu0
      %v4587 = vadd.f32 %v4374, %v4586
      %v4588 = vpop.f32.mrf.mxu0
      %v4589 = vpop.f32.mrf.mxu0
      %v4590 = vadd.f32 %v4374, %v4589
      %v4591 = vpop.f32.mrf.mxu0
      %4592 = vmatprep.mubr.bf16.mxu0 0
      %4593 = vmatmul.mubr.bf16.gmra.mxu0 %v4336
      %v4594 = vpop.f32.mrf.mxu0
      %v4595 = vadd.f32 %v4374, %v4594
      %v4596 = vpop.f32.mrf.mxu0
      %v4597 = vpop.f32.mrf.mxu0
      %v4598 = vadd.f32 %v4374, %v4597
      %v4599 = vpop.f32.mrf.mxu0
      %4600 = vmatprep.mubr.bf16.mxu0 0
      %4601 = vmatmul.mubr.bf16.gmra.mxu0 %v4337
      %v4602 = vpop.f32.mrf.mxu0
      %v4603 = vadd.f32 %v4374, %v4602
      %v4604 = vpop.f32.mrf.mxu0
      %v4605 = vpop.f32.mrf.mxu0
      %v4606 = vadd.f32 %v4374, %v4605
      %v4607 = vpop.f32.mrf.mxu0
      %4608 = vmatprep.mubr.bf16.mxu0 0
      %4609 = vmatmul.mubr.bf16.gmra.mxu0 %v4338
      %v4610 = vpop.f32.mrf.mxu0
      %v4611 = vadd.f32 %v4374, %v4610
      %v4612 = vpop.f32.mrf.mxu0
      %v4613 = vpop.f32.mrf.mxu0
      %v4614 = vadd.f32 %v4374, %v4613
      %v4615 = vpop.f32.mrf.mxu0
      %4616 = vmatprep.mubr.bf16.mxu0 0
      %4617 = vmatmul.mubr.bf16.gmra.mxu0 %v4339
      %v4618 = vpop.f32.mrf.mxu0
      %v4619 = vadd.f32 %v4374, %v4618
      %v4620 = vpop.f32.mrf.mxu0
      %v4621 = vpop.f32.mrf.mxu0
      %v4622 = vadd.f32 %v4374, %v4621
      %v4623 = vpop.f32.mrf.mxu0
      %4624 = vmatprep.mubr.bf16.mxu0 0
      %4625 = vmatmul.mubr.bf16.gmra.mxu0 %v4340
      %v4626 = vpop.f32.mrf.mxu0
      %v4627 = vadd.f32 %v4374, %v4626
      %v4628 = vpop.f32.mrf.mxu0
      %v4629 = vpop.f32.mrf.mxu0
      %v4630 = vadd.f32 %v4374, %v4629
      %v4631 = vpop.f32.mrf.mxu0
      %4632 = vmatprep.mubr.bf16.mxu0 0
      %4633 = vmatmul.mubr.bf16.gmra.mxu0 %v4341
      %v4634 = vpop.f32.mrf.mxu0
      %v4635 = vadd.f32 %v4374, %v4634
      %v4636 = vpop.f32.mrf.mxu0
      %v4637 = vpop.f32.mrf.mxu0
      %v4638 = vadd.f32 %v4374, %v4637
      %v4639 = vpop.f32.mrf.mxu0
      %4640 = vmatprep.mubr.bf16.mxu0 0
      %4641 = vmatmul.mubr.bf16.gmra.mxu0 %v4342
      %v4642 = vpop.f32.mrf.mxu0
      %v4643 = vadd.f32 %v4374, %v4642
      %v4644 = vpop.f32.mrf.mxu0
      %v4645 = vpop.f32.mrf.mxu0
      %v4646 = vadd.f32 %v4374, %v4645
      %v4647 = vpop.f32.mrf.mxu0
      %4648 = vmatprep.mubr.bf16.mxu0 0
      %4649 = vmatmul.mubr.bf16.gmra.mxu0 %v4343
      %v4650 = vpop.f32.mrf.mxu0
      %v4651 = vadd.f32 %v4374, %v4650
      %v4652 = vpop.f32.mrf.mxu0
      %v4653 = vpop.f32.mrf.mxu0
      %v4654 = vadd.f32 %v4374, %v4653
      %v4655 = vpop.f32.mrf.mxu0
      %4656 = vmatprep.mubr.bf16.mxu0 0
      %4657 = vmatmul.mubr.bf16.gmra.mxu0 %v4344
      %v4658 = vpop.f32.mrf.mxu0
      %v4659 = vadd.f32 %v4374, %v4658
      %v4660 = vpop.f32.mrf.mxu0
      %v4661 = vpop.f32.mrf.mxu0
      %v4662 = vadd.f32 %v4374, %v4661
      %v4663 = vpop.f32.mrf.mxu0
      %4664 = vmatprep.mubr.bf16.mxu0 0
      %4665 = vmatmul.mubr.bf16.gmra.mxu0 %v4345
      %v4666 = vpop.f32.mrf.mxu0
      %v4667 = vadd.f32 %v4374, %v4666
      %v4668 = vpop.f32.mrf.mxu0
      %v4669 = vpop.f32.mrf.mxu0
      %v4670 = vadd.f32 %v4374, %v4669
      %v4671 = vpop.f32.mrf.mxu0
      %4672 = vmatprep.mubr.bf16.mxu0 0
      %4673 = vmatmul.mubr.bf16.gmra.mxu0 %v4346
      %v4674 = vpop.f32.mrf.mxu0
      %v4675 = vadd.f32 %v4374, %v4674
      %v4676 = vpop.f32.mrf.mxu0
      %v4677 = vpop.f32.mrf.mxu0
      %v4678 = vadd.f32 %v4374, %v4677
      %v4679 = vpop.f32.mrf.mxu0
      %4680 = vmatprep.mubr.bf16.mxu0 0
      %4681 = vmatmul.mubr.bf16.gmra.mxu0 %v4347
      %v4682 = vpop.f32.mrf.mxu0
      %v4683 = vadd.f32 %v4374, %v4682
      %v4684 = vpop.f32.mrf.mxu0
      %v4685 = vpop.f32.mrf.mxu0
      %v4686 = vadd.f32 %v4374, %v4685
      %v4687 = vpop.f32.mrf.mxu0
      %4688 = vmatprep.mubr.bf16.mxu0 0
      %4689 = vmatmul.mubr.bf16.gmra.mxu0 %v4348
      %v4690 = vpop.f32.mrf.mxu0
      %v4691 = vadd.f32 %v4374, %v4690
      %v4692 = vpop.f32.mrf.mxu0
      %v4693 = vpop.f32.mrf.mxu0
      %v4694 = vadd.f32 %v4374, %v4693
      %v4695 = vpop.f32.mrf.mxu0
      %4696 = vmatprep.mubr.bf16.mxu0 0
      %4697 = vmatmul.mubr.bf16.gmra.mxu0 %v4349
      %v4698 = vpop.f32.mrf.mxu0
      %v4699 = vadd.f32 %v4374, %v4698
      %v4700 = vpop.f32.mrf.mxu0
      %v4701 = vpop.f32.mrf.mxu0
      %v4702 = vadd.f32 %v4374, %v4701
      %v4703 = vpop.f32.mrf.mxu0
      %4704 = vmatprep.mubr.bf16.mxu0 0
      %4705 = vmatmul.mubr.bf16.gmra.mxu0 %v4350
      %v4706 = vpop.f32.mrf.mxu0
      %v4707 = vadd.f32 %v4374, %v4706
      %v4708 = vpop.f32.mrf.mxu0
      %v4709 = vpop.f32.mrf.mxu0
      %v4710 = vadd.f32 %v4374, %v4709
      %v4711 = vpop.f32.mrf.mxu0
      %4712 = vdwg.mxu0
      %v4713 = vmax.f32 %v4459, 0.0
      %v4714 = vmax.f32 %v4462, 0.0
      %v4715 = vmax.f32 %v4467, 0.0
      %v4716 = vmax.f32 %v4470, 0.0
      %v4717 = vmax.f32 %v4475, 0.0
      %v4718 = vmax.f32 %v4478, 0.0
      %v4719 = vmax.f32 %v4483, 0.0
      %v4720 = vmax.f32 %v4486, 0.0
      %v4721 = vmax.f32 %v4491, 0.0
      %v4722 = vmax.f32 %v4494, 0.0
      %v4723 = vmax.f32 %v4499, 0.0
      %v4724 = vmax.f32 %v4502, 0.0
      %v4725 = vmax.f32 %v4507, 0.0
      %v4726 = vmax.f32 %v4510, 0.0
      %v4727 = vmax.f32 %v4515, 0.0
      %v4728 = vmax.f32 %v4518, 0.0
      %v4729 = vmax.f32 %v4523, 0.0
      %v4730 = vmax.f32 %v4526, 0.0
      %v4731 = vmax.f32 %v4531, 0.0
      %v4732 = vmax.f32 %v4534, 0.0
      %v4733 = vmax.f32 %v4539, 0.0
      %v4734 = vmax.f32 %v4542, 0.0
      %v4735 = vmax.f32 %v4547, 0.0
      %v4736 = vmax.f32 %v4550, 0.0
      %v4737 = vmax.f32 %v4555, 0.0
      %v4738 = vmax.f32 %v4558, 0.0
      %v4739 = vmax.f32 %v4563, 0.0
      %v4740 = vmax.f32 %v4566, 0.0
      %v4741 = vmax.f32 %v4571, 0.0
      %v4742 = vmax.f32 %v4574, 0.0
      %v4743 = vmax.f32 %v4579, 0.0
      %v4744 = vmax.f32 %v4582, 0.0
      %v4745 = vmax.f32 %v4587, 0.0
      %v4746 = vmax.f32 %v4590, 0.0
      %v4747 = vmax.f32 %v4595, 0.0
      %v4748 = vmax.f32 %v4598, 0.0
      %v4749 = vmax.f32 %v4603, 0.0
      %v4750 = vmax.f32 %v4606, 0.0
      %v4751 = vmax.f32 %v4611, 0.0
      %v4752 = vmax.f32 %v4614, 0.0
      %v4753 = vmax.f32 %v4619, 0.0
      %v4754 = vmax.f32 %v4622, 0.0
      %v4755 = vmax.f32 %v4627, 0.0
      %v4756 = vmax.f32 %v4630, 0.0
      %v4757 = vmax.f32 %v4635, 0.0
      %v4758 = vmax.f32 %v4638, 0.0
      %v4759 = vmax.f32 %v4643, 0.0
      %v4760 = vmax.f32 %v4646, 0.0
      %v4761 = vmax.f32 %v4651, 0.0
      %v4762 = vmax.f32 %v4654, 0.0
      %v4763 = vmax.f32 %v4659, 0.0
      %v4764 = vmax.f32 %v4662, 0.0
      %v4765 = vmax.f32 %v4667, 0.0
      %v4766 = vmax.f32 %v4670, 0.0
      %v4767 = vmax.f32 %v4675, 0.0
      %v4768 = vmax.f32 %v4678, 0.0
      %v4769 = vmax.f32 %v4683, 0.0
      %v4770 = vmax.f32 %v4686, 0.0
      %v4771 = vmax.f32 %v4691, 0.0
      %v4772 = vmax.f32 %v4694, 0.0
      %v4773 = vmax.f32 %v4699, 0.0
      %v4774 = vmax.f32 %v4702, 0.0
      %v4775 = vmax.f32 %v4707, 0.0
      %v4776 = vmax.f32 %v4710, 0.0
      %v4777 = vpack.c.bf16 %v4714, %v4713
      %v4778 = vpack.c.bf16 %v4716, %v4715
      %v4779 = vpack.c.bf16 %v4718, %v4717
      %v4780 = vpack.c.bf16 %v4720, %v4719
      %v4781 = vpack.c.bf16 %v4722, %v4721
      %v4782 = vpack.c.bf16 %v4724, %v4723
      %v4783 = vpack.c.bf16 %v4726, %v4725
      %v4784 = vpack.c.bf16 %v4728, %v4727
      %v4785 = vpack.c.bf16 %v4730, %v4729
      %v4786 = vpack.c.bf16 %v4732, %v4731
      %v4787 = vpack.c.bf16 %v4734, %v4733
      %v4788 = vpack.c.bf16 %v4736, %v4735
      %v4789 = vpack.c.bf16 %v4738, %v4737
      %v4790 = vpack.c.bf16 %v4740, %v4739
      %v4791 = vpack.c.bf16 %v4742, %v4741
      %v4792 = vpack.c.bf16 %v4744, %v4743
      %v4793 = vpack.c.bf16 %v4746, %v4745
      %v4794 = vpack.c.bf16 %v4748, %v4747
      %v4795 = vpack.c.bf16 %v4750, %v4749
      %v4796 = vpack.c.bf16 %v4752, %v4751
      %v4797 = vpack.c.bf16 %v4754, %v4753
      %v4798 = vpack.c.bf16 %v4756, %v4755
      %v4799 = vpack.c.bf16 %v4758, %v4757
      %v4800 = vpack.c.bf16 %v4760, %v4759
      %v4801 = vpack.c.bf16 %v4762, %v4761
      %v4802 = vpack.c.bf16 %v4764, %v4763
      %v4803 = vpack.c.bf16 %v4766, %v4765
      %v4804 = vpack.c.bf16 %v4768, %v4767
      %v4805 = vpack.c.bf16 %v4770, %v4769
      %v4806 = vpack.c.bf16 %v4772, %v4771
      %v4807 = vpack.c.bf16 %v4774, %v4773
      %v4808 = vpack.c.bf16 %v4776, %v4775
      %v4809 = vld [vmem:[%s5] sm:$0xff]
      %v4810 = vld [vmem:[%s5 + $0x8] sm:$0xff]
      %v4811 = vld [vmem:[%s5 + $0x10] sm:$0xff]
      %v4812 = vld [vmem:[%s5 + $0x18] sm:$0xff]
      %v4813 = vld [vmem:[%s5 + $0x20] sm:$0xff]
      %v4814 = vld [vmem:[%s5 + $0x28] sm:$0xff]
      %v4815 = vld [vmem:[%s5 + $0x30] sm:$0xff]
      %v4816 = vld [vmem:[%s5 + $0x38] sm:$0xff]
      %v4817 = vld [vmem:[%s5 + $0x40] sm:$0xff]
      %v4818 = vld [vmem:[%s5 + $0x48] sm:$0xff]
      %v4819 = vld [vmem:[%s5 + $0x50] sm:$0xff]
      %v4820 = vld [vmem:[%s5 + $0x58] sm:$0xff]
      %v4821 = vld [vmem:[%s5 + $0x60] sm:$0xff]
      %v4822 = vld [vmem:[%s5 + $0x68] sm:$0xff]
      %v4823 = vld [vmem:[%s5 + $0x70] sm:$0xff]
      %v4824 = vld [vmem:[%s5 + $0x78] sm:$0xff]
      %v4825 = vld [vmem:[%s6] sm:$0x3]
      %v4827 = vlaneseq
      %v4828 = vshrl.u32 %v4827, 7
      %v4829 = vsub.s32 0, %v4828
      %v4830 = vrot.slane %v4825, %v4829
      %v4831 = vlaneseq
      %v4832 = vshrl.u32 %v4831, 7
      %v4833 = vsub.s32 1, %v4832
      %v4834 = vrot.slane %v4825, %v4833
      %v4853 = vunpack.c.l.b16 %v4809
      %v4854 = vunpack.c.h.b16 %v4809
      %v4855 = vunpack.c.l.b16 %v4810
      %v4856 = vunpack.c.h.b16 %v4810
      %v4857 = vunpack.c.l.b16 %v4811
      %v4858 = vunpack.c.h.b16 %v4811
      %v4859 = vunpack.c.l.b16 %v4812
      %v4860 = vunpack.c.h.b16 %v4812
      %v4861 = vunpack.c.l.b16 %v4813
      %v4862 = vunpack.c.h.b16 %v4813
      %v4863 = vunpack.c.l.b16 %v4814
      %v4864 = vunpack.c.h.b16 %v4814
      %v4865 = vunpack.c.l.b16 %v4815
      %v4866 = vunpack.c.h.b16 %v4815
      %v4867 = vunpack.c.l.b16 %v4816
      %v4868 = vunpack.c.h.b16 %v4816
      %v4869 = vunpack.c.l.b16 %v4817
      %v4870 = vunpack.c.h.b16 %v4817
      %v4871 = vunpack.c.l.b16 %v4818
      %v4872 = vunpack.c.h.b16 %v4818
      %v4873 = vunpack.c.l.b16 %v4819
      %v4874 = vunpack.c.h.b16 %v4819
      %v4875 = vunpack.c.l.b16 %v4820
      %v4876 = vunpack.c.h.b16 %v4820
      %v4877 = vunpack.c.l.b16 %v4821
      %v4878 = vunpack.c.h.b16 %v4821
      %v4879 = vunpack.c.l.b16 %v4822
      %v4880 = vunpack.c.h.b16 %v4822
      %v4881 = vunpack.c.l.b16 %v4823
      %v4882 = vunpack.c.h.b16 %v4823
      %v4883 = vunpack.c.l.b16 %v4824
      %v4884 = vunpack.c.h.b16 %v4824
      %v4885 = vpack.c.b16 %v4855, %v4853
      %v4886 = vpack.c.b16 %v4856, %v4854
      %v4887 = vpack.c.b16 %v4859, %v4857
      %v4888 = vpack.c.b16 %v4860, %v4858
      %v4889 = vpack.c.b16 %v4863, %v4861
      %v4890 = vpack.c.b16 %v4864, %v4862
      %v4891 = vpack.c.b16 %v4867, %v4865
      %v4892 = vpack.c.b16 %v4868, %v4866
      %v4893 = vpack.c.b16 %v4871, %v4869
      %v4894 = vpack.c.b16 %v4872, %v4870
      %v4895 = vpack.c.b16 %v4875, %v4873
      %v4896 = vpack.c.b16 %v4876, %v4874
      %v4897 = vpack.c.b16 %v4879, %v4877
      %v4898 = vpack.c.b16 %v4880, %v4878
      %v4899 = vpack.c.b16 %v4883, %v4881
      %v4900 = vpack.c.b16 %v4884, %v4882
      %4917 = vmatprep.subr.bf16.mxu0 %v4900
      %4918 = vmatpush1.bf16.msra.mxu0 %v4899
      %4919 = vmatprep.subr.bf16.mxu0 %v4898
      %4920 = vmatpush1.bf16.msra.mxu0 %v4897
      %4921 = vmatprep.subr.bf16.mxu0 %v4896
      %4922 = vmatpush1.bf16.msra.mxu0 %v4895
      %4923 = vmatprep.subr.bf16.mxu0 %v4894
      %4924 = vmatpush1.bf16.msra.mxu0 %v4893
      %4925 = vmatprep.subr.bf16.mxu0 %v4892
      %4926 = vmatpush1.bf16.msra.mxu0 %v4891
      %4927 = vmatprep.subr.bf16.mxu0 %v4890
      %4928 = vmatpush1.bf16.msra.mxu0 %v4889
      %4929 = vmatprep.subr.bf16.mxu0 %v4888
      %4930 = vmatpush1.bf16.msra.mxu0 %v4887
      %4931 = vmatprep.subr.bf16.mxu0 %v4886
      %4932 = vmatpush1.bf16.msra.mxu0 %v4885
      %4933 = vmatprep.subr.bf16.mxu0 0
      %4934 = vmatpush2.bf16.msra.mxu0 0
      %4935 = vmatprep.subr.bf16.mxu0 0
      %4936 = vmatpush2.bf16.msra.mxu0 0
      %4937 = vmatprep.subr.bf16.mxu0 0
      %4938 = vmatpush2.bf16.msra.mxu0 0
      %4939 = vmatprep.subr.bf16.mxu0 0
      %4940 = vmatpush2.bf16.msra.mxu0 0
      %4941 = vmatprep.subr.bf16.mxu0 0
      %4942 = vmatpush2.bf16.msra.mxu0 0
      %4943 = vmatprep.subr.bf16.mxu0 0
      %4944 = vmatpush2.bf16.msra.mxu0 0
      %4945 = vmatprep.subr.bf16.mxu0 0
      %4946 = vmatpush2.bf16.msra.mxu0 0
      %4947 = vmatprep.subr.bf16.mxu0 0
      %4948 = vmatpush2.bf16.msra.mxu0 0
      %4949 = vmatprep.mubr.bf16.mxu0 0
      %4950 = vmatmul.mubr.bf16.gmra.mxu0 %v4777
      %v4951 = vpop.f32.mrf.mxu0
      %v4952 = vadd.f32 %v4830, %v4951
      %v4953 = vpop.f32.mrf.mxu0
      %v4954 = vadd.f32 %v4834, %v4953
      %v4955 = vpop.f32.mrf.mxu0
      %v4956 = vadd.f32 %v4830, %v4955
      %v4957 = vpop.f32.mrf.mxu0
      %v4958 = vadd.f32 %v4834, %v4957
      %4959 = vmatprep.mubr.bf16.mxu0 0
      %4960 = vmatmul.mubr.bf16.gmra.mxu0 %v4778
      %v4961 = vpop.f32.mrf.mxu0
      %v4962 = vadd.f32 %v4830, %v4961
      %v4963 = vpop.f32.mrf.mxu0
      %v4964 = vadd.f32 %v4834, %v4963
      %v4965 = vpop.f32.mrf.mxu0
      %v4966 = vadd.f32 %v4830, %v4965
      %v4967 = vpop.f32.mrf.mxu0
      %v4968 = vadd.f32 %v4834, %v4967
      %4969 = vmatprep.mubr.bf16.mxu0 0
      %4970 = vmatmul.mubr.bf16.gmra.mxu0 %v4779
      %v4971 = vpop.f32.mrf.mxu0
      %v4972 = vadd.f32 %v4830, %v4971
      %v4973 = vpop.f32.mrf.mxu0
      %v4974 = vadd.f32 %v4834, %v4973
      %v4975 = vpop.f32.mrf.mxu0
      %v4976 = vadd.f32 %v4830, %v4975
      %v4977 = vpop.f32.mrf.mxu0
      %v4978 = vadd.f32 %v4834, %v4977
      %4979 = vmatprep.mubr.bf16.mxu0 0
      %4980 = vmatmul.mubr.bf16.gmra.mxu0 %v4780
      %v4981 = vpop.f32.mrf.mxu0
      %v4982 = vadd.f32 %v4830, %v4981
      %v4983 = vpop.f32.mrf.mxu0
      %v4984 = vadd.f32 %v4834, %v4983
      %v4985 = vpop.f32.mrf.mxu0
      %v4986 = vadd.f32 %v4830, %v4985
      %v4987 = vpop.f32.mrf.mxu0
      %v4988 = vadd.f32 %v4834, %v4987
      %4989 = vmatprep.mubr.bf16.mxu0 0
      %4990 = vmatmul.mubr.bf16.gmra.mxu0 %v4781
      %v4991 = vpop.f32.mrf.mxu0
      %v4992 = vadd.f32 %v4830, %v4991
      %v4993 = vpop.f32.mrf.mxu0
      %v4994 = vadd.f32 %v4834, %v4993
      %v4995 = vpop.f32.mrf.mxu0
      %v4996 = vadd.f32 %v4830, %v4995
      %v4997 = vpop.f32.mrf.mxu0
      %v4998 = vadd.f32 %v4834, %v4997
      %4999 = vmatprep.mubr.bf16.mxu0 0
      %5000 = vmatmul.mubr.bf16.gmra.mxu0 %v4782
      %v5001 = vpop.f32.mrf.mxu0
      %v5002 = vadd.f32 %v4830, %v5001
      %v5003 = vpop.f32.mrf.mxu0
      %v5004 = vadd.f32 %v4834, %v5003
      %v5005 = vpop.f32.mrf.mxu0
      %v5006 = vadd.f32 %v4830, %v5005
      %v5007 = vpop.f32.mrf.mxu0
      %v5008 = vadd.f32 %v4834, %v5007
      %5009 = vmatprep.mubr.bf16.mxu0 0
      %5010 = vmatmul.mubr.bf16.gmra.mxu0 %v4783
      %v5011 = vpop.f32.mrf.mxu0
      %v5012 = vadd.f32 %v4830, %v5011
      %v5013 = vpop.f32.mrf.mxu0
      %v5014 = vadd.f32 %v4834, %v5013
      %v5015 = vpop.f32.mrf.mxu0
      %v5016 = vadd.f32 %v4830, %v5015
      %v5017 = vpop.f32.mrf.mxu0
      %v5018 = vadd.f32 %v4834, %v5017
      %5019 = vmatprep.mubr.bf16.mxu0 0
      %5020 = vmatmul.mubr.bf16.gmra.mxu0 %v4784
      %v5021 = vpop.f32.mrf.mxu0
      %v5022 = vadd.f32 %v4830, %v5021
      %v5023 = vpop.f32.mrf.mxu0
      %v5024 = vadd.f32 %v4834, %v5023
      %v5025 = vpop.f32.mrf.mxu0
      %v5026 = vadd.f32 %v4830, %v5025
      %v5027 = vpop.f32.mrf.mxu0
      %v5028 = vadd.f32 %v4834, %v5027
      %5029 = vmatprep.mubr.bf16.mxu0 0
      %5030 = vmatmul.mubr.bf16.gmra.mxu0 %v4785
      %v5031 = vpop.f32.mrf.mxu0
      %v5032 = vadd.f32 %v4830, %v5031
      %v5033 = vpop.f32.mrf.mxu0
      %v5034 = vadd.f32 %v4834, %v5033
      %v5035 = vpop.f32.mrf.mxu0
      %v5036 = vadd.f32 %v4830, %v5035
      %v5037 = vpop.f32.mrf.mxu0
      %v5038 = vadd.f32 %v4834, %v5037
      %5039 = vmatprep.mubr.bf16.mxu0 0
      %5040 = vmatmul.mubr.bf16.gmra.mxu0 %v4786
      %v5041 = vpop.f32.mrf.mxu0
      %v5042 = vadd.f32 %v4830, %v5041
      %v5043 = vpop.f32.mrf.mxu0
      %v5044 = vadd.f32 %v4834, %v5043
      %v5045 = vpop.f32.mrf.mxu0
      %v5046 = vadd.f32 %v4830, %v5045
      %v5047 = vpop.f32.mrf.mxu0
      %v5048 = vadd.f32 %v4834, %v5047
      %5049 = vmatprep.mubr.bf16.mxu0 0
      %5050 = vmatmul.mubr.bf16.gmra.mxu0 %v4787
      %v5051 = vpop.f32.mrf.mxu0
      %v5052 = vadd.f32 %v4830, %v5051
      %v5053 = vpop.f32.mrf.mxu0
      %v5054 = vadd.f32 %v4834, %v5053
      %v5055 = vpop.f32.mrf.mxu0
      %v5056 = vadd.f32 %v4830, %v5055
      %v5057 = vpop.f32.mrf.mxu0
      %v5058 = vadd.f32 %v4834, %v5057
      %5059 = vmatprep.mubr.bf16.mxu0 0
      %5060 = vmatmul.mubr.bf16.gmra.mxu0 %v4788
      %v5061 = vpop.f32.mrf.mxu0
      %v5062 = vadd.f32 %v4830, %v5061
      %v5063 = vpop.f32.mrf.mxu0
      %v5064 = vadd.f32 %v4834, %v5063
      %v5065 = vpop.f32.mrf.mxu0
      %v5066 = vadd.f32 %v4830, %v5065
      %v5067 = vpop.f32.mrf.mxu0
      %v5068 = vadd.f32 %v4834, %v5067
      %5069 = vmatprep.mubr.bf16.mxu0 0
      %5070 = vmatmul.mubr.bf16.gmra.mxu0 %v4789
      %v5071 = vpop.f32.mrf.mxu0
      %v5072 = vadd.f32 %v4830, %v5071
      %v5073 = vpop.f32.mrf.mxu0
      %v5074 = vadd.f32 %v4834, %v5073
      %v5075 = vpop.f32.mrf.mxu0
      %v5076 = vadd.f32 %v4830, %v5075
      %v5077 = vpop.f32.mrf.mxu0
      %v5078 = vadd.f32 %v4834, %v5077
      %5079 = vmatprep.mubr.bf16.mxu0 0
      %5080 = vmatmul.mubr.bf16.gmra.mxu0 %v4790
      %v5081 = vpop.f32.mrf.mxu0
      %v5082 = vadd.f32 %v4830, %v5081
      %v5083 = vpop.f32.mrf.mxu0
      %v5084 = vadd.f32 %v4834, %v5083
      %v5085 = vpop.f32.mrf.mxu0
      %v5086 = vadd.f32 %v4830, %v5085
      %v5087 = vpop.f32.mrf.mxu0
      %v5088 = vadd.f32 %v4834, %v5087
      %5089 = vmatprep.mubr.bf16.mxu0 0
      %5090 = vmatmul.mubr.bf16.gmra.mxu0 %v4791
      %v5091 = vpop.f32.mrf.mxu0
      %v5092 = vadd.f32 %v4830, %v5091
      %v5093 = vpop.f32.mrf.mxu0
      %v5094 = vadd.f32 %v4834, %v5093
      %v5095 = vpop.f32.mrf.mxu0
      %v5096 = vadd.f32 %v4830, %v5095
      %v5097 = vpop.f32.mrf.mxu0
      %v5098 = vadd.f32 %v4834, %v5097
      %5099 = vmatprep.mubr.bf16.mxu0 0
      %5100 = vmatmul.mubr.bf16.gmra.mxu0 %v4792
      %v5101 = vpop.f32.mrf.mxu0
      %v5102 = vadd.f32 %v4830, %v5101
      %v5103 = vpop.f32.mrf.mxu0
      %v5104 = vadd.f32 %v4834, %v5103
      %v5105 = vpop.f32.mrf.mxu0
      %v5106 = vadd.f32 %v4830, %v5105
      %v5107 = vpop.f32.mrf.mxu0
      %v5108 = vadd.f32 %v4834, %v5107
      %5109 = vmatprep.mubr.bf16.mxu0 0
      %5110 = vmatmul.mubr.bf16.gmra.mxu0 %v4793
      %v5111 = vpop.f32.mrf.mxu0
      %v5112 = vadd.f32 %v4830, %v5111
      %v5113 = vpop.f32.mrf.mxu0
      %v5114 = vadd.f32 %v4834, %v5113
      %v5115 = vpop.f32.mrf.mxu0
      %v5116 = vadd.f32 %v4830, %v5115
      %v5117 = vpop.f32.mrf.mxu0
      %v5118 = vadd.f32 %v4834, %v5117
      %5119 = vmatprep.mubr.bf16.mxu0 0
      %5120 = vmatmul.mubr.bf16.gmra.mxu0 %v4794
      %v5121 = vpop.f32.mrf.mxu0
      %v5122 = vadd.f32 %v4830, %v5121
      %v5123 = vpop.f32.mrf.mxu0
      %v5124 = vadd.f32 %v4834, %v5123
      %v5125 = vpop.f32.mrf.mxu0
      %v5126 = vadd.f32 %v4830, %v5125
      %v5127 = vpop.f32.mrf.mxu0
      %v5128 = vadd.f32 %v4834, %v5127
      %5129 = vmatprep.mubr.bf16.mxu0 0
      %5130 = vmatmul.mubr.bf16.gmra.mxu0 %v4795
      %v5131 = vpop.f32.mrf.mxu0
      %v5132 = vadd.f32 %v4830, %v5131
      %v5133 = vpop.f32.mrf.mxu0
      %v5134 = vadd.f32 %v4834, %v5133
      %v5135 = vpop.f32.mrf.mxu0
      %v5136 = vadd.f32 %v4830, %v5135
      %v5137 = vpop.f32.mrf.mxu0
      %v5138 = vadd.f32 %v4834, %v5137
      %5139 = vmatprep.mubr.bf16.mxu0 0
      %5140 = vmatmul.mubr.bf16.gmra.mxu0 %v4796
      %v5141 = vpop.f32.mrf.mxu0
      %v5142 = vadd.f32 %v4830, %v5141
      %v5143 = vpop.f32.mrf.mxu0
      %v5144 = vadd.f32 %v4834, %v5143
      %v5145 = vpop.f32.mrf.mxu0
      %v5146 = vadd.f32 %v4830, %v5145
      %v5147 = vpop.f32.mrf.mxu0
      %v5148 = vadd.f32 %v4834, %v5147
      %5149 = vmatprep.mubr.bf16.mxu0 0
      %5150 = vmatmul.mubr.bf16.gmra.mxu0 %v4797
      %v5151 = vpop.f32.mrf.mxu0
      %v5152 = vadd.f32 %v4830, %v5151
      %v5153 = vpop.f32.mrf.mxu0
      %v5154 = vadd.f32 %v4834, %v5153
      %v5155 = vpop.f32.mrf.mxu0
      %v5156 = vadd.f32 %v4830, %v5155
      %v5157 = vpop.f32.mrf.mxu0
      %v5158 = vadd.f32 %v4834, %v5157
      %5159 = vmatprep.mubr.bf16.mxu0 0
      %5160 = vmatmul.mubr.bf16.gmra.mxu0 %v4798
      %v5161 = vpop.f32.mrf.mxu0
      %v5162 = vadd.f32 %v4830, %v5161
      %v5163 = vpop.f32.mrf.mxu0
      %v5164 = vadd.f32 %v4834, %v5163
      %v5165 = vpop.f32.mrf.mxu0
      %v5166 = vadd.f32 %v4830, %v5165
      %v5167 = vpop.f32.mrf.mxu0
      %v5168 = vadd.f32 %v4834, %v5167
      %5169 = vmatprep.mubr.bf16.mxu0 0
      %5170 = vmatmul.mubr.bf16.gmra.mxu0 %v4799
      %v5171 = vpop.f32.mrf.mxu0
      %v5172 = vadd.f32 %v4830, %v5171
      %v5173 = vpop.f32.mrf.mxu0
      %v5174 = vadd.f32 %v4834, %v5173
      %v5175 = vpop.f32.mrf.mxu0
      %v5176 = vadd.f32 %v4830, %v5175
      %v5177 = vpop.f32.mrf.mxu0
      %v5178 = vadd.f32 %v4834, %v5177
      %5179 = vmatprep.mubr.bf16.mxu0 0
      %5180 = vmatmul.mubr.bf16.gmra.mxu0 %v4800
      %v5181 = vpop.f32.mrf.mxu0
      %v5182 = vadd.f32 %v4830, %v5181
      %v5183 = vpop.f32.mrf.mxu0
      %v5184 = vadd.f32 %v4834, %v5183
      %v5185 = vpop.f32.mrf.mxu0
      %v5186 = vadd.f32 %v4830, %v5185
      %v5187 = vpop.f32.mrf.mxu0
      %v5188 = vadd.f32 %v4834, %v5187
      %5189 = vmatprep.mubr.bf16.mxu0 0
      %5190 = vmatmul.mubr.bf16.gmra.mxu0 %v4801
      %v5191 = vpop.f32.mrf.mxu0
      %v5192 = vadd.f32 %v4830, %v5191
      %v5193 = vpop.f32.mrf.mxu0
      %v5194 = vadd.f32 %v4834, %v5193
      %v5195 = vpop.f32.mrf.mxu0
      %v5196 = vadd.f32 %v4830, %v5195
      %v5197 = vpop.f32.mrf.mxu0
      %v5198 = vadd.f32 %v4834, %v5197
      %5199 = vmatprep.mubr.bf16.mxu0 0
      %5200 = vmatmul.mubr.bf16.gmra.mxu0 %v4802
      %v5201 = vpop.f32.mrf.mxu0
      %v5202 = vadd.f32 %v4830, %v5201
      %v5203 = vpop.f32.mrf.mxu0
      %v5204 = vadd.f32 %v4834, %v5203
      %v5205 = vpop.f32.mrf.mxu0
      %v5206 = vadd.f32 %v4830, %v5205
      %v5207 = vpop.f32.mrf.mxu0
      %v5208 = vadd.f32 %v4834, %v5207
      %5209 = vmatprep.mubr.bf16.mxu0 0
      %5210 = vmatmul.mubr.bf16.gmra.mxu0 %v4803
      %v5211 = vpop.f32.mrf.mxu0
      %v5212 = vadd.f32 %v4830, %v5211
      %v5213 = vpop.f32.mrf.mxu0
      %v5214 = vadd.f32 %v4834, %v5213
      %v5215 = vpop.f32.mrf.mxu0
      %v5216 = vadd.f32 %v4830, %v5215
      %v5217 = vpop.f32.mrf.mxu0
      %v5218 = vadd.f32 %v4834, %v5217
      %5219 = vmatprep.mubr.bf16.mxu0 0
      %5220 = vmatmul.mubr.bf16.gmra.mxu0 %v4804
      %v5221 = vpop.f32.mrf.mxu0
      %v5222 = vadd.f32 %v4830, %v5221
      %v5223 = vpop.f32.mrf.mxu0
      %v5224 = vadd.f32 %v4834, %v5223
      %v5225 = vpop.f32.mrf.mxu0
      %v5226 = vadd.f32 %v4830, %v5225
      %v5227 = vpop.f32.mrf.mxu0
      %v5228 = vadd.f32 %v4834, %v5227
      %5229 = vmatprep.mubr.bf16.mxu0 0
      %5230 = vmatmul.mubr.bf16.gmra.mxu0 %v4805
      %v5231 = vpop.f32.mrf.mxu0
      %v5232 = vadd.f32 %v4830, %v5231
      %v5233 = vpop.f32.mrf.mxu0
      %v5234 = vadd.f32 %v4834, %v5233
      %v5235 = vpop.f32.mrf.mxu0
      %v5236 = vadd.f32 %v4830, %v5235
      %v5237 = vpop.f32.mrf.mxu0
      %v5238 = vadd.f32 %v4834, %v5237
      %5239 = vmatprep.mubr.bf16.mxu0 0
      %5240 = vmatmul.mubr.bf16.gmra.mxu0 %v4806
      %v5241 = vpop.f32.mrf.mxu0
      %v5242 = vadd.f32 %v4830, %v5241
      %v5243 = vpop.f32.mrf.mxu0
      %v5244 = vadd.f32 %v4834, %v5243
      %v5245 = vpop.f32.mrf.mxu0
      %v5246 = vadd.f32 %v4830, %v5245
      %v5247 = vpop.f32.mrf.mxu0
      %v5248 = vadd.f32 %v4834, %v5247
      %5249 = vmatprep.mubr.bf16.mxu0 0
      %5250 = vmatmul.mubr.bf16.gmra.mxu0 %v4807
      %v5251 = vpop.f32.mrf.mxu0
      %v5252 = vadd.f32 %v4830, %v5251
      %v5253 = vpop.f32.mrf.mxu0
      %v5254 = vadd.f32 %v4834, %v5253
      %v5255 = vpop.f32.mrf.mxu0
      %v5256 = vadd.f32 %v4830, %v5255
      %v5257 = vpop.f32.mrf.mxu0
      %v5258 = vadd.f32 %v4834, %v5257
      %5259 = vmatprep.mubr.bf16.mxu0 0
      %5260 = vmatmul.mubr.bf16.gmra.mxu0 %v4808
      %v5261 = vpop.f32.mrf.mxu0
      %v5262 = vadd.f32 %v4830, %v5261
      %v5263 = vpop.f32.mrf.mxu0
      %v5264 = vadd.f32 %v4834, %v5263
      %v5265 = vpop.f32.mrf.mxu0
      %v5266 = vadd.f32 %v4830, %v5265
      %v5267 = vpop.f32.mrf.mxu0
      %v5268 = vadd.f32 %v4834, %v5267
      %5269 = vdwg.mxu0
      %v5270 = vpack.c.bf16 %v4956, %v4952
      %v5271 = vpack.c.bf16 %v4966, %v4962
      %v5272 = vpack.c.bf16 %v4976, %v4972
      %v5273 = vpack.c.bf16 %v4986, %v4982
      %v5274 = vpack.c.bf16 %v4996, %v4992
      %v5275 = vpack.c.bf16 %v5006, %v5002
      %v5276 = vpack.c.bf16 %v5016, %v5012
      %v5277 = vpack.c.bf16 %v5026, %v5022
      %v5278 = vpack.c.bf16 %v5036, %v5032
      %v5279 = vpack.c.bf16 %v5046, %v5042
      %v5280 = vpack.c.bf16 %v5056, %v5052
      %v5281 = vpack.c.bf16 %v5066, %v5062
      %v5282 = vpack.c.bf16 %v5076, %v5072
      %v5283 = vpack.c.bf16 %v5086, %v5082
      %v5284 = vpack.c.bf16 %v5096, %v5092
      %v5285 = vpack.c.bf16 %v5106, %v5102
      %v5286 = vpack.c.bf16 %v5116, %v5112
      %v5287 = vpack.c.bf16 %v5126, %v5122
      %v5288 = vpack.c.bf16 %v5136, %v5132
      %v5289 = vpack.c.bf16 %v5146, %v5142
      %v5290 = vpack.c.bf16 %v5156, %v5152
      %v5291 = vpack.c.bf16 %v5166, %v5162
      %v5292 = vpack.c.bf16 %v5176, %v5172
      %v5293 = vpack.c.bf16 %v5186, %v5182
      %v5294 = vpack.c.bf16 %v5196, %v5192
      %v5295 = vpack.c.bf16 %v5206, %v5202
      %v5296 = vpack.c.bf16 %v5216, %v5212
      %v5297 = vpack.c.bf16 %v5226, %v5222
      %v5298 = vpack.c.bf16 %v5236, %v5232
      %v5299 = vpack.c.bf16 %v5246, %v5242
      %v5300 = vpack.c.bf16 %v5256, %v5252
      %v5301 = vpack.c.bf16 %v5266, %v5262
      %v5302 = vld [vmem:[%s7] sm:$0xf]
      %v5303 = vld [vmem:[%s7 + $0x4] sm:$0xf]
      %v5304 = vld [vmem:[%s7 + $0x8] sm:$0xf]
      %v5305 = vld [vmem:[%s7 + $0xc] sm:$0xf]
      %v5306 = vld [vmem:[%s7 + $0x10] sm:$0xf]
      %v5307 = vld [vmem:[%s7 + $0x14] sm:$0xf]
      %v5308 = vld [vmem:[%s7 + $0x18] sm:$0xf]
      %v5309 = vld [vmem:[%s7 + $0x1c] sm:$0xf]
      %v5310 = vld [vmem:[%s7 + $0x20] sm:$0xf]
      %v5311 = vld [vmem:[%s7 + $0x24] sm:$0xf]
      %v5312 = vld [vmem:[%s7 + $0x28] sm:$0xf]
      %v5313 = vld [vmem:[%s7 + $0x2c] sm:$0xf]
      %v5314 = vld [vmem:[%s7 + $0x30] sm:$0xf]
      %v5315 = vld [vmem:[%s7 + $0x34] sm:$0xf]
      %v5316 = vld [vmem:[%s7 + $0x38] sm:$0xf]
      %v5317 = vld [vmem:[%s7 + $0x3c] sm:$0xf]
      %v5334 = vunpack.c.l.b16 %v5302
      %v5335 = vunpack.c.l.b16 %v5303
      %v5336 = vunpack.c.l.b16 %v5304
      %v5337 = vunpack.c.l.b16 %v5305
      %v5338 = vunpack.c.l.b16 %v5306
      %v5339 = vunpack.c.l.b16 %v5307
      %v5340 = vunpack.c.l.b16 %v5308
      %v5341 = vunpack.c.l.b16 %v5309
      %v5342 = vunpack.c.l.b16 %v5310
      %v5343 = vunpack.c.l.b16 %v5311
      %v5344 = vunpack.c.l.b16 %v5312
      %v5345 = vunpack.c.l.b16 %v5313
      %v5346 = vunpack.c.l.b16 %v5314
      %v5347 = vunpack.c.l.b16 %v5315
      %v5348 = vunpack.c.l.b16 %v5316
      %v5349 = vunpack.c.l.b16 %v5317
      %v5350 = vpack.c.b16 %v5335, %v5334
      %v5351 = vpack.c.b16 %v5337, %v5336
      %v5352 = vpack.c.b16 %v5339, %v5338
      %v5353 = vpack.c.b16 %v5341, %v5340
      %v5354 = vpack.c.b16 %v5343, %v5342
      %v5355 = vpack.c.b16 %v5345, %v5344
      %v5356 = vpack.c.b16 %v5347, %v5346
      %v5357 = vpack.c.b16 %v5349, %v5348
      %5366 = vmatprep.subr.bf16.mxu0 0
      %5367 = vmatpush1.bf16.msra.mxu0 %v5357
      %5368 = vmatprep.subr.bf16.mxu0 0
      %5369 = vmatpush1.bf16.msra.mxu0 %v5356
      %5370 = vmatprep.subr.bf16.mxu0 0
      %5371 = vmatpush1.bf16.msra.mxu0 %v5355
      %5372 = vmatprep.subr.bf16.mxu0 0
      %5373 = vmatpush1.bf16.msra.mxu0 %v5354
      %5374 = vmatprep.subr.bf16.mxu0 0
      %5375 = vmatpush1.bf16.msra.mxu0 %v5353
      %5376 = vmatprep.subr.bf16.mxu0 0
      %5377 = vmatpush1.bf16.msra.mxu0 %v5352
      %5378 = vmatprep.subr.bf16.mxu0 0
      %5379 = vmatpush1.bf16.msra.mxu0 %v5351
      %5380 = vmatprep.subr.bf16.mxu0 0
      %5381 = vmatpush1.bf16.msra.mxu0 %v5350
      %5382 = vmatprep.subr.bf16.mxu0 0
      %5383 = vmatpush2.bf16.msra.mxu0 0
      %5384 = vmatprep.subr.bf16.mxu0 0
      %5385 = vmatpush2.bf16.msra.mxu0 0
      %5386 = vmatprep.subr.bf16.mxu0 0
      %5387 = vmatpush2.bf16.msra.mxu0 0
      %5388 = vmatprep.subr.bf16.mxu0 0
      %5389 = vmatpush2.bf16.msra.mxu0 0
      %5390 = vmatprep.subr.bf16.mxu0 0
      %5391 = vmatpush2.bf16.msra.mxu0 0
      %5392 = vmatprep.subr.bf16.mxu0 0
      %5393 = vmatpush2.bf16.msra.mxu0 0
      %5394 = vmatprep.subr.bf16.mxu0 0
      %5395 = vmatpush2.bf16.msra.mxu0 0
      %5396 = vmatprep.subr.bf16.mxu0 0
      %5397 = vmatpush2.bf16.msra.mxu0 0
      %5398 = vmatprep.mubr.bf16.mxu0 0
      %5399 = vmatmul.mubr.bf16.gmra.mxu0 %v5270
      %v5400 = vpop.f32.mrf.mxu0
      %v5401 = vadd.f32 %v1120, %v5400
      %v5402 = vpop.f32.mrf.mxu0
      %v5403 = vpop.f32.mrf.mxu0
      %v5404 = vadd.f32 %v1123, %v5403
      %v5405 = vpop.f32.mrf.mxu0
      %5406 = vmatprep.mubr.bf16.mxu0 0
      %5407 = vmatmul.mubr.bf16.gmra.mxu0 %v5271
      %v5408 = vpop.f32.mrf.mxu0
      %v5409 = vadd.f32 %v1128, %v5408
      %v5410 = vpop.f32.mrf.mxu0
      %v5411 = vpop.f32.mrf.mxu0
      %v5412 = vadd.f32 %v1131, %v5411
      %v5413 = vpop.f32.mrf.mxu0
      %5414 = vmatprep.mubr.bf16.mxu0 0
      %5415 = vmatmul.mubr.bf16.gmra.mxu0 %v5272
      %v5416 = vpop.f32.mrf.mxu0
      %v5417 = vadd.f32 %v1136, %v5416
      %v5418 = vpop.f32.mrf.mxu0
      %v5419 = vpop.f32.mrf.mxu0
      %v5420 = vadd.f32 %v1139, %v5419
      %v5421 = vpop.f32.mrf.mxu0
      %5422 = vmatprep.mubr.bf16.mxu0 0
      %5423 = vmatmul.mubr.bf16.gmra.mxu0 %v5273
      %v5424 = vpop.f32.mrf.mxu0
      %v5425 = vadd.f32 %v1144, %v5424
      %v5426 = vpop.f32.mrf.mxu0
      %v5427 = vpop.f32.mrf.mxu0
      %v5428 = vadd.f32 %v1147, %v5427
      %v5429 = vpop.f32.mrf.mxu0
      %5430 = vmatprep.mubr.bf16.mxu0 0
      %5431 = vmatmul.mubr.bf16.gmra.mxu0 %v5274
      %v5432 = vpop.f32.mrf.mxu0
      %v5433 = vadd.f32 %v1152, %v5432
      %v5434 = vpop.f32.mrf.mxu0
      %v5435 = vpop.f32.mrf.mxu0
      %v5436 = vadd.f32 %v1155, %v5435
      %v5437 = vpop.f32.mrf.mxu0
      %5438 = vmatprep.mubr.bf16.mxu0 0
      %5439 = vmatmul.mubr.bf16.gmra.mxu0 %v5275
      %v5440 = vpop.f32.mrf.mxu0
      %v5441 = vadd.f32 %v1160, %v5440
      %v5442 = vpop.f32.mrf.mxu0
      %v5443 = vpop.f32.mrf.mxu0
      %v5444 = vadd.f32 %v1163, %v5443
      %v5445 = vpop.f32.mrf.mxu0
      %5446 = vmatprep.mubr.bf16.mxu0 0
      %5447 = vmatmul.mubr.bf16.gmra.mxu0 %v5276
      %v5448 = vpop.f32.mrf.mxu0
      %v5449 = vadd.f32 %v1168, %v5448
      %v5450 = vpop.f32.mrf.mxu0
      %v5451 = vpop.f32.mrf.mxu0
      %v5452 = vadd.f32 %v1171, %v5451
      %v5453 = vpop.f32.mrf.mxu0
      %5454 = vmatprep.mubr.bf16.mxu0 0
      %5455 = vmatmul.mubr.bf16.gmra.mxu0 %v5277
      %v5456 = vpop.f32.mrf.mxu0
      %v5457 = vadd.f32 %v1176, %v5456
      %v5458 = vpop.f32.mrf.mxu0
      %v5459 = vpop.f32.mrf.mxu0
      %v5460 = vadd.f32 %v1179, %v5459
      %v5461 = vpop.f32.mrf.mxu0
      %5462 = vmatprep.mubr.bf16.mxu0 0
      %5463 = vmatmul.mubr.bf16.gmra.mxu0 %v5278
      %v5464 = vpop.f32.mrf.mxu0
      %v5465 = vadd.f32 %v1184, %v5464
      %v5466 = vpop.f32.mrf.mxu0
      %v5467 = vpop.f32.mrf.mxu0
      %v5468 = vadd.f32 %v1187, %v5467
      %v5469 = vpop.f32.mrf.mxu0
      %5470 = vmatprep.mubr.bf16.mxu0 0
      %5471 = vmatmul.mubr.bf16.gmra.mxu0 %v5279
      %v5472 = vpop.f32.mrf.mxu0
      %v5473 = vadd.f32 %v1192, %v5472
      %v5474 = vpop.f32.mrf.mxu0
      %v5475 = vpop.f32.mrf.mxu0
      %v5476 = vadd.f32 %v1195, %v5475
      %v5477 = vpop.f32.mrf.mxu0
      %5478 = vmatprep.mubr.bf16.mxu0 0
      %5479 = vmatmul.mubr.bf16.gmra.mxu0 %v5280
      %v5480 = vpop.f32.mrf.mxu0
      %v5481 = vadd.f32 %v1200, %v5480
      %v5482 = vpop.f32.mrf.mxu0
      %v5483 = vpop.f32.mrf.mxu0
      %v5484 = vadd.f32 %v1203, %v5483
      %v5485 = vpop.f32.mrf.mxu0
      %5486 = vmatprep.mubr.bf16.mxu0 0
      %5487 = vmatmul.mubr.bf16.gmra.mxu0 %v5281
      %v5488 = vpop.f32.mrf.mxu0
      %v5489 = vadd.f32 %v1208, %v5488
      %v5490 = vpop.f32.mrf.mxu0
      %v5491 = vpop.f32.mrf.mxu0
      %v5492 = vadd.f32 %v1211, %v5491
      %v5493 = vpop.f32.mrf.mxu0
      %5494 = vmatprep.mubr.bf16.mxu0 0
      %5495 = vmatmul.mubr.bf16.gmra.mxu0 %v5282
      %v5496 = vpop.f32.mrf.mxu0
      %v5497 = vadd.f32 %v1216, %v5496
      %v5498 = vpop.f32.mrf.mxu0
      %v5499 = vpop.f32.mrf.mxu0
      %v5500 = vadd.f32 %v1219, %v5499
      %v5501 = vpop.f32.mrf.mxu0
      %5502 = vmatprep.mubr.bf16.mxu0 0
      %5503 = vmatmul.mubr.bf16.gmra.mxu0 %v5283
      %v5504 = vpop.f32.mrf.mxu0
      %v5505 = vadd.f32 %v1224, %v5504
      %v5506 = vpop.f32.mrf.mxu0
      %v5507 = vpop.f32.mrf.mxu0
      %v5508 = vadd.f32 %v1227, %v5507
      %v5509 = vpop.f32.mrf.mxu0
      %5510 = vmatprep.mubr.bf16.mxu0 0
      %5511 = vmatmul.mubr.bf16.gmra.mxu0 %v5284
      %v5512 = vpop.f32.mrf.mxu0
      %v5513 = vadd.f32 %v1232, %v5512
      %v5514 = vpop.f32.mrf.mxu0
      %v5515 = vpop.f32.mrf.mxu0
      %v5516 = vadd.f32 %v1235, %v5515
      %v5517 = vpop.f32.mrf.mxu0
      %5518 = vmatprep.mubr.bf16.mxu0 0
      %5519 = vmatmul.mubr.bf16.gmra.mxu0 %v5285
      %v5520 = vpop.f32.mrf.mxu0
      %v5521 = vadd.f32 %v1240, %v5520
      %v5522 = vpop.f32.mrf.mxu0
      %v5523 = vpop.f32.mrf.mxu0
      %v5524 = vadd.f32 %v1243, %v5523
      %v5525 = vpop.f32.mrf.mxu0
      %5526 = vmatprep.mubr.bf16.mxu0 0
      %5527 = vmatmul.mubr.bf16.gmra.mxu0 %v5286
      %v5528 = vpop.f32.mrf.mxu0
      %v5529 = vadd.f32 %v1248, %v5528
      %v5530 = vpop.f32.mrf.mxu0
      %v5531 = vpop.f32.mrf.mxu0
      %v5532 = vadd.f32 %v1251, %v5531
      %v5533 = vpop.f32.mrf.mxu0
      %5534 = vmatprep.mubr.bf16.mxu0 0
      %5535 = vmatmul.mubr.bf16.gmra.mxu0 %v5287
      %v5536 = vpop.f32.mrf.mxu0
      %v5537 = vadd.f32 %v1256, %v5536
      %v5538 = vpop.f32.mrf.mxu0
      %v5539 = vpop.f32.mrf.mxu0
      %v5540 = vadd.f32 %v1259, %v5539
      %v5541 = vpop.f32.mrf.mxu0
      %5542 = vmatprep.mubr.bf16.mxu0 0
      %5543 = vmatmul.mubr.bf16.gmra.mxu0 %v5288
      %v5544 = vpop.f32.mrf.mxu0
      %v5545 = vadd.f32 %v1264, %v5544
      %v5546 = vpop.f32.mrf.mxu0
      %v5547 = vpop.f32.mrf.mxu0
      %v5548 = vadd.f32 %v1267, %v5547
      %v5549 = vpop.f32.mrf.mxu0
      %5550 = vmatprep.mubr.bf16.mxu0 0
      %5551 = vmatmul.mubr.bf16.gmra.mxu0 %v5289
      %v5552 = vpop.f32.mrf.mxu0
      %v5553 = vadd.f32 %v1272, %v5552
      %v5554 = vpop.f32.mrf.mxu0
      %v5555 = vpop.f32.mrf.mxu0
      %v5556 = vadd.f32 %v1275, %v5555
      %v5557 = vpop.f32.mrf.mxu0
      %5558 = vmatprep.mubr.bf16.mxu0 0
      %5559 = vmatmul.mubr.bf16.gmra.mxu0 %v5290
      %v5560 = vpop.f32.mrf.mxu0
      %v5561 = vadd.f32 %v1280, %v5560
      %v5562 = vpop.f32.mrf.mxu0
      %v5563 = vpop.f32.mrf.mxu0
      %v5564 = vadd.f32 %v1283, %v5563
      %v5565 = vpop.f32.mrf.mxu0
      %5566 = vmatprep.mubr.bf16.mxu0 0
      %5567 = vmatmul.mubr.bf16.gmra.mxu0 %v5291
      %v5568 = vpop.f32.mrf.mxu0
      %v5569 = vadd.f32 %v1288, %v5568
      %v5570 = vpop.f32.mrf.mxu0
      %v5571 = vpop.f32.mrf.mxu0
      %v5572 = vadd.f32 %v1291, %v5571
      %v5573 = vpop.f32.mrf.mxu0
      %5574 = vmatprep.mubr.bf16.mxu0 0
      %5575 = vmatmul.mubr.bf16.gmra.mxu0 %v5292
      %v5576 = vpop.f32.mrf.mxu0
      %v5577 = vadd.f32 %v1296, %v5576
      %v5578 = vpop.f32.mrf.mxu0
      %v5579 = vpop.f32.mrf.mxu0
      %v5580 = vadd.f32 %v1299, %v5579
      %v5581 = vpop.f32.mrf.mxu0
      %5582 = vmatprep.mubr.bf16.mxu0 0
      %5583 = vmatmul.mubr.bf16.gmra.mxu0 %v5293
      %v5584 = vpop.f32.mrf.mxu0
      %v5585 = vadd.f32 %v1304, %v5584
      %v5586 = vpop.f32.mrf.mxu0
      %v5587 = vpop.f32.mrf.mxu0
      %v5588 = vadd.f32 %v1307, %v5587
      %v5589 = vpop.f32.mrf.mxu0
      %5590 = vmatprep.mubr.bf16.mxu0 0
      %5591 = vmatmul.mubr.bf16.gmra.mxu0 %v5294
      %v5592 = vpop.f32.mrf.mxu0
      %v5593 = vadd.f32 %v1312, %v5592
      %v5594 = vpop.f32.mrf.mxu0
      %v5595 = vpop.f32.mrf.mxu0
      %v5596 = vadd.f32 %v1315, %v5595
      %v5597 = vpop.f32.mrf.mxu0
      %5598 = vmatprep.mubr.bf16.mxu0 0
      %5599 = vmatmul.mubr.bf16.gmra.mxu0 %v5295
      %v5600 = vpop.f32.mrf.mxu0
      %v5601 = vadd.f32 %v1320, %v5600
      %v5602 = vpop.f32.mrf.mxu0
      %v5603 = vpop.f32.mrf.mxu0
      %v5604 = vadd.f32 %v1323, %v5603
      %v5605 = vpop.f32.mrf.mxu0
      %5606 = vmatprep.mubr.bf16.mxu0 0
      %5607 = vmatmul.mubr.bf16.gmra.mxu0 %v5296
      %v5608 = vpop.f32.mrf.mxu0
      %v5609 = vadd.f32 %v1328, %v5608
      %v5610 = vpop.f32.mrf.mxu0
      %v5611 = vpop.f32.mrf.mxu0
      %v5612 = vadd.f32 %v1331, %v5611
      %v5613 = vpop.f32.mrf.mxu0
      %5614 = vmatprep.mubr.bf16.mxu0 0
      %5615 = vmatmul.mubr.bf16.gmra.mxu0 %v5297
      %v5616 = vpop.f32.mrf.mxu0
      %v5617 = vadd.f32 %v1336, %v5616
      %v5618 = vpop.f32.mrf.mxu0
      %v5619 = vpop.f32.mrf.mxu0
      %v5620 = vadd.f32 %v1339, %v5619
      %v5621 = vpop.f32.mrf.mxu0
      %5622 = vmatprep.mubr.bf16.mxu0 0
      %5623 = vmatmul.mubr.bf16.gmra.mxu0 %v5298
      %v5624 = vpop.f32.mrf.mxu0
      %v5625 = vadd.f32 %v1344, %v5624
      %v5626 = vpop.f32.mrf.mxu0
      %v5627 = vpop.f32.mrf.mxu0
      %v5628 = vadd.f32 %v1347, %v5627
      %v5629 = vpop.f32.mrf.mxu0
      %5630 = vmatprep.mubr.bf16.mxu0 0
      %5631 = vmatmul.mubr.bf16.gmra.mxu0 %v5299
      %v5632 = vpop.f32.mrf.mxu0
      %v5633 = vadd.f32 %v1352, %v5632
      %v5634 = vpop.f32.mrf.mxu0
      %v5635 = vpop.f32.mrf.mxu0
      %v5636 = vadd.f32 %v1355, %v5635
      %v5637 = vpop.f32.mrf.mxu0
      %5638 = vmatprep.mubr.bf16.mxu0 0
      %5639 = vmatmul.mubr.bf16.gmra.mxu0 %v5300
      %v5640 = vpop.f32.mrf.mxu0
      %v5641 = vadd.f32 %v1360, %v5640
      %v5642 = vpop.f32.mrf.mxu0
      %v5643 = vpop.f32.mrf.mxu0
      %v5644 = vadd.f32 %v1363, %v5643
      %v5645 = vpop.f32.mrf.mxu0
      %5646 = vmatprep.mubr.bf16.mxu0 0
      %5647 = vmatmul.mubr.bf16.gmra.mxu0 %v5301
      %v5648 = vpop.f32.mrf.mxu0
      %v5649 = vadd.f32 %v1368, %v5648
      %v5650 = vpop.f32.mrf.mxu0
      %v5651 = vpop.f32.mrf.mxu0
      %v5652 = vadd.f32 %v1371, %v5651
      %v5653 = vpop.f32.mrf.mxu0
      %5654 = vdwg.mxu0
      %v5655 = vld [vmem:[%s8] sm:$0x1]
      %v5657 = vlaneseq
      %v5658 = vshrl.u32 %v5657, 7
      %v5659 = vsub.s32 0, %v5658
      %v5660 = vrot.slane %v5655, %v5659
      %v5662 = vadd.f32 %v5401, %v5660
      %v5663 = vadd.f32 %v5404, %v5660
      %v5664 = vadd.f32 %v5409, %v5660
      %v5665 = vadd.f32 %v5412, %v5660
      %v5666 = vadd.f32 %v5417, %v5660
      %v5667 = vadd.f32 %v5420, %v5660
      %v5668 = vadd.f32 %v5425, %v5660
      %v5669 = vadd.f32 %v5428, %v5660
      %v5670 = vadd.f32 %v5433, %v5660
      %v5671 = vadd.f32 %v5436, %v5660
      %v5672 = vadd.f32 %v5441, %v5660
      %v5673 = vadd.f32 %v5444, %v5660
      %v5674 = vadd.f32 %v5449, %v5660
      %v5675 = vadd.f32 %v5452, %v5660
      %v5676 = vadd.f32 %v5457, %v5660
      %v5677 = vadd.f32 %v5460, %v5660
      %v5678 = vadd.f32 %v5465, %v5660
      %v5679 = vadd.f32 %v5468, %v5660
      %v5680 = vadd.f32 %v5473, %v5660
      %v5681 = vadd.f32 %v5476, %v5660
      %v5682 = vadd.f32 %v5481, %v5660
      %v5683 = vadd.f32 %v5484, %v5660
      %v5684 = vadd.f32 %v5489, %v5660
      %v5685 = vadd.f32 %v5492, %v5660
      %v5686 = vadd.f32 %v5497, %v5660
      %v5687 = vadd.f32 %v5500, %v5660
      %v5688 = vadd.f32 %v5505, %v5660
      %v5689 = vadd.f32 %v5508, %v5660
      %v5690 = vadd.f32 %v5513, %v5660
      %v5691 = vadd.f32 %v5516, %v5660
      %v5692 = vadd.f32 %v5521, %v5660
      %v5693 = vadd.f32 %v5524, %v5660
      %v5694 = vadd.f32 %v5529, %v5660
      %v5695 = vadd.f32 %v5532, %v5660
      %v5696 = vadd.f32 %v5537, %v5660
      %v5697 = vadd.f32 %v5540, %v5660
      %v5698 = vadd.f32 %v5545, %v5660
      %v5699 = vadd.f32 %v5548, %v5660
      %v5700 = vadd.f32 %v5553, %v5660
      %v5701 = vadd.f32 %v5556, %v5660
      %v5702 = vadd.f32 %v5561, %v5660
      %v5703 = vadd.f32 %v5564, %v5660
      %v5704 = vadd.f32 %v5569, %v5660
      %v5705 = vadd.f32 %v5572, %v5660
      %v5706 = vadd.f32 %v5577, %v5660
      %v5707 = vadd.f32 %v5580, %v5660
      %v5708 = vadd.f32 %v5585, %v5660
      %v5709 = vadd.f32 %v5588, %v5660
      %v5710 = vadd.f32 %v5593, %v5660
      %v5711 = vadd.f32 %v5596, %v5660
      %v5712 = vadd.f32 %v5601, %v5660
      %v5713 = vadd.f32 %v5604, %v5660
      %v5714 = vadd.f32 %v5609, %v5660
      %v5715 = vadd.f32 %v5612, %v5660
      %v5716 = vadd.f32 %v5617, %v5660
      %v5717 = vadd.f32 %v5620, %v5660
      %v5718 = vadd.f32 %v5625, %v5660
      %v5719 = vadd.f32 %v5628, %v5660
      %v5720 = vadd.f32 %v5633, %v5660
      %v5721 = vadd.f32 %v5636, %v5660
      %v5722 = vadd.f32 %v5641, %v5660
      %v5723 = vadd.f32 %v5644, %v5660
      %v5724 = vadd.f32 %v5649, %v5660
      %v5725 = vadd.f32 %v5652, %v5660
      %v5726 = vmax.f32 %v5662, 0.0
      %v5727 = vmax.f32 %v5663, 0.0
      %v5728 = vmax.f32 %v5664, 0.0
      %v5729 = vmax.f32 %v5665, 0.0
      %v5730 = vmax.f32 %v5666, 0.0
      %v5731 = vmax.f32 %v5667, 0.0
      %v5732 = vmax.f32 %v5668, 0.0
      %v5733 = vmax.f32 %v5669, 0.0
      %v5734 = vmax.f32 %v5670, 0.0
      %v5735 = vmax.f32 %v5671, 0.0
      %v5736 = vmax.f32 %v5672, 0.0
      %v5737 = vmax.f32 %v5673, 0.0
      %v5738 = vmax.f32 %v5674, 0.0
      %v5739 = vmax.f32 %v5675, 0.0
      %v5740 = vmax.f32 %v5676, 0.0
      %v5741 = vmax.f32 %v5677, 0.0
      %v5742 = vmax.f32 %v5678, 0.0
      %v5743 = vmax.f32 %v5679, 0.0
      %v5744 = vmax.f32 %v5680, 0.0
      %v5745 = vmax.f32 %v5681, 0.0
      %v5746 = vmax.f32 %v5682, 0.0
      %v5747 = vmax.f32 %v5683, 0.0
      %v5748 = vmax.f32 %v5684, 0.0
      %v5749 = vmax.f32 %v5685, 0.0
      %v5750 = vmax.f32 %v5686, 0.0
      %v5751 = vmax.f32 %v5687, 0.0
      %v5752 = vmax.f32 %v5688, 0.0
      %v5753 = vmax.f32 %v5689, 0.0
      %v5754 = vmax.f32 %v5690, 0.0
      %v5755 = vmax.f32 %v5691, 0.0
      %v5756 = vmax.f32 %v5692, 0.0
      %v5757 = vmax.f32 %v5693, 0.0
      %v5758 = vmax.f32 %v5694, 0.0
      %v5759 = vmax.f32 %v5695, 0.0
      %v5760 = vmax.f32 %v5696, 0.0
      %v5761 = vmax.f32 %v5697, 0.0
      %v5762 = vmax.f32 %v5698, 0.0
      %v5763 = vmax.f32 %v5699, 0.0
      %v5764 = vmax.f32 %v5700, 0.0
      %v5765 = vmax.f32 %v5701, 0.0
      %v5766 = vmax.f32 %v5702, 0.0
      %v5767 = vmax.f32 %v5703, 0.0
      %v5768 = vmax.f32 %v5704, 0.0
      %v5769 = vmax.f32 %v5705, 0.0
      %v5770 = vmax.f32 %v5706, 0.0
      %v5771 = vmax.f32 %v5707, 0.0
      %v5772 = vmax.f32 %v5708, 0.0
      %v5773 = vmax.f32 %v5709, 0.0
      %v5774 = vmax.f32 %v5710, 0.0
      %v5775 = vmax.f32 %v5711, 0.0
      %v5776 = vmax.f32 %v5712, 0.0
      %v5777 = vmax.f32 %v5713, 0.0
      %v5778 = vmax.f32 %v5714, 0.0
      %v5779 = vmax.f32 %v5715, 0.0
      %v5780 = vmax.f32 %v5716, 0.0
      %v5781 = vmax.f32 %v5717, 0.0
      %v5782 = vmax.f32 %v5718, 0.0
      %v5783 = vmax.f32 %v5719, 0.0
      %v5784 = vmax.f32 %v5720, 0.0
      %v5785 = vmax.f32 %v5721, 0.0
      %v5786 = vmax.f32 %v5722, 0.0
      %v5787 = vmax.f32 %v5723, 0.0
      %v5788 = vmax.f32 %v5724, 0.0
      %v5789 = vmax.f32 %v5725, 0.0
      %v5790 = vpack.c.bf16 %v5727, %v5726
      %v5791 = vpack.c.bf16 %v5729, %v5728
      %v5792 = vpack.c.bf16 %v5731, %v5730
      %v5793 = vpack.c.bf16 %v5733, %v5732
      %v5794 = vpack.c.bf16 %v5735, %v5734
      %v5795 = vpack.c.bf16 %v5737, %v5736
      %v5796 = vpack.c.bf16 %v5739, %v5738
      %v5797 = vpack.c.bf16 %v5741, %v5740
      %v5798 = vpack.c.bf16 %v5743, %v5742
      %v5799 = vpack.c.bf16 %v5745, %v5744
      %v5800 = vpack.c.bf16 %v5747, %v5746
      %v5801 = vpack.c.bf16 %v5749, %v5748
      %v5802 = vpack.c.bf16 %v5751, %v5750
      %v5803 = vpack.c.bf16 %v5753, %v5752
      %v5804 = vpack.c.bf16 %v5755, %v5754
      %v5805 = vpack.c.bf16 %v5757, %v5756
      %v5806 = vpack.c.bf16 %v5759, %v5758
      %v5807 = vpack.c.bf16 %v5761, %v5760
      %v5808 = vpack.c.bf16 %v5763, %v5762
      %v5809 = vpack.c.bf16 %v5765, %v5764
      %v5810 = vpack.c.bf16 %v5767, %v5766
      %v5811 = vpack.c.bf16 %v5769, %v5768
      %v5812 = vpack.c.bf16 %v5771, %v5770
      %v5813 = vpack.c.bf16 %v5773, %v5772
      %v5814 = vpack.c.bf16 %v5775, %v5774
      %v5815 = vpack.c.bf16 %v5777, %v5776
      %v5816 = vpack.c.bf16 %v5779, %v5778
      %v5817 = vpack.c.bf16 %v5781, %v5780
      %v5818 = vpack.c.bf16 %v5783, %v5782
      %v5819 = vpack.c.bf16 %v5785, %v5784
      %v5820 = vpack.c.bf16 %v5787, %v5786
      %v5821 = vpack.c.bf16 %v5789, %v5788
      %v5822 = vld [vmem:[%s9] sm:$0xf]
      %v5823 = vld [vmem:[%s9 + $0x4] sm:$0xf]
      %v5824 = vld [vmem:[%s9 + $0x8] sm:$0xf]
      %v5825 = vld [vmem:[%s9 + $0xc] sm:$0xf]
      %v5826 = vld [vmem:[%s9 + $0x10] sm:$0xf]
      %v5827 = vld [vmem:[%s9 + $0x14] sm:$0xf]
      %v5828 = vld [vmem:[%s9 + $0x18] sm:$0xf]
      %v5829 = vld [vmem:[%s9 + $0x1c] sm:$0xf]
      %v5830 = vld [vmem:[%s10] sm:$0x1]
      %v5832 = vlaneseq
      %v5833 = vshrl.u32 %v5832, 7
      %v5834 = vsub.s32 0, %v5833
      %v5835 = vrot.slane %v5830, %v5834
      %v5845 = vunpack.c.l.b16 %v5822
      %v5846 = vunpack.c.l.b16 %v5823
      %v5847 = vunpack.c.l.b16 %v5824
      %v5848 = vunpack.c.l.b16 %v5825
      %v5849 = vunpack.c.l.b16 %v5826
      %v5850 = vunpack.c.l.b16 %v5827
      %v5851 = vunpack.c.l.b16 %v5828
      %v5852 = vunpack.c.l.b16 %v5829
      %v5853 = vpack.c.b16 %v5846, %v5845
      %v5854 = vpack.c.b16 %v5848, %v5847
      %v5855 = vpack.c.b16 %v5850, %v5849
      %v5856 = vpack.c.b16 %v5852, %v5851
      %vm5861 = vcmask 523264
      %v5863 = vsel %vm5861, %v5790, 0
      %v5866 = vsel %vm5861, %v5791, 0
      %v5869 = vsel %vm5861, %v5792, 0
      %v5872 = vsel %vm5861, %v5793, 0
      %v5875 = vsel %vm5861, %v5794, 0
      %v5878 = vsel %vm5861, %v5795, 0
      %v5881 = vsel %vm5861, %v5796, 0
      %v5884 = vsel %vm5861, %v5797, 0
      %v5887 = vsel %vm5861, %v5798, 0
      %v5890 = vsel %vm5861, %v5799, 0
      %v5893 = vsel %vm5861, %v5800, 0
      %v5896 = vsel %vm5861, %v5801, 0
      %v5899 = vsel %vm5861, %v5802, 0
      %v5902 = vsel %vm5861, %v5803, 0
      %v5905 = vsel %vm5861, %v5804, 0
      %v5908 = vsel %vm5861, %v5805, 0
      %v5911 = vsel %vm5861, %v5806, 0
      %v5914 = vsel %vm5861, %v5807, 0
      %v5917 = vsel %vm5861, %v5808, 0
      %v5920 = vsel %vm5861, %v5809, 0
      %v5923 = vsel %vm5861, %v5810, 0
      %v5926 = vsel %vm5861, %v5811, 0
      %v5929 = vsel %vm5861, %v5812, 0
      %v5932 = vsel %vm5861, %v5813, 0
      %v5935 = vsel %vm5861, %v5814, 0
      %v5938 = vsel %vm5861, %v5815, 0
      %v5941 = vsel %vm5861, %v5816, 0
      %v5944 = vsel %vm5861, %v5817, 0
      %v5947 = vsel %vm5861, %v5818, 0
      %v5950 = vsel %vm5861, %v5819, 0
      %v5953 = vsel %vm5861, %v5820, 0
      %v5956 = vsel %vm5861, %v5821, 0
      %5958 = vmatprep.subr.bf16.mxu0 0
      %5959 = vmatpush1.bf16.msra.mxu0 0
      %5960 = vmatprep.subr.bf16.mxu0 0
      %5961 = vmatpush1.bf16.msra.mxu0 0
      %5962 = vmatprep.subr.bf16.mxu0 0
      %5963 = vmatpush1.bf16.msra.mxu0 0
      %5964 = vmatprep.subr.bf16.mxu0 0
      %5965 = vmatpush1.bf16.msra.mxu0 0
      %5966 = vmatprep.subr.bf16.mxu0 0
      %5967 = vmatpush1.bf16.msra.mxu0 %v5856
      %5968 = vmatprep.subr.bf16.mxu0 0
      %5969 = vmatpush1.bf16.msra.mxu0 %v5855
      %5970 = vmatprep.subr.bf16.mxu0 0
      %5971 = vmatpush1.bf16.msra.mxu0 %v5854
      %5972 = vmatprep.subr.bf16.mxu0 0
      %5973 = vmatpush1.bf16.msra.mxu0 %v5853
      %5974 = vmatprep.subr.bf16.mxu0 0
      %5975 = vmatpush2.bf16.msra.mxu0 0
      %5976 = vmatprep.subr.bf16.mxu0 0
      %5977 = vmatpush2.bf16.msra.mxu0 0
      %5978 = vmatprep.subr.bf16.mxu0 0
      %5979 = vmatpush2.bf16.msra.mxu0 0
      %5980 = vmatprep.subr.bf16.mxu0 0
      %5981 = vmatpush2.bf16.msra.mxu0 0
      %5982 = vmatprep.subr.bf16.mxu0 0
      %5983 = vmatpush2.bf16.msra.mxu0 0
      %5984 = vmatprep.subr.bf16.mxu0 0
      %5985 = vmatpush2.bf16.msra.mxu0 0
      %5986 = vmatprep.subr.bf16.mxu0 0
      %5987 = vmatpush2.bf16.msra.mxu0 0
      %5988 = vmatprep.subr.bf16.mxu0 0
      %5989 = vmatpush2.bf16.msra.mxu0 0
      %5990 = vmatprep.mubr.bf16.mxu0 0
      %5991 = vmatmul.mubr.bf16.gmra.mxu0 %v5863
      %v5992 = vpop.f32.mrf.mxu0
      %v5993 = vadd.f32 %v5835, %v5992
      %v5994 = vpop.f32.mrf.mxu0
      %v5995 = vpop.f32.mrf.mxu0
      %v5996 = vadd.f32 %v5835, %v5995
      %v5997 = vpop.f32.mrf.mxu0
      %5998 = vmatprep.mubr.bf16.mxu0 0
      %5999 = vmatmul.mubr.bf16.gmra.mxu0 %v5866
      %v6000 = vpop.f32.mrf.mxu0
      %v6001 = vadd.f32 %v5835, %v6000
      %v6002 = vpop.f32.mrf.mxu0
      %v6003 = vpop.f32.mrf.mxu0
      %v6004 = vadd.f32 %v5835, %v6003
      %v6005 = vpop.f32.mrf.mxu0
      %6006 = vmatprep.mubr.bf16.mxu0 0
      %6007 = vmatmul.mubr.bf16.gmra.mxu0 %v5869
      %v6008 = vpop.f32.mrf.mxu0
      %v6009 = vadd.f32 %v5835, %v6008
      %v6010 = vpop.f32.mrf.mxu0
      %v6011 = vpop.f32.mrf.mxu0
      %v6012 = vadd.f32 %v5835, %v6011
      %v6013 = vpop.f32.mrf.mxu0
      %6014 = vmatprep.mubr.bf16.mxu0 0
      %6015 = vmatmul.mubr.bf16.gmra.mxu0 %v5872
      %v6016 = vpop.f32.mrf.mxu0
      %v6017 = vadd.f32 %v5835, %v6016
      %v6018 = vpop.f32.mrf.mxu0
      %v6019 = vpop.f32.mrf.mxu0
      %v6020 = vadd.f32 %v5835, %v6019
      %v6021 = vpop.f32.mrf.mxu0
      %6022 = vmatprep.mubr.bf16.mxu0 0
      %6023 = vmatmul.mubr.bf16.gmra.mxu0 %v5875
      %v6024 = vpop.f32.mrf.mxu0
      %v6025 = vadd.f32 %v5835, %v6024
      %v6026 = vpop.f32.mrf.mxu0
      %v6027 = vpop.f32.mrf.mxu0
      %v6028 = vadd.f32 %v5835, %v6027
      %v6029 = vpop.f32.mrf.mxu0
      %6030 = vmatprep.mubr.bf16.mxu0 0
      %6031 = vmatmul.mubr.bf16.gmra.mxu0 %v5878
      %v6032 = vpop.f32.mrf.mxu0
      %v6033 = vadd.f32 %v5835, %v6032
      %v6034 = vpop.f32.mrf.mxu0
      %v6035 = vpop.f32.mrf.mxu0
      %v6036 = vadd.f32 %v5835, %v6035
      %v6037 = vpop.f32.mrf.mxu0
      %6038 = vmatprep.mubr.bf16.mxu0 0
      %6039 = vmatmul.mubr.bf16.gmra.mxu0 %v5881
      %v6040 = vpop.f32.mrf.mxu0
      %v6041 = vadd.f32 %v5835, %v6040
      %v6042 = vpop.f32.mrf.mxu0
      %v6043 = vpop.f32.mrf.mxu0
      %v6044 = vadd.f32 %v5835, %v6043
      %v6045 = vpop.f32.mrf.mxu0
      %6046 = vmatprep.mubr.bf16.mxu0 0
      %6047 = vmatmul.mubr.bf16.gmra.mxu0 %v5884
      %v6048 = vpop.f32.mrf.mxu0
      %v6049 = vadd.f32 %v5835, %v6048
      %v6050 = vpop.f32.mrf.mxu0
      %v6051 = vpop.f32.mrf.mxu0
      %v6052 = vadd.f32 %v5835, %v6051
      %v6053 = vpop.f32.mrf.mxu0
      %6054 = vmatprep.mubr.bf16.mxu0 0
      %6055 = vmatmul.mubr.bf16.gmra.mxu0 %v5887
      %v6056 = vpop.f32.mrf.mxu0
      %v6057 = vadd.f32 %v5835, %v6056
      %v6058 = vpop.f32.mrf.mxu0
      %v6059 = vpop.f32.mrf.mxu0
      %v6060 = vadd.f32 %v5835, %v6059
      %v6061 = vpop.f32.mrf.mxu0
      %6062 = vmatprep.mubr.bf16.mxu0 0
      %6063 = vmatmul.mubr.bf16.gmra.mxu0 %v5890
      %v6064 = vpop.f32.mrf.mxu0
      %v6065 = vadd.f32 %v5835, %v6064
      %v6066 = vpop.f32.mrf.mxu0
      %v6067 = vpop.f32.mrf.mxu0
      %v6068 = vadd.f32 %v5835, %v6067
      %v6069 = vpop.f32.mrf.mxu0
      %6070 = vmatprep.mubr.bf16.mxu0 0
      %6071 = vmatmul.mubr.bf16.gmra.mxu0 %v5893
      %v6072 = vpop.f32.mrf.mxu0
      %v6073 = vadd.f32 %v5835, %v6072
      %v6074 = vpop.f32.mrf.mxu0
      %v6075 = vpop.f32.mrf.mxu0
      %v6076 = vadd.f32 %v5835, %v6075
      %v6077 = vpop.f32.mrf.mxu0
      %6078 = vmatprep.mubr.bf16.mxu0 0
      %6079 = vmatmul.mubr.bf16.gmra.mxu0 %v5896
      %v6080 = vpop.f32.mrf.mxu0
      %v6081 = vadd.f32 %v5835, %v6080
      %v6082 = vpop.f32.mrf.mxu0
      %v6083 = vpop.f32.mrf.mxu0
      %v6084 = vadd.f32 %v5835, %v6083
      %v6085 = vpop.f32.mrf.mxu0
      %6086 = vmatprep.mubr.bf16.mxu0 0
      %6087 = vmatmul.mubr.bf16.gmra.mxu0 %v5899
      %v6088 = vpop.f32.mrf.mxu0
      %v6089 = vadd.f32 %v5835, %v6088
      %v6090 = vpop.f32.mrf.mxu0
      %v6091 = vpop.f32.mrf.mxu0
      %v6092 = vadd.f32 %v5835, %v6091
      %v6093 = vpop.f32.mrf.mxu0
      %6094 = vmatprep.mubr.bf16.mxu0 0
      %6095 = vmatmul.mubr.bf16.gmra.mxu0 %v5902
      %v6096 = vpop.f32.mrf.mxu0
      %v6097 = vadd.f32 %v5835, %v6096
      %v6098 = vpop.f32.mrf.mxu0
      %v6099 = vpop.f32.mrf.mxu0
      %v6100 = vadd.f32 %v5835, %v6099
      %v6101 = vpop.f32.mrf.mxu0
      %6102 = vmatprep.mubr.bf16.mxu0 0
      %6103 = vmatmul.mubr.bf16.gmra.mxu0 %v5905
      %v6104 = vpop.f32.mrf.mxu0
      %v6105 = vadd.f32 %v5835, %v6104
      %v6106 = vpop.f32.mrf.mxu0
      %v6107 = vpop.f32.mrf.mxu0
      %v6108 = vadd.f32 %v5835, %v6107
      %v6109 = vpop.f32.mrf.mxu0
      %6110 = vmatprep.mubr.bf16.mxu0 0
      %6111 = vmatmul.mubr.bf16.gmra.mxu0 %v5908
      %v6112 = vpop.f32.mrf.mxu0
      %v6113 = vadd.f32 %v5835, %v6112
      %v6114 = vpop.f32.mrf.mxu0
      %v6115 = vpop.f32.mrf.mxu0
      %v6116 = vadd.f32 %v5835, %v6115
      %v6117 = vpop.f32.mrf.mxu0
      %6118 = vmatprep.mubr.bf16.mxu0 0
      %6119 = vmatmul.mubr.bf16.gmra.mxu0 %v5911
      %v6120 = vpop.f32.mrf.mxu0
      %v6121 = vadd.f32 %v5835, %v6120
      %v6122 = vpop.f32.mrf.mxu0
      %v6123 = vpop.f32.mrf.mxu0
      %v6124 = vadd.f32 %v5835, %v6123
      %v6125 = vpop.f32.mrf.mxu0
      %6126 = vmatprep.mubr.bf16.mxu0 0
      %6127 = vmatmul.mubr.bf16.gmra.mxu0 %v5914
      %v6128 = vpop.f32.mrf.mxu0
      %v6129 = vadd.f32 %v5835, %v6128
      %v6130 = vpop.f32.mrf.mxu0
      %v6131 = vpop.f32.mrf.mxu0
      %v6132 = vadd.f32 %v5835, %v6131
      %v6133 = vpop.f32.mrf.mxu0
      %6134 = vmatprep.mubr.bf16.mxu0 0
      %6135 = vmatmul.mubr.bf16.gmra.mxu0 %v5917
      %v6136 = vpop.f32.mrf.mxu0
      %v6137 = vadd.f32 %v5835, %v6136
      %v6138 = vpop.f32.mrf.mxu0
      %v6139 = vpop.f32.mrf.mxu0
      %v6140 = vadd.f32 %v5835, %v6139
      %v6141 = vpop.f32.mrf.mxu0
      %6142 = vmatprep.mubr.bf16.mxu0 0
      %6143 = vmatmul.mubr.bf16.gmra.mxu0 %v5920
      %v6144 = vpop.f32.mrf.mxu0
      %v6145 = vadd.f32 %v5835, %v6144
      %v6146 = vpop.f32.mrf.mxu0
      %v6147 = vpop.f32.mrf.mxu0
      %v6148 = vadd.f32 %v5835, %v6147
      %v6149 = vpop.f32.mrf.mxu0
      %6150 = vmatprep.mubr.bf16.mxu0 0
      %6151 = vmatmul.mubr.bf16.gmra.mxu0 %v5923
      %v6152 = vpop.f32.mrf.mxu0
      %v6153 = vadd.f32 %v5835, %v6152
      %v6154 = vpop.f32.mrf.mxu0
      %v6155 = vpop.f32.mrf.mxu0
      %v6156 = vadd.f32 %v5835, %v6155
      %v6157 = vpop.f32.mrf.mxu0
      %6158 = vmatprep.mubr.bf16.mxu0 0
      %6159 = vmatmul.mubr.bf16.gmra.mxu0 %v5926
      %v6160 = vpop.f32.mrf.mxu0
      %v6161 = vadd.f32 %v5835, %v6160
      %v6162 = vpop.f32.mrf.mxu0
      %v6163 = vpop.f32.mrf.mxu0
      %v6164 = vadd.f32 %v5835, %v6163
      %v6165 = vpop.f32.mrf.mxu0
      %6166 = vmatprep.mubr.bf16.mxu0 0
      %6167 = vmatmul.mubr.bf16.gmra.mxu0 %v5929
      %v6168 = vpop.f32.mrf.mxu0
      %v6169 = vadd.f32 %v5835, %v6168
      %v6170 = vpop.f32.mrf.mxu0
      %v6171 = vpop.f32.mrf.mxu0
      %v6172 = vadd.f32 %v5835, %v6171
      %v6173 = vpop.f32.mrf.mxu0
      %6174 = vmatprep.mubr.bf16.mxu0 0
      %6175 = vmatmul.mubr.bf16.gmra.mxu0 %v5932
      %v6176 = vpop.f32.mrf.mxu0
      %v6177 = vadd.f32 %v5835, %v6176
      %v6178 = vpop.f32.mrf.mxu0
      %v6179 = vpop.f32.mrf.mxu0
      %v6180 = vadd.f32 %v5835, %v6179
      %v6181 = vpop.f32.mrf.mxu0
      %6182 = vmatprep.mubr.bf16.mxu0 0
      %6183 = vmatmul.mubr.bf16.gmra.mxu0 %v5935
      %v6184 = vpop.f32.mrf.mxu0
      %v6185 = vadd.f32 %v5835, %v6184
      %v6186 = vpop.f32.mrf.mxu0
      %v6187 = vpop.f32.mrf.mxu0
      %v6188 = vadd.f32 %v5835, %v6187
      %v6189 = vpop.f32.mrf.mxu0
      %6190 = vmatprep.mubr.bf16.mxu0 0
      %6191 = vmatmul.mubr.bf16.gmra.mxu0 %v5938
      %v6192 = vpop.f32.mrf.mxu0
      %v6193 = vadd.f32 %v5835, %v6192
      %v6194 = vpop.f32.mrf.mxu0
      %v6195 = vpop.f32.mrf.mxu0
      %v6196 = vadd.f32 %v5835, %v6195
      %v6197 = vpop.f32.mrf.mxu0
      %6198 = vmatprep.mubr.bf16.mxu0 0
      %6199 = vmatmul.mubr.bf16.gmra.mxu0 %v5941
      %v6200 = vpop.f32.mrf.mxu0
      %v6201 = vadd.f32 %v5835, %v6200
      %v6202 = vpop.f32.mrf.mxu0
      %v6203 = vpop.f32.mrf.mxu0
      %v6204 = vadd.f32 %v5835, %v6203
      %v6205 = vpop.f32.mrf.mxu0
      %6206 = vmatprep.mubr.bf16.mxu0 0
      %6207 = vmatmul.mubr.bf16.gmra.mxu0 %v5944
      %v6208 = vpop.f32.mrf.mxu0
      %v6209 = vadd.f32 %v5835, %v6208
      %v6210 = vpop.f32.mrf.mxu0
      %v6211 = vpop.f32.mrf.mxu0
      %v6212 = vadd.f32 %v5835, %v6211
      %v6213 = vpop.f32.mrf.mxu0
      %6214 = vmatprep.mubr.bf16.mxu0 0
      %6215 = vmatmul.mubr.bf16.gmra.mxu0 %v5947
      %v6216 = vpop.f32.mrf.mxu0
      %v6217 = vadd.f32 %v5835, %v6216
      %v6218 = vpop.f32.mrf.mxu0
      %v6219 = vpop.f32.mrf.mxu0
      %v6220 = vadd.f32 %v5835, %v6219
      %v6221 = vpop.f32.mrf.mxu0
      %6222 = vmatprep.mubr.bf16.mxu0 0
      %6223 = vmatmul.mubr.bf16.gmra.mxu0 %v5950
      %v6224 = vpop.f32.mrf.mxu0
      %v6225 = vadd.f32 %v5835, %v6224
      %v6226 = vpop.f32.mrf.mxu0
      %v6227 = vpop.f32.mrf.mxu0
      %v6228 = vadd.f32 %v5835, %v6227
      %v6229 = vpop.f32.mrf.mxu0
      %6230 = vmatprep.mubr.bf16.mxu0 0
      %6231 = vmatmul.mubr.bf16.gmra.mxu0 %v5953
      %v6232 = vpop.f32.mrf.mxu0
      %v6233 = vadd.f32 %v5835, %v6232
      %v6234 = vpop.f32.mrf.mxu0
      %v6235 = vpop.f32.mrf.mxu0
      %v6236 = vadd.f32 %v5835, %v6235
      %v6237 = vpop.f32.mrf.mxu0
      %6238 = vmatprep.mubr.bf16.mxu0 0
      %6239 = vmatmul.mubr.bf16.gmra.mxu0 %v5956
      %v6240 = vpop.f32.mrf.mxu0
      %v6241 = vadd.f32 %v5835, %v6240
      %v6242 = vpop.f32.mrf.mxu0
      %v6243 = vpop.f32.mrf.mxu0
      %v6244 = vadd.f32 %v5835, %v6243
      %v6245 = vpop.f32.mrf.mxu0
      %6246 = vdwg.mxu0
      %v6247 = vlaneseq
      %v6248 = vand.u32 %v6247, 127
      %vm6249 = vcmp.eq.s32.totalorder %v6248, 3
      %v6250 = vsel %vm6249, 1, 0
      %vm6251 = vcmp.eq.s32.totalorder %v6250, 1
      %6253 = vset.pattern.permute.xlu0 0
      %6254 = vperm.xlu0 %6253, %v4954
      %v6255 = vpop.permute.xlu0 %6254
      %6258 = vset.pattern.permute.xlu0 0
      %6259 = vperm.xlu0 %6258, %v4958
      %v6260 = vpop.permute.xlu0 %6259
      %6263 = vset.pattern.permute.xlu0 0
      %6264 = vperm.xlu0 %6263, %v4964
      %v6265 = vpop.permute.xlu0 %6264
      %6268 = vset.pattern.permute.xlu0 0
      %6269 = vperm.xlu0 %6268, %v4968
      %v6270 = vpop.permute.xlu0 %6269
      %6273 = vset.pattern.permute.xlu0 0
      %6274 = vperm.xlu0 %6273, %v4974
      %v6275 = vpop.permute.xlu0 %6274
      %6278 = vset.pattern.permute.xlu0 0
      %6279 = vperm.xlu0 %6278, %v4978
      %v6280 = vpop.permute.xlu0 %6279
      %6283 = vset.pattern.permute.xlu0 0
      %6284 = vperm.xlu0 %6283, %v4984
      %v6285 = vpop.permute.xlu0 %6284
      %6288 = vset.pattern.permute.xlu0 0
      %6289 = vperm.xlu0 %6288, %v4988
      %v6290 = vpop.permute.xlu0 %6289
      %6293 = vset.pattern.permute.xlu0 0
      %6294 = vperm.xlu0 %6293, %v4994
      %v6295 = vpop.permute.xlu0 %6294
      %6298 = vset.pattern.permute.xlu0 0
      %6299 = vperm.xlu0 %6298, %v4998
      %v6300 = vpop.permute.xlu0 %6299
      %6303 = vset.pattern.permute.xlu0 0
      %6304 = vperm.xlu0 %6303, %v5004
      %v6305 = vpop.permute.xlu0 %6304
      %6308 = vset.pattern.permute.xlu0 0
      %6309 = vperm.xlu0 %6308, %v5008
      %v6310 = vpop.permute.xlu0 %6309
      %6313 = vset.pattern.permute.xlu0 0
      %6314 = vperm.xlu0 %6313, %v5014
      %v6315 = vpop.permute.xlu0 %6314
      %6318 = vset.pattern.permute.xlu0 0
      %6319 = vperm.xlu0 %6318, %v5018
      %v6320 = vpop.permute.xlu0 %6319
      %6323 = vset.pattern.permute.xlu0 0
      %6324 = vperm.xlu0 %6323, %v5024
      %v6325 = vpop.permute.xlu0 %6324
      %6328 = vset.pattern.permute.xlu0 0
      %6329 = vperm.xlu0 %6328, %v5028
      %v6330 = vpop.permute.xlu0 %6329
      %6333 = vset.pattern.permute.xlu0 0
      %6334 = vperm.xlu0 %6333, %v5034
      %v6335 = vpop.permute.xlu0 %6334
      %6338 = vset.pattern.permute.xlu0 0
      %6339 = vperm.xlu0 %6338, %v5038
      %v6340 = vpop.permute.xlu0 %6339
      %6343 = vset.pattern.permute.xlu0 0
      %6344 = vperm.xlu0 %6343, %v5044
      %v6345 = vpop.permute.xlu0 %6344
      %6348 = vset.pattern.permute.xlu0 0
      %6349 = vperm.xlu0 %6348, %v5048
      %v6350 = vpop.permute.xlu0 %6349
      %6353 = vset.pattern.permute.xlu0 0
      %6354 = vperm.xlu0 %6353, %v5054
      %v6355 = vpop.permute.xlu0 %6354
      %6358 = vset.pattern.permute.xlu0 0
      %6359 = vperm.xlu0 %6358, %v5058
      %v6360 = vpop.permute.xlu0 %6359
      %6363 = vset.pattern.permute.xlu0 0
      %6364 = vperm.xlu0 %6363, %v5064
      %v6365 = vpop.permute.xlu0 %6364
      %6368 = vset.pattern.permute.xlu0 0
      %6369 = vperm.xlu0 %6368, %v5068
      %v6370 = vpop.permute.xlu0 %6369
      %6373 = vset.pattern.permute.xlu0 0
      %6374 = vperm.xlu0 %6373, %v5074
      %v6375 = vpop.permute.xlu0 %6374
      %6378 = vset.pattern.permute.xlu0 0
      %6379 = vperm.xlu0 %6378, %v5078
      %v6380 = vpop.permute.xlu0 %6379
      %6383 = vset.pattern.permute.xlu0 0
      %6384 = vperm.xlu0 %6383, %v5084
      %v6385 = vpop.permute.xlu0 %6384
      %6388 = vset.pattern.permute.xlu0 0
      %6389 = vperm.xlu0 %6388, %v5088
      %v6390 = vpop.permute.xlu0 %6389
      %6393 = vset.pattern.permute.xlu0 0
      %6394 = vperm.xlu0 %6393, %v5094
      %v6395 = vpop.permute.xlu0 %6394
      %6398 = vset.pattern.permute.xlu0 0
      %6399 = vperm.xlu0 %6398, %v5098
      %v6400 = vpop.permute.xlu0 %6399
      %6403 = vset.pattern.permute.xlu0 0
      %6404 = vperm.xlu0 %6403, %v5104
      %v6405 = vpop.permute.xlu0 %6404
      %6408 = vset.pattern.permute.xlu0 0
      %6409 = vperm.xlu0 %6408, %v5108
      %v6410 = vpop.permute.xlu0 %6409
      %6413 = vset.pattern.permute.xlu0 0
      %6414 = vperm.xlu0 %6413, %v5114
      %v6415 = vpop.permute.xlu0 %6414
      %6418 = vset.pattern.permute.xlu0 0
      %6419 = vperm.xlu0 %6418, %v5118
      %v6420 = vpop.permute.xlu0 %6419
      %6423 = vset.pattern.permute.xlu0 0
      %6424 = vperm.xlu0 %6423, %v5124
      %v6425 = vpop.permute.xlu0 %6424
      %6428 = vset.pattern.permute.xlu0 0
      %6429 = vperm.xlu0 %6428, %v5128
      %v6430 = vpop.permute.xlu0 %6429
      %6433 = vset.pattern.permute.xlu0 0
      %6434 = vperm.xlu0 %6433, %v5134
      %v6435 = vpop.permute.xlu0 %6434
      %6438 = vset.pattern.permute.xlu0 0
      %6439 = vperm.xlu0 %6438, %v5138
      %v6440 = vpop.permute.xlu0 %6439
      %6443 = vset.pattern.permute.xlu0 0
      %6444 = vperm.xlu0 %6443, %v5144
      %v6445 = vpop.permute.xlu0 %6444
      %6448 = vset.pattern.permute.xlu0 0
      %6449 = vperm.xlu0 %6448, %v5148
      %v6450 = vpop.permute.xlu0 %6449
      %6453 = vset.pattern.permute.xlu0 0
      %6454 = vperm.xlu0 %6453, %v5154
      %v6455 = vpop.permute.xlu0 %6454
      %6458 = vset.pattern.permute.xlu0 0
      %6459 = vperm.xlu0 %6458, %v5158
      %v6460 = vpop.permute.xlu0 %6459
      %6463 = vset.pattern.permute.xlu0 0
      %6464 = vperm.xlu0 %6463, %v5164
      %v6465 = vpop.permute.xlu0 %6464
      %6468 = vset.pattern.permute.xlu0 0
      %6469 = vperm.xlu0 %6468, %v5168
      %v6470 = vpop.permute.xlu0 %6469
      %6473 = vset.pattern.permute.xlu0 0
      %6474 = vperm.xlu0 %6473, %v5174
      %v6475 = vpop.permute.xlu0 %6474
      %6478 = vset.pattern.permute.xlu0 0
      %6479 = vperm.xlu0 %6478, %v5178
      %v6480 = vpop.permute.xlu0 %6479
      %6483 = vset.pattern.permute.xlu0 0
      %6484 = vperm.xlu0 %6483, %v5184
      %v6485 = vpop.permute.xlu0 %6484
      %6488 = vset.pattern.permute.xlu0 0
      %6489 = vperm.xlu0 %6488, %v5188
      %v6490 = vpop.permute.xlu0 %6489
      %6493 = vset.pattern.permute.xlu0 0
      %6494 = vperm.xlu0 %6493, %v5194
      %v6495 = vpop.permute.xlu0 %6494
      %6498 = vset.pattern.permute.xlu0 0
      %6499 = vperm.xlu0 %6498, %v5198
      %v6500 = vpop.permute.xlu0 %6499
      %6503 = vset.pattern.permute.xlu0 0
      %6504 = vperm.xlu0 %6503, %v5204
      %v6505 = vpop.permute.xlu0 %6504
      %6508 = vset.pattern.permute.xlu0 0
      %6509 = vperm.xlu0 %6508, %v5208
      %v6510 = vpop.permute.xlu0 %6509
      %6513 = vset.pattern.permute.xlu0 0
      %6514 = vperm.xlu0 %6513, %v5214
      %v6515 = vpop.permute.xlu0 %6514
      %6518 = vset.pattern.permute.xlu0 0
      %6519 = vperm.xlu0 %6518, %v5218
      %v6520 = vpop.permute.xlu0 %6519
      %6523 = vset.pattern.permute.xlu0 0
      %6524 = vperm.xlu0 %6523, %v5224
      %v6525 = vpop.permute.xlu0 %6524
      %6528 = vset.pattern.permute.xlu0 0
      %6529 = vperm.xlu0 %6528, %v5228
      %v6530 = vpop.permute.xlu0 %6529
      %6533 = vset.pattern.permute.xlu0 0
      %6534 = vperm.xlu0 %6533, %v5234
      %v6535 = vpop.permute.xlu0 %6534
      %6538 = vset.pattern.permute.xlu0 0
      %6539 = vperm.xlu0 %6538, %v5238
      %v6540 = vpop.permute.xlu0 %6539
      %6543 = vset.pattern.permute.xlu0 0
      %6544 = vperm.xlu0 %6543, %v5244
      %v6545 = vpop.permute.xlu0 %6544
      %6548 = vset.pattern.permute.xlu0 0
      %6549 = vperm.xlu0 %6548, %v5248
      %v6550 = vpop.permute.xlu0 %6549
      %6553 = vset.pattern.permute.xlu0 0
      %6554 = vperm.xlu0 %6553, %v5254
      %v6555 = vpop.permute.xlu0 %6554
      %6558 = vset.pattern.permute.xlu0 0
      %6559 = vperm.xlu0 %6558, %v5258
      %v6560 = vpop.permute.xlu0 %6559
      %6563 = vset.pattern.permute.xlu0 0
      %6564 = vperm.xlu0 %6563, %v5264
      %v6565 = vpop.permute.xlu0 %6564
      %6568 = vset.pattern.permute.xlu0 0
      %6569 = vperm.xlu0 %6568, %v5268
      %v6570 = vpop.permute.xlu0 %6569
      %v6572 = vsel %vm6251, %v6255, %v5993
      %v6573 = vsel %vm6251, %v6260, %v5996
      %v6574 = vsel %vm6251, %v6265, %v6001
      %v6575 = vsel %vm6251, %v6270, %v6004
      %v6576 = vsel %vm6251, %v6275, %v6009
      %v6577 = vsel %vm6251, %v6280, %v6012
      %v6578 = vsel %vm6251, %v6285, %v6017
      %v6579 = vsel %vm6251, %v6290, %v6020
      %v6580 = vsel %vm6251, %v6295, %v6025
      %v6581 = vsel %vm6251, %v6300, %v6028
      %v6582 = vsel %vm6251, %v6305, %v6033
      %v6583 = vsel %vm6251, %v6310, %v6036
      %v6584 = vsel %vm6251, %v6315, %v6041
      %v6585 = vsel %vm6251, %v6320, %v6044
      %v6586 = vsel %vm6251, %v6325, %v6049
      %v6587 = vsel %vm6251, %v6330, %v6052
      %v6588 = vsel %vm6251, %v6335, %v6057
      %v6589 = vsel %vm6251, %v6340, %v6060
      %v6590 = vsel %vm6251, %v6345, %v6065
      %v6591 = vsel %vm6251, %v6350, %v6068
      %v6592 = vsel %vm6251, %v6355, %v6073
      %v6593 = vsel %vm6251, %v6360, %v6076
      %v6594 = vsel %vm6251, %v6365, %v6081
      %v6595 = vsel %vm6251, %v6370, %v6084
      %v6596 = vsel %vm6251, %v6375, %v6089
      %v6597 = vsel %vm6251, %v6380, %v6092
      %v6598 = vsel %vm6251, %v6385, %v6097
      %v6599 = vsel %vm6251, %v6390, %v6100
      %v6600 = vsel %vm6251, %v6395, %v6105
      %v6601 = vsel %vm6251, %v6400, %v6108
      %v6602 = vsel %vm6251, %v6405, %v6113
      %v6603 = vsel %vm6251, %v6410, %v6116
      %v6604 = vsel %vm6251, %v6415, %v6121
      %v6605 = vsel %vm6251, %v6420, %v6124
      %v6606 = vsel %vm6251, %v6425, %v6129
      %v6607 = vsel %vm6251, %v6430, %v6132
      %v6608 = vsel %vm6251, %v6435, %v6137
      %v6609 = vsel %vm6251, %v6440, %v6140
      %v6610 = vsel %vm6251, %v6445, %v6145
      %v6611 = vsel %vm6251, %v6450, %v6148
      %v6612 = vsel %vm6251, %v6455, %v6153
      %v6613 = vsel %vm6251, %v6460, %v6156
      %v6614 = vsel %vm6251, %v6465, %v6161
      %v6615 = vsel %vm6251, %v6470, %v6164
      %v6616 = vsel %vm6251, %v6475, %v6169
      %v6617 = vsel %vm6251, %v6480, %v6172
      %v6618 = vsel %vm6251, %v6485, %v6177
      %v6619 = vsel %vm6251, %v6490, %v6180
      %v6620 = vsel %vm6251, %v6495, %v6185
      %v6621 = vsel %vm6251, %v6500, %v6188
      %v6622 = vsel %vm6251, %v6505, %v6193
      %v6623 = vsel %vm6251, %v6510, %v6196
      %v6624 = vsel %vm6251, %v6515, %v6201
      %v6625 = vsel %vm6251, %v6520, %v6204
      %v6626 = vsel %vm6251, %v6525, %v6209
      %v6627 = vsel %vm6251, %v6530, %v6212
      %v6628 = vsel %vm6251, %v6535, %v6217
      %v6629 = vsel %vm6251, %v6540, %v6220
      %v6630 = vsel %vm6251, %v6545, %v6225
      %v6631 = vsel %vm6251, %v6550, %v6228
      %v6632 = vsel %vm6251, %v6555, %v6233
      %v6633 = vsel %vm6251, %v6560, %v6236
      %v6634 = vsel %vm6251, %v6565, %v6241
      %v6635 = vsel %vm6251, %v6570, %v6244
      %vm6636 = vcmask 31744
      %6637 = vst.msk [vmem:[%s388] sm:$0xff] %vm6636, %v6572
      %6638 = vst.msk [vmem:[%s388 + $0x8] sm:$0xff] %vm6636, %v6573
      %6639 = vst.msk [vmem:[%s388 + $0x10] sm:$0xff] %vm6636, %v6574
      %6640 = vst.msk [vmem:[%s388 + $0x18] sm:$0xff] %vm6636, %v6575
      %6641 = vst.msk [vmem:[%s388 + $0x20] sm:$0xff] %vm6636, %v6576
      %6642 = vst.msk [vmem:[%s388 + $0x28] sm:$0xff] %vm6636, %v6577
      %6643 = vst.msk [vmem:[%s388 + $0x30] sm:$0xff] %vm6636, %v6578
      %6644 = vst.msk [vmem:[%s388 + $0x38] sm:$0xff] %vm6636, %v6579
      %6645 = vst.msk [vmem:[%s388 + $0x40] sm:$0xff] %vm6636, %v6580
      %6646 = vst.msk [vmem:[%s388 + $0x48] sm:$0xff] %vm6636, %v6581
      %6647 = vst.msk [vmem:[%s388 + $0x50] sm:$0xff] %vm6636, %v6582
      %6648 = vst.msk [vmem:[%s388 + $0x58] sm:$0xff] %vm6636, %v6583
      %6649 = vst.msk [vmem:[%s388 + $0x60] sm:$0xff] %vm6636, %v6584
      %6650 = vst.msk [vmem:[%s388 + $0x68] sm:$0xff] %vm6636, %v6585
      %6651 = vst.msk [vmem:[%s388 + $0x70] sm:$0xff] %vm6636, %v6586
      %6652 = vst.msk [vmem:[%s388 + $0x78] sm:$0xff] %vm6636, %v6587
      %6653 = vst.msk [vmem:[%s388 + $0x80] sm:$0xff] %vm6636, %v6588
      %6654 = vst.msk [vmem:[%s388 + $0x88] sm:$0xff] %vm6636, %v6589
      %6655 = vst.msk [vmem:[%s388 + $0x90] sm:$0xff] %vm6636, %v6590
      %6656 = vst.msk [vmem:[%s388 + $0x98] sm:$0xff] %vm6636, %v6591
      %6657 = vst.msk [vmem:[%s388 + $0xa0] sm:$0xff] %vm6636, %v6592
      %6658 = vst.msk [vmem:[%s388 + $0xa8] sm:$0xff] %vm6636, %v6593
      %6659 = vst.msk [vmem:[%s388 + $0xb0] sm:$0xff] %vm6636, %v6594
      %6660 = vst.msk [vmem:[%s388 + $0xb8] sm:$0xff] %vm6636, %v6595
      %6661 = vst.msk [vmem:[%s388 + $0xc0] sm:$0xff] %vm6636, %v6596
      %6662 = vst.msk [vmem:[%s388 + $0xc8] sm:$0xff] %vm6636, %v6597
      %6663 = vst.msk [vmem:[%s388 + $0xd0] sm:$0xff] %vm6636, %v6598
      %6664 = vst.msk [vmem:[%s388 + $0xd8] sm:$0xff] %vm6636, %v6599
      %6665 = vst.msk [vmem:[%s388 + $0xe0] sm:$0xff] %vm6636, %v6600
      %6666 = vst.msk [vmem:[%s388 + $0xe8] sm:$0xff] %vm6636, %v6601
      %6667 = vst.msk [vmem:[%s388 + $0xf0] sm:$0xff] %vm6636, %v6602
      %6668 = vst.msk [vmem:[%s388 + $0xf8] sm:$0xff] %vm6636, %v6603
      %6669 = vst.msk [vmem:[%s388 + $0x100] sm:$0xff] %vm6636, %v6604
      %6670 = vst.msk [vmem:[%s388 + $0x108] sm:$0xff] %vm6636, %v6605
      %6671 = vst.msk [vmem:[%s388 + $0x110] sm:$0xff] %vm6636, %v6606
      %6672 = vst.msk [vmem:[%s388 + $0x118] sm:$0xff] %vm6636, %v6607
      %6673 = vst.msk [vmem:[%s388 + $0x120] sm:$0xff] %vm6636, %v6608
      %6674 = vst.msk [vmem:[%s388 + $0x128] sm:$0xff] %vm6636, %v6609
      %6675 = vst.msk [vmem:[%s388 + $0x130] sm:$0xff] %vm6636, %v6610
      %6676 = vst.msk [vmem:[%s388 + $0x138] sm:$0xff] %vm6636, %v6611
      %6677 = vst.msk [vmem:[%s388 + $0x140] sm:$0xff] %vm6636, %v6612
      %6678 = vst.msk [vmem:[%s388 + $0x148] sm:$0xff] %vm6636, %v6613
      %6679 = vst.msk [vmem:[%s388 + $0x150] sm:$0xff] %vm6636, %v6614
      %6680 = vst.msk [vmem:[%s388 + $0x158] sm:$0xff] %vm6636, %v6615
      %6681 = vst.msk [vmem:[%s388 + $0x160] sm:$0xff] %vm6636, %v6616
      %6682 = vst.msk [vmem:[%s388 + $0x168] sm:$0xff] %vm6636, %v6617
      %6683 = vst.msk [vmem:[%s388 + $0x170] sm:$0xff] %vm6636, %v6618
      %6684 = vst.msk [vmem:[%s388 + $0x178] sm:$0xff] %vm6636, %v6619
      %6685 = vst.msk [vmem:[%s388 + $0x180] sm:$0xff] %vm6636, %v6620
      %6686 = vst.msk [vmem:[%s388 + $0x188] sm:$0xff] %vm6636, %v6621
      %6687 = vst.msk [vmem:[%s388 + $0x190] sm:$0xff] %vm6636, %v6622
      %6688 = vst.msk [vmem:[%s388 + $0x198] sm:$0xff] %vm6636, %v6623
      %6689 = vst.msk [vmem:[%s388 + $0x1a0] sm:$0xff] %vm6636, %v6624
      %6690 = vst.msk [vmem:[%s388 + $0x1a8] sm:$0xff] %vm6636, %v6625
      %6691 = vst.msk [vmem:[%s388 + $0x1b0] sm:$0xff] %vm6636, %v6626
      %6692 = vst.msk [vmem:[%s388 + $0x1b8] sm:$0xff] %vm6636, %v6627
      %6693 = vst.msk [vmem:[%s388 + $0x1c0] sm:$0xff] %vm6636, %v6628
      %6694 = vst.msk [vmem:[%s388 + $0x1c8] sm:$0xff] %vm6636, %v6629
      %6695 = vst.msk [vmem:[%s388 + $0x1d0] sm:$0xff] %vm6636, %v6630
      %6696 = vst.msk [vmem:[%s388 + $0x1d8] sm:$0xff] %vm6636, %v6631
      %6697 = vst.msk [vmem:[%s388 + $0x1e0] sm:$0xff] %vm6636, %v6632
      %6698 = vst.msk [vmem:[%s388 + $0x1e8] sm:$0xff] %vm6636, %v6633
      %6699 = vst.msk [vmem:[%s388 + $0x1f0] sm:$0xff] %vm6636, %v6634
      %6700 = vst.msk [vmem:[%s388 + $0x1f8] sm:$0xff] %vm6636, %v6635
      %s6701 = smul.u32 64, %s22
      %p6702 = scmp.lt.s32.totalorder %s6701, 127
      %s6703 = scalar_select %p6702, %s6701, 127
      %s6704 = smul.addr %s6703, 8
      %s6705 = scalar_lea.vmem %s11, %s6704
      // Predicated region
      $region65: #{tpu_custom_call.1} parent=63 // pred_check
        %p6706 = pneg %p276
      $region66: #{tpu_custom_call.1} parent=63 // pred_check_branch
        %6708 = sbr.rel (%p6706) target = $region68
      $region67: #{tpu_custom_call.1} parent=63 // pred_region
        %s6709 = smul.u32 64, %s22
      $region68: #{tpu_custom_call.1} parent=63 // pred_fallthru
        _
    $region64: #{tpu_custom_call.1} parent=5 // pred_fallthru
      _
    %p6710 = scmp.le.s32.totalorder 2, %s17
    // Predicated region
    $region69: #{tpu_custom_call.1} parent=5 // pred_check
      %p6711 = pneg %p6710
    $region70: #{tpu_custom_call.1} parent=5 // pred_check_branch
      %6713 = sbr.rel (%p6711) target = $region72
    $region71: #{tpu_custom_call.1} parent=5 // pred_region
      %s6714 = ssub.s32 %s17, 2
      // Predicated region
      $region73: #{tpu_custom_call.1} parent=71 // pred_check
        %p6715 = pneg %p282
      $region74: #{tpu_custom_call.1} parent=71 // pred_check_branch
        %6717 = sbr.rel (%p6715) target = $region76
      $region75: #{tpu_custom_call.1} parent=71 // pred_region
        %s6718 = smul.u32 64, %s23
        %p6719 = scmp.lt.s32.totalorder %s6718, 127
        %s6720 = scalar_select %p6719, %s6718, 127
        %s6721 = smul.addr %s6720, 8
        %s6722 = scalar_lea.vmem %s11, %s6721
      $region76: #{tpu_custom_call.1} parent=71 // pred_fallthru
        _
    $region72: #{tpu_custom_call.1} parent=5 // pred_fallthru
      _
  $region6: #{tpu_custom_call.1} parent=0 // loop_footer
    %s21 = sadd.s32 1, %s17
  $region7: #{tpu_custom_call.1} parent=0 // loop_footer_branch
    %16 = sbr.rel target = $region3
  $region8: #{tpu_custom_call.1} parent=0 // loop_exit
    _

</llo_original>
